<compile_context>
chip_gen: v5e
topology: v5e:2x2
jax: 0.10.0
libtpu: 0.0.40
codegen_flags: <defaults>
</compile_context>

<pallas_src>
import functools

import jax
import jax.numpy as jnp
from jax.experimental import pallas as pl
from jax.experimental.pallas import tpu as pltpu


# ----------------------------------------------------------------------------
# Helpers
# ----------------------------------------------------------------------------
def _round_up(x, m):
    return ((x + m - 1) // m) * m


def _cdiv(a, b):
    return -(-a // b)


def _tpu_vmem_bytes():
    try:
        return int(pltpu.get_tpu_info().vmem_capacity_bytes)
    except Exception:
        return 128 * 1024 * 1024


def _vmem_limit_bytes():
    # Leave headroom below physical VMEM (v5e/v6e: 128 MiB, v7x: 64 MiB / TC).
    return int(min((_tpu_vmem_bytes() * 3) // 4, 96 * 1024 * 1024))


def _as_bf16(x):
    return x if x.dtype == jnp.bfloat16 else x.astype(jnp.bfloat16)


def _maybe_pad2d(arr, rows, cols):
    pr, pc = rows - arr.shape[0], cols - arr.shape[1]
    if pr == 0 and pc == 0:
        return arr                      # skip the pad pass when already aligned
    return jnp.pad(arr, ((0, pr), (0, pc)))


def _pick_row_tile(M, tm_max=512):
    """Row tile for GEMM-style ops; aims for >=2 row blocks (v7x megacore)."""
    if M <= 16:
        return _round_up(max(M, 1), 8)
    return min(tm_max, _round_up(_cdiv(M, 2), 8))


# ----------------------------------------------------------------------------
# Matmul with fused bias / residual / ReLU epilogue
# ----------------------------------------------------------------------------
def _mm_resident_kernel(a_ref, b_ref, bias_ref, *rest, relu, has_res):
    # Whole (K, N) weight resident in VMEM; grid runs over row tiles only.
    if has_res:
        res_ref, o_ref = rest
    else:
        (o_ref,) = rest
        res_ref = None
    r = jnp.dot(a_ref[...], b_ref[...], preferred_element_type=jnp.float32)
    r = r + bias_ref[...]
    if has_res:
        r = r + res_ref[...].astype(jnp.float32)
    if relu:
        r = jnp.maximum(r, 0.0)
    o_ref[...] = r.astype(o_ref.dtype)


def _mm_ktiled_kernel(a_ref, b_ref, bias_ref, *rest, relu, has_res):
    # Fallback for very large K / N: K-accumulating with f32 VMEM scratch.
    if has_res:
        res_ref, o_ref, acc_ref = rest
    else:
        o_ref, acc_ref = rest
        res_ref = None
    k = pl.program_id(2)

    @pl.when(k == 0)
    def _zero():
        acc_ref[...] = jnp.zeros_like(acc_ref)

    acc_ref[...] += jnp.dot(a_ref[...], b_ref[...],
                            preferred_element_type=jnp.float32)

    @pl.when(k == pl.num_programs(2) - 1)
    def _epilogue():
        r = acc_ref[...] + bias_ref[...]
        if has_res:
            r = r + res_ref[...].astype(jnp.float32)
        if relu:
            r = jnp.maximum(r, 0.0)
        o_ref[...] = r.astype(o_ref.dtype)


_RESIDENT_WEIGHT_BYTES = 8 * 1024 * 1024   # bf16 weight kept resident below this


def matmul_bias(a, b, bias, *, residual=None, relu=False, out_dtype=jnp.bfloat16):
    """out = relu?(a @ b + bias [+ residual]).  a:(M,K), b:(K,N), bias:(N,)."""
    M, K = a.shape
    K2, N = b.shape
    assert K2 == K
    a = _as_bf16(a)
    b = _as_bf16(b)
    bias = bias.astype(jnp.float32)

    Kp = _round_up(K, 128)
    Np = _round_up(N, 128)
    TM = _pick_row_tile(M)
    Mp = _round_up(M, TM)
    has_res = residual is not None
    flops = 2 * M * N * K
    vmem_limit = _vmem_limit_bytes()
    resident = Kp * Np * 2 <= _RESIDENT_WEIGHT_BYTES

    if resident:
        a_p = _maybe_pad2d(a, Mp, Kp)
        b_p = _maybe_pad2d(b, Kp, Np)
        bias_p = _maybe_pad2d(bias.reshape(1, N), 1, Np)
        in_specs = [
            pl.BlockSpec((TM, Kp), lambda i: (i, 0)),
            pl.BlockSpec((Kp, Np), lambda i: (0, 0)),     # resident weight
            pl.BlockSpec((1, Np), lambda i: (0, 0)),
        ]
        args = [a_p, b_p, bias_p]
        if has_res:
            r_p = _maybe_pad2d(_as_bf16(residual), Mp, Np)
            in_specs.append(pl.BlockSpec((TM, Np), lambda i: (i, 0)))
            args.append(r_p)
        bytes_acc = (a_p.size + b_p.size) * 2 \
            + Mp * Np * jnp.dtype(out_dtype).itemsize \
            + (Mp * Np * 2 if has_res else 0)
        out = pl.pallas_call(
            functools.partial(_mm_resident_kernel, relu=relu, has_res=has_res),
            out_shape=jax.ShapeDtypeStruct((Mp, Np), out_dtype),
            grid=(Mp // TM,),
            in_specs=in_specs,
            out_specs=pl.BlockSpec((TM, Np), lambda i: (i, 0)),
            compiler_params=pltpu.CompilerParams(
                dimension_semantics=("parallel",),
                vmem_limit_bytes=vmem_limit),
            cost_estimate=pl.CostEstimate(flops=int(flops), transcendentals=0,
                                          bytes_accessed=int(bytes_acc)),
        )(*args)
    else:
        TK = 512
        TN = 512 if Np >= 512 else Np
        Kp = _round_up(K, TK)
        Np = _round_up(N, TN)
        a_p = _maybe_pad2d(a, Mp, Kp)
        b_p = _maybe_pad2d(b, Kp, Np)
        bias_p = _maybe_pad2d(bias.reshape(1, N), 1, Np)
        in_specs = [
            pl.BlockSpec((TM, TK), lambda i, j, k: (i, k)),
            pl.BlockSpec((TK, TN), lambda i, j, k: (k, j)),
            pl.BlockSpec((1, TN), lambda i, j, k: (0, j)),
        ]
        args = [a_p, b_p, bias_p]
        if has_res:
            r_p = _maybe_pad2d(_as_bf16(residual), Mp, Np)
            in_specs.append(pl.BlockSpec((TM, TN), lambda i, j, k: (i, j)))
            args.append(r_p)
        bytes_acc = (a_p.size + b_p.size) * 2 \
            + Mp * Np * jnp.dtype(out_dtype).itemsize
        out = pl.pallas_call(
            functools.partial(_mm_ktiled_kernel, relu=relu, has_res=has_res),
            out_shape=jax.ShapeDtypeStruct((Mp, Np), out_dtype),
            grid=(Mp // TM, Np // TN, Kp // TK),
            in_specs=in_specs,
            out_specs=pl.BlockSpec((TM, TN), lambda i, j, k: (i, j)),
            scratch_shapes=[pltpu.VMEM((TM, TN), jnp.float32)],
            compiler_params=pltpu.CompilerParams(
                dimension_semantics=("parallel", "parallel", "arbitrary"),
                vmem_limit_bytes=vmem_limit),
            cost_estimate=pl.CostEstimate(flops=int(flops), transcendentals=0,
                                          bytes_accessed=int(bytes_acc)),
        )(*args)

    if Mp != M or Np != N:
        out = out[:M, :N]
    return out


# ----------------------------------------------------------------------------
# 3x3 conv (stride 1): windowed tap-accumulation kernel (no HBM im2col)
# ----------------------------------------------------------------------------
def _conv3x3_kernel(x_hbm, w_ref, b_ref, o_ref, win_ref, sem, acc_ref, *,
                    tm, win, taps, n_row_tiles, relu):
    n = pl.program_id(0)
    t = pl.program_id(1)
    slot = t % 2

    def issue(batch_idx, tile_idx, s):
        start = pl.multiple_of(tile_idx * tm, 8)
        pltpu.make_async_copy(x_hbm.at[batch_idx, pl.ds(start, win), :],
                              win_ref.at[s], sem.at[s]).start()

    # First row-tile of this image: fetch its own window (chain start).  The
    # prefetch chain is confined to the sequential ("arbitrary") t-axis, so it
    # stays correct when the batch axis is split across TensorCores (v7x).
    @pl.when(t == 0)
    def _prime():
        issue(n, t, slot)

    # Prefetch the next row-tile of the SAME image into the other slot.
    @pl.when(t + 1 < n_row_tiles)
    def _prefetch():
        issue(n, t + 1, 1 - slot)

    # Wait for the current slot's window.
    pltpu.make_async_copy(x_hbm.at[0, pl.ds(0, win), :],
                          win_ref.at[slot], sem.at[slot]).wait()

    cur = win_ref.at[slot]
    # 9 static tap offsets, accumulated into an explicit f32 VMEM scratch.
    # TODO(synk): on v6e/v7x the three kw taps per kh row could be fused into
    # one K=3*Cp matmul to better fill the 256-deep MXU.
    acc_ref[...] = jnp.dot(cur[pl.ds(taps[0], tm), :], w_ref[0],
                           preferred_element_type=jnp.float32)
    for k in range(1, 9):
        acc_ref[...] += jnp.dot(cur[pl.ds(taps[k], tm), :], w_ref[k],
                                preferred_element_type=jnp.float32)

    r = acc_ref[...] + b_ref[...]
    if relu:
        r = jnp.maximum(r, 0.0)
    o_ref[0] = r.astype(o_ref.dtype)


def conv3x3_nhwc(x, w, b, *, stride=1, dilation=1, relu=False,
                 out_dtype=jnp.bfloat16):
    """3x3 conv with padding=dilation, NHWC.  w: (3,3,Cin,Cout), b: (Cout,)."""
    if stride != 1:
        return _conv3x3_strided_fallback(x, w, b, stride=stride,
                                         dilation=dilation, relu=relu,
                                         out_dtype=out_dtype)
    N, H, W, Cin = x.shape
    Cout = w.shape[-1]
    d = dilation
    Hp, Wp = H + 2 * d, W + 2 * d
    Cp = _round_up(Cin, 128)
    Coutp = _round_up(Cout, 128)

    # One padded bf16 copy of the activation in HBM, flattened to (N,Hp*Wp,Cp).
    x = _as_bf16(x)
    xp = jnp.pad(x, ((0, 0), (d, d), (d, d), (0, Cp - Cin)))
    x_flat = xp.reshape(N, Hp * Wp, Cp)

    Lout = H * Wp                               # outputs use the padded row pitch
    TM = min(512, _round_up(Lout, 8))
    T = _cdiv(Lout, TM)
    if N * T < 2 and Lout > 16:                 # keep >=2 grid blocks around
        TM = _round_up(_cdiv(Lout, 2), 8)
        T = _cdiv(Lout, TM)
    WIN = _round_up(TM + 2 * d * Wp + 2 * d, 16)   # flat window for all 9 taps
    Lp = (T - 1) * TM + WIN
    if Lp > Hp * Wp:
        x_flat = jnp.pad(x_flat, ((0, 0), (0, Lp - Hp * Wp), (0, 0)))

    taps = [kh * d * Wp + kw * d for kh in range(3) for kw in range(3)]
    w = _as_bf16(w)
    if Cp != Cin or Coutp != Cout:
        w = jnp.pad(w, ((0, 0), (0, 0), (0, Cp - Cin), (0, Coutp - Cout)))
    w9 = w.reshape(9, Cp, Coutp)
    b_p = b.astype(jnp.float32)
    if Coutp != Cout:
        b_p = jnp.pad(b_p, (0, Coutp - Cout))
    b_p = b_p.reshape(1, Coutp)

    kernel = functools.partial(_conv3x3_kernel, tm=TM, win=WIN, taps=taps,
                               n_row_tiles=T, relu=relu)
    flops = 2 * N * Lout * 9 * Cin * Cout
    bytes_acc = (x_flat.size + w9.size) * 2 \
        + N * T * TM * Coutp * jnp.dtype(out_dtype).itemsize
    out = pl.pallas_call(
        kernel,
        out_shape=jax.ShapeDtypeStruct((N, T * TM, Coutp), out_dtype),
        grid=(N, T),
        in_specs=[
            pl.BlockSpec(memory_space=pl.ANY),                      # padded act (HBM)
            pl.BlockSpec((9, Cp, Coutp), lambda n, t: (0, 0, 0)),   # BN-folded w
            pl.BlockSpec((1, Coutp), lambda n, t: (0, 0)),          # BN-folded bias
        ],
        out_specs=pl.BlockSpec((1, TM, Coutp), lambda n, t: (n, t, 0)),
        scratch_shapes=[
            pltpu.VMEM((2, WIN, Cp), jnp.bfloat16),    # double-buffered window
            pltpu.SemaphoreType.DMA((2,)),
            pltpu.VMEM((TM, Coutp), jnp.float32),      # tap accumulator
        ],
        compiler_params=pltpu.CompilerParams(
            dimension_semantics=("parallel", "arbitrary"),
            vmem_limit_bytes=_vmem_limit_bytes()),
        cost_estimate=pl.CostEstimate(flops=int(flops), transcendentals=0,
                                      bytes_accessed=int(bytes_acc)),
    )(x_flat, w9, b_p)
    # TODO(synk): this Wp->W / Coutp->Cout slice is one extra (bf16) pass over
    # the conv2 output; a 2-D (row, W-tile) grid would avoid it.
    out = out[:, :Lout, :Cout].reshape(N, H, Wp, Cout)[:, :, :W, :]
    return out


def _conv3x3_strided_fallback(x, w, b, *, stride, dilation, relu, out_dtype):
    # TODO(synk): stride>1 still uses a bf16 HBM im2col + GEMM; a strided
    # windowed kernel (like the stride==1 path) would avoid the 9x duplication.
    N, H, W, Cin = x.shape
    Cout = w.shape[-1]
    d, s = dilation, stride
    Ho = (H - 1) // s + 1
    Wo = (W - 1) // s + 1
    xp = jnp.pad(_as_bf16(x), ((0, 0), (d, d), (d, d), (0, 0)))
    taps = []
    for kh in range(3):
        for kw in range(3):
            taps.append(xp[:, kh * d: kh * d + (Ho - 1) * s + 1: s,
                           kw * d: kw * d + (Wo - 1) * s + 1: s, :])
    col = jnp.concatenate(taps, axis=-1).reshape(N * Ho * Wo, 9 * Cin)
    wm = _as_bf16(w).reshape(9 * Cin, Cout)
    y = matmul_bias(col, wm, b, relu=relu, out_dtype=out_dtype)
    return y.reshape(N, Ho, Wo, Cout)


# ----------------------------------------------------------------------------
# 1x1 conv wrapper (layout plumbing only; matmul runs in Pallas)
# ----------------------------------------------------------------------------
def conv1x1_nhwc(x, w, b, *, stride=1, relu=False, residual=None,
                 out_dtype=jnp.bfloat16):
    """1x1 conv, NHWC.  w: (Cin, Cout), b: (Cout,).  Optional fused residual."""
    if stride != 1:
        x = x[:, ::stride, ::stride, :]
    N, H, W, Cin = x.shape
    Cout = w.shape[1]
    res = residual.reshape(N * H * W, Cout) if residual is not None else None
    y = matmul_bias(x.reshape(N * H * W, Cin), w, b,
                    residual=res, relu=relu, out_dtype=out_dtype)
    return y.reshape(N, H, W, Cout)


# ----------------------------------------------------------------------------
# Parameters (deterministic) + inference-mode BN folding
# ----------------------------------------------------------------------------
def _bn_stats(key, c):
    k1, k2, k3, k4 = jax.random.split(key, 4)
    gamma = 1.0 + 0.1 * jax.random.normal(k1, (c,), jnp.float32)
    beta = 0.1 * jax.random.normal(k2, (c,), jnp.float32)
    mean = 0.1 * jax.random.normal(k3, (c,), jnp.float32)
    var = 1.0 + 0.1 * jax.random.uniform(k4, (c,), jnp.float32)
    return gamma, beta, mean, var


def _fold_bn(w, bn, eps=1e-5):
    gamma, beta, mean, var = bn
    s = gamma / jnp.sqrt(var + eps)
    wf = (w * s).astype(jnp.bfloat16)            # out-channels are the last axis
    bf = (beta - mean * s).astype(jnp.float32)
    return wf, bf


def init_bottleneck_params(key, inplanes, planes, *, has_downsample):
    exp = 4
    keys = iter(jax.random.split(key, 16))
    nk = lambda: next(keys)  # noqa: E731
    p = {}
    w1 = 0.2 * jax.random.normal(nk(), (inplanes, planes), jnp.float32)
    p['w1'], p['b1'] = _fold_bn(w1, _bn_stats(nk(), planes))
    w2 = 0.2 * jax.random.normal(nk(), (3, 3, planes, planes), jnp.float32)
    p['w2'], p['b2'] = _fold_bn(w2, _bn_stats(nk(), planes))
    w3 = 0.2 * jax.random.normal(nk(), (planes, planes * exp), jnp.float32)
    p['w3'], p['b3'] = _fold_bn(w3, _bn_stats(nk(), planes * exp))
    if has_downsample:
        wd = 0.2 * jax.random.normal(nk(), (inplanes, planes * exp), jnp.float32)
        p['wd'], p['bd'] = _fold_bn(wd, _bn_stats(nk(), planes * exp))
    return p


# ----------------------------------------------------------------------------
# Bottleneck forward
# ----------------------------------------------------------------------------
def bottleneck_forward(x_nchw, p, *, stride=1, dilation=1):
    # NCHW -> NHWC once; bf16 activations end-to-end inside the block.
    x = jnp.transpose(x_nchw, (0, 2, 3, 1)).astype(jnp.bfloat16)
    # conv1 + bn1 + relu
    out = conv1x1_nhwc(x, p['w1'], p['b1'], relu=True, out_dtype=jnp.bfloat16)
    # conv2 (3x3, stride, dilation) + bn2 + relu
    out = conv3x3_nhwc(out, p['w2'], p['b2'], stride=stride, dilation=dilation,
                       relu=True, out_dtype=jnp.bfloat16)
    # residual branch
    if 'wd' in p:
        residual = conv1x1_nhwc(x, p['wd'], p['bd'], stride=stride,
                                relu=False, out_dtype=jnp.bfloat16)
    else:
        residual = x if stride == 1 else x[:, ::stride, ::stride, :]
    # conv3 + bn3, fused with residual add + final ReLU; block output in f32.
    out = conv1x1_nhwc(out, p['w3'], p['b3'], relu=True, residual=residual,
                       out_dtype=jnp.float32)
    return jnp.transpose(out, (0, 3, 1, 2))                       # back to NCHW


# ----------------------------------------------------------------------------
if __name__ == "__main__":
    key = jax.random.PRNGKey(0)
    kx, kp = jax.random.split(key)
    N, inplanes, planes, H, W = 2, 16, 8, 16, 16            # out channels = 32
    x = jax.random.normal(kx, (N, inplanes, H, W), dtype=jnp.float32)
    params = init_bottleneck_params(kp, inplanes, planes, has_downsample=True)
    fwd = jax.jit(bottleneck_forward)
    out = fwd(x, params)
    jax.block_until_ready(out)
    assert out.shape == (N, planes * 4, H, W), out.shape
    assert bool(jnp.all(jnp.isfinite(out)))
    print("KERNEL_OK")
</pallas_src>

<mosaic_0001>
module attributes {stable_mosaic.version = 11 : i64} {
  func.func @_mm_resident_kernel(%arg0: i32, %arg1: memref<256x128xbf16, #tpu.memory_space<vmem>>, %arg2: memref<128x128xbf16, #tpu.memory_space<vmem>>, %arg3: memref<1x128xf32, #tpu.memory_space<vmem>>, %arg4: memref<256x128xbf16, #tpu.memory_space<vmem>>) attributes {dimension_semantics = [#tpu.dimension_semantics<parallel>], iteration_bounds = array<i64: 2>, scalar_prefetch = 0 : i64, scratch_operands = 0 : i64, tpu.core_type = #tpu.core_type<tc>, window_params = [{transform_indices = @transform_0, window_bounds = array<i64: 256, 128>}, {pipeline_mode = #tpu.pipeline_mode<synchronous>, transform_indices = @transform_1, window_bounds = array<i64: 128, 128>}, {pipeline_mode = #tpu.pipeline_mode<synchronous>, transform_indices = @transform_2, window_bounds = array<i64: 1, 128>}, {transform_indices = @transform_3, window_bounds = array<i64: 256, 128>}]} {
    %c0 = arith.constant 0 : index
    %c0_0 = arith.constant 0 : index
    %0 = vector.load %arg1[%c0, %c0_0] : memref<256x128xbf16, #tpu.memory_space<vmem>>, vector<256x128xbf16>
    %c0_1 = arith.constant 0 : index
    %c0_2 = arith.constant 0 : index
    %1 = vector.load %arg2[%c0_1, %c0_2] : memref<128x128xbf16, #tpu.memory_space<vmem>>, vector<128x128xbf16>
    %cst = arith.constant dense<0.000000e+00> : vector<256x128xf32>
    %2 = tpu.matmul %0, %1, %cst {dimension_numbers = #tpu.dot_dimension_numbers<[1], [0], [0], [1], [0, 0, 1, 1], [], []>} : vector<256x128xbf16>, vector<128x128xbf16>, vector<256x128xf32> -> vector<256x128xf32>
    %c0_3 = arith.constant 0 : index
    %c0_4 = arith.constant 0 : index
    %3 = vector.load %arg3[%c0_3, %c0_4] : memref<1x128xf32, #tpu.memory_space<vmem>>, vector<1x128xf32>
    %4 = vector.broadcast %3 : vector<1x128xf32> to vector<256x128xf32>
    %5 = arith.addf %2, %4 : vector<256x128xf32>
    %cst_5 = arith.constant 0.000000e+00 : f32
    %6 = vector.broadcast %cst_5 : f32 to vector<256x128xf32>
    %7 = arith.maximumf %5, %6 : vector<256x128xf32>
    %8 = arith.truncf %7 : vector<256x128xf32> to vector<256x128xbf16>
    %c0_6 = arith.constant 0 : index
    %c0_7 = arith.constant 0 : index
    %9 = vector.load %arg4[%c0_6, %c0_7] : memref<256x128xbf16, #tpu.memory_space<vmem>>, vector<256x128xbf16>
    tpu.vector_store %arg4[%c0_6, %c0_7], %8 {strides = array<i32>} : memref<256x128xbf16, #tpu.memory_space<vmem>>, vector<256x128xbf16>,
    return
  }
  func.func @transform_0(%arg0: i32) -> (i32, i32) {
    %c0_i32 = arith.constant 0 : i32
    %c0_i32_0 = arith.constant 0 : i32
    return %arg0, %c0_i32 : i32, i32
  }
  func.func @transform_1(%arg0: i32) -> (i32, i32) {
    %c0_i32 = arith.constant 0 : i32
    %c0_i32_0 = arith.constant 0 : i32
    %c0_i32_1 = arith.constant 0 : i32
    return %c0_i32, %c0_i32_0 : i32, i32
  }
  func.func @transform_2(%arg0: i32) -> (i32, i32) {
    %c0_i32 = arith.constant 0 : i32
    %c0_i32_0 = arith.constant 0 : i32
    %c0_i32_1 = arith.constant 0 : i32
    return %c0_i32, %c0_i32_0 : i32, i32
  }
  func.func @transform_3(%arg0: i32) -> (i32, i32) {
    %c0_i32 = arith.constant 0 : i32
    %c0_i32_0 = arith.constant 0 : i32
    return %arg0, %c0_i32 : i32, i32
  }
}

module attributes {stable_mosaic.version = 11 : i64} {
  func.func @_conv3x3_kernel(%arg0: i32, %arg1: i32, %arg2: memref<2x336x128xbf16, #tpu.memory_space<any>>, %arg3: memref<9x128x128xbf16, #tpu.memory_space<vmem>>, %arg4: memref<1x128xf32, #tpu.memory_space<vmem>>, %arg5: memref<1x288x128xbf16, #tpu.memory_space<vmem>>, %arg6: memref<2x336x128xbf16, #tpu.memory_space<vmem>>, %arg7: memref<2x!tpu.dma_semaphore, #tpu.memory_space<semaphore_mem>>, %arg8: memref<288x128xf32, #tpu.memory_space<vmem>>) attributes {dimension_semantics = [#tpu.dimension_semantics<parallel>, #tpu.dimension_semantics<arbitrary>], iteration_bounds = array<i64: 2, 1>, scalar_prefetch = 0 : i64, scratch_operands = 3 : i64, tpu.core_type = #tpu.core_type<tc>, window_params = [{}, {pipeline_mode = #tpu.pipeline_mode<synchronous>, transform_indices = @transform_1, window_bounds = array<i64: 9, 128, 128>}, {pipeline_mode = #tpu.pipeline_mode<synchronous>, transform_indices = @transform_2, window_bounds = array<i64: 1, 128>}, {transform_indices = @transform_3, window_bounds = array<i64: 1, 288, 128>}]} {
    %c2_i32 = arith.constant 2 : i32
    %c0_i32 = arith.constant 0 : i32
    %0 = arith.cmpi eq, %c2_i32, %c0_i32 : i32
    %c1_i32 = arith.constant 1 : i32
    %1 = arith.select %0, %c1_i32, %c2_i32 : i32
    %2 = arith.remsi %arg1, %1 : i32
    %c0_i32_0 = arith.constant 0 : i32
    %3 = arith.cmpi ne, %2, %c0_i32_0 : i32
    %c0_i32_1 = arith.constant 0 : i32
    %4 = arith.cmpi slt, %2, %c0_i32_1 : i32
    %c0_i32_2 = arith.constant 0 : i32
    %5 = arith.cmpi slt, %1, %c0_i32_2 : i32
    %6 = arith.xori %4, %5 : i1
    %7 = arith.andi %6, %3 : i1
    %8 = arith.addi %2, %1 : i32
    %9 = arith.select %7, %8, %2 : i32
    %c0_i32_3 = arith.constant 0 : i32
    %10 = arith.cmpi eq, %arg1, %c0_i32_3 : i32
    %11 = arith.extui %10 : i1 to i32
    %c0_i32_4 = arith.constant 0 : i32
    %12 = arith.cmpi ne, %11, %c0_i32_4 : i32
    scf.if %12 {
      %c288_i32 = arith.constant 288 : i32
      %112 = arith.muli %arg1, %c288_i32 : i32
      %113 = tpu.assume_multiple %112, 8 : i32
      %c0_i32_111 = arith.constant 0 : i32
      %114 = tpu.memref_slice %arg2[%arg0, %113, %c0_i32_111] : memref<2x336x128xbf16, #tpu.memory_space<any>> -> memref<1x336x128xbf16, #tpu.memory_space<any>>
      %115 = tpu.memref_squeeze %114 : memref<1x336x128xbf16, #tpu.memory_space<any>> -> memref<336x128xbf16, #tpu.memory_space<any>>
      %c0_i32_112 = arith.constant 0 : i32
      %c0_i32_113 = arith.constant 0 : i32
      %116 = tpu.memref_slice %arg6[%9, %c0_i32_112, %c0_i32_113] : memref<2x336x128xbf16, #tpu.memory_space<vmem>> -> memref<1x336x128xbf16, #tpu.memory_space<vmem>>
      %117 = tpu.memref_squeeze %116 : memref<1x336x128xbf16, #tpu.memory_space<vmem>> -> memref<336x128xbf16, #tpu.memory_space<vmem>>
      %118 = tpu.memref_slice %arg7[%9] : memref<2x!tpu.dma_semaphore, #tpu.memory_space<semaphore_mem>> -> memref<1x!tpu.dma_semaphore, #tpu.memory_space<semaphore_mem>>
      %119 = tpu.memref_squeeze %118 : memref<1x!tpu.dma_semaphore, #tpu.memory_space<semaphore_mem>> -> memref<!tpu.dma_semaphore, #tpu.memory_space<semaphore_mem>>
      tpu.enqueue_dma source(%115 : memref<336x128xbf16, #tpu.memory_space<any>>) target(%117 : memref<336x128xbf16, #tpu.memory_space<vmem>>) target_semaphore(%119 : memref<!tpu.dma_semaphore, #tpu.memory_space<semaphore_mem>>)
    } else {
    }
    %c1_i32_5 = arith.constant 1 : i32
    %13 = arith.addi %arg1, %c1_i32_5 : i32
    %c1_i32_6 = arith.constant 1 : i32
    %14 = arith.cmpi slt, %13, %c1_i32_6 : i32
    %15 = arith.extui %14 : i1 to i32
    %c0_i32_7 = arith.constant 0 : i32
    %16 = arith.cmpi ne, %15, %c0_i32_7 : i32
    scf.if %16 {
      %c1_i32_111 = arith.constant 1 : i32
      %112 = arith.addi %arg1, %c1_i32_111 : i32
      %c1_i32_112 = arith.constant 1 : i32
      %113 = arith.subi %c1_i32_112, %9 : i32
      %c288_i32 = arith.constant 288 : i32
      %114 = arith.muli %112, %c288_i32 : i32
      %115 = tpu.assume_multiple %114, 8 : i32
      %c0_i32_113 = arith.constant 0 : i32
      %116 = tpu.memref_slice %arg2[%arg0, %115, %c0_i32_113] : memref<2x336x128xbf16, #tpu.memory_space<any>> -> memref<1x336x128xbf16, #tpu.memory_space<any>>
      %117 = tpu.memref_squeeze %116 : memref<1x336x128xbf16, #tpu.memory_space<any>> -> memref<336x128xbf16, #tpu.memory_space<any>>
      %c0_i32_114 = arith.constant 0 : i32
      %c0_i32_115 = arith.constant 0 : i32
      %118 = tpu.memref_slice %arg6[%113, %c0_i32_114, %c0_i32_115] : memref<2x336x128xbf16, #tpu.memory_space<vmem>> -> memref<1x336x128xbf16, #tpu.memory_space<vmem>>
      %119 = tpu.memref_squeeze %118 : memref<1x336x128xbf16, #tpu.memory_space<vmem>> -> memref<336x128xbf16, #tpu.memory_space<vmem>>
      %120 = tpu.memref_slice %arg7[%113] : memref<2x!tpu.dma_semaphore, #tpu.memory_space<semaphore_mem>> -> memref<1x!tpu.dma_semaphore, #tpu.memory_space<semaphore_mem>>
      %121 = tpu.memref_squeeze %120 : memref<1x!tpu.dma_semaphore, #tpu.memory_space<semaphore_mem>> -> memref<!tpu.dma_semaphore, #tpu.memory_space<semaphore_mem>>
      tpu.enqueue_dma source(%117 : memref<336x128xbf16, #tpu.memory_space<any>>) target(%119 : memref<336x128xbf16, #tpu.memory_space<vmem>>) target_semaphore(%121 : memref<!tpu.dma_semaphore, #tpu.memory_space<semaphore_mem>>)
    } else {
    }
    %c0_i32_8 = arith.constant 0 : i32
    %c0_i32_9 = arith.constant 0 : i32
    %c0_i32_10 = arith.constant 0 : i32
    %17 = tpu.memref_slice %arg2[%c0_i32_8, %c0_i32_9, %c0_i32_10] : memref<2x336x128xbf16, #tpu.memory_space<any>> -> memref<1x336x128xbf16, #tpu.memory_space<any>>
    %18 = tpu.memref_squeeze %17 : memref<1x336x128xbf16, #tpu.memory_space<any>> -> memref<336x128xbf16, #tpu.memory_space<any>>
    %c0_i32_11 = arith.constant 0 : i32
    %c0_i32_12 = arith.constant 0 : i32
    %19 = tpu.memref_slice %arg6[%9, %c0_i32_11, %c0_i32_12] : memref<2x336x128xbf16, #tpu.memory_space<vmem>> -> memref<1x336x128xbf16, #tpu.memory_space<vmem>>
    %20 = tpu.memref_squeeze %19 : memref<1x336x128xbf16, #tpu.memory_space<vmem>> -> memref<336x128xbf16, #tpu.memory_space<vmem>>
    %21 = tpu.memref_slice %arg7[%9] : memref<2x!tpu.dma_semaphore, #tpu.memory_space<semaphore_mem>> -> memref<1x!tpu.dma_semaphore, #tpu.memory_space<semaphore_mem>>
    %22 = tpu.memref_squeeze %21 : memref<1x!tpu.dma_semaphore, #tpu.memory_space<semaphore_mem>> -> memref<!tpu.dma_semaphore, #tpu.memory_space<semaphore_mem>>
    tpu.wait_dma2 semaphore(%22 : memref<!tpu.dma_semaphore, #tpu.memory_space<semaphore_mem>>) src(%18 : memref<336x128xbf16, #tpu.memory_space<any>>) dst(%20 : memref<336x128xbf16, #tpu.memory_space<vmem>>)
    %c0_i32_13 = arith.constant 0 : i32
    %c0_i32_14 = arith.constant 0 : i32
    %23 = tpu.memref_slice %arg6[%9, %c0_i32_13, %c0_i32_14] : memref<2x336x128xbf16, #tpu.memory_space<vmem>> -> memref<1x336x128xbf16, #tpu.memory_space<vmem>>
    %24 = tpu.memref_squeeze %23 : memref<1x336x128xbf16, #tpu.memory_space<vmem>> -> memref<336x128xbf16, #tpu.memory_space<vmem>>
    %c0 = arith.constant 0 : index
    %c0_15 = arith.constant 0 : index
    %25 = vector.load %24[%c0, %c0_15] : memref<336x128xbf16, #tpu.memory_space<vmem>>, vector<288x128xbf16>
    %c0_16 = arith.constant 0 : index
    %c0_17 = arith.constant 0 : index
    %c0_18 = arith.constant 0 : index
    %26 = vector.load %arg3[%c0_16, %c0_17, %c0_18] : memref<9x128x128xbf16, #tpu.memory_space<vmem>>, vector<1x128x128xbf16>
    %27 = vector.shape_cast %26 : vector<1x128x128xbf16> to vector<128x128xbf16>
    %cst = arith.constant dense<0.000000e+00> : vector<288x128xf32>
    %28 = tpu.matmul %25, %27, %cst {dimension_numbers = #tpu.dot_dimension_numbers<[1], [0], [0], [1], [0, 0, 1, 1], [], []>} : vector<288x128xbf16>, vector<128x128xbf16>, vector<288x128xf32> -> vector<288x128xf32>
    %c0_19 = arith.constant 0 : index
    %c0_20 = arith.constant 0 : index
    %29 = vector.load %arg8[%c0_19, %c0_20] : memref<288x128xf32, #tpu.memory_space<vmem>>, vector<288x128xf32>
    tpu.vector_store %arg8[%c0_19, %c0_20], %28 {strides = array<i32>} : memref<288x128xf32, #tpu.memory_space<vmem>>, vector<288x128xf32>,
    %c0_21 = arith.constant 0 : index
    %c0_22 = arith.constant 0 : index
    %30 = vector.load %arg8[%c0_21, %c0_22] : memref<288x128xf32, #tpu.memory_space<vmem>>, vector<288x128xf32>
    %c0_i32_23 = arith.constant 0 : i32
    %c0_i32_24 = arith.constant 0 : i32
    %31 = tpu.memref_slice %arg6[%9, %c0_i32_23, %c0_i32_24] : memref<2x336x128xbf16, #tpu.memory_space<vmem>> -> memref<1x336x128xbf16, #tpu.memory_space<vmem>>
    %32 = tpu.memref_squeeze %31 : memref<1x336x128xbf16, #tpu.memory_space<vmem>> -> memref<336x128xbf16, #tpu.memory_space<vmem>>
    %c1 = arith.constant 1 : index
    %c0_25 = arith.constant 0 : index
    %33 = vector.load %32[%c1, %c0_25] : memref<336x128xbf16, #tpu.memory_space<vmem>>, vector<288x128xbf16>
    %c1_26 = arith.constant 1 : index
    %c0_27 = arith.constant 0 : index
    %c0_28 = arith.constant 0 : index
    %34 = vector.load %arg3[%c1_26, %c0_27, %c0_28] : memref<9x128x128xbf16, #tpu.memory_space<vmem>>, vector<1x128x128xbf16>
    %35 = vector.shape_cast %34 : vector<1x128x128xbf16> to vector<128x128xbf16>
    %cst_29 = arith.constant dense<0.000000e+00> : vector<288x128xf32>
    %36 = tpu.matmul %33, %35, %cst_29 {dimension_numbers = #tpu.dot_dimension_numbers<[1], [0], [0], [1], [0, 0, 1, 1], [], []>} : vector<288x128xbf16>, vector<128x128xbf16>, vector<288x128xf32> -> vector<288x128xf32>
    %37 = arith.addf %30, %36 : vector<288x128xf32>
    %c0_30 = arith.constant 0 : index
    %c0_31 = arith.constant 0 : index
    %38 = vector.load %arg8[%c0_30, %c0_31] : memref<288x128xf32, #tpu.memory_space<vmem>>, vector<288x128xf32>
    tpu.vector_store %arg8[%c0_30, %c0_31], %37 {strides = array<i32>} : memref<288x128xf32, #tpu.memory_space<vmem>>, vector<288x128xf32>,
    %c0_32 = arith.constant 0 : index
    %c0_33 = arith.constant 0 : index
    %39 = vector.load %arg8[%c0_32, %c0_33] : memref<288x128xf32, #tpu.memory_space<vmem>>, vector<288x128xf32>
    %c0_i32_34 = arith.constant 0 : i32
    %c0_i32_35 = arith.constant 0 : i32
    %40 = tpu.memref_slice %arg6[%9, %c0_i32_34, %c0_i32_35] : memref<2x336x128xbf16, #tpu.memory_space<vmem>> -> memref<1x336x128xbf16, #tpu.memory_space<vmem>>
    %41 = tpu.memref_squeeze %40 : memref<1x336x128xbf16, #tpu.memory_space<vmem>> -> memref<336x128xbf16, #tpu.memory_space<vmem>>
    %c2 = arith.constant 2 : index
    %c0_36 = arith.constant 0 : index
    %42 = vector.load %41[%c2, %c0_36] : memref<336x128xbf16, #tpu.memory_space<vmem>>, vector<288x128xbf16>
    %c2_37 = arith.constant 2 : index
    %c0_38 = arith.constant 0 : index
    %c0_39 = arith.constant 0 : index
    %43 = vector.load %arg3[%c2_37, %c0_38, %c0_39] : memref<9x128x128xbf16, #tpu.memory_space<vmem>>, vector<1x128x128xbf16>
    %44 = vector.shape_cast %43 : vector<1x128x128xbf16> to vector<128x128xbf16>
    %cst_40 = arith.constant dense<0.000000e+00> : vector<288x128xf32>
    %45 = tpu.matmul %42, %44, %cst_40 {dimension_numbers = #tpu.dot_dimension_numbers<[1], [0], [0], [1], [0, 0, 1, 1], [], []>} : vector<288x128xbf16>, vector<128x128xbf16>, vector<288x128xf32> -> vector<288x128xf32>
    %46 = arith.addf %39, %45 : vector<288x128xf32>
    %c0_41 = arith.constant 0 : index
    %c0_42 = arith.constant 0 : index
    %47 = vector.load %arg8[%c0_41, %c0_42] : memref<288x128xf32, #tpu.memory_space<vmem>>, vector<288x128xf32>
    tpu.vector_store %arg8[%c0_41, %c0_42], %46 {strides = array<i32>} : memref<288x128xf32, #tpu.memory_space<vmem>>, vector<288x128xf32>,
    %c0_43 = arith.constant 0 : index
    %c0_44 = arith.constant 0 : index
    %48 = vector.load %arg8[%c0_43, %c0_44] : memref<288x128xf32, #tpu.memory_space<vmem>>, vector<288x128xf32>
    %c0_i32_45 = arith.constant 0 : i32
    %c0_i32_46 = arith.constant 0 : i32
    %49 = tpu.memref_slice %arg6[%9, %c0_i32_45, %c0_i32_46] : memref<2x336x128xbf16, #tpu.memory_space<vmem>> -> memref<1x336x128xbf16, #tpu.memory_space<vmem>>
    %50 = tpu.memref_squeeze %49 : memref<1x336x128xbf16, #tpu.memory_space<vmem>> -> memref<336x128xbf16, #tpu.memory_space<vmem>>
    %c18 = arith.constant 18 : index
    %c0_47 = arith.constant 0 : index
    %51 = vector.load %50[%c18, %c0_47] : memref<336x128xbf16, #tpu.memory_space<vmem>>, vector<288x128xbf16>
    %c3 = arith.constant 3 : index
    %c0_48 = arith.constant 0 : index
    %c0_49 = arith.constant 0 : index
    %52 = vector.load %arg3[%c3, %c0_48, %c0_49] : memref<9x128x128xbf16, #tpu.memory_space<vmem>>, vector<1x128x128xbf16>
    %53 = vector.shape_cast %52 : vector<1x128x128xbf16> to vector<128x128xbf16>
    %cst_50 = arith.constant dense<0.000000e+00> : vector<288x128xf32>
    %54 = tpu.matmul %51, %53, %cst_50 {dimension_numbers = #tpu.dot_dimension_numbers<[1], [0], [0], [1], [0, 0, 1, 1], [], []>} : vector<288x128xbf16>, vector<128x128xbf16>, vector<288x128xf32> -> vector<288x128xf32>
    %55 = arith.addf %48, %54 : vector<288x128xf32>
    %c0_51 = arith.constant 0 : index
    %c0_52 = arith.constant 0 : index
    %56 = vector.load %arg8[%c0_51, %c0_52] : memref<288x128xf32, #tpu.memory_space<vmem>>, vector<288x128xf32>
    tpu.vector_store %arg8[%c0_51, %c0_52], %55 {strides = array<i32>} : memref<288x128xf32, #tpu.memory_space<vmem>>, vector<288x128xf32>,
    %c0_53 = arith.constant 0 : index
    %c0_54 = arith.constant 0 : index
    %57 = vector.load %arg8[%c0_53, %c0_54] : memref<288x128xf32, #tpu.memory_space<vmem>>, vector<288x128xf32>
    %c0_i32_55 = arith.constant 0 : i32
    %c0_i32_56 = arith.constant 0 : i32
    %58 = tpu.memref_slice %arg6[%9, %c0_i32_55, %c0_i32_56] : memref<2x336x128xbf16, #tpu.memory_space<vmem>> -> memref<1x336x128xbf16, #tpu.memory_space<vmem>>
    %59 = tpu.memref_squeeze %58 : memref<1x336x128xbf16, #tpu.memory_space<vmem>> -> memref<336x128xbf16, #tpu.memory_space<vmem>>
    %c19 = arith.constant 19 : index
    %c0_57 = arith.constant 0 : index
    %60 = vector.load %59[%c19, %c0_57] : memref<336x128xbf16, #tpu.memory_space<vmem>>, vector<288x128xbf16>
    %c4 = arith.constant 4 : index
    %c0_58 = arith.constant 0 : index
    %c0_59 = arith.constant 0 : index
    %61 = vector.load %arg3[%c4, %c0_58, %c0_59] : memref<9x128x128xbf16, #tpu.memory_space<vmem>>, vector<1x128x128xbf16>
    %62 = vector.shape_cast %61 : vector<1x128x128xbf16> to vector<128x128xbf16>
    %cst_60 = arith.constant dense<0.000000e+00> : vector<288x128xf32>
    %63 = tpu.matmul %60, %62, %cst_60 {dimension_numbers = #tpu.dot_dimension_numbers<[1], [0], [0], [1], [0, 0, 1, 1], [], []>} : vector<288x128xbf16>, vector<128x128xbf16>, vector<288x128xf32> -> vector<288x128xf32>
    %64 = arith.addf %57, %63 : vector<288x128xf32>
    %c0_61 = arith.constant 0 : index
    %c0_62 = arith.constant 0 : index
    %65 = vector.load %arg8[%c0_61, %c0_62] : memref<288x128xf32, #tpu.memory_space<vmem>>, vector<288x128xf32>
    tpu.vector_store %arg8[%c0_61, %c0_62], %64 {strides = array<i32>} : memref<288x128xf32, #tpu.memory_space<vmem>>, vector<288x128xf32>,
    %c0_63 = arith.constant 0 : index
    %c0_64 = arith.constant 0 : index
    %66 = vector.load %arg8[%c0_63, %c0_64] : memref<288x128xf32, #tpu.memory_space<vmem>>, vector<288x128xf32>
    %c0_i32_65 = arith.constant 0 : i32
    %c0_i32_66 = arith.constant 0 : i32
    %67 = tpu.memref_slice %arg6[%9, %c0_i32_65, %c0_i32_66] : memref<2x336x128xbf16, #tpu.memory_space<vmem>> -> memref<1x336x128xbf16, #tpu.memory_space<vmem>>
    %68 = tpu.memref_squeeze %67 : memref<1x336x128xbf16, #tpu.memory_space<vmem>> -> memref<336x128xbf16, #tpu.memory_space<vmem>>
    %c20 = arith.constant 20 : index
    %c0_67 = arith.constant 0 : index
    %69 = vector.load %68[%c20, %c0_67] : memref<336x128xbf16, #tpu.memory_space<vmem>>, vector<288x128xbf16>
    %c5 = arith.constant 5 : index
    %c0_68 = arith.constant 0 : index
    %c0_69 = arith.constant 0 : index
    %70 = vector.load %arg3[%c5, %c0_68, %c0_69] : memref<9x128x128xbf16, #tpu.memory_space<vmem>>, vector<1x128x128xbf16>
    %71 = vector.shape_cast %70 : vector<1x128x128xbf16> to vector<128x128xbf16>
    %cst_70 = arith.constant dense<0.000000e+00> : vector<288x128xf32>
    %72 = tpu.matmul %69, %71, %cst_70 {dimension_numbers = #tpu.dot_dimension_numbers<[1], [0], [0], [1], [0, 0, 1, 1], [], []>} : vector<288x128xbf16>, vector<128x128xbf16>, vector<288x128xf32> -> vector<288x128xf32>
    %73 = arith.addf %66, %72 : vector<288x128xf32>
    %c0_71 = arith.constant 0 : index
    %c0_72 = arith.constant 0 : index
    %74 = vector.load %arg8[%c0_71, %c0_72] : memref<288x128xf32, #tpu.memory_space<vmem>>, vector<288x128xf32>
    tpu.vector_store %arg8[%c0_71, %c0_72], %73 {strides = array<i32>} : memref<288x128xf32, #tpu.memory_space<vmem>>, vector<288x128xf32>,
    %c0_73 = arith.constant 0 : index
    %c0_74 = arith.constant 0 : index
    %75 = vector.load %arg8[%c0_73, %c0_74] : memref<288x128xf32, #tpu.memory_space<vmem>>, vector<288x128xf32>
    %c0_i32_75 = arith.constant 0 : i32
    %c0_i32_76 = arith.constant 0 : i32
    %76 = tpu.memref_slice %arg6[%9, %c0_i32_75, %c0_i32_76] : memref<2x336x128xbf16, #tpu.memory_space<vmem>> -> memref<1x336x128xbf16, #tpu.memory_space<vmem>>
    %77 = tpu.memref_squeeze %76 : memref<1x336x128xbf16, #tpu.memory_space<vmem>> -> memref<336x128xbf16, #tpu.memory_space<vmem>>
    %c36 = arith.constant 36 : index
    %c0_77 = arith.constant 0 : index
    %78 = vector.load %77[%c36, %c0_77] : memref<336x128xbf16, #tpu.memory_space<vmem>>, vector<288x128xbf16>
    %c6 = arith.constant 6 : index
    %c0_78 = arith.constant 0 : index
    %c0_79 = arith.constant 0 : index
    %79 = vector.load %arg3[%c6, %c0_78, %c0_79] : memref<9x128x128xbf16, #tpu.memory_space<vmem>>, vector<1x128x128xbf16>
    %80 = vector.shape_cast %79 : vector<1x128x128xbf16> to vector<128x128xbf16>
    %cst_80 = arith.constant dense<0.000000e+00> : vector<288x128xf32>
    %81 = tpu.matmul %78, %80, %cst_80 {dimension_numbers = #tpu.dot_dimension_numbers<[1], [0], [0], [1], [0, 0, 1, 1], [], []>} : vector<288x128xbf16>, vector<128x128xbf16>, vector<288x128xf32> -> vector<288x128xf32>
    %82 = arith.addf %75, %81 : vector<288x128xf32>
    %c0_81 = arith.constant 0 : index
    %c0_82 = arith.constant 0 : index
    %83 = vector.load %arg8[%c0_81, %c0_82] : memref<288x128xf32, #tpu.memory_space<vmem>>, vector<288x128xf32>
    tpu.vector_store %arg8[%c0_81, %c0_82], %82 {strides = array<i32>} : memref<288x128xf32, #tpu.memory_space<vmem>>, vector<288x128xf32>,
    %c0_83 = arith.constant 0 : index
    %c0_84 = arith.constant 0 : index
    %84 = vector.load %arg8[%c0_83, %c0_84] : memref<288x128xf32, #tpu.memory_space<vmem>>, vector<288x128xf32>
    %c0_i32_85 = arith.constant 0 : i32
    %c0_i32_86 = arith.constant 0 : i32
    %85 = tpu.memref_slice %arg6[%9, %c0_i32_85, %c0_i32_86] : memref<2x336x128xbf16, #tpu.memory_space<vmem>> -> memref<1x336x128xbf16, #tpu.memory_space<vmem>>
    %86 = tpu.memref_squeeze %85 : memref<1x336x128xbf16, #tpu.memory_space<vmem>> -> memref<336x128xbf16, #tpu.memory_space<vmem>>
    %c37 = arith.constant 37 : index
    %c0_87 = arith.constant 0 : index
    %87 = vector.load %86[%c37, %c0_87] : memref<336x128xbf16, #tpu.memory_space<vmem>>, vector<288x128xbf16>
    %c7 = arith.constant 7 : index
    %c0_88 = arith.constant 0 : index
    %c0_89 = arith.constant 0 : index
    %88 = vector.load %arg3[%c7, %c0_88, %c0_89] : memref<9x128x128xbf16, #tpu.memory_space<vmem>>, vector<1x128x128xbf16>
    %89 = vector.shape_cast %88 : vector<1x128x128xbf16> to vector<128x128xbf16>
    %cst_90 = arith.constant dense<0.000000e+00> : vector<288x128xf32>
    %90 = tpu.matmul %87, %89, %cst_90 {dimension_numbers = #tpu.dot_dimension_numbers<[1], [0], [0], [1], [0, 0, 1, 1], [], []>} : vector<288x128xbf16>, vector<128x128xbf16>, vector<288x128xf32> -> vector<288x128xf32>
    %91 = arith.addf %84, %90 : vector<288x128xf32>
    %c0_91 = arith.constant 0 : index
    %c0_92 = arith.constant 0 : index
    %92 = vector.load %arg8[%c0_91, %c0_92] : memref<288x128xf32, #tpu.memory_space<vmem>>, vector<288x128xf32>
    tpu.vector_store %arg8[%c0_91, %c0_92], %91 {strides = array<i32>} : memref<288x128xf32, #tpu.memory_space<vmem>>, vector<288x128xf32>,
    %c0_93 = arith.constant 0 : index
    %c0_94 = arith.constant 0 : index
    %93 = vector.load %arg8[%c0_93, %c0_94] : memref<288x128xf32, #tpu.memory_space<vmem>>, vector<288x128xf32>
    %c0_i32_95 = arith.constant 0 : i32
    %c0_i32_96 = arith.constant 0 : i32
    %94 = tpu.memref_slice %arg6[%9, %c0_i32_95, %c0_i32_96] : memref<2x336x128xbf16, #tpu.memory_space<vmem>> -> memref<1x336x128xbf16, #tpu.memory_space<vmem>>
    %95 = tpu.memref_squeeze %94 : memref<1x336x128xbf16, #tpu.memory_space<vmem>> -> memref<336x128xbf16, #tpu.memory_space<vmem>>
    %c38 = arith.constant 38 : index
    %c0_97 = arith.constant 0 : index
    %96 = vector.load %95[%c38, %c0_97] : memref<336x128xbf16, #tpu.memory_space<vmem>>, vector<288x128xbf16>
    %c8 = arith.constant 8 : index
    %c0_98 = arith.constant 0 : index
    %c0_99 = arith.constant 0 : index
    %97 = vector.load %arg3[%c8, %c0_98, %c0_99] : memref<9x128x128xbf16, #tpu.memory_space<vmem>>, vector<1x128x128xbf16>
    %98 = vector.shape_cast %97 : vector<1x128x128xbf16> to vector<128x128xbf16>
    %cst_100 = arith.constant dense<0.000000e+00> : vector<288x128xf32>
    %99 = tpu.matmul %96, %98, %cst_100 {dimension_numbers = #tpu.dot_dimension_numbers<[1], [0], [0], [1], [0, 0, 1, 1], [], []>} : vector<288x128xbf16>, vector<128x128xbf16>, vector<288x128xf32> -> vector<288x128xf32>
    %100 = arith.addf %93, %99 : vector<288x128xf32>
    %c0_101 = arith.constant 0 : index
    %c0_102 = arith.constant 0 : index
    %101 = vector.load %arg8[%c0_101, %c0_102] : memref<288x128xf32, #tpu.memory_space<vmem>>, vector<288x128xf32>
    tpu.vector_store %arg8[%c0_101, %c0_102], %100 {strides = array<i32>} : memref<288x128xf32, #tpu.memory_space<vmem>>, vector<288x128xf32>,
    %c0_103 = arith.constant 0 : index
    %c0_104 = arith.constant 0 : index
    %102 = vector.load %arg8[%c0_103, %c0_104] : memref<288x128xf32, #tpu.memory_space<vmem>>, vector<288x128xf32>
    %c0_105 = arith.constant 0 : index
    %c0_106 = arith.constant 0 : index
    %103 = vector.load %arg4[%c0_105, %c0_106] : memref<1x128xf32, #tpu.memory_space<vmem>>, vector<1x128xf32>
    %104 = vector.broadcast %103 : vector<1x128xf32> to vector<288x128xf32>
    %105 = arith.addf %102, %104 : vector<288x128xf32>
    %cst_107 = arith.constant 0.000000e+00 : f32
    %106 = vector.broadcast %cst_107 : f32 to vector<288x128xf32>
    %107 = arith.maximumf %105, %106 : vector<288x128xf32>
    %108 = arith.truncf %107 : vector<288x128xf32> to vector<288x128xbf16>
    %c0_108 = arith.constant 0 : index
    %c0_109 = arith.constant 0 : index
    %c0_110 = arith.constant 0 : index
    %109 = vector.load %arg5[%c0_108, %c0_109, %c0_110] : memref<1x288x128xbf16, #tpu.memory_space<vmem>>, vector<1x288x128xbf16>
    %110 = vector.shape_cast %109 : vector<1x288x128xbf16> to vector<288x128xbf16>
    %111 = vector.shape_cast %108 : vector<288x128xbf16> to vector<1x288x128xbf16>
    tpu.vector_store %arg5[%c0_108, %c0_109, %c0_110], %111 {strides = array<i32>} : memref<1x288x128xbf16, #tpu.memory_space<vmem>>, vector<1x288x128xbf16>,
    return
  }
  func.func @transform_1(%arg0: i32, %arg1: i32) -> (i32, i32, i32) {
    %c0_i32 = arith.constant 0 : i32
    %c0_i32_0 = arith.constant 0 : i32
    %c0_i32_1 = arith.constant 0 : i32
    %c0_i32_2 = arith.constant 0 : i32
    return %c0_i32, %c0_i32_0, %c0_i32_1 : i32, i32, i32
  }
  func.func @transform_2(%arg0: i32, %arg1: i32) -> (i32, i32) {
    %c0_i32 = arith.constant 0 : i32
    %c0_i32_0 = arith.constant 0 : i32
    %c0_i32_1 = arith.constant 0 : i32
    return %c0_i32, %c0_i32_0 : i32, i32
  }
  func.func @transform_3(%arg0: i32, %arg1: i32) -> (i32, i32, i32) {
    %c0_i32 = arith.constant 0 : i32
    %c0_i32_0 = arith.constant 0 : i32
    return %arg0, %arg1, %c0_i32 : i32, i32, i32
  }
}

module attributes {stable_mosaic.version = 11 : i64} {
  func.func @_mm_resident_kernel(%arg0: i32, %arg1: memref<256x128xbf16, #tpu.memory_space<vmem>>, %arg2: memref<128x128xbf16, #tpu.memory_space<vmem>>, %arg3: memref<1x128xf32, #tpu.memory_space<vmem>>, %arg4: memref<256x128xbf16, #tpu.memory_space<vmem>>) attributes {dimension_semantics = [#tpu.dimension_semantics<parallel>], iteration_bounds = array<i64: 2>, scalar_prefetch = 0 : i64, scratch_operands = 0 : i64, tpu.core_type = #tpu.core_type<tc>, window_params = [{transform_indices = @transform_0, window_bounds = array<i64: 256, 128>}, {pipeline_mode = #tpu.pipeline_mode<synchronous>, transform_indices = @transform_1, window_bounds = array<i64: 128, 128>}, {pipeline_mode = #tpu.pipeline_mode<synchronous>, transform_indices = @transform_2, window_bounds = array<i64: 1, 128>}, {transform_indices = @transform_3, window_bounds = array<i64: 256, 128>}]} {
    %c0 = arith.constant 0 : index
    %c0_0 = arith.constant 0 : index
    %0 = vector.load %arg1[%c0, %c0_0] : memref<256x128xbf16, #tpu.memory_space<vmem>>, vector<256x128xbf16>
    %c0_1 = arith.constant 0 : index
    %c0_2 = arith.constant 0 : index
    %1 = vector.load %arg2[%c0_1, %c0_2] : memref<128x128xbf16, #tpu.memory_space<vmem>>, vector<128x128xbf16>
    %cst = arith.constant dense<0.000000e+00> : vector<256x128xf32>
    %2 = tpu.matmul %0, %1, %cst {dimension_numbers = #tpu.dot_dimension_numbers<[1], [0], [0], [1], [0, 0, 1, 1], [], []>} : vector<256x128xbf16>, vector<128x128xbf16>, vector<256x128xf32> -> vector<256x128xf32>
    %c0_3 = arith.constant 0 : index
    %c0_4 = arith.constant 0 : index
    %3 = vector.load %arg3[%c0_3, %c0_4] : memref<1x128xf32, #tpu.memory_space<vmem>>, vector<1x128xf32>
    %4 = vector.broadcast %3 : vector<1x128xf32> to vector<256x128xf32>
    %5 = arith.addf %2, %4 : vector<256x128xf32>
    %6 = arith.truncf %5 : vector<256x128xf32> to vector<256x128xbf16>
    %c0_5 = arith.constant 0 : index
    %c0_6 = arith.constant 0 : index
    %7 = vector.load %arg4[%c0_5, %c0_6] : memref<256x128xbf16, #tpu.memory_space<vmem>>, vector<256x128xbf16>
    tpu.vector_store %arg4[%c0_5, %c0_6], %6 {strides = array<i32>} : memref<256x128xbf16, #tpu.memory_space<vmem>>, vector<256x128xbf16>,
    return
  }
  func.func @transform_0(%arg0: i32) -> (i32, i32) {
    %c0_i32 = arith.constant 0 : i32
    %c0_i32_0 = arith.constant 0 : i32
    return %arg0, %c0_i32 : i32, i32
  }
  func.func @transform_1(%arg0: i32) -> (i32, i32) {
    %c0_i32 = arith.constant 0 : i32
    %c0_i32_0 = arith.constant 0 : i32
    %c0_i32_1 = arith.constant 0 : i32
    return %c0_i32, %c0_i32_0 : i32, i32
  }
  func.func @transform_2(%arg0: i32) -> (i32, i32) {
    %c0_i32 = arith.constant 0 : i32
    %c0_i32_0 = arith.constant 0 : i32
    %c0_i32_1 = arith.constant 0 : i32
    return %c0_i32, %c0_i32_0 : i32, i32
  }
  func.func @transform_3(%arg0: i32) -> (i32, i32) {
    %c0_i32 = arith.constant 0 : i32
    %c0_i32_0 = arith.constant 0 : i32
    return %arg0, %c0_i32 : i32, i32
  }
}

module attributes {stable_mosaic.version = 11 : i64} {
  func.func @_mm_resident_kernel(%arg0: i32, %arg1: memref<256x128xbf16, #tpu.memory_space<vmem>>, %arg2: memref<128x128xbf16, #tpu.memory_space<vmem>>, %arg3: memref<1x128xf32, #tpu.memory_space<vmem>>, %arg4: memref<256x128xbf16, #tpu.memory_space<vmem>>, %arg5: memref<256x128xf32, #tpu.memory_space<vmem>>) attributes {dimension_semantics = [#tpu.dimension_semantics<parallel>], iteration_bounds = array<i64: 2>, scalar_prefetch = 0 : i64, scratch_operands = 0 : i64, tpu.core_type = #tpu.core_type<tc>, window_params = [{transform_indices = @transform_0, window_bounds = array<i64: 256, 128>}, {pipeline_mode = #tpu.pipeline_mode<synchronous>, transform_indices = @transform_1, window_bounds = array<i64: 128, 128>}, {pipeline_mode = #tpu.pipeline_mode<synchronous>, transform_indices = @transform_2, window_bounds = array<i64: 1, 128>}, {transform_indices = @transform_3, window_bounds = array<i64: 256, 128>}, {transform_indices = @transform_4, window_bounds = array<i64: 256, 128>}]} {
    %c0 = arith.constant 0 : index
    %c0_0 = arith.constant 0 : index
    %0 = vector.load %arg1[%c0, %c0_0] : memref<256x128xbf16, #tpu.memory_space<vmem>>, vector<256x128xbf16>
    %c0_1 = arith.constant 0 : index
    %c0_2 = arith.constant 0 : index
    %1 = vector.load %arg2[%c0_1, %c0_2] : memref<128x128xbf16, #tpu.memory_space<vmem>>, vector<128x128xbf16>
    %cst = arith.constant dense<0.000000e+00> : vector<256x128xf32>
    %2 = tpu.matmul %0, %1, %cst {dimension_numbers = #tpu.dot_dimension_numbers<[1], [0], [0], [1], [0, 0, 1, 1], [], []>} : vector<256x128xbf16>, vector<128x128xbf16>, vector<256x128xf32> -> vector<256x128xf32>
    %c0_3 = arith.constant 0 : index
    %c0_4 = arith.constant 0 : index
    %3 = vector.load %arg3[%c0_3, %c0_4] : memref<1x128xf32, #tpu.memory_space<vmem>>, vector<1x128xf32>
    %4 = vector.broadcast %3 : vector<1x128xf32> to vector<256x128xf32>
    %5 = arith.addf %2, %4 : vector<256x128xf32>
    %c0_5 = arith.constant 0 : index
    %c0_6 = arith.constant 0 : index
    %6 = vector.load %arg4[%c0_5, %c0_6] : memref<256x128xbf16, #tpu.memory_space<vmem>>, vector<256x128xbf16>
    %7 = arith.extf %6 : vector<256x128xbf16> to vector<256x128xf32>
    %8 = arith.addf %5, %7 : vector<256x128xf32>
    %cst_7 = arith.constant 0.000000e+00 : f32
    %9 = vector.broadcast %cst_7 : f32 to vector<256x128xf32>
    %10 = arith.maximumf %8, %9 : vector<256x128xf32>
    %c0_8 = arith.constant 0 : index
    %c0_9 = arith.constant 0 : index
    %11 = vector.load %arg5[%c0_8, %c0_9] : memref<256x128xf32, #tpu.memory_space<vmem>>, vector<256x128xf32>
    tpu.vector_store %arg5[%c0_8, %c0_9], %10 {strides = array<i32>} : memref<256x128xf32, #tpu.memory_space<vmem>>, vector<256x128xf32>,
    return
  }
  func.func @transform_0(%arg0: i32) -> (i32, i32) {
    %c0_i32 = arith.constant 0 : i32
    %c0_i32_0 = arith.constant 0 : i32
    return %arg0, %c0_i32 : i32, i32
  }
  func.func @transform_1(%arg0: i32) -> (i32, i32) {
    %c0_i32 = arith.constant 0 : i32
    %c0_i32_0 = arith.constant 0 : i32
    %c0_i32_1 = arith.constant 0 : i32
    return %c0_i32, %c0_i32_0 : i32, i32
  }
  func.func @transform_2(%arg0: i32) -> (i32, i32) {
    %c0_i32 = arith.constant 0 : i32
    %c0_i32_0 = arith.constant 0 : i32
    %c0_i32_1 = arith.constant 0 : i32
    return %c0_i32, %c0_i32_0 : i32, i32
  }
  func.func @transform_3(%arg0: i32) -> (i32, i32) {
    %c0_i32 = arith.constant 0 : i32
    %c0_i32_0 = arith.constant 0 : i32
    return %arg0, %c0_i32 : i32, i32
  }
  func.func @transform_4(%arg0: i32) -> (i32, i32) {
    %c0_i32 = arith.constant 0 : i32
    %c0_i32_0 = arith.constant 0 : i32
    return %arg0, %c0_i32 : i32, i32
  }
}

</mosaic_0001>

<llo_original>
// kernel: bottleneck_forward.4
$region0: #{bottleneck_forward.4}
  #allocation0 [shape = 'u32[]', space=smem, size = 0x4, offset = 0x4, fixed_abs, tag = 'smem constant byte address 0x4 - core index']
  #allocation1 [shape = 'u32[72,128]{1,0:T(1,128)}', space=vmem, size = 0x9000, scoped, tag = 'internal scratch']
  %s0 = inlined_call_operand.vmem [shape: bf16[512,128], index: 0, kind: input, shape index: {}]
  %s1 = inlined_call_operand.vmem [shape: bf16[128,128], index: 1, kind: input, shape index: {}]
  %s2 = inlined_call_operand.vmem [shape: f32[1,128], index: 2, kind: input, shape index: {}]
  %s3 = inlined_call_operand.vmem [shape: bf16[512,128], index: 3, kind: output, shape index: {}]
  %s4 = sld [smem:[#allocation0]]
  $region45: #{bottleneck_forward.4} parent=0
    _
  %s6 = ssub.s32 1, %s4
  %s7 = scalar_select 0, %s6, %s4
  loop: start=0, step=1, limit=4
  $region2: #{bottleneck_forward.4} parent=0 // loop_pre_header
    _
  $region3: #{bottleneck_forward.4} parent=0 // loop_header
    %s9 = sphi 0, %s13
    %p10 = scmp.ge.s32.totalorder %s9, 4
    %s19 = sphi 0, %s21
    %s22 = sphi 0, %s19
    %s23 = sphi 0, %s22
    %s39 = sphi 0, %s23
    %s43 = sphi 0, %s43
    %s45 = sphi 0, %s43
    %s46 = sphi 0, %s45
    %s60 = sphi 0, %s46
    %s64 = sphi 0, %s64
    %s66 = sphi 0, %s64
    %s67 = sphi 0, %s66
    %s81 = sphi 0, %s67
    %s87 = sphi 0, %s89
    %s90 = sphi 0, %s87
    %s91 = sphi 0, %s90
    %s107 = sphi 0, %s91
  $region4: #{bottleneck_forward.4} parent=0 // loop_header_branch
    %12 = sbr.rel (%p10) target = $region8
  $region5: #{bottleneck_forward.4} parent=0 // loop_body
    %s14 = ssub.s32 %s9, 1
    %s15 = ssub.s32 %s9, 2
    %s16 = sadd.s32 %s9, 1
    %s17 = ssub.s32 %s9, %s16
    %p18 = scmp.eq.s32.totalorder %s17, 0
    %s20 = sadd.s32 %s19, 1
    %s21 = scalar_select %p18, %s19, %s20
    %p24 = pneg %p18
    %p25 = scmp.eq.s32.totalorder %s9, 1
    %p26 = por %p24, %p25
    %p27 = scmp.ne.s32.totalorder %s19, %s22
    %p28 = scmp.eq.s32.totalorder %s9, 0
    %p29 = por %p27, %p28
    %p30 = scmp.ne.s32.totalorder %s19, %s22
    %p31 = scmp.eq.s32.totalorder %s14, 1
    %p32 = por %p30, %p31
    %p33 = scmp.ne.s32.totalorder %s22, %s23
    %p34 = scmp.eq.s32.totalorder %s14, 0
    %p35 = por %p33, %p34
    %p36 = scmp.ne.s32.totalorder %s22, %s23
    %p37 = scmp.eq.s32.totalorder %s15, 1
    %p38 = por %p36, %p37
    %p40 = scmp.ne.s32.totalorder %s23, %s39
    %p41 = scmp.eq.s32.totalorder %s15, 0
    %p42 = por %p40, %p41
    %s44 = sadd.s32 %s43, 1
    %p47 = scmp.eq.s32.totalorder %s9, 1
    %p48 = scmp.ne.s32.totalorder %s43, %s45
    %p49 = scmp.eq.s32.totalorder %s9, 0
    %p50 = por %p48, %p49
    %p51 = scmp.ne.s32.totalorder %s43, %s45
    %p52 = scmp.eq.s32.totalorder %s14, 1
    %p53 = por %p51, %p52
    %p54 = scmp.ne.s32.totalorder %s45, %s46
    %p55 = scmp.eq.s32.totalorder %s14, 0
    %p56 = por %p54, %p55
    %p57 = scmp.ne.s32.totalorder %s45, %s46
    %p58 = scmp.eq.s32.totalorder %s15, 1
    %p59 = por %p57, %p58
    %p61 = scmp.ne.s32.totalorder %s46, %s60
    %p62 = scmp.eq.s32.totalorder %s15, 0
    %p63 = por %p61, %p62
    %s65 = sadd.s32 %s64, 1
    %p68 = scmp.eq.s32.totalorder %s9, 1
    %p69 = scmp.ne.s32.totalorder %s64, %s66
    %p70 = scmp.eq.s32.totalorder %s9, 0
    %p71 = por %p69, %p70
    %p72 = scmp.ne.s32.totalorder %s64, %s66
    %p73 = scmp.eq.s32.totalorder %s14, 1
    %p74 = por %p72, %p73
    %p75 = scmp.ne.s32.totalorder %s66, %s67
    %p76 = scmp.eq.s32.totalorder %s14, 0
    %p77 = por %p75, %p76
    %p78 = scmp.ne.s32.totalorder %s66, %s67
    %p79 = scmp.eq.s32.totalorder %s15, 1
    %p80 = por %p78, %p79
    %p82 = scmp.ne.s32.totalorder %s67, %s81
    %p83 = scmp.eq.s32.totalorder %s15, 0
    %p84 = por %p82, %p83
    %s85 = ssub.s32 %s9, %s16
    %p86 = scmp.eq.s32.totalorder %s85, 0
    %s88 = sadd.s32 %s87, 1
    %s89 = scalar_select %p86, %s87, %s88
    %p92 = pneg %p86
    %p93 = scmp.eq.s32.totalorder %s9, 1
    %p94 = por %p92, %p93
    %p95 = scmp.ne.s32.totalorder %s87, %s90
    %p96 = scmp.eq.s32.totalorder %s9, 0
    %p97 = por %p95, %p96
    %p98 = scmp.ne.s32.totalorder %s87, %s90
    %p99 = scmp.eq.s32.totalorder %s14, 1
    %p100 = por %p98, %p99
    %p101 = scmp.ne.s32.totalorder %s90, %s91
    %p102 = scmp.eq.s32.totalorder %s14, 0
    %p103 = por %p101, %p102
    %p104 = scmp.ne.s32.totalorder %s90, %s91
    %p105 = scmp.eq.s32.totalorder %s15, 1
    %p106 = por %p104, %p105
    %p108 = scmp.ne.s32.totalorder %s91, %s107
    %p109 = scmp.eq.s32.totalorder %s15, 0
    %p110 = por %p108, %p109
    %p111 = scmp.le.s32.totalorder 1, %s9
    %p112 = scmp.lt.s32.totalorder %s9, 3
    %p113 = pnand %p111, %p112
    %p114 = pneg %p113
    // Predicated region
    $region9: #{bottleneck_forward.4} parent=5 // pred_check
      _
    $region10: #{bottleneck_forward.4} parent=5 // pred_check_branch
      %116 = sbr.rel (%p113) target = $region12
    $region11: #{bottleneck_forward.4} parent=5 // pred_region
      %s117 = ssub.s32 %s9, 1
      // Predicated region
      $region13: #{bottleneck_forward.4} parent=11 // pred_check
        %p118 = pneg %p56
      $region14: #{bottleneck_forward.4} parent=11 // pred_check_branch
        %120 = sbr.rel (%p118) target = $region16
      $region15: #{bottleneck_forward.4} parent=11 // pred_region
        _
      $region16: #{bottleneck_forward.4} parent=11 // pred_fallthru
        _
      // Predicated region
      $region17: #{bottleneck_forward.4} parent=11 // pred_check
        %p121 = pneg %p77
      $region18: #{bottleneck_forward.4} parent=11 // pred_check_branch
        %123 = sbr.rel (%p121) target = $region20
      $region19: #{bottleneck_forward.4} parent=11 // pred_region
        _
      $region20: #{bottleneck_forward.4} parent=11 // pred_fallthru
        _
    $region12: #{bottleneck_forward.4} parent=5 // pred_fallthru
      _
    %p124 = scmp.lt.s32.totalorder %s9, 2
    // Predicated region
    $region21: #{bottleneck_forward.4} parent=5 // pred_check
      %p125 = pneg %p124
    $region22: #{bottleneck_forward.4} parent=5 // pred_check_branch
      %127 = sbr.rel (%p125) target = $region24
    $region23: #{bottleneck_forward.4} parent=5 // pred_region
      // Predicated region
      $region25: #{bottleneck_forward.4} parent=23 // pred_check
        %p128 = pneg %p29
      $region26: #{bottleneck_forward.4} parent=23 // pred_check_branch
        %130 = sbr.rel (%p128) target = $region28
      $region27: #{bottleneck_forward.4} parent=23 // pred_region
        %s131 = smul.u32 32, %s9
        %p132 = scmp.lt.s32.totalorder %s131, 63
        %s133 = scalar_select %p132, %s131, 63
        %s134 = smul.addr %s133, 4
        %s135 = scalar_lea.vmem %s0, %s134
        %s136 = smul.u32 32, %s9
      $region28: #{bottleneck_forward.4} parent=23 // pred_fallthru
        _
    $region24: #{bottleneck_forward.4} parent=5 // pred_fallthru
      _
    %p137 = scmp.le.s32.totalorder 1, %s9
    %p138 = scmp.lt.s32.totalorder %s9, 3
    %p139 = pnand %p137, %p138
    %p140 = pneg %p139
    // Predicated region
    $region29: #{bottleneck_forward.4} parent=5 // pred_check
      _
    $region30: #{bottleneck_forward.4} parent=5 // pred_check_branch
      %142 = sbr.rel (%p139) target = $region32
    $region31: #{bottleneck_forward.4} parent=5 // pred_region
      %s143 = ssub.s32 %s9, 1
      %s144 = smul.u32 32, %s14
      %p145 = scmp.lt.s32.totalorder %s144, 63
      %s146 = scalar_select %p145, %s144, 63
      %s147 = smul.addr %s146, 4
      %s148 = scalar_lea.vmem %s0, %s147
      %p149 = pneg %p35
      %p150 = pneg %p32
      %p151 = pneg %p56
      %p152 = pneg %p53
      %p153 = pneg %p77
      %p154 = pneg %p74
      %p155 = pneg %p103
      %p156 = pneg %p100
      %s157 = smul.u32 32, %s14
      %p158 = scmp.lt.s32.totalorder %s157, 63
      %s159 = scalar_select %p158, %s157, 63
      %s160 = smul.addr %s159, 4
      %s161 = scalar_lea.vmem %s3, %s160
      %s162 = smul.u32 32, %s14
      %p163 = scmp.lt.s32.totalorder %s162, 63
      %s164 = scalar_select %p163, %s162, 63
      %s165 = smul.addr %s164, 4
      %s166 = scalar_lea.vmem %s0, %s165
      %s167 = smul.u32 32, %s14
      %s168 = smul.u32 32, %s14
      %p169 = scmp.lt.s32.totalorder %s168, 63
      %s170 = scalar_select %p169, %s168, 63
      %s171 = smul.addr %s170, 4
      %s172 = scalar_lea.vmem %s3, %s171
      %s173 = smul.u32 32, %s14
      %v174 = vld [vmem:[%s166] sm:$0xf]
      %v175 = vld [vmem:[%s166 + $0x4] sm:$0xf]
      %v176 = vld [vmem:[%s166 + $0x8] sm:$0xf]
      %v177 = vld [vmem:[%s166 + $0xc] sm:$0xf]
      %v178 = vld [vmem:[%s166 + $0x10] sm:$0xf]
      %v179 = vld [vmem:[%s166 + $0x14] sm:$0xf]
      %v180 = vld [vmem:[%s166 + $0x18] sm:$0xf]
      %v181 = vld [vmem:[%s166 + $0x1c] sm:$0xf]
      %v182 = vld [vmem:[%s166 + $0x20] sm:$0xf]
      %v183 = vld [vmem:[%s166 + $0x24] sm:$0xf]
      %v184 = vld [vmem:[%s166 + $0x28] sm:$0xf]
      %v185 = vld [vmem:[%s166 + $0x2c] sm:$0xf]
      %v186 = vld [vmem:[%s166 + $0x30] sm:$0xf]
      %v187 = vld [vmem:[%s166 + $0x34] sm:$0xf]
      %v188 = vld [vmem:[%s166 + $0x38] sm:$0xf]
      %v189 = vld [vmem:[%s166 + $0x3c] sm:$0xf]
      %v190 = vld [vmem:[%s166 + $0x40] sm:$0xf]
      %v191 = vld [vmem:[%s166 + $0x44] sm:$0xf]
      %v192 = vld [vmem:[%s166 + $0x48] sm:$0xf]
      %v193 = vld [vmem:[%s166 + $0x4c] sm:$0xf]
      %v194 = vld [vmem:[%s166 + $0x50] sm:$0xf]
      %v195 = vld [vmem:[%s166 + $0x54] sm:$0xf]
      %v196 = vld [vmem:[%s166 + $0x58] sm:$0xf]
      %v197 = vld [vmem:[%s166 + $0x5c] sm:$0xf]
      %v198 = vld [vmem:[%s166 + $0x60] sm:$0xf]
      %v199 = vld [vmem:[%s166 + $0x64] sm:$0xf]
      %v200 = vld [vmem:[%s166 + $0x68] sm:$0xf]
      %v201 = vld [vmem:[%s166 + $0x6c] sm:$0xf]
      %v202 = vld [vmem:[%s166 + $0x70] sm:$0xf]
      %v203 = vld [vmem:[%s166 + $0x74] sm:$0xf]
      %v204 = vld [vmem:[%s166 + $0x78] sm:$0xf]
      %v205 = vld [vmem:[%s166 + $0x7c] sm:$0xf]
      %v206 = vld [vmem:[%s1] sm:$0xf]
      %v207 = vld [vmem:[%s1 + $0x4] sm:$0xf]
      %v208 = vld [vmem:[%s1 + $0x8] sm:$0xf]
      %v209 = vld [vmem:[%s1 + $0xc] sm:$0xf]
      %v210 = vld [vmem:[%s1 + $0x10] sm:$0xf]
      %v211 = vld [vmem:[%s1 + $0x14] sm:$0xf]
      %v212 = vld [vmem:[%s1 + $0x18] sm:$0xf]
      %v213 = vld [vmem:[%s1 + $0x1c] sm:$0xf]
      %v214 = vld [vmem:[%s1 + $0x20] sm:$0xf]
      %v215 = vld [vmem:[%s1 + $0x24] sm:$0xf]
      %v216 = vld [vmem:[%s1 + $0x28] sm:$0xf]
      %v217 = vld [vmem:[%s1 + $0x2c] sm:$0xf]
      %v218 = vld [vmem:[%s1 + $0x30] sm:$0xf]
      %v219 = vld [vmem:[%s1 + $0x34] sm:$0xf]
      %v220 = vld [vmem:[%s1 + $0x38] sm:$0xf]
      %v221 = vld [vmem:[%s1 + $0x3c] sm:$0xf]
      %v222 = vld [vmem:[%s2] sm:$0x1]
      %v224 = vperm.slane %v222, 0
      %v258 = vunpack.c.l.b16 %v174
      %v259 = vunpack.c.l.b16 %v175
      %v260 = vunpack.c.l.b16 %v176
      %v261 = vunpack.c.l.b16 %v177
      %v262 = vunpack.c.l.b16 %v178
      %v263 = vunpack.c.l.b16 %v179
      %v264 = vunpack.c.l.b16 %v180
      %v265 = vunpack.c.l.b16 %v181
      %v266 = vunpack.c.l.b16 %v182
      %v267 = vunpack.c.l.b16 %v183
      %v268 = vunpack.c.l.b16 %v184
      %v269 = vunpack.c.l.b16 %v185
      %v270 = vunpack.c.l.b16 %v186
      %v271 = vunpack.c.l.b16 %v187
      %v272 = vunpack.c.l.b16 %v188
      %v273 = vunpack.c.l.b16 %v189
      %v274 = vunpack.c.l.b16 %v190
      %v275 = vunpack.c.l.b16 %v191
      %v276 = vunpack.c.l.b16 %v192
      %v277 = vunpack.c.l.b16 %v193
      %v278 = vunpack.c.l.b16 %v194
      %v279 = vunpack.c.l.b16 %v195
      %v280 = vunpack.c.l.b16 %v196
      %v281 = vunpack.c.l.b16 %v197
      %v282 = vunpack.c.l.b16 %v198
      %v283 = vunpack.c.l.b16 %v199
      %v284 = vunpack.c.l.b16 %v200
      %v285 = vunpack.c.l.b16 %v201
      %v286 = vunpack.c.l.b16 %v202
      %v287 = vunpack.c.l.b16 %v203
      %v288 = vunpack.c.l.b16 %v204
      %v289 = vunpack.c.l.b16 %v205
      %v290 = vpack.c.b16 %v259, %v258
      %v291 = vpack.c.b16 %v261, %v260
      %v292 = vpack.c.b16 %v263, %v262
      %v293 = vpack.c.b16 %v265, %v264
      %v294 = vpack.c.b16 %v267, %v266
      %v295 = vpack.c.b16 %v269, %v268
      %v296 = vpack.c.b16 %v271, %v270
      %v297 = vpack.c.b16 %v273, %v272
      %v298 = vpack.c.b16 %v275, %v274
      %v299 = vpack.c.b16 %v277, %v276
      %v300 = vpack.c.b16 %v279, %v278
      %v301 = vpack.c.b16 %v281, %v280
      %v302 = vpack.c.b16 %v283, %v282
      %v303 = vpack.c.b16 %v285, %v284
      %v304 = vpack.c.b16 %v287, %v286
      %v305 = vpack.c.b16 %v289, %v288
      %v338 = vunpack.c.l.b16 %v206
      %v339 = vunpack.c.l.b16 %v207
      %v340 = vunpack.c.l.b16 %v208
      %v341 = vunpack.c.l.b16 %v209
      %v342 = vunpack.c.l.b16 %v210
      %v343 = vunpack.c.l.b16 %v211
      %v344 = vunpack.c.l.b16 %v212
      %v345 = vunpack.c.l.b16 %v213
      %v346 = vunpack.c.l.b16 %v214
      %v347 = vunpack.c.l.b16 %v215
      %v348 = vunpack.c.l.b16 %v216
      %v349 = vunpack.c.l.b16 %v217
      %v350 = vunpack.c.l.b16 %v218
      %v351 = vunpack.c.l.b16 %v219
      %v352 = vunpack.c.l.b16 %v220
      %v353 = vunpack.c.l.b16 %v221
      %v354 = vpack.c.b16 %v339, %v338
      %v355 = vpack.c.b16 %v341, %v340
      %v356 = vpack.c.b16 %v343, %v342
      %v357 = vpack.c.b16 %v345, %v344
      %v358 = vpack.c.b16 %v347, %v346
      %v359 = vpack.c.b16 %v349, %v348
      %v360 = vpack.c.b16 %v351, %v350
      %v361 = vpack.c.b16 %v353, %v352
      %370 = vmatpush.bf16.msra.mxu0 %v361
      %371 = vmatpush.bf16.msra.mxu0 %v360
      %372 = vmatpush.bf16.msra.mxu0 %v359
      %373 = vmatpush.bf16.msra.mxu0 %v358
      %374 = vmatpush.bf16.msra.mxu0 %v357
      %375 = vmatpush.bf16.msra.mxu0 %v356
      %376 = vmatpush.bf16.msra.mxu0 %v355
      %377 = vmatpush.bf16.msra.mxu0 %v354
      %378 = vmatmul.bf16.gmra.mxu0 %v290
      %v379 = vpop.f32.mrf.mxu0
      %v380 = vadd.f32 %v224, %v379
      %v381 = vpop.f32.mrf.mxu0
      %v382 = vadd.f32 %v224, %v381
      %383 = vmatmul.bf16.gmra.mxu0 %v291
      %v384 = vpop.f32.mrf.mxu0
      %v385 = vadd.f32 %v224, %v384
      %v386 = vpop.f32.mrf.mxu0
      %v387 = vadd.f32 %v224, %v386
      %388 = vmatmul.bf16.gmra.mxu0 %v292
      %v389 = vpop.f32.mrf.mxu0
      %v390 = vadd.f32 %v224, %v389
      %v391 = vpop.f32.mrf.mxu0
      %v392 = vadd.f32 %v224, %v391
      %393 = vmatmul.bf16.gmra.mxu0 %v293
      %v394 = vpop.f32.mrf.mxu0
      %v395 = vadd.f32 %v224, %v394
      %v396 = vpop.f32.mrf.mxu0
      %v397 = vadd.f32 %v224, %v396
      %398 = vmatmul.bf16.gmra.mxu0 %v294
      %v399 = vpop.f32.mrf.mxu0
      %v400 = vadd.f32 %v224, %v399
      %v401 = vpop.f32.mrf.mxu0
      %v402 = vadd.f32 %v224, %v401
      %403 = vmatmul.bf16.gmra.mxu0 %v295
      %v404 = vpop.f32.mrf.mxu0
      %v405 = vadd.f32 %v224, %v404
      %v406 = vpop.f32.mrf.mxu0
      %v407 = vadd.f32 %v224, %v406
      %408 = vmatmul.bf16.gmra.mxu0 %v296
      %v409 = vpop.f32.mrf.mxu0
      %v410 = vadd.f32 %v224, %v409
      %v411 = vpop.f32.mrf.mxu0
      %v412 = vadd.f32 %v224, %v411
      %413 = vmatmul.bf16.gmra.mxu0 %v297
      %v414 = vpop.f32.mrf.mxu0
      %v415 = vadd.f32 %v224, %v414
      %v416 = vpop.f32.mrf.mxu0
      %v417 = vadd.f32 %v224, %v416
      %418 = vmatmul.bf16.gmra.mxu0 %v298
      %v419 = vpop.f32.mrf.mxu0
      %v420 = vadd.f32 %v224, %v419
      %v421 = vpop.f32.mrf.mxu0
      %v422 = vadd.f32 %v224, %v421
      %423 = vmatmul.bf16.gmra.mxu0 %v299
      %v424 = vpop.f32.mrf.mxu0
      %v425 = vadd.f32 %v224, %v424
      %v426 = vpop.f32.mrf.mxu0
      %v427 = vadd.f32 %v224, %v426
      %428 = vmatmul.bf16.gmra.mxu0 %v300
      %v429 = vpop.f32.mrf.mxu0
      %v430 = vadd.f32 %v224, %v429
      %v431 = vpop.f32.mrf.mxu0
      %v432 = vadd.f32 %v224, %v431
      %433 = vmatmul.bf16.gmra.mxu0 %v301
      %v434 = vpop.f32.mrf.mxu0
      %v435 = vadd.f32 %v224, %v434
      %v436 = vpop.f32.mrf.mxu0
      %v437 = vadd.f32 %v224, %v436
      %438 = vmatmul.bf16.gmra.mxu0 %v302
      %v439 = vpop.f32.mrf.mxu0
      %v440 = vadd.f32 %v224, %v439
      %v441 = vpop.f32.mrf.mxu0
      %v442 = vadd.f32 %v224, %v441
      %443 = vmatmul.bf16.gmra.mxu0 %v303
      %v444 = vpop.f32.mrf.mxu0
      %v445 = vadd.f32 %v224, %v444
      %v446 = vpop.f32.mrf.mxu0
      %v447 = vadd.f32 %v224, %v446
      %448 = vmatmul.bf16.gmra.mxu0 %v304
      %v449 = vpop.f32.mrf.mxu0
      %v450 = vadd.f32 %v224, %v449
      %v451 = vpop.f32.mrf.mxu0
      %v452 = vadd.f32 %v224, %v451
      %453 = vmatmul.bf16.gmra.mxu0 %v305
      %v454 = vpop.f32.mrf.mxu0
      %v455 = vadd.f32 %v224, %v454
      %v456 = vpop.f32.mrf.mxu0
      %v457 = vadd.f32 %v224, %v456
      %458 = vdwg.mxu0
      %v459 = vmax.f32 %v380, 0.0
      %v460 = vmax.f32 %v382, 0.0
      %v461 = vmax.f32 %v385, 0.0
      %v462 = vmax.f32 %v387, 0.0
      %v463 = vmax.f32 %v390, 0.0
      %v464 = vmax.f32 %v392, 0.0
      %v465 = vmax.f32 %v395, 0.0
      %v466 = vmax.f32 %v397, 0.0
      %v467 = vmax.f32 %v400, 0.0
      %v468 = vmax.f32 %v402, 0.0
      %v469 = vmax.f32 %v405, 0.0
      %v470 = vmax.f32 %v407, 0.0
      %v471 = vmax.f32 %v410, 0.0
      %v472 = vmax.f32 %v412, 0.0
      %v473 = vmax.f32 %v415, 0.0
      %v474 = vmax.f32 %v417, 0.0
      %v475 = vmax.f32 %v420, 0.0
      %v476 = vmax.f32 %v422, 0.0
      %v477 = vmax.f32 %v425, 0.0
      %v478 = vmax.f32 %v427, 0.0
      %v479 = vmax.f32 %v430, 0.0
      %v480 = vmax.f32 %v432, 0.0
      %v481 = vmax.f32 %v435, 0.0
      %v482 = vmax.f32 %v437, 0.0
      %v483 = vmax.f32 %v440, 0.0
      %v484 = vmax.f32 %v442, 0.0
      %v485 = vmax.f32 %v445, 0.0
      %v486 = vmax.f32 %v447, 0.0
      %v487 = vmax.f32 %v450, 0.0
      %v488 = vmax.f32 %v452, 0.0
      %v489 = vmax.f32 %v455, 0.0
      %v490 = vmax.f32 %v457, 0.0
      %v491 = vpack.c.bf16 %v459, %v459
      %v492 = vpack.c.bf16 %v460, %v460
      %v493 = vpack.c.bf16 %v461, %v461
      %v494 = vpack.c.bf16 %v462, %v462
      %v495 = vpack.c.bf16 %v463, %v463
      %v496 = vpack.c.bf16 %v464, %v464
      %v497 = vpack.c.bf16 %v465, %v465
      %v498 = vpack.c.bf16 %v466, %v466
      %v499 = vpack.c.bf16 %v467, %v467
      %v500 = vpack.c.bf16 %v468, %v468
      %v501 = vpack.c.bf16 %v469, %v469
      %v502 = vpack.c.bf16 %v470, %v470
      %v503 = vpack.c.bf16 %v471, %v471
      %v504 = vpack.c.bf16 %v472, %v472
      %v505 = vpack.c.bf16 %v473, %v473
      %v506 = vpack.c.bf16 %v474, %v474
      %v507 = vpack.c.bf16 %v475, %v475
      %v508 = vpack.c.bf16 %v476, %v476
      %v509 = vpack.c.bf16 %v477, %v477
      %v510 = vpack.c.bf16 %v478, %v478
      %v511 = vpack.c.bf16 %v479, %v479
      %v512 = vpack.c.bf16 %v480, %v480
      %v513 = vpack.c.bf16 %v481, %v481
      %v514 = vpack.c.bf16 %v482, %v482
      %v515 = vpack.c.bf16 %v483, %v483
      %v516 = vpack.c.bf16 %v484, %v484
      %v517 = vpack.c.bf16 %v485, %v485
      %v518 = vpack.c.bf16 %v486, %v486
      %v519 = vpack.c.bf16 %v487, %v487
      %v520 = vpack.c.bf16 %v488, %v488
      %v521 = vpack.c.bf16 %v489, %v489
      %v522 = vpack.c.bf16 %v490, %v490
      %523 = vst [vmem:[%s172] sm:$0xf] %v491
      %524 = vst [vmem:[%s172 + $0x4] sm:$0xf] %v492
      %525 = vst [vmem:[%s172 + $0x8] sm:$0xf] %v493
      %526 = vst [vmem:[%s172 + $0xc] sm:$0xf] %v494
      %527 = vst [vmem:[%s172 + $0x10] sm:$0xf] %v495
      %528 = vst [vmem:[%s172 + $0x14] sm:$0xf] %v496
      %529 = vst [vmem:[%s172 + $0x18] sm:$0xf] %v497
      %530 = vst [vmem:[%s172 + $0x1c] sm:$0xf] %v498
      %531 = vst [vmem:[%s172 + $0x20] sm:$0xf] %v499
      %532 = vst [vmem:[%s172 + $0x24] sm:$0xf] %v500
      %533 = vst [vmem:[%s172 + $0x28] sm:$0xf] %v501
      %534 = vst [vmem:[%s172 + $0x2c] sm:$0xf] %v502
      %535 = vst [vmem:[%s172 + $0x30] sm:$0xf] %v503
      %536 = vst [vmem:[%s172 + $0x34] sm:$0xf] %v504
      %537 = vst [vmem:[%s172 + $0x38] sm:$0xf] %v505
      %538 = vst [vmem:[%s172 + $0x3c] sm:$0xf] %v506
      %539 = vst [vmem:[%s172 + $0x40] sm:$0xf] %v507
      %540 = vst [vmem:[%s172 + $0x44] sm:$0xf] %v508
      %541 = vst [vmem:[%s172 + $0x48] sm:$0xf] %v509
      %542 = vst [vmem:[%s172 + $0x4c] sm:$0xf] %v510
      %543 = vst [vmem:[%s172 + $0x50] sm:$0xf] %v511
      %544 = vst [vmem:[%s172 + $0x54] sm:$0xf] %v512
      %545 = vst [vmem:[%s172 + $0x58] sm:$0xf] %v513
      %546 = vst [vmem:[%s172 + $0x5c] sm:$0xf] %v514
      %547 = vst [vmem:[%s172 + $0x60] sm:$0xf] %v515
      %548 = vst [vmem:[%s172 + $0x64] sm:$0xf] %v516
      %549 = vst [vmem:[%s172 + $0x68] sm:$0xf] %v517
      %550 = vst [vmem:[%s172 + $0x6c] sm:$0xf] %v518
      %551 = vst [vmem:[%s172 + $0x70] sm:$0xf] %v519
      %552 = vst [vmem:[%s172 + $0x74] sm:$0xf] %v520
      %553 = vst [vmem:[%s172 + $0x78] sm:$0xf] %v521
      %554 = vst [vmem:[%s172 + $0x7c] sm:$0xf] %v522
      %s555 = smul.u32 32, %s14
      %p556 = scmp.lt.s32.totalorder %s555, 63
      %s557 = scalar_select %p556, %s555, 63
      %s558 = smul.addr %s557, 4
      %s559 = scalar_lea.vmem %s3, %s558
      // Predicated region
      $region33: #{bottleneck_forward.4} parent=31 // pred_check
        %p560 = pneg %p100
      $region34: #{bottleneck_forward.4} parent=31 // pred_check_branch
        %562 = sbr.rel (%p560) target = $region36
      $region35: #{bottleneck_forward.4} parent=31 // pred_region
        %s563 = smul.u32 32, %s14
      $region36: #{bottleneck_forward.4} parent=31 // pred_fallthru
        _
    $region32: #{bottleneck_forward.4} parent=5 // pred_fallthru
      _
    %p564 = scmp.le.s32.totalorder 2, %s9
    // Predicated region
    $region37: #{bottleneck_forward.4} parent=5 // pred_check
      %p565 = pneg %p564
    $region38: #{bottleneck_forward.4} parent=5 // pred_check_branch
      %567 = sbr.rel (%p565) target = $region40
    $region39: #{bottleneck_forward.4} parent=5 // pred_region
      %s568 = ssub.s32 %s9, 2
      // Predicated region
      $region41: #{bottleneck_forward.4} parent=39 // pred_check
        %p569 = pneg %p106
      $region42: #{bottleneck_forward.4} parent=39 // pred_check_branch
        %571 = sbr.rel (%p569) target = $region44
      $region43: #{bottleneck_forward.4} parent=39 // pred_region
        %s572 = smul.u32 32, %s15
        %p573 = scmp.lt.s32.totalorder %s572, 63
        %s574 = scalar_select %p573, %s572, 63
        %s575 = smul.addr %s574, 4
        %s576 = scalar_lea.vmem %s3, %s575
      $region44: #{bottleneck_forward.4} parent=39 // pred_fallthru
        _
    $region40: #{bottleneck_forward.4} parent=5 // pred_fallthru
      _
  $region6: #{bottleneck_forward.4} parent=0 // loop_footer
    %s13 = sadd.s32 1, %s9
  $region7: #{bottleneck_forward.4} parent=0 // loop_footer_branch
    %8 = sbr.rel target = $region3
  $region8: #{bottleneck_forward.4} parent=0 // loop_exit
    _

// kernel: bottleneck_forward.6
$region0: #{bottleneck_forward.6}
  #allocation0 [shape = 'u32[]', space=smem, size = 0x4, offset = 0x4, fixed_abs, tag = 'smem constant byte address 0x4 - core index']
  #allocation1 [shape = 'u32[72,128]{1,0:T(1,128)}', space=vmem, size = 0x9000, scoped, tag = 'internal scratch']
  %s0 = inlined_call_operand.vmem [shape: bf16[512,128], index: 0, kind: input, shape index: {}]
  %s1 = inlined_call_operand.vmem [shape: bf16[128,128], index: 1, kind: input, shape index: {}]
  %s2 = inlined_call_operand.vmem [shape: f32[1,128], index: 2, kind: input, shape index: {}]
  %s3 = inlined_call_operand.vmem [shape: bf16[512,128], index: 3, kind: output, shape index: {}]
  %s4 = sld [smem:[#allocation0]]
  $region45: #{bottleneck_forward.6} parent=0
    _
  %s6 = ssub.s32 1, %s4
  %s7 = scalar_select 0, %s6, %s4
  loop: start=0, step=1, limit=4
  $region2: #{bottleneck_forward.6} parent=0 // loop_pre_header
    _
  $region3: #{bottleneck_forward.6} parent=0 // loop_header
    %s9 = sphi 0, %s13
    %p10 = scmp.ge.s32.totalorder %s9, 4
    %s19 = sphi 0, %s21
    %s22 = sphi 0, %s19
    %s23 = sphi 0, %s22
    %s39 = sphi 0, %s23
    %s43 = sphi 0, %s43
    %s45 = sphi 0, %s43
    %s46 = sphi 0, %s45
    %s60 = sphi 0, %s46
    %s64 = sphi 0, %s64
    %s66 = sphi 0, %s64
    %s67 = sphi 0, %s66
    %s81 = sphi 0, %s67
    %s87 = sphi 0, %s89
    %s90 = sphi 0, %s87
    %s91 = sphi 0, %s90
    %s107 = sphi 0, %s91
  $region4: #{bottleneck_forward.6} parent=0 // loop_header_branch
    %12 = sbr.rel (%p10) target = $region8
  $region5: #{bottleneck_forward.6} parent=0 // loop_body
    %s14 = ssub.s32 %s9, 1
    %s15 = ssub.s32 %s9, 2
    %s16 = sadd.s32 %s9, 1
    %s17 = ssub.s32 %s9, %s16
    %p18 = scmp.eq.s32.totalorder %s17, 0
    %s20 = sadd.s32 %s19, 1
    %s21 = scalar_select %p18, %s19, %s20
    %p24 = pneg %p18
    %p25 = scmp.eq.s32.totalorder %s9, 1
    %p26 = por %p24, %p25
    %p27 = scmp.ne.s32.totalorder %s19, %s22
    %p28 = scmp.eq.s32.totalorder %s9, 0
    %p29 = por %p27, %p28
    %p30 = scmp.ne.s32.totalorder %s19, %s22
    %p31 = scmp.eq.s32.totalorder %s14, 1
    %p32 = por %p30, %p31
    %p33 = scmp.ne.s32.totalorder %s22, %s23
    %p34 = scmp.eq.s32.totalorder %s14, 0
    %p35 = por %p33, %p34
    %p36 = scmp.ne.s32.totalorder %s22, %s23
    %p37 = scmp.eq.s32.totalorder %s15, 1
    %p38 = por %p36, %p37
    %p40 = scmp.ne.s32.totalorder %s23, %s39
    %p41 = scmp.eq.s32.totalorder %s15, 0
    %p42 = por %p40, %p41
    %s44 = sadd.s32 %s43, 1
    %p47 = scmp.eq.s32.totalorder %s9, 1
    %p48 = scmp.ne.s32.totalorder %s43, %s45
    %p49 = scmp.eq.s32.totalorder %s9, 0
    %p50 = por %p48, %p49
    %p51 = scmp.ne.s32.totalorder %s43, %s45
    %p52 = scmp.eq.s32.totalorder %s14, 1
    %p53 = por %p51, %p52
    %p54 = scmp.ne.s32.totalorder %s45, %s46
    %p55 = scmp.eq.s32.totalorder %s14, 0
    %p56 = por %p54, %p55
    %p57 = scmp.ne.s32.totalorder %s45, %s46
    %p58 = scmp.eq.s32.totalorder %s15, 1
    %p59 = por %p57, %p58
    %p61 = scmp.ne.s32.totalorder %s46, %s60
    %p62 = scmp.eq.s32.totalorder %s15, 0
    %p63 = por %p61, %p62
    %s65 = sadd.s32 %s64, 1
    %p68 = scmp.eq.s32.totalorder %s9, 1
    %p69 = scmp.ne.s32.totalorder %s64, %s66
    %p70 = scmp.eq.s32.totalorder %s9, 0
    %p71 = por %p69, %p70
    %p72 = scmp.ne.s32.totalorder %s64, %s66
    %p73 = scmp.eq.s32.totalorder %s14, 1
    %p74 = por %p72, %p73
    %p75 = scmp.ne.s32.totalorder %s66, %s67
    %p76 = scmp.eq.s32.totalorder %s14, 0
    %p77 = por %p75, %p76
    %p78 = scmp.ne.s32.totalorder %s66, %s67
    %p79 = scmp.eq.s32.totalorder %s15, 1
    %p80 = por %p78, %p79
    %p82 = scmp.ne.s32.totalorder %s67, %s81
    %p83 = scmp.eq.s32.totalorder %s15, 0
    %p84 = por %p82, %p83
    %s85 = ssub.s32 %s9, %s16
    %p86 = scmp.eq.s32.totalorder %s85, 0
    %s88 = sadd.s32 %s87, 1
    %s89 = scalar_select %p86, %s87, %s88
    %p92 = pneg %p86
    %p93 = scmp.eq.s32.totalorder %s9, 1
    %p94 = por %p92, %p93
    %p95 = scmp.ne.s32.totalorder %s87, %s90
    %p96 = scmp.eq.s32.totalorder %s9, 0
    %p97 = por %p95, %p96
    %p98 = scmp.ne.s32.totalorder %s87, %s90
    %p99 = scmp.eq.s32.totalorder %s14, 1
    %p100 = por %p98, %p99
    %p101 = scmp.ne.s32.totalorder %s90, %s91
    %p102 = scmp.eq.s32.totalorder %s14, 0
    %p103 = por %p101, %p102
    %p104 = scmp.ne.s32.totalorder %s90, %s91
    %p105 = scmp.eq.s32.totalorder %s15, 1
    %p106 = por %p104, %p105
    %p108 = scmp.ne.s32.totalorder %s91, %s107
    %p109 = scmp.eq.s32.totalorder %s15, 0
    %p110 = por %p108, %p109
    %p111 = scmp.le.s32.totalorder 1, %s9
    %p112 = scmp.lt.s32.totalorder %s9, 3
    %p113 = pnand %p111, %p112
    %p114 = pneg %p113
    // Predicated region
    $region9: #{bottleneck_forward.6} parent=5 // pred_check
      _
    $region10: #{bottleneck_forward.6} parent=5 // pred_check_branch
      %116 = sbr.rel (%p113) target = $region12
    $region11: #{bottleneck_forward.6} parent=5 // pred_region
      %s117 = ssub.s32 %s9, 1
      // Predicated region
      $region13: #{bottleneck_forward.6} parent=11 // pred_check
        %p118 = pneg %p56
      $region14: #{bottleneck_forward.6} parent=11 // pred_check_branch
        %120 = sbr.rel (%p118) target = $region16
      $region15: #{bottleneck_forward.6} parent=11 // pred_region
        _
      $region16: #{bottleneck_forward.6} parent=11 // pred_fallthru
        _
      // Predicated region
      $region17: #{bottleneck_forward.6} parent=11 // pred_check
        %p121 = pneg %p77
      $region18: #{bottleneck_forward.6} parent=11 // pred_check_branch
        %123 = sbr.rel (%p121) target = $region20
      $region19: #{bottleneck_forward.6} parent=11 // pred_region
        _
      $region20: #{bottleneck_forward.6} parent=11 // pred_fallthru
        _
    $region12: #{bottleneck_forward.6} parent=5 // pred_fallthru
      _
    %p124 = scmp.lt.s32.totalorder %s9, 2
    // Predicated region
    $region21: #{bottleneck_forward.6} parent=5 // pred_check
      %p125 = pneg %p124
    $region22: #{bottleneck_forward.6} parent=5 // pred_check_branch
      %127 = sbr.rel (%p125) target = $region24
    $region23: #{bottleneck_forward.6} parent=5 // pred_region
      // Predicated region
      $region25: #{bottleneck_forward.6} parent=23 // pred_check
        %p128 = pneg %p29
      $region26: #{bottleneck_forward.6} parent=23 // pred_check_branch
        %130 = sbr.rel (%p128) target = $region28
      $region27: #{bottleneck_forward.6} parent=23 // pred_region
        %s131 = smul.u32 32, %s9
        %p132 = scmp.lt.s32.totalorder %s131, 63
        %s133 = scalar_select %p132, %s131, 63
        %s134 = smul.addr %s133, 4
        %s135 = scalar_lea.vmem %s0, %s134
        %s136 = smul.u32 32, %s9
      $region28: #{bottleneck_forward.6} parent=23 // pred_fallthru
        _
    $region24: #{bottleneck_forward.6} parent=5 // pred_fallthru
      _
    %p137 = scmp.le.s32.totalorder 1, %s9
    %p138 = scmp.lt.s32.totalorder %s9, 3
    %p139 = pnand %p137, %p138
    %p140 = pneg %p139
    // Predicated region
    $region29: #{bottleneck_forward.6} parent=5 // pred_check
      _
    $region30: #{bottleneck_forward.6} parent=5 // pred_check_branch
      %142 = sbr.rel (%p139) target = $region32
    $region31: #{bottleneck_forward.6} parent=5 // pred_region
      %s143 = ssub.s32 %s9, 1
      %s144 = smul.u32 32, %s14
      %p145 = scmp.lt.s32.totalorder %s144, 63
      %s146 = scalar_select %p145, %s144, 63
      %s147 = smul.addr %s146, 4
      %s148 = scalar_lea.vmem %s0, %s147
      %p149 = pneg %p35
      %p150 = pneg %p32
      %p151 = pneg %p56
      %p152 = pneg %p53
      %p153 = pneg %p77
      %p154 = pneg %p74
      %p155 = pneg %p103
      %p156 = pneg %p100
      %s157 = smul.u32 32, %s14
      %p158 = scmp.lt.s32.totalorder %s157, 63
      %s159 = scalar_select %p158, %s157, 63
      %s160 = smul.addr %s159, 4
      %s161 = scalar_lea.vmem %s3, %s160
      %s162 = smul.u32 32, %s14
      %p163 = scmp.lt.s32.totalorder %s162, 63
      %s164 = scalar_select %p163, %s162, 63
      %s165 = smul.addr %s164, 4
      %s166 = scalar_lea.vmem %s0, %s165
      %s167 = smul.u32 32, %s14
      %s168 = smul.u32 32, %s14
      %p169 = scmp.lt.s32.totalorder %s168, 63
      %s170 = scalar_select %p169, %s168, 63
      %s171 = smul.addr %s170, 4
      %s172 = scalar_lea.vmem %s3, %s171
      %s173 = smul.u32 32, %s14
      %v174 = vld [vmem:[%s166] sm:$0xf]
      %v175 = vld [vmem:[%s166 + $0x4] sm:$0xf]
      %v176 = vld [vmem:[%s166 + $0x8] sm:$0xf]
      %v177 = vld [vmem:[%s166 + $0xc] sm:$0xf]
      %v178 = vld [vmem:[%s166 + $0x10] sm:$0xf]
      %v179 = vld [vmem:[%s166 + $0x14] sm:$0xf]
      %v180 = vld [vmem:[%s166 + $0x18] sm:$0xf]
      %v181 = vld [vmem:[%s166 + $0x1c] sm:$0xf]
      %v182 = vld [vmem:[%s166 + $0x20] sm:$0xf]
      %v183 = vld [vmem:[%s166 + $0x24] sm:$0xf]
      %v184 = vld [vmem:[%s166 + $0x28] sm:$0xf]
      %v185 = vld [vmem:[%s166 + $0x2c] sm:$0xf]
      %v186 = vld [vmem:[%s166 + $0x30] sm:$0xf]
      %v187 = vld [vmem:[%s166 + $0x34] sm:$0xf]
      %v188 = vld [vmem:[%s166 + $0x38] sm:$0xf]
      %v189 = vld [vmem:[%s166 + $0x3c] sm:$0xf]
      %v190 = vld [vmem:[%s166 + $0x40] sm:$0xf]
      %v191 = vld [vmem:[%s166 + $0x44] sm:$0xf]
      %v192 = vld [vmem:[%s166 + $0x48] sm:$0xf]
      %v193 = vld [vmem:[%s166 + $0x4c] sm:$0xf]
      %v194 = vld [vmem:[%s166 + $0x50] sm:$0xf]
      %v195 = vld [vmem:[%s166 + $0x54] sm:$0xf]
      %v196 = vld [vmem:[%s166 + $0x58] sm:$0xf]
      %v197 = vld [vmem:[%s166 + $0x5c] sm:$0xf]
      %v198 = vld [vmem:[%s166 + $0x60] sm:$0xf]
      %v199 = vld [vmem:[%s166 + $0x64] sm:$0xf]
      %v200 = vld [vmem:[%s166 + $0x68] sm:$0xf]
      %v201 = vld [vmem:[%s166 + $0x6c] sm:$0xf]
      %v202 = vld [vmem:[%s166 + $0x70] sm:$0xf]
      %v203 = vld [vmem:[%s166 + $0x74] sm:$0xf]
      %v204 = vld [vmem:[%s166 + $0x78] sm:$0xf]
      %v205 = vld [vmem:[%s166 + $0x7c] sm:$0xf]
      %v206 = vld [vmem:[%s1] sm:$0xf]
      %v207 = vld [vmem:[%s1 + $0x4] sm:$0xf]
      %v208 = vld [vmem:[%s1 + $0x8] sm:$0xf]
      %v209 = vld [vmem:[%s1 + $0xc] sm:$0xf]
      %v210 = vld [vmem:[%s1 + $0x10] sm:$0xf]
      %v211 = vld [vmem:[%s1 + $0x14] sm:$0xf]
      %v212 = vld [vmem:[%s1 + $0x18] sm:$0xf]
      %v213 = vld [vmem:[%s1 + $0x1c] sm:$0xf]
      %v214 = vld [vmem:[%s1 + $0x20] sm:$0xf]
      %v215 = vld [vmem:[%s1 + $0x24] sm:$0xf]
      %v216 = vld [vmem:[%s1 + $0x28] sm:$0xf]
      %v217 = vld [vmem:[%s1 + $0x2c] sm:$0xf]
      %v218 = vld [vmem:[%s1 + $0x30] sm:$0xf]
      %v219 = vld [vmem:[%s1 + $0x34] sm:$0xf]
      %v220 = vld [vmem:[%s1 + $0x38] sm:$0xf]
      %v221 = vld [vmem:[%s1 + $0x3c] sm:$0xf]
      %v222 = vld [vmem:[%s2] sm:$0x1]
      %v224 = vperm.slane %v222, 0
      %v258 = vunpack.c.l.b16 %v174
      %v259 = vunpack.c.l.b16 %v175
      %v260 = vunpack.c.l.b16 %v176
      %v261 = vunpack.c.l.b16 %v177
      %v262 = vunpack.c.l.b16 %v178
      %v263 = vunpack.c.l.b16 %v179
      %v264 = vunpack.c.l.b16 %v180
      %v265 = vunpack.c.l.b16 %v181
      %v266 = vunpack.c.l.b16 %v182
      %v267 = vunpack.c.l.b16 %v183
      %v268 = vunpack.c.l.b16 %v184
      %v269 = vunpack.c.l.b16 %v185
      %v270 = vunpack.c.l.b16 %v186
      %v271 = vunpack.c.l.b16 %v187
      %v272 = vunpack.c.l.b16 %v188
      %v273 = vunpack.c.l.b16 %v189
      %v274 = vunpack.c.l.b16 %v190
      %v275 = vunpack.c.l.b16 %v191
      %v276 = vunpack.c.l.b16 %v192
      %v277 = vunpack.c.l.b16 %v193
      %v278 = vunpack.c.l.b16 %v194
      %v279 = vunpack.c.l.b16 %v195
      %v280 = vunpack.c.l.b16 %v196
      %v281 = vunpack.c.l.b16 %v197
      %v282 = vunpack.c.l.b16 %v198
      %v283 = vunpack.c.l.b16 %v199
      %v284 = vunpack.c.l.b16 %v200
      %v285 = vunpack.c.l.b16 %v201
      %v286 = vunpack.c.l.b16 %v202
      %v287 = vunpack.c.l.b16 %v203
      %v288 = vunpack.c.l.b16 %v204
      %v289 = vunpack.c.l.b16 %v205
      %v290 = vpack.c.b16 %v259, %v258
      %v291 = vpack.c.b16 %v261, %v260
      %v292 = vpack.c.b16 %v263, %v262
      %v293 = vpack.c.b16 %v265, %v264
      %v294 = vpack.c.b16 %v267, %v266
      %v295 = vpack.c.b16 %v269, %v268
      %v296 = vpack.c.b16 %v271, %v270
      %v297 = vpack.c.b16 %v273, %v272
      %v298 = vpack.c.b16 %v275, %v274
      %v299 = vpack.c.b16 %v277, %v276
      %v300 = vpack.c.b16 %v279, %v278
      %v301 = vpack.c.b16 %v281, %v280
      %v302 = vpack.c.b16 %v283, %v282
      %v303 = vpack.c.b16 %v285, %v284
      %v304 = vpack.c.b16 %v287, %v286
      %v305 = vpack.c.b16 %v289, %v288
      %v338 = vunpack.c.l.b16 %v206
      %v339 = vunpack.c.l.b16 %v207
      %v340 = vunpack.c.l.b16 %v208
      %v341 = vunpack.c.l.b16 %v209
      %v342 = vunpack.c.l.b16 %v210
      %v343 = vunpack.c.l.b16 %v211
      %v344 = vunpack.c.l.b16 %v212
      %v345 = vunpack.c.l.b16 %v213
      %v346 = vunpack.c.l.b16 %v214
      %v347 = vunpack.c.l.b16 %v215
      %v348 = vunpack.c.l.b16 %v216
      %v349 = vunpack.c.l.b16 %v217
      %v350 = vunpack.c.l.b16 %v218
      %v351 = vunpack.c.l.b16 %v219
      %v352 = vunpack.c.l.b16 %v220
      %v353 = vunpack.c.l.b16 %v221
      %v354 = vpack.c.b16 %v339, %v338
      %v355 = vpack.c.b16 %v341, %v340
      %v356 = vpack.c.b16 %v343, %v342
      %v357 = vpack.c.b16 %v345, %v344
      %v358 = vpack.c.b16 %v347, %v346
      %v359 = vpack.c.b16 %v349, %v348
      %v360 = vpack.c.b16 %v351, %v350
      %v361 = vpack.c.b16 %v353, %v352
      %370 = vmatpush.bf16.msra.mxu0 %v361
      %371 = vmatpush.bf16.msra.mxu0 %v360
      %372 = vmatpush.bf16.msra.mxu0 %v359
      %373 = vmatpush.bf16.msra.mxu0 %v358
      %374 = vmatpush.bf16.msra.mxu0 %v357
      %375 = vmatpush.bf16.msra.mxu0 %v356
      %376 = vmatpush.bf16.msra.mxu0 %v355
      %377 = vmatpush.bf16.msra.mxu0 %v354
      %378 = vmatmul.bf16.gmra.mxu0 %v290
      %v379 = vpop.f32.mrf.mxu0
      %v380 = vadd.f32 %v224, %v379
      %v381 = vpop.f32.mrf.mxu0
      %v382 = vadd.f32 %v224, %v381
      %383 = vmatmul.bf16.gmra.mxu0 %v291
      %v384 = vpop.f32.mrf.mxu0
      %v385 = vadd.f32 %v224, %v384
      %v386 = vpop.f32.mrf.mxu0
      %v387 = vadd.f32 %v224, %v386
      %388 = vmatmul.bf16.gmra.mxu0 %v292
      %v389 = vpop.f32.mrf.mxu0
      %v390 = vadd.f32 %v224, %v389
      %v391 = vpop.f32.mrf.mxu0
      %v392 = vadd.f32 %v224, %v391
      %393 = vmatmul.bf16.gmra.mxu0 %v293
      %v394 = vpop.f32.mrf.mxu0
      %v395 = vadd.f32 %v224, %v394
      %v396 = vpop.f32.mrf.mxu0
      %v397 = vadd.f32 %v224, %v396
      %398 = vmatmul.bf16.gmra.mxu0 %v294
      %v399 = vpop.f32.mrf.mxu0
      %v400 = vadd.f32 %v224, %v399
      %v401 = vpop.f32.mrf.mxu0
      %v402 = vadd.f32 %v224, %v401
      %403 = vmatmul.bf16.gmra.mxu0 %v295
      %v404 = vpop.f32.mrf.mxu0
      %v405 = vadd.f32 %v224, %v404
      %v406 = vpop.f32.mrf.mxu0
      %v407 = vadd.f32 %v224, %v406
      %408 = vmatmul.bf16.gmra.mxu0 %v296
      %v409 = vpop.f32.mrf.mxu0
      %v410 = vadd.f32 %v224, %v409
      %v411 = vpop.f32.mrf.mxu0
      %v412 = vadd.f32 %v224, %v411
      %413 = vmatmul.bf16.gmra.mxu0 %v297
      %v414 = vpop.f32.mrf.mxu0
      %v415 = vadd.f32 %v224, %v414
      %v416 = vpop.f32.mrf.mxu0
      %v417 = vadd.f32 %v224, %v416
      %418 = vmatmul.bf16.gmra.mxu0 %v298
      %v419 = vpop.f32.mrf.mxu0
      %v420 = vadd.f32 %v224, %v419
      %v421 = vpop.f32.mrf.mxu0
      %v422 = vadd.f32 %v224, %v421
      %423 = vmatmul.bf16.gmra.mxu0 %v299
      %v424 = vpop.f32.mrf.mxu0
      %v425 = vadd.f32 %v224, %v424
      %v426 = vpop.f32.mrf.mxu0
      %v427 = vadd.f32 %v224, %v426
      %428 = vmatmul.bf16.gmra.mxu0 %v300
      %v429 = vpop.f32.mrf.mxu0
      %v430 = vadd.f32 %v224, %v429
      %v431 = vpop.f32.mrf.mxu0
      %v432 = vadd.f32 %v224, %v431
      %433 = vmatmul.bf16.gmra.mxu0 %v301
      %v434 = vpop.f32.mrf.mxu0
      %v435 = vadd.f32 %v224, %v434
      %v436 = vpop.f32.mrf.mxu0
      %v437 = vadd.f32 %v224, %v436
      %438 = vmatmul.bf16.gmra.mxu0 %v302
      %v439 = vpop.f32.mrf.mxu0
      %v440 = vadd.f32 %v224, %v439
      %v441 = vpop.f32.mrf.mxu0
      %v442 = vadd.f32 %v224, %v441
      %443 = vmatmul.bf16.gmra.mxu0 %v303
      %v444 = vpop.f32.mrf.mxu0
      %v445 = vadd.f32 %v224, %v444
      %v446 = vpop.f32.mrf.mxu0
      %v447 = vadd.f32 %v224, %v446
      %448 = vmatmul.bf16.gmra.mxu0 %v304
      %v449 = vpop.f32.mrf.mxu0
      %v450 = vadd.f32 %v224, %v449
      %v451 = vpop.f32.mrf.mxu0
      %v452 = vadd.f32 %v224, %v451
      %453 = vmatmul.bf16.gmra.mxu0 %v305
      %v454 = vpop.f32.mrf.mxu0
      %v455 = vadd.f32 %v224, %v454
      %v456 = vpop.f32.mrf.mxu0
      %v457 = vadd.f32 %v224, %v456
      %458 = vdwg.mxu0
      %v459 = vpack.c.bf16 %v380, %v380
      %v460 = vpack.c.bf16 %v382, %v382
      %v461 = vpack.c.bf16 %v385, %v385
      %v462 = vpack.c.bf16 %v387, %v387
      %v463 = vpack.c.bf16 %v390, %v390
      %v464 = vpack.c.bf16 %v392, %v392
      %v465 = vpack.c.bf16 %v395, %v395
      %v466 = vpack.c.bf16 %v397, %v397
      %v467 = vpack.c.bf16 %v400, %v400
      %v468 = vpack.c.bf16 %v402, %v402
      %v469 = vpack.c.bf16 %v405, %v405
      %v470 = vpack.c.bf16 %v407, %v407
      %v471 = vpack.c.bf16 %v410, %v410
      %v472 = vpack.c.bf16 %v412, %v412
      %v473 = vpack.c.bf16 %v415, %v415
      %v474 = vpack.c.bf16 %v417, %v417
      %v475 = vpack.c.bf16 %v420, %v420
      %v476 = vpack.c.bf16 %v422, %v422
      %v477 = vpack.c.bf16 %v425, %v425
      %v478 = vpack.c.bf16 %v427, %v427
      %v479 = vpack.c.bf16 %v430, %v430
      %v480 = vpack.c.bf16 %v432, %v432
      %v481 = vpack.c.bf16 %v435, %v435
      %v482 = vpack.c.bf16 %v437, %v437
      %v483 = vpack.c.bf16 %v440, %v440
      %v484 = vpack.c.bf16 %v442, %v442
      %v485 = vpack.c.bf16 %v445, %v445
      %v486 = vpack.c.bf16 %v447, %v447
      %v487 = vpack.c.bf16 %v450, %v450
      %v488 = vpack.c.bf16 %v452, %v452
      %v489 = vpack.c.bf16 %v455, %v455
      %v490 = vpack.c.bf16 %v457, %v457
      %491 = vst [vmem:[%s172] sm:$0xf] %v459
      %492 = vst [vmem:[%s172 + $0x4] sm:$0xf] %v460
      %493 = vst [vmem:[%s172 + $0x8] sm:$0xf] %v461
      %494 = vst [vmem:[%s172 + $0xc] sm:$0xf] %v462
      %495 = vst [vmem:[%s172 + $0x10] sm:$0xf] %v463
      %496 = vst [vmem:[%s172 + $0x14] sm:$0xf] %v464
      %497 = vst [vmem:[%s172 + $0x18] sm:$0xf] %v465
      %498 = vst [vmem:[%s172 + $0x1c] sm:$0xf] %v466
      %499 = vst [vmem:[%s172 + $0x20] sm:$0xf] %v467
      %500 = vst [vmem:[%s172 + $0x24] sm:$0xf] %v468
      %501 = vst [vmem:[%s172 + $0x28] sm:$0xf] %v469
      %502 = vst [vmem:[%s172 + $0x2c] sm:$0xf] %v470
      %503 = vst [vmem:[%s172 + $0x30] sm:$0xf] %v471
      %504 = vst [vmem:[%s172 + $0x34] sm:$0xf] %v472
      %505 = vst [vmem:[%s172 + $0x38] sm:$0xf] %v473
      %506 = vst [vmem:[%s172 + $0x3c] sm:$0xf] %v474
      %507 = vst [vmem:[%s172 + $0x40] sm:$0xf] %v475
      %508 = vst [vmem:[%s172 + $0x44] sm:$0xf] %v476
      %509 = vst [vmem:[%s172 + $0x48] sm:$0xf] %v477
      %510 = vst [vmem:[%s172 + $0x4c] sm:$0xf] %v478
      %511 = vst [vmem:[%s172 + $0x50] sm:$0xf] %v479
      %512 = vst [vmem:[%s172 + $0x54] sm:$0xf] %v480
      %513 = vst [vmem:[%s172 + $0x58] sm:$0xf] %v481
      %514 = vst [vmem:[%s172 + $0x5c] sm:$0xf] %v482
      %515 = vst [vmem:[%s172 + $0x60] sm:$0xf] %v483
      %516 = vst [vmem:[%s172 + $0x64] sm:$0xf] %v484
      %517 = vst [vmem:[%s172 + $0x68] sm:$0xf] %v485
      %518 = vst [vmem:[%s172 + $0x6c] sm:$0xf] %v486
      %519 = vst [vmem:[%s172 + $0x70] sm:$0xf] %v487
      %520 = vst [vmem:[%s172 + $0x74] sm:$0xf] %v488
      %521 = vst [vmem:[%s172 + $0x78] sm:$0xf] %v489
      %522 = vst [vmem:[%s172 + $0x7c] sm:$0xf] %v490
      %s523 = smul.u32 32, %s14
      %p524 = scmp.lt.s32.totalorder %s523, 63
      %s525 = scalar_select %p524, %s523, 63
      %s526 = smul.addr %s525, 4
      %s527 = scalar_lea.vmem %s3, %s526
      // Predicated region
      $region33: #{bottleneck_forward.6} parent=31 // pred_check
        %p528 = pneg %p100
      $region34: #{bottleneck_forward.6} parent=31 // pred_check_branch
        %530 = sbr.rel (%p528) target = $region36
      $region35: #{bottleneck_forward.6} parent=31 // pred_region
        %s531 = smul.u32 32, %s14
      $region36: #{bottleneck_forward.6} parent=31 // pred_fallthru
        _
    $region32: #{bottleneck_forward.6} parent=5 // pred_fallthru
      _
    %p532 = scmp.le.s32.totalorder 2, %s9
    // Predicated region
    $region37: #{bottleneck_forward.6} parent=5 // pred_check
      %p533 = pneg %p532
    $region38: #{bottleneck_forward.6} parent=5 // pred_check_branch
      %535 = sbr.rel (%p533) target = $region40
    $region39: #{bottleneck_forward.6} parent=5 // pred_region
      %s536 = ssub.s32 %s9, 2
      // Predicated region
      $region41: #{bottleneck_forward.6} parent=39 // pred_check
        %p537 = pneg %p106
      $region42: #{bottleneck_forward.6} parent=39 // pred_check_branch
        %539 = sbr.rel (%p537) target = $region44
      $region43: #{bottleneck_forward.6} parent=39 // pred_region
        %s540 = smul.u32 32, %s15
        %p541 = scmp.lt.s32.totalorder %s540, 63
        %s542 = scalar_select %p541, %s540, 63
        %s543 = smul.addr %s542, 4
        %s544 = scalar_lea.vmem %s3, %s543
      $region44: #{bottleneck_forward.6} parent=39 // pred_fallthru
        _
    $region40: #{bottleneck_forward.6} parent=5 // pred_fallthru
      _
  $region6: #{bottleneck_forward.6} parent=0 // loop_footer
    %s13 = sadd.s32 1, %s9
  $region7: #{bottleneck_forward.6} parent=0 // loop_footer_branch
    %8 = sbr.rel target = $region3
  $region8: #{bottleneck_forward.6} parent=0 // loop_exit
    _

// kernel: bottleneck_forward.7
$region0: #{bottleneck_forward.7}
  #allocation0 [shape = 'u32[]', space=smem, size = 0x4, offset = 0x4, fixed_abs, tag = 'smem constant byte address 0x4 - core index']
  #allocation1 [shape = 'u32[72,128]{1,0:T(1,128)}', space=vmem, size = 0x9000, scoped, tag = 'internal scratch']
  %s0 = inlined_call_operand.vmem [shape: bf16[512,128], index: 0, kind: input, shape index: {}]
  %s1 = inlined_call_operand.vmem [shape: bf16[128,128], index: 1, kind: input, shape index: {}]
  %s2 = inlined_call_operand.vmem [shape: f32[1,128], index: 2, kind: input, shape index: {}]
  %s3 = inlined_call_operand.vmem [shape: bf16[512,128], index: 3, kind: input, shape index: {}]
  %s4 = inlined_call_operand.hbm [shape: f32[512,128], index: 4, kind: output, shape index: {}]
  %s5 = sld [smem:[#allocation0]]
  $region49: #{bottleneck_forward.7} parent=0
    _
  %s7 = ssub.s32 1, %s5
  %s8 = scalar_select 0, %s7, %s5
  $region1: #{bottleneck_forward.7} parent=0
    #allocation2 [shape = 'u8[262144]{0}', space=vmem, size = 0x40000, scoped, tag = 'output window, operand 0']
    #allocation3 [shape = 's32[2]{0}', space=sflag, size = 0x8, scoped, tag = 'scoped memory for bottleneck_forward.7']
    %9 = vsyncpa [#allocation3], 0
    %s10 = scalar_lea.sflag [#allocation3], 1
    %11 = vsyncpa %s10, 0
    loop: start=0, step=1, limit=4
    $region2: #{bottleneck_forward.7} parent=1 // loop_pre_header
      _
    $region3: #{bottleneck_forward.7} parent=1 // loop_header
      %s13 = sphi 0, %s17
      %p14 = scmp.ge.s32.totalorder %s13, 4
      %s23 = sphi 0, %s25
      %s26 = sphi 0, %s23
      %s27 = sphi 0, %s26
      %s43 = sphi 0, %s27
      %s47 = sphi 0, %s47
      %s49 = sphi 0, %s47
      %s50 = sphi 0, %s49
      %s64 = sphi 0, %s50
      %s68 = sphi 0, %s68
      %s70 = sphi 0, %s68
      %s71 = sphi 0, %s70
      %s85 = sphi 0, %s71
      %s91 = sphi 0, %s93
      %s94 = sphi 0, %s91
      %s95 = sphi 0, %s94
      %s111 = sphi 0, %s95
      %s117 = sphi 0, %s119
      %s120 = sphi 0, %s117
      %s121 = sphi 0, %s120
      %s137 = sphi 0, %s121
    $region4: #{bottleneck_forward.7} parent=1 // loop_header_branch
      %16 = sbr.rel (%p14) target = $region8
    $region5: #{bottleneck_forward.7} parent=1 // loop_body
      %s18 = ssub.s32 %s13, 1
      %s19 = ssub.s32 %s13, 2
      %s20 = sadd.s32 %s13, 1
      %s21 = ssub.s32 %s13, %s20
      %p22 = scmp.eq.s32.totalorder %s21, 0
      %s24 = sadd.s32 %s23, 1
      %s25 = scalar_select %p22, %s23, %s24
      %p28 = pneg %p22
      %p29 = scmp.eq.s32.totalorder %s13, 1
      %p30 = por %p28, %p29
      %p31 = scmp.ne.s32.totalorder %s23, %s26
      %p32 = scmp.eq.s32.totalorder %s13, 0
      %p33 = por %p31, %p32
      %p34 = scmp.ne.s32.totalorder %s23, %s26
      %p35 = scmp.eq.s32.totalorder %s18, 1
      %p36 = por %p34, %p35
      %p37 = scmp.ne.s32.totalorder %s26, %s27
      %p38 = scmp.eq.s32.totalorder %s18, 0
      %p39 = por %p37, %p38
      %p40 = scmp.ne.s32.totalorder %s26, %s27
      %p41 = scmp.eq.s32.totalorder %s19, 1
      %p42 = por %p40, %p41
      %p44 = scmp.ne.s32.totalorder %s27, %s43
      %p45 = scmp.eq.s32.totalorder %s19, 0
      %p46 = por %p44, %p45
      %s48 = sadd.s32 %s47, 1
      %p51 = scmp.eq.s32.totalorder %s13, 1
      %p52 = scmp.ne.s32.totalorder %s47, %s49
      %p53 = scmp.eq.s32.totalorder %s13, 0
      %p54 = por %p52, %p53
      %p55 = scmp.ne.s32.totalorder %s47, %s49
      %p56 = scmp.eq.s32.totalorder %s18, 1
      %p57 = por %p55, %p56
      %p58 = scmp.ne.s32.totalorder %s49, %s50
      %p59 = scmp.eq.s32.totalorder %s18, 0
      %p60 = por %p58, %p59
      %p61 = scmp.ne.s32.totalorder %s49, %s50
      %p62 = scmp.eq.s32.totalorder %s19, 1
      %p63 = por %p61, %p62
      %p65 = scmp.ne.s32.totalorder %s50, %s64
      %p66 = scmp.eq.s32.totalorder %s19, 0
      %p67 = por %p65, %p66
      %s69 = sadd.s32 %s68, 1
      %p72 = scmp.eq.s32.totalorder %s13, 1
      %p73 = scmp.ne.s32.totalorder %s68, %s70
      %p74 = scmp.eq.s32.totalorder %s13, 0
      %p75 = por %p73, %p74
      %p76 = scmp.ne.s32.totalorder %s68, %s70
      %p77 = scmp.eq.s32.totalorder %s18, 1
      %p78 = por %p76, %p77
      %p79 = scmp.ne.s32.totalorder %s70, %s71
      %p80 = scmp.eq.s32.totalorder %s18, 0
      %p81 = por %p79, %p80
      %p82 = scmp.ne.s32.totalorder %s70, %s71
      %p83 = scmp.eq.s32.totalorder %s19, 1
      %p84 = por %p82, %p83
      %p86 = scmp.ne.s32.totalorder %s71, %s85
      %p87 = scmp.eq.s32.totalorder %s19, 0
      %p88 = por %p86, %p87
      %s89 = ssub.s32 %s13, %s20
      %p90 = scmp.eq.s32.totalorder %s89, 0
      %s92 = sadd.s32 %s91, 1
      %s93 = scalar_select %p90, %s91, %s92
      %p96 = pneg %p90
      %p97 = scmp.eq.s32.totalorder %s13, 1
      %p98 = por %p96, %p97
      %p99 = scmp.ne.s32.totalorder %s91, %s94
      %p100 = scmp.eq.s32.totalorder %s13, 0
      %p101 = por %p99, %p100
      %p102 = scmp.ne.s32.totalorder %s91, %s94
      %p103 = scmp.eq.s32.totalorder %s18, 1
      %p104 = por %p102, %p103
      %p105 = scmp.ne.s32.totalorder %s94, %s95
      %p106 = scmp.eq.s32.totalorder %s18, 0
      %p107 = por %p105, %p106
      %p108 = scmp.ne.s32.totalorder %s94, %s95
      %p109 = scmp.eq.s32.totalorder %s19, 1
      %p110 = por %p108, %p109
      %p112 = scmp.ne.s32.totalorder %s95, %s111
      %p113 = scmp.eq.s32.totalorder %s19, 0
      %p114 = por %p112, %p113
      %s115 = ssub.s32 %s13, %s20
      %p116 = scmp.eq.s32.totalorder %s115, 0
      %s118 = sadd.s32 %s117, 1
      %s119 = scalar_select %p116, %s117, %s118
      %p122 = pneg %p116
      %p123 = scmp.eq.s32.totalorder %s13, 1
      %p124 = por %p122, %p123
      %p125 = scmp.ne.s32.totalorder %s117, %s120
      %p126 = scmp.eq.s32.totalorder %s13, 0
      %p127 = por %p125, %p126
      %p128 = scmp.ne.s32.totalorder %s117, %s120
      %p129 = scmp.eq.s32.totalorder %s18, 1
      %p130 = por %p128, %p129
      %p131 = scmp.ne.s32.totalorder %s120, %s121
      %p132 = scmp.eq.s32.totalorder %s18, 0
      %p133 = por %p131, %p132
      %p134 = scmp.ne.s32.totalorder %s120, %s121
      %p135 = scmp.eq.s32.totalorder %s19, 1
      %p136 = por %p134, %p135
      %p138 = scmp.ne.s32.totalorder %s121, %s137
      %p139 = scmp.eq.s32.totalorder %s19, 0
      %p140 = por %p138, %p139
      %p141 = scmp.le.s32.totalorder 1, %s13
      %p142 = scmp.lt.s32.totalorder %s13, 3
      %p143 = pnand %p141, %p142
      %p144 = pneg %p143
      // Predicated region
      $region9: #{bottleneck_forward.7} parent=5 // pred_check
        _
      $region10: #{bottleneck_forward.7} parent=5 // pred_check_branch
        %146 = sbr.rel (%p143) target = $region12
      $region11: #{bottleneck_forward.7} parent=5 // pred_region
        %s147 = ssub.s32 %s13, 1
        // Predicated region
        $region13: #{bottleneck_forward.7} parent=11 // pred_check
          %p148 = pneg %p60
        $region14: #{bottleneck_forward.7} parent=11 // pred_check_branch
          %150 = sbr.rel (%p148) target = $region16
        $region15: #{bottleneck_forward.7} parent=11 // pred_region
          _
        $region16: #{bottleneck_forward.7} parent=11 // pred_fallthru
          _
        // Predicated region
        $region17: #{bottleneck_forward.7} parent=11 // pred_check
          %p151 = pneg %p81
        $region18: #{bottleneck_forward.7} parent=11 // pred_check_branch
          %153 = sbr.rel (%p151) target = $region20
        $region19: #{bottleneck_forward.7} parent=11 // pred_region
          _
        $region20: #{bottleneck_forward.7} parent=11 // pred_fallthru
          _
      $region12: #{bottleneck_forward.7} parent=5 // pred_fallthru
        _
      %p154 = scmp.lt.s32.totalorder %s13, 2
      // Predicated region
      $region21: #{bottleneck_forward.7} parent=5 // pred_check
        %p155 = pneg %p154
      $region22: #{bottleneck_forward.7} parent=5 // pred_check_branch
        %157 = sbr.rel (%p155) target = $region24
      $region23: #{bottleneck_forward.7} parent=5 // pred_region
        // Predicated region
        $region25: #{bottleneck_forward.7} parent=23 // pred_check
          %p158 = pneg %p33
        $region26: #{bottleneck_forward.7} parent=23 // pred_check_branch
          %160 = sbr.rel (%p158) target = $region28
        $region27: #{bottleneck_forward.7} parent=23 // pred_region
          %s161 = smul.u32 32, %s13
          %p162 = scmp.lt.s32.totalorder %s161, 63
          %s163 = scalar_select %p162, %s161, 63
          %s164 = smul.addr %s163, 4
          %s165 = scalar_lea.vmem %s0, %s164
          %s166 = smul.u32 32, %s13
        $region28: #{bottleneck_forward.7} parent=23 // pred_fallthru
          _
        // Predicated region
        $region29: #{bottleneck_forward.7} parent=23 // pred_check
          %p167 = pneg %p101
        $region30: #{bottleneck_forward.7} parent=23 // pred_check_branch
          %169 = sbr.rel (%p167) target = $region32
        $region31: #{bottleneck_forward.7} parent=23 // pred_region
          %s170 = smul.u32 32, %s13
          %p171 = scmp.lt.s32.totalorder %s170, 63
          %s172 = scalar_select %p171, %s170, 63
          %s173 = smul.addr %s172, 4
          %s174 = scalar_lea.vmem %s3, %s173
          %s175 = smul.u32 32, %s13
        $region32: #{bottleneck_forward.7} parent=23 // pred_fallthru
          _
      $region24: #{bottleneck_forward.7} parent=5 // pred_fallthru
        _
      %p176 = scmp.le.s32.totalorder 1, %s13
      %p177 = scmp.lt.s32.totalorder %s13, 3
      %p178 = pnand %p176, %p177
      %p179 = pneg %p178
      // Predicated region
      $region33: #{bottleneck_forward.7} parent=5 // pred_check
        _
      $region34: #{bottleneck_forward.7} parent=5 // pred_check_branch
        %181 = sbr.rel (%p178) target = $region36
      $region35: #{bottleneck_forward.7} parent=5 // pred_region
        %s182 = ssub.s32 %s13, 1
        %s183 = smul.u32 32, %s18
        %p184 = scmp.lt.s32.totalorder %s183, 63
        %s185 = scalar_select %p184, %s183, 63
        %s186 = smul.addr %s185, 4
        %s187 = scalar_lea.vmem %s0, %s186
        %p188 = pneg %p39
        %p189 = pneg %p36
        %p190 = pneg %p60
        %p191 = pneg %p57
        %p192 = pneg %p81
        %p193 = pneg %p78
        %s194 = smul.u32 32, %s18
        %p195 = scmp.lt.s32.totalorder %s194, 63
        %s196 = scalar_select %p195, %s194, 63
        %s197 = smul.addr %s196, 4
        %s198 = scalar_lea.vmem %s3, %s197
        %p199 = pneg %p107
        %p200 = pneg %p104
        %p201 = pneg %p133
        %p202 = pneg %p130
        %s203 = sand.u32 %s120, 1
        %s204 = scalar_lea.sflag [#allocation3], %s203
        %s205 = sand.u32 %s120, 1
        %s206 = smul.addr %s205, 256
        %s207 = scalar_lea.vmem [#allocation2], %s206
        %s208 = smul.u32 32, %s18
        %p209 = scmp.lt.s32.totalorder %s208, 63
        %s210 = scalar_select %p209, %s208, 63
        %s211 = smul.addr %s210, 4
        %s212 = scalar_lea.vmem %s0, %s211
        %s213 = smul.u32 32, %s18
        %s214 = smul.u32 32, %s18
        %p215 = scmp.lt.s32.totalorder %s214, 63
        %s216 = scalar_select %p215, %s214, 63
        %s217 = smul.addr %s216, 4
        %s218 = scalar_lea.vmem %s3, %s217
        %s219 = smul.u32 32, %s18
        %s220 = smul.u32 32, %s18
        %v221 = vld [vmem:[%s212] sm:$0xf]
        %v222 = vld [vmem:[%s212 + $0x4] sm:$0xf]
        %v223 = vld [vmem:[%s212 + $0x8] sm:$0xf]
        %v224 = vld [vmem:[%s212 + $0xc] sm:$0xf]
        %v225 = vld [vmem:[%s212 + $0x10] sm:$0xf]
        %v226 = vld [vmem:[%s212 + $0x14] sm:$0xf]
        %v227 = vld [vmem:[%s212 + $0x18] sm:$0xf]
        %v228 = vld [vmem:[%s212 + $0x1c] sm:$0xf]
        %v229 = vld [vmem:[%s212 + $0x20] sm:$0xf]
        %v230 = vld [vmem:[%s212 + $0x24] sm:$0xf]
        %v231 = vld [vmem:[%s212 + $0x28] sm:$0xf]
        %v232 = vld [vmem:[%s212 + $0x2c] sm:$0xf]
        %v233 = vld [vmem:[%s212 + $0x30] sm:$0xf]
        %v234 = vld [vmem:[%s212 + $0x34] sm:$0xf]
        %v235 = vld [vmem:[%s212 + $0x38] sm:$0xf]
        %v236 = vld [vmem:[%s212 + $0x3c] sm:$0xf]
        %v237 = vld [vmem:[%s212 + $0x40] sm:$0xf]
        %v238 = vld [vmem:[%s212 + $0x44] sm:$0xf]
        %v239 = vld [vmem:[%s212 + $0x48] sm:$0xf]
        %v240 = vld [vmem:[%s212 + $0x4c] sm:$0xf]
        %v241 = vld [vmem:[%s212 + $0x50] sm:$0xf]
        %v242 = vld [vmem:[%s212 + $0x54] sm:$0xf]
        %v243 = vld [vmem:[%s212 + $0x58] sm:$0xf]
        %v244 = vld [vmem:[%s212 + $0x5c] sm:$0xf]
        %v245 = vld [vmem:[%s212 + $0x60] sm:$0xf]
        %v246 = vld [vmem:[%s212 + $0x64] sm:$0xf]
        %v247 = vld [vmem:[%s212 + $0x68] sm:$0xf]
        %v248 = vld [vmem:[%s212 + $0x6c] sm:$0xf]
        %v249 = vld [vmem:[%s212 + $0x70] sm:$0xf]
        %v250 = vld [vmem:[%s212 + $0x74] sm:$0xf]
        %v251 = vld [vmem:[%s212 + $0x78] sm:$0xf]
        %v252 = vld [vmem:[%s212 + $0x7c] sm:$0xf]
        %v253 = vld [vmem:[%s1] sm:$0xf]
        %v254 = vld [vmem:[%s1 + $0x4] sm:$0xf]
        %v255 = vld [vmem:[%s1 + $0x8] sm:$0xf]
        %v256 = vld [vmem:[%s1 + $0xc] sm:$0xf]
        %v257 = vld [vmem:[%s1 + $0x10] sm:$0xf]
        %v258 = vld [vmem:[%s1 + $0x14] sm:$0xf]
        %v259 = vld [vmem:[%s1 + $0x18] sm:$0xf]
        %v260 = vld [vmem:[%s1 + $0x1c] sm:$0xf]
        %v261 = vld [vmem:[%s1 + $0x20] sm:$0xf]
        %v262 = vld [vmem:[%s1 + $0x24] sm:$0xf]
        %v263 = vld [vmem:[%s1 + $0x28] sm:$0xf]
        %v264 = vld [vmem:[%s1 + $0x2c] sm:$0xf]
        %v265 = vld [vmem:[%s1 + $0x30] sm:$0xf]
        %v266 = vld [vmem:[%s1 + $0x34] sm:$0xf]
        %v267 = vld [vmem:[%s1 + $0x38] sm:$0xf]
        %v268 = vld [vmem:[%s1 + $0x3c] sm:$0xf]
        %v269 = vld [vmem:[%s2] sm:$0x1]
        %v271 = vperm.slane %v269, 0
        %v305 = vunpack.c.l.b16 %v221
        %v306 = vunpack.c.l.b16 %v222
        %v307 = vunpack.c.l.b16 %v223
        %v308 = vunpack.c.l.b16 %v224
        %v309 = vunpack.c.l.b16 %v225
        %v310 = vunpack.c.l.b16 %v226
        %v311 = vunpack.c.l.b16 %v227
        %v312 = vunpack.c.l.b16 %v228
        %v313 = vunpack.c.l.b16 %v229
        %v314 = vunpack.c.l.b16 %v230
        %v315 = vunpack.c.l.b16 %v231
        %v316 = vunpack.c.l.b16 %v232
        %v317 = vunpack.c.l.b16 %v233
        %v318 = vunpack.c.l.b16 %v234
        %v319 = vunpack.c.l.b16 %v235
        %v320 = vunpack.c.l.b16 %v236
        %v321 = vunpack.c.l.b16 %v237
        %v322 = vunpack.c.l.b16 %v238
        %v323 = vunpack.c.l.b16 %v239
        %v324 = vunpack.c.l.b16 %v240
        %v325 = vunpack.c.l.b16 %v241
        %v326 = vunpack.c.l.b16 %v242
        %v327 = vunpack.c.l.b16 %v243
        %v328 = vunpack.c.l.b16 %v244
        %v329 = vunpack.c.l.b16 %v245
        %v330 = vunpack.c.l.b16 %v246
        %v331 = vunpack.c.l.b16 %v247
        %v332 = vunpack.c.l.b16 %v248
        %v333 = vunpack.c.l.b16 %v249
        %v334 = vunpack.c.l.b16 %v250
        %v335 = vunpack.c.l.b16 %v251
        %v336 = vunpack.c.l.b16 %v252
        %v337 = vpack.c.b16 %v306, %v305
        %v338 = vpack.c.b16 %v308, %v307
        %v339 = vpack.c.b16 %v310, %v309
        %v340 = vpack.c.b16 %v312, %v311
        %v341 = vpack.c.b16 %v314, %v313
        %v342 = vpack.c.b16 %v316, %v315
        %v343 = vpack.c.b16 %v318, %v317
        %v344 = vpack.c.b16 %v320, %v319
        %v345 = vpack.c.b16 %v322, %v321
        %v346 = vpack.c.b16 %v324, %v323
        %v347 = vpack.c.b16 %v326, %v325
        %v348 = vpack.c.b16 %v328, %v327
        %v349 = vpack.c.b16 %v330, %v329
        %v350 = vpack.c.b16 %v332, %v331
        %v351 = vpack.c.b16 %v334, %v333
        %v352 = vpack.c.b16 %v336, %v335
        %v385 = vunpack.c.l.b16 %v253
        %v386 = vunpack.c.l.b16 %v254
        %v387 = vunpack.c.l.b16 %v255
        %v388 = vunpack.c.l.b16 %v256
        %v389 = vunpack.c.l.b16 %v257
        %v390 = vunpack.c.l.b16 %v258
        %v391 = vunpack.c.l.b16 %v259
        %v392 = vunpack.c.l.b16 %v260
        %v393 = vunpack.c.l.b16 %v261
        %v394 = vunpack.c.l.b16 %v262
        %v395 = vunpack.c.l.b16 %v263
        %v396 = vunpack.c.l.b16 %v264
        %v397 = vunpack.c.l.b16 %v265
        %v398 = vunpack.c.l.b16 %v266
        %v399 = vunpack.c.l.b16 %v267
        %v400 = vunpack.c.l.b16 %v268
        %v401 = vpack.c.b16 %v386, %v385
        %v402 = vpack.c.b16 %v388, %v387
        %v403 = vpack.c.b16 %v390, %v389
        %v404 = vpack.c.b16 %v392, %v391
        %v405 = vpack.c.b16 %v394, %v393
        %v406 = vpack.c.b16 %v396, %v395
        %v407 = vpack.c.b16 %v398, %v397
        %v408 = vpack.c.b16 %v400, %v399
        %417 = vmatpush.bf16.msra.mxu0 %v408
        %418 = vmatpush.bf16.msra.mxu0 %v407
        %419 = vmatpush.bf16.msra.mxu0 %v406
        %420 = vmatpush.bf16.msra.mxu0 %v405
        %421 = vmatpush.bf16.msra.mxu0 %v404
        %422 = vmatpush.bf16.msra.mxu0 %v403
        %423 = vmatpush.bf16.msra.mxu0 %v402
        %424 = vmatpush.bf16.msra.mxu0 %v401
        %425 = vmatmul.bf16.gmra.mxu0 %v337
        %v426 = vpop.f32.mrf.mxu0
        %v427 = vadd.f32 %v271, %v426
        %v428 = vpop.f32.mrf.mxu0
        %v429 = vadd.f32 %v271, %v428
        %430 = vmatmul.bf16.gmra.mxu0 %v338
        %v431 = vpop.f32.mrf.mxu0
        %v432 = vadd.f32 %v271, %v431
        %v433 = vpop.f32.mrf.mxu0
        %v434 = vadd.f32 %v271, %v433
        %435 = vmatmul.bf16.gmra.mxu0 %v339
        %v436 = vpop.f32.mrf.mxu0
        %v437 = vadd.f32 %v271, %v436
        %v438 = vpop.f32.mrf.mxu0
        %v439 = vadd.f32 %v271, %v438
        %440 = vmatmul.bf16.gmra.mxu0 %v340
        %v441 = vpop.f32.mrf.mxu0
        %v442 = vadd.f32 %v271, %v441
        %v443 = vpop.f32.mrf.mxu0
        %v444 = vadd.f32 %v271, %v443
        %445 = vmatmul.bf16.gmra.mxu0 %v341
        %v446 = vpop.f32.mrf.mxu0
        %v447 = vadd.f32 %v271, %v446
        %v448 = vpop.f32.mrf.mxu0
        %v449 = vadd.f32 %v271, %v448
        %450 = vmatmul.bf16.gmra.mxu0 %v342
        %v451 = vpop.f32.mrf.mxu0
        %v452 = vadd.f32 %v271, %v451
        %v453 = vpop.f32.mrf.mxu0
        %v454 = vadd.f32 %v271, %v453
        %455 = vmatmul.bf16.gmra.mxu0 %v343
        %v456 = vpop.f32.mrf.mxu0
        %v457 = vadd.f32 %v271, %v456
        %v458 = vpop.f32.mrf.mxu0
        %v459 = vadd.f32 %v271, %v458
        %460 = vmatmul.bf16.gmra.mxu0 %v344
        %v461 = vpop.f32.mrf.mxu0
        %v462 = vadd.f32 %v271, %v461
        %v463 = vpop.f32.mrf.mxu0
        %v464 = vadd.f32 %v271, %v463
        %465 = vmatmul.bf16.gmra.mxu0 %v345
        %v466 = vpop.f32.mrf.mxu0
        %v467 = vadd.f32 %v271, %v466
        %v468 = vpop.f32.mrf.mxu0
        %v469 = vadd.f32 %v271, %v468
        %470 = vmatmul.bf16.gmra.mxu0 %v346
        %v471 = vpop.f32.mrf.mxu0
        %v472 = vadd.f32 %v271, %v471
        %v473 = vpop.f32.mrf.mxu0
        %v474 = vadd.f32 %v271, %v473
        %475 = vmatmul.bf16.gmra.mxu0 %v347
        %v476 = vpop.f32.mrf.mxu0
        %v477 = vadd.f32 %v271, %v476
        %v478 = vpop.f32.mrf.mxu0
        %v479 = vadd.f32 %v271, %v478
        %480 = vmatmul.bf16.gmra.mxu0 %v348
        %v481 = vpop.f32.mrf.mxu0
        %v482 = vadd.f32 %v271, %v481
        %v483 = vpop.f32.mrf.mxu0
        %v484 = vadd.f32 %v271, %v483
        %485 = vmatmul.bf16.gmra.mxu0 %v349
        %v486 = vpop.f32.mrf.mxu0
        %v487 = vadd.f32 %v271, %v486
        %v488 = vpop.f32.mrf.mxu0
        %v489 = vadd.f32 %v271, %v488
        %490 = vmatmul.bf16.gmra.mxu0 %v350
        %v491 = vpop.f32.mrf.mxu0
        %v492 = vadd.f32 %v271, %v491
        %v493 = vpop.f32.mrf.mxu0
        %v494 = vadd.f32 %v271, %v493
        %495 = vmatmul.bf16.gmra.mxu0 %v351
        %v496 = vpop.f32.mrf.mxu0
        %v497 = vadd.f32 %v271, %v496
        %v498 = vpop.f32.mrf.mxu0
        %v499 = vadd.f32 %v271, %v498
        %500 = vmatmul.bf16.gmra.mxu0 %v352
        %v501 = vpop.f32.mrf.mxu0
        %v502 = vadd.f32 %v271, %v501
        %v503 = vpop.f32.mrf.mxu0
        %v504 = vadd.f32 %v271, %v503
        %505 = vdwg.mxu0
        %v506 = vld [vmem:[%s218] sm:$0xf]
        %v507 = vld [vmem:[%s218 + $0x4] sm:$0xf]
        %v508 = vld [vmem:[%s218 + $0x8] sm:$0xf]
        %v509 = vld [vmem:[%s218 + $0xc] sm:$0xf]
        %v510 = vld [vmem:[%s218 + $0x10] sm:$0xf]
        %v511 = vld [vmem:[%s218 + $0x14] sm:$0xf]
        %v512 = vld [vmem:[%s218 + $0x18] sm:$0xf]
        %v513 = vld [vmem:[%s218 + $0x1c] sm:$0xf]
        %v514 = vld [vmem:[%s218 + $0x20] sm:$0xf]
        %v515 = vld [vmem:[%s218 + $0x24] sm:$0xf]
        %v516 = vld [vmem:[%s218 + $0x28] sm:$0xf]
        %v517 = vld [vmem:[%s218 + $0x2c] sm:$0xf]
        %v518 = vld [vmem:[%s218 + $0x30] sm:$0xf]
        %v519 = vld [vmem:[%s218 + $0x34] sm:$0xf]
        %v520 = vld [vmem:[%s218 + $0x38] sm:$0xf]
        %v521 = vld [vmem:[%s218 + $0x3c] sm:$0xf]
        %v522 = vld [vmem:[%s218 + $0x40] sm:$0xf]
        %v523 = vld [vmem:[%s218 + $0x44] sm:$0xf]
        %v524 = vld [vmem:[%s218 + $0x48] sm:$0xf]
        %v525 = vld [vmem:[%s218 + $0x4c] sm:$0xf]
        %v526 = vld [vmem:[%s218 + $0x50] sm:$0xf]
        %v527 = vld [vmem:[%s218 + $0x54] sm:$0xf]
        %v528 = vld [vmem:[%s218 + $0x58] sm:$0xf]
        %v529 = vld [vmem:[%s218 + $0x5c] sm:$0xf]
        %v530 = vld [vmem:[%s218 + $0x60] sm:$0xf]
        %v531 = vld [vmem:[%s218 + $0x64] sm:$0xf]
        %v532 = vld [vmem:[%s218 + $0x68] sm:$0xf]
        %v533 = vld [vmem:[%s218 + $0x6c] sm:$0xf]
        %v534 = vld [vmem:[%s218 + $0x70] sm:$0xf]
        %v535 = vld [vmem:[%s218 + $0x74] sm:$0xf]
        %v536 = vld [vmem:[%s218 + $0x78] sm:$0xf]
        %v537 = vld [vmem:[%s218 + $0x7c] sm:$0xf]
        %v538 = vunpack.c.l.bf16 %v506
        %v539 = vunpack.c.l.bf16 %v507
        %v540 = vunpack.c.l.bf16 %v508
        %v541 = vunpack.c.l.bf16 %v509
        %v542 = vunpack.c.l.bf16 %v510
        %v543 = vunpack.c.l.bf16 %v511
        %v544 = vunpack.c.l.bf16 %v512
        %v545 = vunpack.c.l.bf16 %v513
        %v546 = vunpack.c.l.bf16 %v514
        %v547 = vunpack.c.l.bf16 %v515
        %v548 = vunpack.c.l.bf16 %v516
        %v549 = vunpack.c.l.bf16 %v517
        %v550 = vunpack.c.l.bf16 %v518
        %v551 = vunpack.c.l.bf16 %v519
        %v552 = vunpack.c.l.bf16 %v520
        %v553 = vunpack.c.l.bf16 %v521
        %v554 = vunpack.c.l.bf16 %v522
        %v555 = vunpack.c.l.bf16 %v523
        %v556 = vunpack.c.l.bf16 %v524
        %v557 = vunpack.c.l.bf16 %v525
        %v558 = vunpack.c.l.bf16 %v526
        %v559 = vunpack.c.l.bf16 %v527
        %v560 = vunpack.c.l.bf16 %v528
        %v561 = vunpack.c.l.bf16 %v529
        %v562 = vunpack.c.l.bf16 %v530
        %v563 = vunpack.c.l.bf16 %v531
        %v564 = vunpack.c.l.bf16 %v532
        %v565 = vunpack.c.l.bf16 %v533
        %v566 = vunpack.c.l.bf16 %v534
        %v567 = vunpack.c.l.bf16 %v535
        %v568 = vunpack.c.l.bf16 %v536
        %v569 = vunpack.c.l.bf16 %v537
        %v570 = vadd.f32 %v427, %v538
        %v571 = vadd.f32 %v429, %v539
        %v572 = vadd.f32 %v432, %v540
        %v573 = vadd.f32 %v434, %v541
        %v574 = vadd.f32 %v437, %v542
        %v575 = vadd.f32 %v439, %v543
        %v576 = vadd.f32 %v442, %v544
        %v577 = vadd.f32 %v444, %v545
        %v578 = vadd.f32 %v447, %v546
        %v579 = vadd.f32 %v449, %v547
        %v580 = vadd.f32 %v452, %v548
        %v581 = vadd.f32 %v454, %v549
        %v582 = vadd.f32 %v457, %v550
        %v583 = vadd.f32 %v459, %v551
        %v584 = vadd.f32 %v462, %v552
        %v585 = vadd.f32 %v464, %v553
        %v586 = vadd.f32 %v467, %v554
        %v587 = vadd.f32 %v469, %v555
        %v588 = vadd.f32 %v472, %v556
        %v589 = vadd.f32 %v474, %v557
        %v590 = vadd.f32 %v477, %v558
        %v591 = vadd.f32 %v479, %v559
        %v592 = vadd.f32 %v482, %v560
        %v593 = vadd.f32 %v484, %v561
        %v594 = vadd.f32 %v487, %v562
        %v595 = vadd.f32 %v489, %v563
        %v596 = vadd.f32 %v492, %v564
        %v597 = vadd.f32 %v494, %v565
        %v598 = vadd.f32 %v497, %v566
        %v599 = vadd.f32 %v499, %v567
        %v600 = vadd.f32 %v502, %v568
        %v601 = vadd.f32 %v504, %v569
        %v602 = vmax.f32 %v570, 0.0
        %v603 = vmax.f32 %v571, 0.0
        %v604 = vmax.f32 %v572, 0.0
        %v605 = vmax.f32 %v573, 0.0
        %v606 = vmax.f32 %v574, 0.0
        %v607 = vmax.f32 %v575, 0.0
        %v608 = vmax.f32 %v576, 0.0
        %v609 = vmax.f32 %v577, 0.0
        %v610 = vmax.f32 %v578, 0.0
        %v611 = vmax.f32 %v579, 0.0
        %v612 = vmax.f32 %v580, 0.0
        %v613 = vmax.f32 %v581, 0.0
        %v614 = vmax.f32 %v582, 0.0
        %v615 = vmax.f32 %v583, 0.0
        %v616 = vmax.f32 %v584, 0.0
        %v617 = vmax.f32 %v585, 0.0
        %v618 = vmax.f32 %v586, 0.0
        %v619 = vmax.f32 %v587, 0.0
        %v620 = vmax.f32 %v588, 0.0
        %v621 = vmax.f32 %v589, 0.0
        %v622 = vmax.f32 %v590, 0.0
        %v623 = vmax.f32 %v591, 0.0
        %v624 = vmax.f32 %v592, 0.0
        %v625 = vmax.f32 %v593, 0.0
        %v626 = vmax.f32 %v594, 0.0
        %v627 = vmax.f32 %v595, 0.0
        %v628 = vmax.f32 %v596, 0.0
        %v629 = vmax.f32 %v597, 0.0
        %v630 = vmax.f32 %v598, 0.0
        %v631 = vmax.f32 %v599, 0.0
        %v632 = vmax.f32 %v600, 0.0
        %v633 = vmax.f32 %v601, 0.0
        %634 = vst [vmem:[%s207] sm:$0xff] %v602
        %635 = vst [vmem:[%s207 + $0x8] sm:$0xff] %v603
        %636 = vst [vmem:[%s207 + $0x10] sm:$0xff] %v604
        %637 = vst [vmem:[%s207 + $0x18] sm:$0xff] %v605
        %638 = vst [vmem:[%s207 + $0x20] sm:$0xff] %v606
        %639 = vst [vmem:[%s207 + $0x28] sm:$0xff] %v607
        %640 = vst [vmem:[%s207 + $0x30] sm:$0xff] %v608
        %641 = vst [vmem:[%s207 + $0x38] sm:$0xff] %v609
        %642 = vst [vmem:[%s207 + $0x40] sm:$0xff] %v610
        %643 = vst [vmem:[%s207 + $0x48] sm:$0xff] %v611
        %644 = vst [vmem:[%s207 + $0x50] sm:$0xff] %v612
        %645 = vst [vmem:[%s207 + $0x58] sm:$0xff] %v613
        %646 = vst [vmem:[%s207 + $0x60] sm:$0xff] %v614
        %647 = vst [vmem:[%s207 + $0x68] sm:$0xff] %v615
        %648 = vst [vmem:[%s207 + $0x70] sm:$0xff] %v616
        %649 = vst [vmem:[%s207 + $0x78] sm:$0xff] %v617
        %650 = vst [vmem:[%s207 + $0x80] sm:$0xff] %v618
        %651 = vst [vmem:[%s207 + $0x88] sm:$0xff] %v619
        %652 = vst [vmem:[%s207 + $0x90] sm:$0xff] %v620
        %653 = vst [vmem:[%s207 + $0x98] sm:$0xff] %v621
        %654 = vst [vmem:[%s207 + $0xa0] sm:$0xff] %v622
        %655 = vst [vmem:[%s207 + $0xa8] sm:$0xff] %v623
        %656 = vst [vmem:[%s207 + $0xb0] sm:$0xff] %v624
        %657 = vst [vmem:[%s207 + $0xb8] sm:$0xff] %v625
        %658 = vst [vmem:[%s207 + $0xc0] sm:$0xff] %v626
        %659 = vst [vmem:[%s207 + $0xc8] sm:$0xff] %v627
        %660 = vst [vmem:[%s207 + $0xd0] sm:$0xff] %v628
        %661 = vst [vmem:[%s207 + $0xd8] sm:$0xff] %v629
        %662 = vst [vmem:[%s207 + $0xe0] sm:$0xff] %v630
        %663 = vst [vmem:[%s207 + $0xe8] sm:$0xff] %v631
        %664 = vst [vmem:[%s207 + $0xf0] sm:$0xff] %v632
        %665 = vst [vmem:[%s207 + $0xf8] sm:$0xff] %v633
        %s666 = sand.u32 %s120, 1
        %s667 = scalar_lea.sflag [#allocation3], %s666
        %s668 = sand.u32 %s120, 1
        %s669 = smul.addr %s668, 256
        %s670 = scalar_lea.vmem [#allocation2], %s669
        // Predicated region
        $region37: #{bottleneck_forward.7} parent=35 // pred_check
          %p671 = pneg %p130
        $region38: #{bottleneck_forward.7} parent=35 // pred_check_branch
          %673 = sbr.rel (%p671) target = $region40
        $region39: #{bottleneck_forward.7} parent=35 // pred_region
          %s674 = smul.u32 32, %s18
          %676 = vsyncadd %s667, 0
          %s677 = smul.addr %s674, 8
          %s678 = scalar_lea.hbm %s4, %s677
          %s679 = sshll.u32 %s670, 4
          %s680 = int_to_ptr.vmem [resolvable:$true] %s679
          %s681 = sshll.u32 %s678, 4
          %s682 = int_to_ptr.hbm [resolvable:$true] %s681
          %687 = dma.vmem_to_hbm [thread:$0]  %s680, 4096, %s682, %s667, 128, 128, 8
        $region40: #{bottleneck_forward.7} parent=35 // pred_fallthru
          _
      $region36: #{bottleneck_forward.7} parent=5 // pred_fallthru
        _
      %p688 = scmp.le.s32.totalorder 2, %s13
      // Predicated region
      $region41: #{bottleneck_forward.7} parent=5 // pred_check
        %p689 = pneg %p688
      $region42: #{bottleneck_forward.7} parent=5 // pred_check_branch
        %691 = sbr.rel (%p689) target = $region44
      $region43: #{bottleneck_forward.7} parent=5 // pred_region
        %s692 = ssub.s32 %s13, 2
        // Predicated region
        $region45: #{bottleneck_forward.7} parent=43 // pred_check
          %p693 = pneg %p136
        $region46: #{bottleneck_forward.7} parent=43 // pred_check_branch
          %695 = sbr.rel (%p693) target = $region48
        $region47: #{bottleneck_forward.7} parent=43 // pred_region
          %s696 = sand.u32 %s121, 1
          %s697 = scalar_lea.sflag [#allocation3], %s696
          %s698 = sand.u32 %s121, 1
          %s699 = smul.addr %s698, 256
          %s700 = scalar_lea.vmem [#allocation2], %s699
          %702 = dma.done %s697, 4096
        $region48: #{bottleneck_forward.7} parent=43 // pred_fallthru
          _
      $region44: #{bottleneck_forward.7} parent=5 // pred_fallthru
        _
    $region6: #{bottleneck_forward.7} parent=1 // loop_footer
      %s17 = sadd.s32 1, %s13
    $region7: #{bottleneck_forward.7} parent=1 // loop_footer_branch
      %12 = sbr.rel target = $region3
    $region8: #{bottleneck_forward.7} parent=1 // loop_exit
      _
    %703 = vsyncpa [#allocation3], 1
    %s704 = scalar_lea.sflag [#allocation3], 1
    %705 = vsyncpa %s704, 1

// kernel: bottleneck_forward.5
$region0: #{bottleneck_forward.5}
  #allocation0 [shape = 'u32[]', space=smem, size = 0x4, offset = 0x4, fixed_abs, tag = 'smem constant byte address 0x4 - core index']
  #allocation1 [shape = 'u32[72,128]{1,0:T(1,128)}', space=vmem, size = 0x9000, scoped, tag = 'internal scratch']
  #allocation2 [shape = 'bf16[2,336,128]{2,1,0:T(8,128)(2,1)}', space=vmem, size = 0x2a000, scoped, tag = 'scratch operand']
  #allocation3 [shape = 's32[2]{0}', space=sflag, size = 0x8, scoped, tag = 'scratch operand']
  #allocation4 [shape = 'f32[288,128]{1,0:T(8,128)}', space=vmem, size = 0x24000, scoped, tag = 'scratch operand']
  #allocation5 [shape = 's32[]', space=sflag, size = 0x4, offset = 0, fixed_abs, tag = 'sflag constant byte address 0x0 - dummy sync flag']
  #allocation6 [shape = 's32[]', space=sflag, size = 0x4, offset = 0, fixed_abs, tag = 'sflag constant byte address 0x0 - dummy sync flag']
  %s0 = inlined_call_operand.vmem [shape: bf16[2,336,128], index: 0, kind: input, shape index: {}]
  %s1 = inlined_call_operand.vmem [shape: bf16[9,128,128], index: 1, kind: input, shape index: {}]
  %s2 = inlined_call_operand.vmem [shape: f32[1,128], index: 2, kind: input, shape index: {}]
  %s3 = inlined_call_operand.vmem [shape: bf16[2,288,128], index: 3, kind: output, shape index: {}]
  %s4 = sld [smem:[#allocation0]]
  $region87: #{bottleneck_forward.5} parent=0
    _
  %s6 = ssub.s32 1, %s4
  %s7 = scalar_select 0, %s6, %s4
  loop: start=0, step=1, limit=4
  $region2: #{bottleneck_forward.5} parent=0 // loop_pre_header
    _
  $region3: #{bottleneck_forward.5} parent=0 // loop_header
    %s9 = sphi 0, %s13
    %p10 = scmp.ge.s32.totalorder %s9, 4
    %s16 = sphi 0, %s28
    %s17 = sphi 0, %s24
    %s18 = sphi 0, %s16
    %s19 = sphi 0, %s17
    %s20 = sphi 0, %s18
    %s21 = sphi 0, %s19
    %s29 = sphi 0, %s29
    %s31 = sphi 0, %s29
    %s32 = sphi 0, %s31
    %s46 = sphi 0, %s32
    %s50 = sphi 0, %s50
    %s52 = sphi 0, %s50
    %s53 = sphi 0, %s52
    %s67 = sphi 0, %s53
    %s75 = sphi 0, %s77
    %s78 = sphi 0, %s75
    %s79 = sphi 0, %s78
    %s95 = sphi 0, %s79
  $region4: #{bottleneck_forward.5} parent=0 // loop_header_branch
    %12 = sbr.rel (%p10) target = $region8
  $region5: #{bottleneck_forward.5} parent=0 // loop_body
    %s14 = ssub.s32 %s9, 1
    %s15 = ssub.s32 %s9, 2
    %s22 = sadd.s32 1, %s17
    %p23 = scmp.ge.s32.totalorder %s22, 1
    %s24 = scalar_select %p23, 0, %s22
    %s25 = sadd.s32 1, %s16
    %s26 = scalar_select %p23, %s25, %s16
    %p27 = scmp.ge.s32.totalorder %s26, 2
    %s28 = scalar_select %p27, 0, %s26
    %s30 = sadd.s32 %s29, 1
    %p33 = scmp.eq.s32.totalorder %s9, 1
    %p34 = scmp.ne.s32.totalorder %s29, %s31
    %p35 = scmp.eq.s32.totalorder %s9, 0
    %p36 = por %p34, %p35
    %p37 = scmp.ne.s32.totalorder %s29, %s31
    %p38 = scmp.eq.s32.totalorder %s14, 1
    %p39 = por %p37, %p38
    %p40 = scmp.ne.s32.totalorder %s31, %s32
    %p41 = scmp.eq.s32.totalorder %s14, 0
    %p42 = por %p40, %p41
    %p43 = scmp.ne.s32.totalorder %s31, %s32
    %p44 = scmp.eq.s32.totalorder %s15, 1
    %p45 = por %p43, %p44
    %p47 = scmp.ne.s32.totalorder %s32, %s46
    %p48 = scmp.eq.s32.totalorder %s15, 0
    %p49 = por %p47, %p48
    %s51 = sadd.s32 %s50, 1
    %p54 = scmp.eq.s32.totalorder %s9, 1
    %p55 = scmp.ne.s32.totalorder %s50, %s52
    %p56 = scmp.eq.s32.totalorder %s9, 0
    %p57 = por %p55, %p56
    %p58 = scmp.ne.s32.totalorder %s50, %s52
    %p59 = scmp.eq.s32.totalorder %s14, 1
    %p60 = por %p58, %p59
    %p61 = scmp.ne.s32.totalorder %s52, %s53
    %p62 = scmp.eq.s32.totalorder %s14, 0
    %p63 = por %p61, %p62
    %p64 = scmp.ne.s32.totalorder %s52, %s53
    %p65 = scmp.eq.s32.totalorder %s15, 1
    %p66 = por %p64, %p65
    %p68 = scmp.ne.s32.totalorder %s53, %s67
    %p69 = scmp.eq.s32.totalorder %s15, 0
    %p70 = por %p68, %p69
    %s71 = ssub.s32 %s16, %s28
    %s72 = ssub.s32 %s17, %s24
    %s73 = sor.u32 %s71, %s72
    %p74 = scmp.eq.s32.totalorder %s73, 0
    %s76 = sadd.s32 %s75, 1
    %s77 = scalar_select %p74, %s75, %s76
    %p80 = pneg %p74
    %p81 = scmp.eq.s32.totalorder %s9, 1
    %p82 = por %p80, %p81
    %p83 = scmp.ne.s32.totalorder %s75, %s78
    %p84 = scmp.eq.s32.totalorder %s9, 0
    %p85 = por %p83, %p84
    %p86 = scmp.ne.s32.totalorder %s75, %s78
    %p87 = scmp.eq.s32.totalorder %s14, 1
    %p88 = por %p86, %p87
    %p89 = scmp.ne.s32.totalorder %s78, %s79
    %p90 = scmp.eq.s32.totalorder %s14, 0
    %p91 = por %p89, %p90
    %p92 = scmp.ne.s32.totalorder %s78, %s79
    %p93 = scmp.eq.s32.totalorder %s15, 1
    %p94 = por %p92, %p93
    %p96 = scmp.ne.s32.totalorder %s79, %s95
    %p97 = scmp.eq.s32.totalorder %s15, 0
    %p98 = por %p96, %p97
    %p99 = scmp.le.s32.totalorder 1, %s9
    %p100 = scmp.lt.s32.totalorder %s9, 3
    %p101 = pnand %p99, %p100
    %p102 = pneg %p101
    // Predicated region
    $region9: #{bottleneck_forward.5} parent=5 // pred_check
      _
    $region10: #{bottleneck_forward.5} parent=5 // pred_check_branch
      %104 = sbr.rel (%p101) target = $region12
    $region11: #{bottleneck_forward.5} parent=5 // pred_region
      %s105 = ssub.s32 %s9, 1
      // Predicated region
      $region13: #{bottleneck_forward.5} parent=11 // pred_check
        %p106 = pneg %p42
      $region14: #{bottleneck_forward.5} parent=11 // pred_check_branch
        %108 = sbr.rel (%p106) target = $region16
      $region15: #{bottleneck_forward.5} parent=11 // pred_region
        _
      $region16: #{bottleneck_forward.5} parent=11 // pred_fallthru
        _
      // Predicated region
      $region17: #{bottleneck_forward.5} parent=11 // pred_check
        %p109 = pneg %p63
      $region18: #{bottleneck_forward.5} parent=11 // pred_check_branch
        %111 = sbr.rel (%p109) target = $region20
      $region19: #{bottleneck_forward.5} parent=11 // pred_region
        _
      $region20: #{bottleneck_forward.5} parent=11 // pred_fallthru
        _
    $region12: #{bottleneck_forward.5} parent=5 // pred_fallthru
      _
    %p112 = scmp.lt.s32.totalorder %s9, 2
    // Predicated region
    $region21: #{bottleneck_forward.5} parent=5 // pred_check
      %p113 = pneg %p112
    $region22: #{bottleneck_forward.5} parent=5 // pred_check_branch
      %115 = sbr.rel (%p113) target = $region24
    $region23: #{bottleneck_forward.5} parent=5 // pred_region
      _
    $region24: #{bottleneck_forward.5} parent=5 // pred_fallthru
      _
    %p116 = scmp.le.s32.totalorder 1, %s9
    %p117 = scmp.lt.s32.totalorder %s9, 3
    %p118 = pnand %p116, %p117
    %p119 = pneg %p118
    // Predicated region
    $region25: #{bottleneck_forward.5} parent=5 // pred_check
      _
    $region26: #{bottleneck_forward.5} parent=5 // pred_check_branch
      %121 = sbr.rel (%p118) target = $region28
    $region27: #{bottleneck_forward.5} parent=5 // pred_region
      %s122 = ssub.s32 %s9, 1
      %p123 = pneg %p42
      %p124 = pneg %p39
      %p125 = pneg %p63
      %p126 = pneg %p60
      %p127 = pneg %p91
      %p128 = pneg %p88
      %s129 = smul.u32 36, %s19
      %p130 = scmp.lt.s32.totalorder %s18, 1
      %s131 = scalar_select %p130, %s18, 1
      %p132 = scmp.lt.s32.totalorder %s129, 35
      %s133 = scalar_select %p132, %s129, 35
      %s134 = smul.addr %s131, 36
      %s135 = sadd.s32 %s133, %s134
      %s136 = smul.addr %s135, 4
      %s137 = scalar_lea.vmem %s3, %s136
      %s138 = smul.u32 36, %s19
      %p139 = scmp.lt.s32.totalorder %s18, 1
      %s140 = scalar_select %p139, %s18, 1
      %p141 = scmp.lt.s32.totalorder %s138, 35
      %s142 = scalar_select %p141, %s138, 35
      %s143 = smul.addr %s140, 36
      %s144 = sadd.s32 %s142, %s143
      %s145 = smul.addr %s144, 4
      %s146 = scalar_lea.vmem %s3, %s145
      %s147 = smul.u32 36, %s19
      %p148 = scmp.lt.s32.totalorder %s19, 0
      %s149 = ssub.s32 0, %s19
      %s150 = scalar_select %p148, %s149, %s19
      %s151 = sand.u32 %s150, 1
      %s152 = ssub.s32 0, %s151
      %s153 = scalar_select %p148, %s152, %s151
      %p154 = scmp.ne.s32.totalorder %s153, 0
      %p155 = scmp.lt.s32.totalorder %s153, 0
      %p156 = pnand %p155, %p154
      %p157 = pneg %p156
      %s158 = sadd.s32 %s153, 2
      %s159 = scalar_select %p157, %s158, %s153
      %p160 = scmp.eq.s32.totalorder %s19, 0
      // Predicated region
      $region29: #{bottleneck_forward.5} parent=27 // pred_check
        %p161 = pneg %p160
      $region30: #{bottleneck_forward.5} parent=27 // pred_check_branch
        %163 = sbr.rel (%p161) target = $region32
      $region31: #{bottleneck_forward.5} parent=27 // pred_region
        %s164 = smul.u32 %s19, 288
        %s165 = sshra.s32 %s164, 3
        %s166 = sand.u32 %s164, 7
        %s167 = smul.u32 %s18, 42
        %s168 = sadd.s32 %s165, %s167
        %s169 = smul.addr %s168, 4
        %s170 = scalar_lea.vmem %s0, %s169
        %s171 = smul.u32 %s159, 42
        %s172 = smul.addr %s171, 4
        %s173 = scalar_lea.vmem [#allocation2], %s172
        %s174 = scalar_lea.sflag [#allocation3], %s159
        // Predicated region
        $region33: #{bottleneck_forward.5} parent=31 // pred_check
          _
        $region34: #{bottleneck_forward.5} parent=31 // pred_check_branch
          %176 = sbr.rel (0) target = $region36
        $region35: #{bottleneck_forward.5} parent=31 // pred_region
          loop: start=0, step=1, limit=1
          $region37: #{bottleneck_forward.5} parent=35 // loop_pre_header
            _
          $region38: #{bottleneck_forward.5} parent=35 // loop_header
            %s178 = sphi 0, %s182
            %p179 = scmp.ge.s32.totalorder %s178, 1
            %s183 = sphi %s170, %s170
            %s184 = sphi %s173, %s173
          $region39: #{bottleneck_forward.5} parent=35 // loop_header_branch
            %181 = sbr.rel (%p179) target = $region43
          $region40: #{bottleneck_forward.5} parent=35 // loop_body
            %v185 = vld [vmem:[%s183] sm:$0xff]
            %186 = vst [vmem:[%s184] sm:$0xff] %v185
            %v187 = vld [vmem:[%s183 + $0x8] sm:$0xff]
            %188 = vst [vmem:[%s184 + $0x8] sm:$0xff] %v187
            %v189 = vld [vmem:[%s183 + $0x10] sm:$0xff]
            %190 = vst [vmem:[%s184 + $0x10] sm:$0xff] %v189
            %v191 = vld [vmem:[%s183 + $0x18] sm:$0xff]
            %192 = vst [vmem:[%s184 + $0x18] sm:$0xff] %v191
            %v193 = vld [vmem:[%s183 + $0x20] sm:$0xff]
            %194 = vst [vmem:[%s184 + $0x20] sm:$0xff] %v193
            %v195 = vld [vmem:[%s183 + $0x28] sm:$0xff]
            %196 = vst [vmem:[%s184 + $0x28] sm:$0xff] %v195
            %v197 = vld [vmem:[%s183 + $0x30] sm:$0xff]
            %198 = vst [vmem:[%s184 + $0x30] sm:$0xff] %v197
            %v199 = vld [vmem:[%s183 + $0x38] sm:$0xff]
            %200 = vst [vmem:[%s184 + $0x38] sm:$0xff] %v199
            %v201 = vld [vmem:[%s183 + $0x40] sm:$0xff]
            %202 = vst [vmem:[%s184 + $0x40] sm:$0xff] %v201
            %v203 = vld [vmem:[%s183 + $0x48] sm:$0xff]
            %204 = vst [vmem:[%s184 + $0x48] sm:$0xff] %v203
            %v205 = vld [vmem:[%s183 + $0x50] sm:$0xff]
            %206 = vst [vmem:[%s184 + $0x50] sm:$0xff] %v205
            %v207 = vld [vmem:[%s183 + $0x58] sm:$0xff]
            %208 = vst [vmem:[%s184 + $0x58] sm:$0xff] %v207
            %v209 = vld [vmem:[%s183 + $0x60] sm:$0xff]
            %210 = vst [vmem:[%s184 + $0x60] sm:$0xff] %v209
            %v211 = vld [vmem:[%s183 + $0x68] sm:$0xff]
            %212 = vst [vmem:[%s184 + $0x68] sm:$0xff] %v211
            %v213 = vld [vmem:[%s183 + $0x70] sm:$0xff]
            %214 = vst [vmem:[%s184 + $0x70] sm:$0xff] %v213
            %v215 = vld [vmem:[%s183 + $0x78] sm:$0xff]
            %216 = vst [vmem:[%s184 + $0x78] sm:$0xff] %v215
            %v217 = vld [vmem:[%s183 + $0x80] sm:$0xff]
            %218 = vst [vmem:[%s184 + $0x80] sm:$0xff] %v217
            %v219 = vld [vmem:[%s183 + $0x88] sm:$0xff]
            %220 = vst [vmem:[%s184 + $0x88] sm:$0xff] %v219
            %v221 = vld [vmem:[%s183 + $0x90] sm:$0xff]
            %222 = vst [vmem:[%s184 + $0x90] sm:$0xff] %v221
            %v223 = vld [vmem:[%s183 + $0x98] sm:$0xff]
            %224 = vst [vmem:[%s184 + $0x98] sm:$0xff] %v223
            %v225 = vld [vmem:[%s183 + $0xa0] sm:$0xff]
            %226 = vst [vmem:[%s184 + $0xa0] sm:$0xff] %v225
          $region41: #{bottleneck_forward.5} parent=35 // loop_footer
            %s182 = sadd.s32 1, %s178
          $region42: #{bottleneck_forward.5} parent=35 // loop_footer_branch
            %177 = sbr.rel target = $region38
          $region43: #{bottleneck_forward.5} parent=35 // loop_exit
            _
        $region36: #{bottleneck_forward.5} parent=31 // pred_fallthru
          _
        // Predicated region
        $region44: #{bottleneck_forward.5} parent=31 // pred_check
          _
        $region45: #{bottleneck_forward.5} parent=31 // pred_check_branch
          %228 = sbr.rel target = $region47
        $region46: #{bottleneck_forward.5} parent=31 // pred_region
          _
        $region47: #{bottleneck_forward.5} parent=31 // pred_fallthru
          _
        // Predicated region
        $region48: #{bottleneck_forward.5} parent=31 // pred_check
          _
        $region49: #{bottleneck_forward.5} parent=31 // pred_check_branch
          %231 = sbr.rel (0) target = $region51
        $region50: #{bottleneck_forward.5} parent=31 // pred_region
          %232 = vsyncadd %s174, 2688
        $region51: #{bottleneck_forward.5} parent=31 // pred_fallthru
          _
      $region32: #{bottleneck_forward.5} parent=27 // pred_fallthru
        _
      %s233 = sadd.s32 %s19, 1
      %p234 = scmp.lt.s32.totalorder %s233, 1
      // Predicated region
      $region52: #{bottleneck_forward.5} parent=27 // pred_check
        %p235 = pneg %p234
      $region53: #{bottleneck_forward.5} parent=27 // pred_check_branch
        %237 = sbr.rel (%p235) target = $region55
      $region54: #{bottleneck_forward.5} parent=27 // pred_region
        %s238 = ssub.s32 1, %s159
        %s239 = smul.u32 %s233, 288
        %s240 = sshra.s32 %s239, 3
        %s241 = sand.u32 %s239, 7
        %s242 = smul.u32 %s18, 42
        %s243 = sadd.s32 %s240, %s242
        %s244 = smul.addr %s243, 4
        %s245 = scalar_lea.vmem %s0, %s244
        %s246 = smul.u32 %s238, 42
        %s247 = smul.addr %s246, 4
        %s248 = scalar_lea.vmem [#allocation2], %s247
        %s249 = scalar_lea.sflag [#allocation3], %s238
        // Predicated region
        $region56: #{bottleneck_forward.5} parent=54 // pred_check
          _
        $region57: #{bottleneck_forward.5} parent=54 // pred_check_branch
          %251 = sbr.rel (0) target = $region59
        $region58: #{bottleneck_forward.5} parent=54 // pred_region
          loop: start=0, step=1, limit=1
          $region60: #{bottleneck_forward.5} parent=58 // loop_pre_header
            _
          $region61: #{bottleneck_forward.5} parent=58 // loop_header
            %s253 = sphi 0, %s257
            %p254 = scmp.ge.s32.totalorder %s253, 1
            %s258 = sphi %s245, %s245
            %s259 = sphi %s248, %s248
          $region62: #{bottleneck_forward.5} parent=58 // loop_header_branch
            %256 = sbr.rel (%p254) target = $region66
          $region63: #{bottleneck_forward.5} parent=58 // loop_body
            %v260 = vld [vmem:[%s258] sm:$0xff]
            %261 = vst [vmem:[%s259] sm:$0xff] %v260
            %v262 = vld [vmem:[%s258 + $0x8] sm:$0xff]
            %263 = vst [vmem:[%s259 + $0x8] sm:$0xff] %v262
            %v264 = vld [vmem:[%s258 + $0x10] sm:$0xff]
            %265 = vst [vmem:[%s259 + $0x10] sm:$0xff] %v264
            %v266 = vld [vmem:[%s258 + $0x18] sm:$0xff]
            %267 = vst [vmem:[%s259 + $0x18] sm:$0xff] %v266
            %v268 = vld [vmem:[%s258 + $0x20] sm:$0xff]
            %269 = vst [vmem:[%s259 + $0x20] sm:$0xff] %v268
            %v270 = vld [vmem:[%s258 + $0x28] sm:$0xff]
            %271 = vst [vmem:[%s259 + $0x28] sm:$0xff] %v270
            %v272 = vld [vmem:[%s258 + $0x30] sm:$0xff]
            %273 = vst [vmem:[%s259 + $0x30] sm:$0xff] %v272
            %v274 = vld [vmem:[%s258 + $0x38] sm:$0xff]
            %275 = vst [vmem:[%s259 + $0x38] sm:$0xff] %v274
            %v276 = vld [vmem:[%s258 + $0x40] sm:$0xff]
            %277 = vst [vmem:[%s259 + $0x40] sm:$0xff] %v276
            %v278 = vld [vmem:[%s258 + $0x48] sm:$0xff]
            %279 = vst [vmem:[%s259 + $0x48] sm:$0xff] %v278
            %v280 = vld [vmem:[%s258 + $0x50] sm:$0xff]
            %281 = vst [vmem:[%s259 + $0x50] sm:$0xff] %v280
            %v282 = vld [vmem:[%s258 + $0x58] sm:$0xff]
            %283 = vst [vmem:[%s259 + $0x58] sm:$0xff] %v282
            %v284 = vld [vmem:[%s258 + $0x60] sm:$0xff]
            %285 = vst [vmem:[%s259 + $0x60] sm:$0xff] %v284
            %v286 = vld [vmem:[%s258 + $0x68] sm:$0xff]
            %287 = vst [vmem:[%s259 + $0x68] sm:$0xff] %v286
            %v288 = vld [vmem:[%s258 + $0x70] sm:$0xff]
            %289 = vst [vmem:[%s259 + $0x70] sm:$0xff] %v288
            %v290 = vld [vmem:[%s258 + $0x78] sm:$0xff]
            %291 = vst [vmem:[%s259 + $0x78] sm:$0xff] %v290
            %v292 = vld [vmem:[%s258 + $0x80] sm:$0xff]
            %293 = vst [vmem:[%s259 + $0x80] sm:$0xff] %v292
            %v294 = vld [vmem:[%s258 + $0x88] sm:$0xff]
            %295 = vst [vmem:[%s259 + $0x88] sm:$0xff] %v294
            %v296 = vld [vmem:[%s258 + $0x90] sm:$0xff]
            %297 = vst [vmem:[%s259 + $0x90] sm:$0xff] %v296
            %v298 = vld [vmem:[%s258 + $0x98] sm:$0xff]
            %299 = vst [vmem:[%s259 + $0x98] sm:$0xff] %v298
            %v300 = vld [vmem:[%s258 + $0xa0] sm:$0xff]
            %301 = vst [vmem:[%s259 + $0xa0] sm:$0xff] %v300
          $region64: #{bottleneck_forward.5} parent=58 // loop_footer
            %s257 = sadd.s32 1, %s253
          $region65: #{bottleneck_forward.5} parent=58 // loop_footer_branch
            %252 = sbr.rel target = $region61
          $region66: #{bottleneck_forward.5} parent=58 // loop_exit
            _
        $region59: #{bottleneck_forward.5} parent=54 // pred_fallthru
          _
        // Predicated region
        $region67: #{bottleneck_forward.5} parent=54 // pred_check
          _
        $region68: #{bottleneck_forward.5} parent=54 // pred_check_branch
          %303 = sbr.rel target = $region70
        $region69: #{bottleneck_forward.5} parent=54 // pred_region
          _
        $region70: #{bottleneck_forward.5} parent=54 // pred_fallthru
          _
        // Predicated region
        $region71: #{bottleneck_forward.5} parent=54 // pred_check
          _
        $region72: #{bottleneck_forward.5} parent=54 // pred_check_branch
          %306 = sbr.rel (0) target = $region74
        $region73: #{bottleneck_forward.5} parent=54 // pred_region
          %307 = vsyncadd %s249, 2688
        $region74: #{bottleneck_forward.5} parent=54 // pred_fallthru
          _
      $region55: #{bottleneck_forward.5} parent=27 // pred_fallthru
        _
      %s308 = smul.u32 %s159, 42
      %s309 = smul.addr %s308, 4
      %s310 = scalar_lea.vmem [#allocation2], %s309
      %s311 = scalar_lea.sflag [#allocation3], %s159
      %s312 = smul.u32 4, 42
      %s313 = smul.u32 %s312, 1
      %s314 = sshll.u32 %s313, 4
      %315 = dma.done %s311, %s314
      %v316 = vld [vmem:[%s310] sm:$0xf]
      %v317 = vld [vmem:[%s310 + $0x4] sm:$0xf]
      %v318 = vld [vmem:[%s310 + $0x8] sm:$0xf]
      %v319 = vld [vmem:[%s310 + $0xc] sm:$0xf]
      %v320 = vld [vmem:[%s310 + $0x10] sm:$0xf]
      %v321 = vld [vmem:[%s310 + $0x14] sm:$0xf]
      %v322 = vld [vmem:[%s310 + $0x18] sm:$0xf]
      %v323 = vld [vmem:[%s310 + $0x1c] sm:$0xf]
      %v324 = vld [vmem:[%s310 + $0x20] sm:$0xf]
      %v325 = vld [vmem:[%s310 + $0x24] sm:$0xf]
      %v326 = vld [vmem:[%s310 + $0x28] sm:$0xf]
      %v327 = vld [vmem:[%s310 + $0x2c] sm:$0xf]
      %v328 = vld [vmem:[%s310 + $0x30] sm:$0xf]
      %v329 = vld [vmem:[%s310 + $0x34] sm:$0xf]
      %v330 = vld [vmem:[%s310 + $0x38] sm:$0xf]
      %v331 = vld [vmem:[%s310 + $0x3c] sm:$0xf]
      %v332 = vld [vmem:[%s310 + $0x40] sm:$0xf]
      %v333 = vld [vmem:[%s310 + $0x44] sm:$0xf]
      %v334 = vld [vmem:[%s310 + $0x48] sm:$0xf]
      %v335 = vld [vmem:[%s310 + $0x4c] sm:$0xf]
      %v336 = vld [vmem:[%s310 + $0x50] sm:$0xf]
      %v337 = vld [vmem:[%s310 + $0x54] sm:$0xf]
      %v338 = vld [vmem:[%s310 + $0x58] sm:$0xf]
      %v339 = vld [vmem:[%s310 + $0x5c] sm:$0xf]
      %v340 = vld [vmem:[%s310 + $0x60] sm:$0xf]
      %v341 = vld [vmem:[%s310 + $0x64] sm:$0xf]
      %v342 = vld [vmem:[%s310 + $0x68] sm:$0xf]
      %v343 = vld [vmem:[%s310 + $0x6c] sm:$0xf]
      %v344 = vld [vmem:[%s310 + $0x70] sm:$0xf]
      %v345 = vld [vmem:[%s310 + $0x74] sm:$0xf]
      %v346 = vld [vmem:[%s310 + $0x78] sm:$0xf]
      %v347 = vld [vmem:[%s310 + $0x7c] sm:$0xf]
      %v348 = vld [vmem:[%s310 + $0x80] sm:$0xf]
      %v349 = vld [vmem:[%s310 + $0x84] sm:$0xf]
      %v350 = vld [vmem:[%s310 + $0x88] sm:$0xf]
      %v351 = vld [vmem:[%s310 + $0x8c] sm:$0xf]
      %v352 = vld [vmem:[%s1] sm:$0xf]
      %v353 = vld [vmem:[%s1 + $0x4] sm:$0xf]
      %v354 = vld [vmem:[%s1 + $0x8] sm:$0xf]
      %v355 = vld [vmem:[%s1 + $0xc] sm:$0xf]
      %v356 = vld [vmem:[%s1 + $0x10] sm:$0xf]
      %v357 = vld [vmem:[%s1 + $0x14] sm:$0xf]
      %v358 = vld [vmem:[%s1 + $0x18] sm:$0xf]
      %v359 = vld [vmem:[%s1 + $0x1c] sm:$0xf]
      %v360 = vld [vmem:[%s1 + $0x20] sm:$0xf]
      %v361 = vld [vmem:[%s1 + $0x24] sm:$0xf]
      %v362 = vld [vmem:[%s1 + $0x28] sm:$0xf]
      %v363 = vld [vmem:[%s1 + $0x2c] sm:$0xf]
      %v364 = vld [vmem:[%s1 + $0x30] sm:$0xf]
      %v365 = vld [vmem:[%s1 + $0x34] sm:$0xf]
      %v366 = vld [vmem:[%s1 + $0x38] sm:$0xf]
      %v367 = vld [vmem:[%s1 + $0x3c] sm:$0xf]
      %v404 = vunpack.c.l.b16 %v316
      %v405 = vunpack.c.l.b16 %v317
      %v406 = vunpack.c.l.b16 %v318
      %v407 = vunpack.c.l.b16 %v319
      %v408 = vunpack.c.l.b16 %v320
      %v409 = vunpack.c.l.b16 %v321
      %v410 = vunpack.c.l.b16 %v322
      %v411 = vunpack.c.l.b16 %v323
      %v412 = vunpack.c.l.b16 %v324
      %v413 = vunpack.c.l.b16 %v325
      %v414 = vunpack.c.l.b16 %v326
      %v415 = vunpack.c.l.b16 %v327
      %v416 = vunpack.c.l.b16 %v328
      %v417 = vunpack.c.l.b16 %v329
      %v418 = vunpack.c.l.b16 %v330
      %v419 = vunpack.c.l.b16 %v331
      %v420 = vunpack.c.l.b16 %v332
      %v421 = vunpack.c.l.b16 %v333
      %v422 = vunpack.c.l.b16 %v334
      %v423 = vunpack.c.l.b16 %v335
      %v424 = vunpack.c.l.b16 %v336
      %v425 = vunpack.c.l.b16 %v337
      %v426 = vunpack.c.l.b16 %v338
      %v427 = vunpack.c.l.b16 %v339
      %v428 = vunpack.c.l.b16 %v340
      %v429 = vunpack.c.l.b16 %v341
      %v430 = vunpack.c.l.b16 %v342
      %v431 = vunpack.c.l.b16 %v343
      %v432 = vunpack.c.l.b16 %v344
      %v433 = vunpack.c.l.b16 %v345
      %v434 = vunpack.c.l.b16 %v346
      %v435 = vunpack.c.l.b16 %v347
      %v436 = vunpack.c.l.b16 %v348
      %v437 = vunpack.c.l.b16 %v349
      %v438 = vunpack.c.l.b16 %v350
      %v439 = vunpack.c.l.b16 %v351
      %v440 = vpack.c.b16 %v405, %v404
      %v441 = vpack.c.b16 %v407, %v406
      %v442 = vpack.c.b16 %v409, %v408
      %v443 = vpack.c.b16 %v411, %v410
      %v444 = vpack.c.b16 %v413, %v412
      %v445 = vpack.c.b16 %v415, %v414
      %v446 = vpack.c.b16 %v417, %v416
      %v447 = vpack.c.b16 %v419, %v418
      %v448 = vpack.c.b16 %v421, %v420
      %v449 = vpack.c.b16 %v423, %v422
      %v450 = vpack.c.b16 %v425, %v424
      %v451 = vpack.c.b16 %v427, %v426
      %v452 = vpack.c.b16 %v429, %v428
      %v453 = vpack.c.b16 %v431, %v430
      %v454 = vpack.c.b16 %v433, %v432
      %v455 = vpack.c.b16 %v435, %v434
      %v456 = vpack.c.b16 %v437, %v436
      %v457 = vpack.c.b16 %v439, %v438
      %v492 = vunpack.c.l.b16 %v352
      %v493 = vunpack.c.l.b16 %v353
      %v494 = vunpack.c.l.b16 %v354
      %v495 = vunpack.c.l.b16 %v355
      %v496 = vunpack.c.l.b16 %v356
      %v497 = vunpack.c.l.b16 %v357
      %v498 = vunpack.c.l.b16 %v358
      %v499 = vunpack.c.l.b16 %v359
      %v500 = vunpack.c.l.b16 %v360
      %v501 = vunpack.c.l.b16 %v361
      %v502 = vunpack.c.l.b16 %v362
      %v503 = vunpack.c.l.b16 %v363
      %v504 = vunpack.c.l.b16 %v364
      %v505 = vunpack.c.l.b16 %v365
      %v506 = vunpack.c.l.b16 %v366
      %v507 = vunpack.c.l.b16 %v367
      %v508 = vpack.c.b16 %v493, %v492
      %v509 = vpack.c.b16 %v495, %v494
      %v510 = vpack.c.b16 %v497, %v496
      %v511 = vpack.c.b16 %v499, %v498
      %v512 = vpack.c.b16 %v501, %v500
      %v513 = vpack.c.b16 %v503, %v502
      %v514 = vpack.c.b16 %v505, %v504
      %v515 = vpack.c.b16 %v507, %v506
      %524 = vmatpush.bf16.msra.mxu0 %v515
      %525 = vmatpush.bf16.msra.mxu0 %v514
      %526 = vmatpush.bf16.msra.mxu0 %v513
      %527 = vmatpush.bf16.msra.mxu0 %v512
      %528 = vmatpush.bf16.msra.mxu0 %v511
      %529 = vmatpush.bf16.msra.mxu0 %v510
      %530 = vmatpush.bf16.msra.mxu0 %v509
      %531 = vmatpush.bf16.msra.mxu0 %v508
      %532 = vmatmul.bf16.gmra.mxu0 %v440
      %v533 = vpop.f32.mrf.mxu0
      %v534 = vadd.f32 0.0, %v533
      %v535 = vpop.f32.mrf.mxu0
      %v536 = vadd.f32 0.0, %v535
      %537 = vmatmul.bf16.gmra.mxu0 %v441
      %v538 = vpop.f32.mrf.mxu0
      %v539 = vadd.f32 0.0, %v538
      %v540 = vpop.f32.mrf.mxu0
      %v541 = vadd.f32 0.0, %v540
      %542 = vmatmul.bf16.gmra.mxu0 %v442
      %v543 = vpop.f32.mrf.mxu0
      %v544 = vadd.f32 0.0, %v543
      %v545 = vpop.f32.mrf.mxu0
      %v546 = vadd.f32 0.0, %v545
      %547 = vmatmul.bf16.gmra.mxu0 %v443
      %v548 = vpop.f32.mrf.mxu0
      %v549 = vadd.f32 0.0, %v548
      %v550 = vpop.f32.mrf.mxu0
      %v551 = vadd.f32 0.0, %v550
      %552 = vmatmul.bf16.gmra.mxu0 %v444
      %v553 = vpop.f32.mrf.mxu0
      %v554 = vadd.f32 0.0, %v553
      %v555 = vpop.f32.mrf.mxu0
      %v556 = vadd.f32 0.0, %v555
      %557 = vmatmul.bf16.gmra.mxu0 %v445
      %v558 = vpop.f32.mrf.mxu0
      %v559 = vadd.f32 0.0, %v558
      %v560 = vpop.f32.mrf.mxu0
      %v561 = vadd.f32 0.0, %v560
      %562 = vmatmul.bf16.gmra.mxu0 %v446
      %v563 = vpop.f32.mrf.mxu0
      %v564 = vadd.f32 0.0, %v563
      %v565 = vpop.f32.mrf.mxu0
      %v566 = vadd.f32 0.0, %v565
      %567 = vmatmul.bf16.gmra.mxu0 %v447
      %v568 = vpop.f32.mrf.mxu0
      %v569 = vadd.f32 0.0, %v568
      %v570 = vpop.f32.mrf.mxu0
      %v571 = vadd.f32 0.0, %v570
      %572 = vmatmul.bf16.gmra.mxu0 %v448
      %v573 = vpop.f32.mrf.mxu0
      %v574 = vadd.f32 0.0, %v573
      %v575 = vpop.f32.mrf.mxu0
      %v576 = vadd.f32 0.0, %v575
      %577 = vmatmul.bf16.gmra.mxu0 %v449
      %v578 = vpop.f32.mrf.mxu0
      %v579 = vadd.f32 0.0, %v578
      %v580 = vpop.f32.mrf.mxu0
      %v581 = vadd.f32 0.0, %v580
      %582 = vmatmul.bf16.gmra.mxu0 %v450
      %v583 = vpop.f32.mrf.mxu0
      %v584 = vadd.f32 0.0, %v583
      %v585 = vpop.f32.mrf.mxu0
      %v586 = vadd.f32 0.0, %v585
      %587 = vmatmul.bf16.gmra.mxu0 %v451
      %v588 = vpop.f32.mrf.mxu0
      %v589 = vadd.f32 0.0, %v588
      %v590 = vpop.f32.mrf.mxu0
      %v591 = vadd.f32 0.0, %v590
      %592 = vmatmul.bf16.gmra.mxu0 %v452
      %v593 = vpop.f32.mrf.mxu0
      %v594 = vadd.f32 0.0, %v593
      %v595 = vpop.f32.mrf.mxu0
      %v596 = vadd.f32 0.0, %v595
      %597 = vmatmul.bf16.gmra.mxu0 %v453
      %v598 = vpop.f32.mrf.mxu0
      %v599 = vadd.f32 0.0, %v598
      %v600 = vpop.f32.mrf.mxu0
      %v601 = vadd.f32 0.0, %v600
      %602 = vmatmul.bf16.gmra.mxu0 %v454
      %v603 = vpop.f32.mrf.mxu0
      %v604 = vadd.f32 0.0, %v603
      %v605 = vpop.f32.mrf.mxu0
      %v606 = vadd.f32 0.0, %v605
      %607 = vmatmul.bf16.gmra.mxu0 %v455
      %v608 = vpop.f32.mrf.mxu0
      %v609 = vadd.f32 0.0, %v608
      %v610 = vpop.f32.mrf.mxu0
      %v611 = vadd.f32 0.0, %v610
      %612 = vmatmul.bf16.gmra.mxu0 %v456
      %v613 = vpop.f32.mrf.mxu0
      %v614 = vadd.f32 0.0, %v613
      %v615 = vpop.f32.mrf.mxu0
      %v616 = vadd.f32 0.0, %v615
      %617 = vmatmul.bf16.gmra.mxu0 %v457
      %v618 = vpop.f32.mrf.mxu0
      %v619 = vadd.f32 0.0, %v618
      %v620 = vpop.f32.mrf.mxu0
      %v621 = vadd.f32 0.0, %v620
      %622 = vdwg.mxu0
      %623 = vst [vmem:[#allocation4] sm:$0xff] %v534
      %624 = vst [vmem:[#allocation4 + $0x8] sm:$0xff] %v536
      %625 = vst [vmem:[#allocation4 + $0x10] sm:$0xff] %v539
      %626 = vst [vmem:[#allocation4 + $0x18] sm:$0xff] %v541
      %627 = vst [vmem:[#allocation4 + $0x20] sm:$0xff] %v544
      %628 = vst [vmem:[#allocation4 + $0x28] sm:$0xff] %v546
      %629 = vst [vmem:[#allocation4 + $0x30] sm:$0xff] %v549
      %630 = vst [vmem:[#allocation4 + $0x38] sm:$0xff] %v551
      %631 = vst [vmem:[#allocation4 + $0x40] sm:$0xff] %v554
      %632 = vst [vmem:[#allocation4 + $0x48] sm:$0xff] %v556
      %633 = vst [vmem:[#allocation4 + $0x50] sm:$0xff] %v559
      %634 = vst [vmem:[#allocation4 + $0x58] sm:$0xff] %v561
      %635 = vst [vmem:[#allocation4 + $0x60] sm:$0xff] %v564
      %636 = vst [vmem:[#allocation4 + $0x68] sm:$0xff] %v566
      %637 = vst [vmem:[#allocation4 + $0x70] sm:$0xff] %v569
      %638 = vst [vmem:[#allocation4 + $0x78] sm:$0xff] %v571
      %639 = vst [vmem:[#allocation4 + $0x80] sm:$0xff] %v574
      %640 = vst [vmem:[#allocation4 + $0x88] sm:$0xff] %v576
      %641 = vst [vmem:[#allocation4 + $0x90] sm:$0xff] %v579
      %642 = vst [vmem:[#allocation4 + $0x98] sm:$0xff] %v581
      %643 = vst [vmem:[#allocation4 + $0xa0] sm:$0xff] %v584
      %644 = vst [vmem:[#allocation4 + $0xa8] sm:$0xff] %v586
      %645 = vst [vmem:[#allocation4 + $0xb0] sm:$0xff] %v589
      %646 = vst [vmem:[#allocation4 + $0xb8] sm:$0xff] %v591
      %647 = vst [vmem:[#allocation4 + $0xc0] sm:$0xff] %v594
      %648 = vst [vmem:[#allocation4 + $0xc8] sm:$0xff] %v596
      %649 = vst [vmem:[#allocation4 + $0xd0] sm:$0xff] %v599
      %650 = vst [vmem:[#allocation4 + $0xd8] sm:$0xff] %v601
      %651 = vst [vmem:[#allocation4 + $0xe0] sm:$0xff] %v604
      %652 = vst [vmem:[#allocation4 + $0xe8] sm:$0xff] %v606
      %653 = vst [vmem:[#allocation4 + $0xf0] sm:$0xff] %v609
      %654 = vst [vmem:[#allocation4 + $0xf8] sm:$0xff] %v611
      %655 = vst [vmem:[#allocation4 + $0x100] sm:$0xff] %v614
      %656 = vst [vmem:[#allocation4 + $0x108] sm:$0xff] %v616
      %657 = vst [vmem:[#allocation4 + $0x110] sm:$0xff] %v619
      %658 = vst [vmem:[#allocation4 + $0x118] sm:$0xff] %v621
      %v659 = vld [vmem:[#allocation4] sm:$0xff]
      %v660 = vld [vmem:[#allocation4 + $0x8] sm:$0xff]
      %v661 = vld [vmem:[#allocation4 + $0x10] sm:$0xff]
      %v662 = vld [vmem:[#allocation4 + $0x18] sm:$0xff]
      %v663 = vld [vmem:[#allocation4 + $0x20] sm:$0xff]
      %v664 = vld [vmem:[#allocation4 + $0x28] sm:$0xff]
      %v665 = vld [vmem:[#allocation4 + $0x30] sm:$0xff]
      %v666 = vld [vmem:[#allocation4 + $0x38] sm:$0xff]
      %v667 = vld [vmem:[#allocation4 + $0x40] sm:$0xff]
      %v668 = vld [vmem:[#allocation4 + $0x48] sm:$0xff]
      %v669 = vld [vmem:[#allocation4 + $0x50] sm:$0xff]
      %v670 = vld [vmem:[#allocation4 + $0x58] sm:$0xff]
      %v671 = vld [vmem:[#allocation4 + $0x60] sm:$0xff]
      %v672 = vld [vmem:[#allocation4 + $0x68] sm:$0xff]
      %v673 = vld [vmem:[#allocation4 + $0x70] sm:$0xff]
      %v674 = vld [vmem:[#allocation4 + $0x78] sm:$0xff]
      %v675 = vld [vmem:[#allocation4 + $0x80] sm:$0xff]
      %v676 = vld [vmem:[#allocation4 + $0x88] sm:$0xff]
      %v677 = vld [vmem:[#allocation4 + $0x90] sm:$0xff]
      %v678 = vld [vmem:[#allocation4 + $0x98] sm:$0xff]
      %v679 = vld [vmem:[#allocation4 + $0xa0] sm:$0xff]
      %v680 = vld [vmem:[#allocation4 + $0xa8] sm:$0xff]
      %v681 = vld [vmem:[#allocation4 + $0xb0] sm:$0xff]
      %v682 = vld [vmem:[#allocation4 + $0xb8] sm:$0xff]
      %v683 = vld [vmem:[#allocation4 + $0xc0] sm:$0xff]
      %v684 = vld [vmem:[#allocation4 + $0xc8] sm:$0xff]
      %v685 = vld [vmem:[#allocation4 + $0xd0] sm:$0xff]
      %v686 = vld [vmem:[#allocation4 + $0xd8] sm:$0xff]
      %v687 = vld [vmem:[#allocation4 + $0xe0] sm:$0xff]
      %v688 = vld [vmem:[#allocation4 + $0xe8] sm:$0xff]
      %v689 = vld [vmem:[#allocation4 + $0xf0] sm:$0xff]
      %v690 = vld [vmem:[#allocation4 + $0xf8] sm:$0xff]
      %v691 = vld [vmem:[#allocation4 + $0x100] sm:$0xff]
      %v692 = vld [vmem:[#allocation4 + $0x108] sm:$0xff]
      %v693 = vld [vmem:[#allocation4 + $0x110] sm:$0xff]
      %v694 = vld [vmem:[#allocation4 + $0x118] sm:$0xff]
      %v695 = vld [vmem:[%s310] sm:$0xf]
      %v696 = vld [vmem:[%s310 + $0x4] sm:$0xf]
      %v697 = vld [vmem:[%s310 + $0x8] sm:$0xf]
      %v698 = vld [vmem:[%s310 + $0xc] sm:$0xf]
      %v699 = vld [vmem:[%s310 + $0x10] sm:$0xf]
      %v700 = vld [vmem:[%s310 + $0x14] sm:$0xf]
      %v701 = vld [vmem:[%s310 + $0x18] sm:$0xf]
      %v702 = vld [vmem:[%s310 + $0x1c] sm:$0xf]
      %v703 = vld [vmem:[%s310 + $0x20] sm:$0xf]
      %v704 = vld [vmem:[%s310 + $0x24] sm:$0xf]
      %v705 = vld [vmem:[%s310 + $0x28] sm:$0xf]
      %v706 = vld [vmem:[%s310 + $0x2c] sm:$0xf]
      %v707 = vld [vmem:[%s310 + $0x30] sm:$0xf]
      %v708 = vld [vmem:[%s310 + $0x34] sm:$0xf]
      %v709 = vld [vmem:[%s310 + $0x38] sm:$0xf]
      %v710 = vld [vmem:[%s310 + $0x3c] sm:$0xf]
      %v711 = vld [vmem:[%s310 + $0x40] sm:$0xf]
      %v712 = vld [vmem:[%s310 + $0x44] sm:$0xf]
      %v713 = vld [vmem:[%s310 + $0x48] sm:$0xf]
      %v714 = vld [vmem:[%s310 + $0x4c] sm:$0xf]
      %v715 = vld [vmem:[%s310 + $0x50] sm:$0xf]
      %v716 = vld [vmem:[%s310 + $0x54] sm:$0xf]
      %v717 = vld [vmem:[%s310 + $0x58] sm:$0xf]
      %v718 = vld [vmem:[%s310 + $0x5c] sm:$0xf]
      %v719 = vld [vmem:[%s310 + $0x60] sm:$0xf]
      %v720 = vld [vmem:[%s310 + $0x64] sm:$0xf]
      %v721 = vld [vmem:[%s310 + $0x68] sm:$0xf]
      %v722 = vld [vmem:[%s310 + $0x6c] sm:$0xf]
      %v723 = vld [vmem:[%s310 + $0x70] sm:$0xf]
      %v724 = vld [vmem:[%s310 + $0x74] sm:$0xf]
      %v725 = vld [vmem:[%s310 + $0x78] sm:$0xf]
      %v726 = vld [vmem:[%s310 + $0x7c] sm:$0xf]
      %v727 = vld [vmem:[%s310 + $0x80] sm:$0xf]
      %v728 = vld [vmem:[%s310 + $0x84] sm:$0xf]
      %v729 = vld [vmem:[%s310 + $0x88] sm:$0xf]
      %v730 = vld [vmem:[%s310 + $0x8c] sm:$0xf]
      %v731 = vld [vmem:[%s310 + $0x90] sm:$0x1]
      %s732 = scalar_lea.vmem %s1, 64
      %v733 = vld [vmem:[%s732] sm:$0xf]
      %v734 = vld [vmem:[%s732 + $0x4] sm:$0xf]
      %v735 = vld [vmem:[%s732 + $0x8] sm:$0xf]
      %v736 = vld [vmem:[%s732 + $0xc] sm:$0xf]
      %v737 = vld [vmem:[%s732 + $0x10] sm:$0xf]
      %v738 = vld [vmem:[%s732 + $0x14] sm:$0xf]
      %v739 = vld [vmem:[%s732 + $0x18] sm:$0xf]
      %v740 = vld [vmem:[%s732 + $0x1c] sm:$0xf]
      %v741 = vld [vmem:[%s732 + $0x20] sm:$0xf]
      %v742 = vld [vmem:[%s732 + $0x24] sm:$0xf]
      %v743 = vld [vmem:[%s732 + $0x28] sm:$0xf]
      %v744 = vld [vmem:[%s732 + $0x2c] sm:$0xf]
      %v745 = vld [vmem:[%s732 + $0x30] sm:$0xf]
      %v746 = vld [vmem:[%s732 + $0x34] sm:$0xf]
      %v747 = vld [vmem:[%s732 + $0x38] sm:$0xf]
      %v748 = vld [vmem:[%s732 + $0x3c] sm:$0xf]
      %v786 = vunpack.c.l.b16 %v695
      %v787 = vunpack.c.l.b16 %v696
      %v788 = vunpack.c.l.b16 %v697
      %v789 = vunpack.c.l.b16 %v698
      %v790 = vunpack.c.l.b16 %v699
      %v791 = vunpack.c.l.b16 %v700
      %v792 = vunpack.c.l.b16 %v701
      %v793 = vunpack.c.l.b16 %v702
      %v794 = vunpack.c.l.b16 %v703
      %v795 = vunpack.c.l.b16 %v704
      %v796 = vunpack.c.l.b16 %v705
      %v797 = vunpack.c.l.b16 %v706
      %v798 = vunpack.c.l.b16 %v707
      %v799 = vunpack.c.l.b16 %v708
      %v800 = vunpack.c.l.b16 %v709
      %v801 = vunpack.c.l.b16 %v710
      %v802 = vunpack.c.l.b16 %v711
      %v803 = vunpack.c.l.b16 %v712
      %v804 = vunpack.c.l.b16 %v713
      %v805 = vunpack.c.l.b16 %v714
      %v806 = vunpack.c.l.b16 %v715
      %v807 = vunpack.c.l.b16 %v716
      %v808 = vunpack.c.l.b16 %v717
      %v809 = vunpack.c.l.b16 %v718
      %v810 = vunpack.c.l.b16 %v719
      %v811 = vunpack.c.l.b16 %v720
      %v812 = vunpack.c.l.b16 %v721
      %v813 = vunpack.c.l.b16 %v722
      %v814 = vunpack.c.l.b16 %v723
      %v815 = vunpack.c.l.b16 %v724
      %v816 = vunpack.c.l.b16 %v725
      %v817 = vunpack.c.l.b16 %v726
      %v818 = vunpack.c.l.b16 %v727
      %v819 = vunpack.c.l.b16 %v728
      %v820 = vunpack.c.l.b16 %v729
      %v821 = vunpack.c.l.b16 %v730
      %v822 = vunpack.c.l.b16 %v731
      %v823 = vpack.c.b16 %v787, %v786
      %v824 = vpack.c.b16 %v789, %v788
      %v825 = vpack.c.b16 %v791, %v790
      %v826 = vpack.c.b16 %v793, %v792
      %v827 = vpack.c.b16 %v795, %v794
      %v828 = vpack.c.b16 %v797, %v796
      %v829 = vpack.c.b16 %v799, %v798
      %v830 = vpack.c.b16 %v801, %v800
      %v831 = vpack.c.b16 %v803, %v802
      %v832 = vpack.c.b16 %v805, %v804
      %v833 = vpack.c.b16 %v807, %v806
      %v834 = vpack.c.b16 %v809, %v808
      %v835 = vpack.c.b16 %v811, %v810
      %v836 = vpack.c.b16 %v813, %v812
      %v837 = vpack.c.b16 %v815, %v814
      %v838 = vpack.c.b16 %v817, %v816
      %v839 = vpack.c.b16 %v819, %v818
      %v840 = vpack.c.b16 %v821, %v820
      %v841 = vpack.c.b16 %v822, %v822
      %vm842 = vsmask.f32 7424
      %v844 = vshrl.u32 %v823, 16
      %v846 = vshll.u32 %v823, 16
      %v848 = vrot.slane %v846, 1
      %v849 = vor.u32 %v844, %v848
      %v851 = vshll.u32 %v824, 16
      %v853 = vrot.slane %v851, 1
      %v854 = vsel %vm842, %v849, %v853
      %v855 = vshrl.u32 %v824, 16
      %v857 = vor.u32 %v855, %v853
      %v859 = vshll.u32 %v825, 16
      %v861 = vrot.slane %v859, 1
      %v862 = vsel %vm842, %v857, %v861
      %v863 = vshrl.u32 %v825, 16
      %v865 = vor.u32 %v863, %v861
      %v867 = vshll.u32 %v826, 16
      %v869 = vrot.slane %v867, 1
      %v870 = vsel %vm842, %v865, %v869
      %v871 = vshrl.u32 %v826, 16
      %v873 = vor.u32 %v871, %v869
      %v875 = vshll.u32 %v827, 16
      %v877 = vrot.slane %v875, 1
      %v878 = vsel %vm842, %v873, %v877
      %v879 = vshrl.u32 %v827, 16
      %v881 = vor.u32 %v879, %v877
      %v883 = vshll.u32 %v828, 16
      %v885 = vrot.slane %v883, 1
      %v886 = vsel %vm842, %v881, %v885
      %v887 = vshrl.u32 %v828, 16
      %v889 = vor.u32 %v887, %v885
      %v891 = vshll.u32 %v829, 16
      %v893 = vrot.slane %v891, 1
      %v894 = vsel %vm842, %v889, %v893
      %v895 = vshrl.u32 %v829, 16
      %v897 = vor.u32 %v895, %v893
      %v899 = vshll.u32 %v830, 16
      %v901 = vrot.slane %v899, 1
      %v902 = vsel %vm842, %v897, %v901
      %v903 = vshrl.u32 %v830, 16
      %v905 = vor.u32 %v903, %v901
      %v907 = vshll.u32 %v831, 16
      %v909 = vrot.slane %v907, 1
      %v910 = vsel %vm842, %v905, %v909
      %v911 = vshrl.u32 %v831, 16
      %v913 = vor.u32 %v911, %v909
      %v915 = vshll.u32 %v832, 16
      %v917 = vrot.slane %v915, 1
      %v918 = vsel %vm842, %v913, %v917
      %v919 = vshrl.u32 %v832, 16
      %v921 = vor.u32 %v919, %v917
      %v923 = vshll.u32 %v833, 16
      %v925 = vrot.slane %v923, 1
      %v926 = vsel %vm842, %v921, %v925
      %v927 = vshrl.u32 %v833, 16
      %v929 = vor.u32 %v927, %v925
      %v931 = vshll.u32 %v834, 16
      %v933 = vrot.slane %v931, 1
      %v934 = vsel %vm842, %v929, %v933
      %v935 = vshrl.u32 %v834, 16
      %v937 = vor.u32 %v935, %v933
      %v939 = vshll.u32 %v835, 16
      %v941 = vrot.slane %v939, 1
      %v942 = vsel %vm842, %v937, %v941
      %v943 = vshrl.u32 %v835, 16
      %v945 = vor.u32 %v943, %v941
      %v947 = vshll.u32 %v836, 16
      %v949 = vrot.slane %v947, 1
      %v950 = vsel %vm842, %v945, %v949
      %v951 = vshrl.u32 %v836, 16
      %v953 = vor.u32 %v951, %v949
      %v955 = vshll.u32 %v837, 16
      %v957 = vrot.slane %v955, 1
      %v958 = vsel %vm842, %v953, %v957
      %v959 = vshrl.u32 %v837, 16
      %v961 = vor.u32 %v959, %v957
      %v963 = vshll.u32 %v838, 16
      %v965 = vrot.slane %v963, 1
      %v966 = vsel %vm842, %v961, %v965
      %v967 = vshrl.u32 %v838, 16
      %v969 = vor.u32 %v967, %v965
      %v971 = vshll.u32 %v839, 16
      %v973 = vrot.slane %v971, 1
      %v974 = vsel %vm842, %v969, %v973
      %v975 = vshrl.u32 %v839, 16
      %v977 = vor.u32 %v975, %v973
      %v979 = vshll.u32 %v840, 16
      %v981 = vrot.slane %v979, 1
      %v982 = vsel %vm842, %v977, %v981
      %v983 = vshrl.u32 %v840, 16
      %v985 = vor.u32 %v983, %v981
      %v987 = vshll.u32 %v841, 16
      %v989 = vrot.slane %v987, 1
      %v990 = vsel %vm842, %v985, %v989
      %v1025 = vunpack.c.l.b16 %v733
      %v1026 = vunpack.c.l.b16 %v734
      %v1027 = vunpack.c.l.b16 %v735
      %v1028 = vunpack.c.l.b16 %v736
      %v1029 = vunpack.c.l.b16 %v737
      %v1030 = vunpack.c.l.b16 %v738
      %v1031 = vunpack.c.l.b16 %v739
      %v1032 = vunpack.c.l.b16 %v740
      %v1033 = vunpack.c.l.b16 %v741
      %v1034 = vunpack.c.l.b16 %v742
      %v1035 = vunpack.c.l.b16 %v743
      %v1036 = vunpack.c.l.b16 %v744
      %v1037 = vunpack.c.l.b16 %v745
      %v1038 = vunpack.c.l.b16 %v746
      %v1039 = vunpack.c.l.b16 %v747
      %v1040 = vunpack.c.l.b16 %v748
      %v1041 = vpack.c.b16 %v1026, %v1025
      %v1042 = vpack.c.b16 %v1028, %v1027
      %v1043 = vpack.c.b16 %v1030, %v1029
      %v1044 = vpack.c.b16 %v1032, %v1031
      %v1045 = vpack.c.b16 %v1034, %v1033
      %v1046 = vpack.c.b16 %v1036, %v1035
      %v1047 = vpack.c.b16 %v1038, %v1037
      %v1048 = vpack.c.b16 %v1040, %v1039
      %1057 = vmatpush.bf16.msra.mxu0 %v1048
      %1058 = vmatpush.bf16.msra.mxu0 %v1047
      %1059 = vmatpush.bf16.msra.mxu0 %v1046
      %1060 = vmatpush.bf16.msra.mxu0 %v1045
      %1061 = vmatpush.bf16.msra.mxu0 %v1044
      %1062 = vmatpush.bf16.msra.mxu0 %v1043
      %1063 = vmatpush.bf16.msra.mxu0 %v1042
      %1064 = vmatpush.bf16.msra.mxu0 %v1041
      %1065 = vmatmul.bf16.gmra.mxu0 %v854
      %v1066 = vpop.f32.mrf.mxu0
      %v1067 = vadd.f32 0.0, %v1066
      %v1068 = vpop.f32.mrf.mxu0
      %v1069 = vadd.f32 0.0, %v1068
      %1070 = vmatmul.bf16.gmra.mxu0 %v862
      %v1071 = vpop.f32.mrf.mxu0
      %v1072 = vadd.f32 0.0, %v1071
      %v1073 = vpop.f32.mrf.mxu0
      %v1074 = vadd.f32 0.0, %v1073
      %1075 = vmatmul.bf16.gmra.mxu0 %v870
      %v1076 = vpop.f32.mrf.mxu0
      %v1077 = vadd.f32 0.0, %v1076
      %v1078 = vpop.f32.mrf.mxu0
      %v1079 = vadd.f32 0.0, %v1078
      %1080 = vmatmul.bf16.gmra.mxu0 %v878
      %v1081 = vpop.f32.mrf.mxu0
      %v1082 = vadd.f32 0.0, %v1081
      %v1083 = vpop.f32.mrf.mxu0
      %v1084 = vadd.f32 0.0, %v1083
      %1085 = vmatmul.bf16.gmra.mxu0 %v886
      %v1086 = vpop.f32.mrf.mxu0
      %v1087 = vadd.f32 0.0, %v1086
      %v1088 = vpop.f32.mrf.mxu0
      %v1089 = vadd.f32 0.0, %v1088
      %1090 = vmatmul.bf16.gmra.mxu0 %v894
      %v1091 = vpop.f32.mrf.mxu0
      %v1092 = vadd.f32 0.0, %v1091
      %v1093 = vpop.f32.mrf.mxu0
      %v1094 = vadd.f32 0.0, %v1093
      %1095 = vmatmul.bf16.gmra.mxu0 %v902
      %v1096 = vpop.f32.mrf.mxu0
      %v1097 = vadd.f32 0.0, %v1096
      %v1098 = vpop.f32.mrf.mxu0
      %v1099 = vadd.f32 0.0, %v1098
      %1100 = vmatmul.bf16.gmra.mxu0 %v910
      %v1101 = vpop.f32.mrf.mxu0
      %v1102 = vadd.f32 0.0, %v1101
      %v1103 = vpop.f32.mrf.mxu0
      %v1104 = vadd.f32 0.0, %v1103
      %1105 = vmatmul.bf16.gmra.mxu0 %v918
      %v1106 = vpop.f32.mrf.mxu0
      %v1107 = vadd.f32 0.0, %v1106
      %v1108 = vpop.f32.mrf.mxu0
      %v1109 = vadd.f32 0.0, %v1108
      %1110 = vmatmul.bf16.gmra.mxu0 %v926
      %v1111 = vpop.f32.mrf.mxu0
      %v1112 = vadd.f32 0.0, %v1111
      %v1113 = vpop.f32.mrf.mxu0
      %v1114 = vadd.f32 0.0, %v1113
      %1115 = vmatmul.bf16.gmra.mxu0 %v934
      %v1116 = vpop.f32.mrf.mxu0
      %v1117 = vadd.f32 0.0, %v1116
      %v1118 = vpop.f32.mrf.mxu0
      %v1119 = vadd.f32 0.0, %v1118
      %1120 = vmatmul.bf16.gmra.mxu0 %v942
      %v1121 = vpop.f32.mrf.mxu0
      %v1122 = vadd.f32 0.0, %v1121
      %v1123 = vpop.f32.mrf.mxu0
      %v1124 = vadd.f32 0.0, %v1123
      %1125 = vmatmul.bf16.gmra.mxu0 %v950
      %v1126 = vpop.f32.mrf.mxu0
      %v1127 = vadd.f32 0.0, %v1126
      %v1128 = vpop.f32.mrf.mxu0
      %v1129 = vadd.f32 0.0, %v1128
      %1130 = vmatmul.bf16.gmra.mxu0 %v958
      %v1131 = vpop.f32.mrf.mxu0
      %v1132 = vadd.f32 0.0, %v1131
      %v1133 = vpop.f32.mrf.mxu0
      %v1134 = vadd.f32 0.0, %v1133
      %1135 = vmatmul.bf16.gmra.mxu0 %v966
      %v1136 = vpop.f32.mrf.mxu0
      %v1137 = vadd.f32 0.0, %v1136
      %v1138 = vpop.f32.mrf.mxu0
      %v1139 = vadd.f32 0.0, %v1138
      %1140 = vmatmul.bf16.gmra.mxu0 %v974
      %v1141 = vpop.f32.mrf.mxu0
      %v1142 = vadd.f32 0.0, %v1141
      %v1143 = vpop.f32.mrf.mxu0
      %v1144 = vadd.f32 0.0, %v1143
      %1145 = vmatmul.bf16.gmra.mxu0 %v982
      %v1146 = vpop.f32.mrf.mxu0
      %v1147 = vadd.f32 0.0, %v1146
      %v1148 = vpop.f32.mrf.mxu0
      %v1149 = vadd.f32 0.0, %v1148
      %1150 = vmatmul.bf16.gmra.mxu0 %v990
      %v1151 = vpop.f32.mrf.mxu0
      %v1152 = vadd.f32 0.0, %v1151
      %v1153 = vpop.f32.mrf.mxu0
      %v1154 = vadd.f32 0.0, %v1153
      %1155 = vdwg.mxu0
      %v1156 = vadd.f32 %v659, %v1067
      %v1157 = vadd.f32 %v660, %v1069
      %v1158 = vadd.f32 %v661, %v1072
      %v1159 = vadd.f32 %v662, %v1074
      %v1160 = vadd.f32 %v663, %v1077
      %v1161 = vadd.f32 %v664, %v1079
      %v1162 = vadd.f32 %v665, %v1082
      %v1163 = vadd.f32 %v666, %v1084
      %v1164 = vadd.f32 %v667, %v1087
      %v1165 = vadd.f32 %v668, %v1089
      %v1166 = vadd.f32 %v669, %v1092
      %v1167 = vadd.f32 %v670, %v1094
      %v1168 = vadd.f32 %v671, %v1097
      %v1169 = vadd.f32 %v672, %v1099
      %v1170 = vadd.f32 %v673, %v1102
      %v1171 = vadd.f32 %v674, %v1104
      %v1172 = vadd.f32 %v675, %v1107
      %v1173 = vadd.f32 %v676, %v1109
      %v1174 = vadd.f32 %v677, %v1112
      %v1175 = vadd.f32 %v678, %v1114
      %v1176 = vadd.f32 %v679, %v1117
      %v1177 = vadd.f32 %v680, %v1119
      %v1178 = vadd.f32 %v681, %v1122
      %v1179 = vadd.f32 %v682, %v1124
      %v1180 = vadd.f32 %v683, %v1127
      %v1181 = vadd.f32 %v684, %v1129
      %v1182 = vadd.f32 %v685, %v1132
      %v1183 = vadd.f32 %v686, %v1134
      %v1184 = vadd.f32 %v687, %v1137
      %v1185 = vadd.f32 %v688, %v1139
      %v1186 = vadd.f32 %v689, %v1142
      %v1187 = vadd.f32 %v690, %v1144
      %v1188 = vadd.f32 %v691, %v1147
      %v1189 = vadd.f32 %v692, %v1149
      %v1190 = vadd.f32 %v693, %v1152
      %v1191 = vadd.f32 %v694, %v1154
      %1192 = vst [vmem:[#allocation4] sm:$0xff] %v1156
      %1193 = vst [vmem:[#allocation4 + $0x8] sm:$0xff] %v1157
      %1194 = vst [vmem:[#allocation4 + $0x10] sm:$0xff] %v1158
      %1195 = vst [vmem:[#allocation4 + $0x18] sm:$0xff] %v1159
      %1196 = vst [vmem:[#allocation4 + $0x20] sm:$0xff] %v1160
      %1197 = vst [vmem:[#allocation4 + $0x28] sm:$0xff] %v1161
      %1198 = vst [vmem:[#allocation4 + $0x30] sm:$0xff] %v1162
      %1199 = vst [vmem:[#allocation4 + $0x38] sm:$0xff] %v1163
      %1200 = vst [vmem:[#allocation4 + $0x40] sm:$0xff] %v1164
      %1201 = vst [vmem:[#allocation4 + $0x48] sm:$0xff] %v1165
      %1202 = vst [vmem:[#allocation4 + $0x50] sm:$0xff] %v1166
      %1203 = vst [vmem:[#allocation4 + $0x58] sm:$0xff] %v1167
      %1204 = vst [vmem:[#allocation4 + $0x60] sm:$0xff] %v1168
      %1205 = vst [vmem:[#allocation4 + $0x68] sm:$0xff] %v1169
      %1206 = vst [vmem:[#allocation4 + $0x70] sm:$0xff] %v1170
      %1207 = vst [vmem:[#allocation4 + $0x78] sm:$0xff] %v1171
      %1208 = vst [vmem:[#allocation4 + $0x80] sm:$0xff] %v1172
      %1209 = vst [vmem:[#allocation4 + $0x88] sm:$0xff] %v1173
      %1210 = vst [vmem:[#allocation4 + $0x90] sm:$0xff] %v1174
      %1211 = vst [vmem:[#allocation4 + $0x98] sm:$0xff] %v1175
      %1212 = vst [vmem:[#allocation4 + $0xa0] sm:$0xff] %v1176
      %1213 = vst [vmem:[#allocation4 + $0xa8] sm:$0xff] %v1177
      %1214 = vst [vmem:[#allocation4 + $0xb0] sm:$0xff] %v1178
      %1215 = vst [vmem:[#allocation4 + $0xb8] sm:$0xff] %v1179
      %1216 = vst [vmem:[#allocation4 + $0xc0] sm:$0xff] %v1180
      %1217 = vst [vmem:[#allocation4 + $0xc8] sm:$0xff] %v1181
      %1218 = vst [vmem:[#allocation4 + $0xd0] sm:$0xff] %v1182
      %1219 = vst [vmem:[#allocation4 + $0xd8] sm:$0xff] %v1183
      %1220 = vst [vmem:[#allocation4 + $0xe0] sm:$0xff] %v1184
      %1221 = vst [vmem:[#allocation4 + $0xe8] sm:$0xff] %v1185
      %1222 = vst [vmem:[#allocation4 + $0xf0] sm:$0xff] %v1186
      %1223 = vst [vmem:[#allocation4 + $0xf8] sm:$0xff] %v1187
      %1224 = vst [vmem:[#allocation4 + $0x100] sm:$0xff] %v1188
      %1225 = vst [vmem:[#allocation4 + $0x108] sm:$0xff] %v1189
      %1226 = vst [vmem:[#allocation4 + $0x110] sm:$0xff] %v1190
      %1227 = vst [vmem:[#allocation4 + $0x118] sm:$0xff] %v1191
      %v1228 = vld [vmem:[#allocation4] sm:$0xff]
      %v1229 = vld [vmem:[#allocation4 + $0x8] sm:$0xff]
      %v1230 = vld [vmem:[#allocation4 + $0x10] sm:$0xff]
      %v1231 = vld [vmem:[#allocation4 + $0x18] sm:$0xff]
      %v1232 = vld [vmem:[#allocation4 + $0x20] sm:$0xff]
      %v1233 = vld [vmem:[#allocation4 + $0x28] sm:$0xff]
      %v1234 = vld [vmem:[#allocation4 + $0x30] sm:$0xff]
      %v1235 = vld [vmem:[#allocation4 + $0x38] sm:$0xff]
      %v1236 = vld [vmem:[#allocation4 + $0x40] sm:$0xff]
      %v1237 = vld [vmem:[#allocation4 + $0x48] sm:$0xff]
      %v1238 = vld [vmem:[#allocation4 + $0x50] sm:$0xff]
      %v1239 = vld [vmem:[#allocation4 + $0x58] sm:$0xff]
      %v1240 = vld [vmem:[#allocation4 + $0x60] sm:$0xff]
      %v1241 = vld [vmem:[#allocation4 + $0x68] sm:$0xff]
      %v1242 = vld [vmem:[#allocation4 + $0x70] sm:$0xff]
      %v1243 = vld [vmem:[#allocation4 + $0x78] sm:$0xff]
      %v1244 = vld [vmem:[#allocation4 + $0x80] sm:$0xff]
      %v1245 = vld [vmem:[#allocation4 + $0x88] sm:$0xff]
      %v1246 = vld [vmem:[#allocation4 + $0x90] sm:$0xff]
      %v1247 = vld [vmem:[#allocation4 + $0x98] sm:$0xff]
      %v1248 = vld [vmem:[#allocation4 + $0xa0] sm:$0xff]
      %v1249 = vld [vmem:[#allocation4 + $0xa8] sm:$0xff]
      %v1250 = vld [vmem:[#allocation4 + $0xb0] sm:$0xff]
      %v1251 = vld [vmem:[#allocation4 + $0xb8] sm:$0xff]
      %v1252 = vld [vmem:[#allocation4 + $0xc0] sm:$0xff]
      %v1253 = vld [vmem:[#allocation4 + $0xc8] sm:$0xff]
      %v1254 = vld [vmem:[#allocation4 + $0xd0] sm:$0xff]
      %v1255 = vld [vmem:[#allocation4 + $0xd8] sm:$0xff]
      %v1256 = vld [vmem:[#allocation4 + $0xe0] sm:$0xff]
      %v1257 = vld [vmem:[#allocation4 + $0xe8] sm:$0xff]
      %v1258 = vld [vmem:[#allocation4 + $0xf0] sm:$0xff]
      %v1259 = vld [vmem:[#allocation4 + $0xf8] sm:$0xff]
      %v1260 = vld [vmem:[#allocation4 + $0x100] sm:$0xff]
      %v1261 = vld [vmem:[#allocation4 + $0x108] sm:$0xff]
      %v1262 = vld [vmem:[#allocation4 + $0x110] sm:$0xff]
      %v1263 = vld [vmem:[#allocation4 + $0x118] sm:$0xff]
      %v1264 = vld [vmem:[%s310] sm:$0xe]
      %v1265 = vld [vmem:[%s310 + $0x4] sm:$0xf]
      %v1266 = vld [vmem:[%s310 + $0x8] sm:$0xf]
      %v1267 = vld [vmem:[%s310 + $0xc] sm:$0xf]
      %v1268 = vld [vmem:[%s310 + $0x10] sm:$0xf]
      %v1269 = vld [vmem:[%s310 + $0x14] sm:$0xf]
      %v1270 = vld [vmem:[%s310 + $0x18] sm:$0xf]
      %v1271 = vld [vmem:[%s310 + $0x1c] sm:$0xf]
      %v1272 = vld [vmem:[%s310 + $0x20] sm:$0xf]
      %v1273 = vld [vmem:[%s310 + $0x24] sm:$0xf]
      %v1274 = vld [vmem:[%s310 + $0x28] sm:$0xf]
      %v1275 = vld [vmem:[%s310 + $0x2c] sm:$0xf]
      %v1276 = vld [vmem:[%s310 + $0x30] sm:$0xf]
      %v1277 = vld [vmem:[%s310 + $0x34] sm:$0xf]
      %v1278 = vld [vmem:[%s310 + $0x38] sm:$0xf]
      %v1279 = vld [vmem:[%s310 + $0x3c] sm:$0xf]
      %v1280 = vld [vmem:[%s310 + $0x40] sm:$0xf]
      %v1281 = vld [vmem:[%s310 + $0x44] sm:$0xf]
      %v1282 = vld [vmem:[%s310 + $0x48] sm:$0xf]
      %v1283 = vld [vmem:[%s310 + $0x4c] sm:$0xf]
      %v1284 = vld [vmem:[%s310 + $0x50] sm:$0xf]
      %v1285 = vld [vmem:[%s310 + $0x54] sm:$0xf]
      %v1286 = vld [vmem:[%s310 + $0x58] sm:$0xf]
      %v1287 = vld [vmem:[%s310 + $0x5c] sm:$0xf]
      %v1288 = vld [vmem:[%s310 + $0x60] sm:$0xf]
      %v1289 = vld [vmem:[%s310 + $0x64] sm:$0xf]
      %v1290 = vld [vmem:[%s310 + $0x68] sm:$0xf]
      %v1291 = vld [vmem:[%s310 + $0x6c] sm:$0xf]
      %v1292 = vld [vmem:[%s310 + $0x70] sm:$0xf]
      %v1293 = vld [vmem:[%s310 + $0x74] sm:$0xf]
      %v1294 = vld [vmem:[%s310 + $0x78] sm:$0xf]
      %v1295 = vld [vmem:[%s310 + $0x7c] sm:$0xf]
      %v1296 = vld [vmem:[%s310 + $0x80] sm:$0xf]
      %v1297 = vld [vmem:[%s310 + $0x84] sm:$0xf]
      %v1298 = vld [vmem:[%s310 + $0x88] sm:$0xf]
      %v1299 = vld [vmem:[%s310 + $0x8c] sm:$0xf]
      %v1300 = vld [vmem:[%s310 + $0x90] sm:$0x1]
      %s1301 = scalar_lea.vmem %s1, 128
      %v1302 = vld [vmem:[%s1301] sm:$0xf]
      %v1303 = vld [vmem:[%s1301 + $0x4] sm:$0xf]
      %v1304 = vld [vmem:[%s1301 + $0x8] sm:$0xf]
      %v1305 = vld [vmem:[%s1301 + $0xc] sm:$0xf]
      %v1306 = vld [vmem:[%s1301 + $0x10] sm:$0xf]
      %v1307 = vld [vmem:[%s1301 + $0x14] sm:$0xf]
      %v1308 = vld [vmem:[%s1301 + $0x18] sm:$0xf]
      %v1309 = vld [vmem:[%s1301 + $0x1c] sm:$0xf]
      %v1310 = vld [vmem:[%s1301 + $0x20] sm:$0xf]
      %v1311 = vld [vmem:[%s1301 + $0x24] sm:$0xf]
      %v1312 = vld [vmem:[%s1301 + $0x28] sm:$0xf]
      %v1313 = vld [vmem:[%s1301 + $0x2c] sm:$0xf]
      %v1314 = vld [vmem:[%s1301 + $0x30] sm:$0xf]
      %v1315 = vld [vmem:[%s1301 + $0x34] sm:$0xf]
      %v1316 = vld [vmem:[%s1301 + $0x38] sm:$0xf]
      %v1317 = vld [vmem:[%s1301 + $0x3c] sm:$0xf]
      %v1355 = vunpack.c.l.b16 %v1264
      %v1356 = vunpack.c.l.b16 %v1265
      %v1357 = vunpack.c.l.b16 %v1266
      %v1358 = vunpack.c.l.b16 %v1267
      %v1359 = vunpack.c.l.b16 %v1268
      %v1360 = vunpack.c.l.b16 %v1269
      %v1361 = vunpack.c.l.b16 %v1270
      %v1362 = vunpack.c.l.b16 %v1271
      %v1363 = vunpack.c.l.b16 %v1272
      %v1364 = vunpack.c.l.b16 %v1273
      %v1365 = vunpack.c.l.b16 %v1274
      %v1366 = vunpack.c.l.b16 %v1275
      %v1367 = vunpack.c.l.b16 %v1276
      %v1368 = vunpack.c.l.b16 %v1277
      %v1369 = vunpack.c.l.b16 %v1278
      %v1370 = vunpack.c.l.b16 %v1279
      %v1371 = vunpack.c.l.b16 %v1280
      %v1372 = vunpack.c.l.b16 %v1281
      %v1373 = vunpack.c.l.b16 %v1282
      %v1374 = vunpack.c.l.b16 %v1283
      %v1375 = vunpack.c.l.b16 %v1284
      %v1376 = vunpack.c.l.b16 %v1285
      %v1377 = vunpack.c.l.b16 %v1286
      %v1378 = vunpack.c.l.b16 %v1287
      %v1379 = vunpack.c.l.b16 %v1288
      %v1380 = vunpack.c.l.b16 %v1289
      %v1381 = vunpack.c.l.b16 %v1290
      %v1382 = vunpack.c.l.b16 %v1291
      %v1383 = vunpack.c.l.b16 %v1292
      %v1384 = vunpack.c.l.b16 %v1293
      %v1385 = vunpack.c.l.b16 %v1294
      %v1386 = vunpack.c.l.b16 %v1295
      %v1387 = vunpack.c.l.b16 %v1296
      %v1388 = vunpack.c.l.b16 %v1297
      %v1389 = vunpack.c.l.b16 %v1298
      %v1390 = vunpack.c.l.b16 %v1299
      %v1391 = vunpack.c.l.b16 %v1300
      %v1392 = vpack.c.b16 %v1356, %v1355
      %v1393 = vpack.c.b16 %v1358, %v1357
      %v1394 = vpack.c.b16 %v1360, %v1359
      %v1395 = vpack.c.b16 %v1362, %v1361
      %v1396 = vpack.c.b16 %v1364, %v1363
      %v1397 = vpack.c.b16 %v1366, %v1365
      %v1398 = vpack.c.b16 %v1368, %v1367
      %v1399 = vpack.c.b16 %v1370, %v1369
      %v1400 = vpack.c.b16 %v1372, %v1371
      %v1401 = vpack.c.b16 %v1374, %v1373
      %v1402 = vpack.c.b16 %v1376, %v1375
      %v1403 = vpack.c.b16 %v1378, %v1377
      %v1404 = vpack.c.b16 %v1380, %v1379
      %v1405 = vpack.c.b16 %v1382, %v1381
      %v1406 = vpack.c.b16 %v1384, %v1383
      %v1407 = vpack.c.b16 %v1386, %v1385
      %v1408 = vpack.c.b16 %v1388, %v1387
      %v1409 = vpack.c.b16 %v1390, %v1389
      %v1410 = vpack.c.b16 %v1391, %v1391
      %vm1411 = vcmask 1046528
      %v1412 = vrot.slane %v1392, 1
      %v1413 = vrot.slane %v1393, 1
      %v1414 = vsel %vm1411, %v1412, %v1413
      %v1415 = vrot.slane %v1394, 1
      %v1416 = vsel %vm1411, %v1413, %v1415
      %v1417 = vrot.slane %v1395, 1
      %v1418 = vsel %vm1411, %v1415, %v1417
      %v1419 = vrot.slane %v1396, 1
      %v1420 = vsel %vm1411, %v1417, %v1419
      %v1421 = vrot.slane %v1397, 1
      %v1422 = vsel %vm1411, %v1419, %v1421
      %v1423 = vrot.slane %v1398, 1
      %v1424 = vsel %vm1411, %v1421, %v1423
      %v1425 = vrot.slane %v1399, 1
      %v1426 = vsel %vm1411, %v1423, %v1425
      %v1427 = vrot.slane %v1400, 1
      %v1428 = vsel %vm1411, %v1425, %v1427
      %v1429 = vrot.slane %v1401, 1
      %v1430 = vsel %vm1411, %v1427, %v1429
      %v1431 = vrot.slane %v1402, 1
      %v1432 = vsel %vm1411, %v1429, %v1431
      %v1433 = vrot.slane %v1403, 1
      %v1434 = vsel %vm1411, %v1431, %v1433
      %v1435 = vrot.slane %v1404, 1
      %v1436 = vsel %vm1411, %v1433, %v1435
      %v1437 = vrot.slane %v1405, 1
      %v1438 = vsel %vm1411, %v1435, %v1437
      %v1439 = vrot.slane %v1406, 1
      %v1440 = vsel %vm1411, %v1437, %v1439
      %v1441 = vrot.slane %v1407, 1
      %v1442 = vsel %vm1411, %v1439, %v1441
      %v1443 = vrot.slane %v1408, 1
      %v1444 = vsel %vm1411, %v1441, %v1443
      %v1445 = vrot.slane %v1409, 1
      %v1446 = vsel %vm1411, %v1443, %v1445
      %v1447 = vrot.slane %v1410, 1
      %v1448 = vsel %vm1411, %v1445, %v1447
      %v1483 = vunpack.c.l.b16 %v1302
      %v1484 = vunpack.c.l.b16 %v1303
      %v1485 = vunpack.c.l.b16 %v1304
      %v1486 = vunpack.c.l.b16 %v1305
      %v1487 = vunpack.c.l.b16 %v1306
      %v1488 = vunpack.c.l.b16 %v1307
      %v1489 = vunpack.c.l.b16 %v1308
      %v1490 = vunpack.c.l.b16 %v1309
      %v1491 = vunpack.c.l.b16 %v1310
      %v1492 = vunpack.c.l.b16 %v1311
      %v1493 = vunpack.c.l.b16 %v1312
      %v1494 = vunpack.c.l.b16 %v1313
      %v1495 = vunpack.c.l.b16 %v1314
      %v1496 = vunpack.c.l.b16 %v1315
      %v1497 = vunpack.c.l.b16 %v1316
      %v1498 = vunpack.c.l.b16 %v1317
      %v1499 = vpack.c.b16 %v1484, %v1483
      %v1500 = vpack.c.b16 %v1486, %v1485
      %v1501 = vpack.c.b16 %v1488, %v1487
      %v1502 = vpack.c.b16 %v1490, %v1489
      %v1503 = vpack.c.b16 %v1492, %v1491
      %v1504 = vpack.c.b16 %v1494, %v1493
      %v1505 = vpack.c.b16 %v1496, %v1495
      %v1506 = vpack.c.b16 %v1498, %v1497
      %1515 = vmatpush.bf16.msra.mxu0 %v1506
      %1516 = vmatpush.bf16.msra.mxu0 %v1505
      %1517 = vmatpush.bf16.msra.mxu0 %v1504
      %1518 = vmatpush.bf16.msra.mxu0 %v1503
      %1519 = vmatpush.bf16.msra.mxu0 %v1502
      %1520 = vmatpush.bf16.msra.mxu0 %v1501
      %1521 = vmatpush.bf16.msra.mxu0 %v1500
      %1522 = vmatpush.bf16.msra.mxu0 %v1499
      %1523 = vmatmul.bf16.gmra.mxu0 %v1414
      %v1524 = vpop.f32.mrf.mxu0
      %v1525 = vadd.f32 0.0, %v1524
      %v1526 = vpop.f32.mrf.mxu0
      %v1527 = vadd.f32 0.0, %v1526
      %1528 = vmatmul.bf16.gmra.mxu0 %v1416
      %v1529 = vpop.f32.mrf.mxu0
      %v1530 = vadd.f32 0.0, %v1529
      %v1531 = vpop.f32.mrf.mxu0
      %v1532 = vadd.f32 0.0, %v1531
      %1533 = vmatmul.bf16.gmra.mxu0 %v1418
      %v1534 = vpop.f32.mrf.mxu0
      %v1535 = vadd.f32 0.0, %v1534
      %v1536 = vpop.f32.mrf.mxu0
      %v1537 = vadd.f32 0.0, %v1536
      %1538 = vmatmul.bf16.gmra.mxu0 %v1420
      %v1539 = vpop.f32.mrf.mxu0
      %v1540 = vadd.f32 0.0, %v1539
      %v1541 = vpop.f32.mrf.mxu0
      %v1542 = vadd.f32 0.0, %v1541
      %1543 = vmatmul.bf16.gmra.mxu0 %v1422
      %v1544 = vpop.f32.mrf.mxu0
      %v1545 = vadd.f32 0.0, %v1544
      %v1546 = vpop.f32.mrf.mxu0
      %v1547 = vadd.f32 0.0, %v1546
      %1548 = vmatmul.bf16.gmra.mxu0 %v1424
      %v1549 = vpop.f32.mrf.mxu0
      %v1550 = vadd.f32 0.0, %v1549
      %v1551 = vpop.f32.mrf.mxu0
      %v1552 = vadd.f32 0.0, %v1551
      %1553 = vmatmul.bf16.gmra.mxu0 %v1426
      %v1554 = vpop.f32.mrf.mxu0
      %v1555 = vadd.f32 0.0, %v1554
      %v1556 = vpop.f32.mrf.mxu0
      %v1557 = vadd.f32 0.0, %v1556
      %1558 = vmatmul.bf16.gmra.mxu0 %v1428
      %v1559 = vpop.f32.mrf.mxu0
      %v1560 = vadd.f32 0.0, %v1559
      %v1561 = vpop.f32.mrf.mxu0
      %v1562 = vadd.f32 0.0, %v1561
      %1563 = vmatmul.bf16.gmra.mxu0 %v1430
      %v1564 = vpop.f32.mrf.mxu0
      %v1565 = vadd.f32 0.0, %v1564
      %v1566 = vpop.f32.mrf.mxu0
      %v1567 = vadd.f32 0.0, %v1566
      %1568 = vmatmul.bf16.gmra.mxu0 %v1432
      %v1569 = vpop.f32.mrf.mxu0
      %v1570 = vadd.f32 0.0, %v1569
      %v1571 = vpop.f32.mrf.mxu0
      %v1572 = vadd.f32 0.0, %v1571
      %1573 = vmatmul.bf16.gmra.mxu0 %v1434
      %v1574 = vpop.f32.mrf.mxu0
      %v1575 = vadd.f32 0.0, %v1574
      %v1576 = vpop.f32.mrf.mxu0
      %v1577 = vadd.f32 0.0, %v1576
      %1578 = vmatmul.bf16.gmra.mxu0 %v1436
      %v1579 = vpop.f32.mrf.mxu0
      %v1580 = vadd.f32 0.0, %v1579
      %v1581 = vpop.f32.mrf.mxu0
      %v1582 = vadd.f32 0.0, %v1581
      %1583 = vmatmul.bf16.gmra.mxu0 %v1438
      %v1584 = vpop.f32.mrf.mxu0
      %v1585 = vadd.f32 0.0, %v1584
      %v1586 = vpop.f32.mrf.mxu0
      %v1587 = vadd.f32 0.0, %v1586
      %1588 = vmatmul.bf16.gmra.mxu0 %v1440
      %v1589 = vpop.f32.mrf.mxu0
      %v1590 = vadd.f32 0.0, %v1589
      %v1591 = vpop.f32.mrf.mxu0
      %v1592 = vadd.f32 0.0, %v1591
      %1593 = vmatmul.bf16.gmra.mxu0 %v1442
      %v1594 = vpop.f32.mrf.mxu0
      %v1595 = vadd.f32 0.0, %v1594
      %v1596 = vpop.f32.mrf.mxu0
      %v1597 = vadd.f32 0.0, %v1596
      %1598 = vmatmul.bf16.gmra.mxu0 %v1444
      %v1599 = vpop.f32.mrf.mxu0
      %v1600 = vadd.f32 0.0, %v1599
      %v1601 = vpop.f32.mrf.mxu0
      %v1602 = vadd.f32 0.0, %v1601
      %1603 = vmatmul.bf16.gmra.mxu0 %v1446
      %v1604 = vpop.f32.mrf.mxu0
      %v1605 = vadd.f32 0.0, %v1604
      %v1606 = vpop.f32.mrf.mxu0
      %v1607 = vadd.f32 0.0, %v1606
      %1608 = vmatmul.bf16.gmra.mxu0 %v1448
      %v1609 = vpop.f32.mrf.mxu0
      %v1610 = vadd.f32 0.0, %v1609
      %v1611 = vpop.f32.mrf.mxu0
      %v1612 = vadd.f32 0.0, %v1611
      %1613 = vdwg.mxu0
      %v1614 = vadd.f32 %v1228, %v1525
      %v1615 = vadd.f32 %v1229, %v1527
      %v1616 = vadd.f32 %v1230, %v1530
      %v1617 = vadd.f32 %v1231, %v1532
      %v1618 = vadd.f32 %v1232, %v1535
      %v1619 = vadd.f32 %v1233, %v1537
      %v1620 = vadd.f32 %v1234, %v1540
      %v1621 = vadd.f32 %v1235, %v1542
      %v1622 = vadd.f32 %v1236, %v1545
      %v1623 = vadd.f32 %v1237, %v1547
      %v1624 = vadd.f32 %v1238, %v1550
      %v1625 = vadd.f32 %v1239, %v1552
      %v1626 = vadd.f32 %v1240, %v1555
      %v1627 = vadd.f32 %v1241, %v1557
      %v1628 = vadd.f32 %v1242, %v1560
      %v1629 = vadd.f32 %v1243, %v1562
      %v1630 = vadd.f32 %v1244, %v1565
      %v1631 = vadd.f32 %v1245, %v1567
      %v1632 = vadd.f32 %v1246, %v1570
      %v1633 = vadd.f32 %v1247, %v1572
      %v1634 = vadd.f32 %v1248, %v1575
      %v1635 = vadd.f32 %v1249, %v1577
      %v1636 = vadd.f32 %v1250, %v1580
      %v1637 = vadd.f32 %v1251, %v1582
      %v1638 = vadd.f32 %v1252, %v1585
      %v1639 = vadd.f32 %v1253, %v1587
      %v1640 = vadd.f32 %v1254, %v1590
      %v1641 = vadd.f32 %v1255, %v1592
      %v1642 = vadd.f32 %v1256, %v1595
      %v1643 = vadd.f32 %v1257, %v1597
      %v1644 = vadd.f32 %v1258, %v1600
      %v1645 = vadd.f32 %v1259, %v1602
      %v1646 = vadd.f32 %v1260, %v1605
      %v1647 = vadd.f32 %v1261, %v1607
      %v1648 = vadd.f32 %v1262, %v1610
      %v1649 = vadd.f32 %v1263, %v1612
      %1650 = vst [vmem:[#allocation4] sm:$0xff] %v1614
      %1651 = vst [vmem:[#allocation4 + $0x8] sm:$0xff] %v1615
      %1652 = vst [vmem:[#allocation4 + $0x10] sm:$0xff] %v1616
      %1653 = vst [vmem:[#allocation4 + $0x18] sm:$0xff] %v1617
      %1654 = vst [vmem:[#allocation4 + $0x20] sm:$0xff] %v1618
      %1655 = vst [vmem:[#allocation4 + $0x28] sm:$0xff] %v1619
      %1656 = vst [vmem:[#allocation4 + $0x30] sm:$0xff] %v1620
      %1657 = vst [vmem:[#allocation4 + $0x38] sm:$0xff] %v1621
      %1658 = vst [vmem:[#allocation4 + $0x40] sm:$0xff] %v1622
      %1659 = vst [vmem:[#allocation4 + $0x48] sm:$0xff] %v1623
      %1660 = vst [vmem:[#allocation4 + $0x50] sm:$0xff] %v1624
      %1661 = vst [vmem:[#allocation4 + $0x58] sm:$0xff] %v1625
      %1662 = vst [vmem:[#allocation4 + $0x60] sm:$0xff] %v1626
      %1663 = vst [vmem:[#allocation4 + $0x68] sm:$0xff] %v1627
      %1664 = vst [vmem:[#allocation4 + $0x70] sm:$0xff] %v1628
      %1665 = vst [vmem:[#allocation4 + $0x78] sm:$0xff] %v1629
      %1666 = vst [vmem:[#allocation4 + $0x80] sm:$0xff] %v1630
      %1667 = vst [vmem:[#allocation4 + $0x88] sm:$0xff] %v1631
      %1668 = vst [vmem:[#allocation4 + $0x90] sm:$0xff] %v1632
      %1669 = vst [vmem:[#allocation4 + $0x98] sm:$0xff] %v1633
      %1670 = vst [vmem:[#allocation4 + $0xa0] sm:$0xff] %v1634
      %1671 = vst [vmem:[#allocation4 + $0xa8] sm:$0xff] %v1635
      %1672 = vst [vmem:[#allocation4 + $0xb0] sm:$0xff] %v1636
      %1673 = vst [vmem:[#allocation4 + $0xb8] sm:$0xff] %v1637
      %1674 = vst [vmem:[#allocation4 + $0xc0] sm:$0xff] %v1638
      %1675 = vst [vmem:[#allocation4 + $0xc8] sm:$0xff] %v1639
      %1676 = vst [vmem:[#allocation4 + $0xd0] sm:$0xff] %v1640
      %1677 = vst [vmem:[#allocation4 + $0xd8] sm:$0xff] %v1641
      %1678 = vst [vmem:[#allocation4 + $0xe0] sm:$0xff] %v1642
      %1679 = vst [vmem:[#allocation4 + $0xe8] sm:$0xff] %v1643
      %1680 = vst [vmem:[#allocation4 + $0xf0] sm:$0xff] %v1644
      %1681 = vst [vmem:[#allocation4 + $0xf8] sm:$0xff] %v1645
      %1682 = vst [vmem:[#allocation4 + $0x100] sm:$0xff] %v1646
      %1683 = vst [vmem:[#allocation4 + $0x108] sm:$0xff] %v1647
      %1684 = vst [vmem:[#allocation4 + $0x110] sm:$0xff] %v1648
      %1685 = vst [vmem:[#allocation4 + $0x118] sm:$0xff] %v1649
      %v1686 = vld [vmem:[#allocation4] sm:$0xff]
      %v1687 = vld [vmem:[#allocation4 + $0x8] sm:$0xff]
      %v1688 = vld [vmem:[#allocation4 + $0x10] sm:$0xff]
      %v1689 = vld [vmem:[#allocation4 + $0x18] sm:$0xff]
      %v1690 = vld [vmem:[#allocation4 + $0x20] sm:$0xff]
      %v1691 = vld [vmem:[#allocation4 + $0x28] sm:$0xff]
      %v1692 = vld [vmem:[#allocation4 + $0x30] sm:$0xff]
      %v1693 = vld [vmem:[#allocation4 + $0x38] sm:$0xff]
      %v1694 = vld [vmem:[#allocation4 + $0x40] sm:$0xff]
      %v1695 = vld [vmem:[#allocation4 + $0x48] sm:$0xff]
      %v1696 = vld [vmem:[#allocation4 + $0x50] sm:$0xff]
      %v1697 = vld [vmem:[#allocation4 + $0x58] sm:$0xff]
      %v1698 = vld [vmem:[#allocation4 + $0x60] sm:$0xff]
      %v1699 = vld [vmem:[#allocation4 + $0x68] sm:$0xff]
      %v1700 = vld [vmem:[#allocation4 + $0x70] sm:$0xff]
      %v1701 = vld [vmem:[#allocation4 + $0x78] sm:$0xff]
      %v1702 = vld [vmem:[#allocation4 + $0x80] sm:$0xff]
      %v1703 = vld [vmem:[#allocation4 + $0x88] sm:$0xff]
      %v1704 = vld [vmem:[#allocation4 + $0x90] sm:$0xff]
      %v1705 = vld [vmem:[#allocation4 + $0x98] sm:$0xff]
      %v1706 = vld [vmem:[#allocation4 + $0xa0] sm:$0xff]
      %v1707 = vld [vmem:[#allocation4 + $0xa8] sm:$0xff]
      %v1708 = vld [vmem:[#allocation4 + $0xb0] sm:$0xff]
      %v1709 = vld [vmem:[#allocation4 + $0xb8] sm:$0xff]
      %v1710 = vld [vmem:[#allocation4 + $0xc0] sm:$0xff]
      %v1711 = vld [vmem:[#allocation4 + $0xc8] sm:$0xff]
      %v1712 = vld [vmem:[#allocation4 + $0xd0] sm:$0xff]
      %v1713 = vld [vmem:[#allocation4 + $0xd8] sm:$0xff]
      %v1714 = vld [vmem:[#allocation4 + $0xe0] sm:$0xff]
      %v1715 = vld [vmem:[#allocation4 + $0xe8] sm:$0xff]
      %v1716 = vld [vmem:[#allocation4 + $0xf0] sm:$0xff]
      %v1717 = vld [vmem:[#allocation4 + $0xf8] sm:$0xff]
      %v1718 = vld [vmem:[#allocation4 + $0x100] sm:$0xff]
      %v1719 = vld [vmem:[#allocation4 + $0x108] sm:$0xff]
      %v1720 = vld [vmem:[#allocation4 + $0x110] sm:$0xff]
      %v1721 = vld [vmem:[#allocation4 + $0x118] sm:$0xff]
      %v1722 = vld [vmem:[%s310 + $0x8] sm:$0xe]
      %v1723 = vld [vmem:[%s310 + $0xc] sm:$0xf]
      %v1724 = vld [vmem:[%s310 + $0x10] sm:$0xf]
      %v1725 = vld [vmem:[%s310 + $0x14] sm:$0xf]
      %v1726 = vld [vmem:[%s310 + $0x18] sm:$0xf]
      %v1727 = vld [vmem:[%s310 + $0x1c] sm:$0xf]
      %v1728 = vld [vmem:[%s310 + $0x20] sm:$0xf]
      %v1729 = vld [vmem:[%s310 + $0x24] sm:$0xf]
      %v1730 = vld [vmem:[%s310 + $0x28] sm:$0xf]
      %v1731 = vld [vmem:[%s310 + $0x2c] sm:$0xf]
      %v1732 = vld [vmem:[%s310 + $0x30] sm:$0xf]
      %v1733 = vld [vmem:[%s310 + $0x34] sm:$0xf]
      %v1734 = vld [vmem:[%s310 + $0x38] sm:$0xf]
      %v1735 = vld [vmem:[%s310 + $0x3c] sm:$0xf]
      %v1736 = vld [vmem:[%s310 + $0x40] sm:$0xf]
      %v1737 = vld [vmem:[%s310 + $0x44] sm:$0xf]
      %v1738 = vld [vmem:[%s310 + $0x48] sm:$0xf]
      %v1739 = vld [vmem:[%s310 + $0x4c] sm:$0xf]
      %v1740 = vld [vmem:[%s310 + $0x50] sm:$0xf]
      %v1741 = vld [vmem:[%s310 + $0x54] sm:$0xf]
      %v1742 = vld [vmem:[%s310 + $0x58] sm:$0xf]
      %v1743 = vld [vmem:[%s310 + $0x5c] sm:$0xf]
      %v1744 = vld [vmem:[%s310 + $0x60] sm:$0xf]
      %v1745 = vld [vmem:[%s310 + $0x64] sm:$0xf]
      %v1746 = vld [vmem:[%s310 + $0x68] sm:$0xf]
      %v1747 = vld [vmem:[%s310 + $0x6c] sm:$0xf]
      %v1748 = vld [vmem:[%s310 + $0x70] sm:$0xf]
      %v1749 = vld [vmem:[%s310 + $0x74] sm:$0xf]
      %v1750 = vld [vmem:[%s310 + $0x78] sm:$0xf]
      %v1751 = vld [vmem:[%s310 + $0x7c] sm:$0xf]
      %v1752 = vld [vmem:[%s310 + $0x80] sm:$0xf]
      %v1753 = vld [vmem:[%s310 + $0x84] sm:$0xf]
      %v1754 = vld [vmem:[%s310 + $0x88] sm:$0xf]
      %v1755 = vld [vmem:[%s310 + $0x8c] sm:$0xf]
      %v1756 = vld [vmem:[%s310 + $0x90] sm:$0xf]
      %v1757 = vld [vmem:[%s310 + $0x94] sm:$0xf]
      %v1758 = vld [vmem:[%s310 + $0x98] sm:$0x1]
      %s1759 = scalar_lea.vmem %s1, 192
      %v1760 = vld [vmem:[%s1759] sm:$0xf]
      %v1761 = vld [vmem:[%s1759 + $0x4] sm:$0xf]
      %v1762 = vld [vmem:[%s1759 + $0x8] sm:$0xf]
      %v1763 = vld [vmem:[%s1759 + $0xc] sm:$0xf]
      %v1764 = vld [vmem:[%s1759 + $0x10] sm:$0xf]
      %v1765 = vld [vmem:[%s1759 + $0x14] sm:$0xf]
      %v1766 = vld [vmem:[%s1759 + $0x18] sm:$0xf]
      %v1767 = vld [vmem:[%s1759 + $0x1c] sm:$0xf]
      %v1768 = vld [vmem:[%s1759 + $0x20] sm:$0xf]
      %v1769 = vld [vmem:[%s1759 + $0x24] sm:$0xf]
      %v1770 = vld [vmem:[%s1759 + $0x28] sm:$0xf]
      %v1771 = vld [vmem:[%s1759 + $0x2c] sm:$0xf]
      %v1772 = vld [vmem:[%s1759 + $0x30] sm:$0xf]
      %v1773 = vld [vmem:[%s1759 + $0x34] sm:$0xf]
      %v1774 = vld [vmem:[%s1759 + $0x38] sm:$0xf]
      %v1775 = vld [vmem:[%s1759 + $0x3c] sm:$0xf]
      %v1813 = vunpack.c.l.b16 %v1722
      %v1814 = vunpack.c.l.b16 %v1723
      %v1815 = vunpack.c.l.b16 %v1724
      %v1816 = vunpack.c.l.b16 %v1725
      %v1817 = vunpack.c.l.b16 %v1726
      %v1818 = vunpack.c.l.b16 %v1727
      %v1819 = vunpack.c.l.b16 %v1728
      %v1820 = vunpack.c.l.b16 %v1729
      %v1821 = vunpack.c.l.b16 %v1730
      %v1822 = vunpack.c.l.b16 %v1731
      %v1823 = vunpack.c.l.b16 %v1732
      %v1824 = vunpack.c.l.b16 %v1733
      %v1825 = vunpack.c.l.b16 %v1734
      %v1826 = vunpack.c.l.b16 %v1735
      %v1827 = vunpack.c.l.b16 %v1736
      %v1828 = vunpack.c.l.b16 %v1737
      %v1829 = vunpack.c.l.b16 %v1738
      %v1830 = vunpack.c.l.b16 %v1739
      %v1831 = vunpack.c.l.b16 %v1740
      %v1832 = vunpack.c.l.b16 %v1741
      %v1833 = vunpack.c.l.b16 %v1742
      %v1834 = vunpack.c.l.b16 %v1743
      %v1835 = vunpack.c.l.b16 %v1744
      %v1836 = vunpack.c.l.b16 %v1745
      %v1837 = vunpack.c.l.b16 %v1746
      %v1838 = vunpack.c.l.b16 %v1747
      %v1839 = vunpack.c.l.b16 %v1748
      %v1840 = vunpack.c.l.b16 %v1749
      %v1841 = vunpack.c.l.b16 %v1750
      %v1842 = vunpack.c.l.b16 %v1751
      %v1843 = vunpack.c.l.b16 %v1752
      %v1844 = vunpack.c.l.b16 %v1753
      %v1845 = vunpack.c.l.b16 %v1754
      %v1846 = vunpack.c.l.b16 %v1755
      %v1847 = vunpack.c.l.b16 %v1756
      %v1848 = vunpack.c.l.b16 %v1757
      %v1849 = vunpack.c.l.b16 %v1758
      %v1850 = vpack.c.b16 %v1814, %v1813
      %v1851 = vpack.c.b16 %v1816, %v1815
      %v1852 = vpack.c.b16 %v1818, %v1817
      %v1853 = vpack.c.b16 %v1820, %v1819
      %v1854 = vpack.c.b16 %v1822, %v1821
      %v1855 = vpack.c.b16 %v1824, %v1823
      %v1856 = vpack.c.b16 %v1826, %v1825
      %v1857 = vpack.c.b16 %v1828, %v1827
      %v1858 = vpack.c.b16 %v1830, %v1829
      %v1859 = vpack.c.b16 %v1832, %v1831
      %v1860 = vpack.c.b16 %v1834, %v1833
      %v1861 = vpack.c.b16 %v1836, %v1835
      %v1862 = vpack.c.b16 %v1838, %v1837
      %v1863 = vpack.c.b16 %v1840, %v1839
      %v1864 = vpack.c.b16 %v1842, %v1841
      %v1865 = vpack.c.b16 %v1844, %v1843
      %v1866 = vpack.c.b16 %v1846, %v1845
      %v1867 = vpack.c.b16 %v1848, %v1847
      %v1868 = vpack.c.b16 %v1849, %v1849
      %v1869 = vrot.slane %v1850, 1
      %v1870 = vrot.slane %v1851, 1
      %v1871 = vsel %vm1411, %v1869, %v1870
      %v1872 = vrot.slane %v1852, 1
      %v1873 = vsel %vm1411, %v1870, %v1872
      %v1874 = vrot.slane %v1853, 1
      %v1875 = vsel %vm1411, %v1872, %v1874
      %v1876 = vrot.slane %v1854, 1
      %v1877 = vsel %vm1411, %v1874, %v1876
      %v1878 = vrot.slane %v1855, 1
      %v1879 = vsel %vm1411, %v1876, %v1878
      %v1880 = vrot.slane %v1856, 1
      %v1881 = vsel %vm1411, %v1878, %v1880
      %v1882 = vrot.slane %v1857, 1
      %v1883 = vsel %vm1411, %v1880, %v1882
      %v1884 = vrot.slane %v1858, 1
      %v1885 = vsel %vm1411, %v1882, %v1884
      %v1886 = vrot.slane %v1859, 1
      %v1887 = vsel %vm1411, %v1884, %v1886
      %v1888 = vrot.slane %v1860, 1
      %v1889 = vsel %vm1411, %v1886, %v1888
      %v1890 = vrot.slane %v1861, 1
      %v1891 = vsel %vm1411, %v1888, %v1890
      %v1892 = vrot.slane %v1862, 1
      %v1893 = vsel %vm1411, %v1890, %v1892
      %v1894 = vrot.slane %v1863, 1
      %v1895 = vsel %vm1411, %v1892, %v1894
      %v1896 = vrot.slane %v1864, 1
      %v1897 = vsel %vm1411, %v1894, %v1896
      %v1898 = vrot.slane %v1865, 1
      %v1899 = vsel %vm1411, %v1896, %v1898
      %v1900 = vrot.slane %v1866, 1
      %v1901 = vsel %vm1411, %v1898, %v1900
      %v1902 = vrot.slane %v1867, 1
      %v1903 = vsel %vm1411, %v1900, %v1902
      %v1904 = vrot.slane %v1868, 1
      %v1905 = vsel %vm1411, %v1902, %v1904
      %v1940 = vunpack.c.l.b16 %v1760
      %v1941 = vunpack.c.l.b16 %v1761
      %v1942 = vunpack.c.l.b16 %v1762
      %v1943 = vunpack.c.l.b16 %v1763
      %v1944 = vunpack.c.l.b16 %v1764
      %v1945 = vunpack.c.l.b16 %v1765
      %v1946 = vunpack.c.l.b16 %v1766
      %v1947 = vunpack.c.l.b16 %v1767
      %v1948 = vunpack.c.l.b16 %v1768
      %v1949 = vunpack.c.l.b16 %v1769
      %v1950 = vunpack.c.l.b16 %v1770
      %v1951 = vunpack.c.l.b16 %v1771
      %v1952 = vunpack.c.l.b16 %v1772
      %v1953 = vunpack.c.l.b16 %v1773
      %v1954 = vunpack.c.l.b16 %v1774
      %v1955 = vunpack.c.l.b16 %v1775
      %v1956 = vpack.c.b16 %v1941, %v1940
      %v1957 = vpack.c.b16 %v1943, %v1942
      %v1958 = vpack.c.b16 %v1945, %v1944
      %v1959 = vpack.c.b16 %v1947, %v1946
      %v1960 = vpack.c.b16 %v1949, %v1948
      %v1961 = vpack.c.b16 %v1951, %v1950
      %v1962 = vpack.c.b16 %v1953, %v1952
      %v1963 = vpack.c.b16 %v1955, %v1954
      %1972 = vmatpush.bf16.msra.mxu0 %v1963
      %1973 = vmatpush.bf16.msra.mxu0 %v1962
      %1974 = vmatpush.bf16.msra.mxu0 %v1961
      %1975 = vmatpush.bf16.msra.mxu0 %v1960
      %1976 = vmatpush.bf16.msra.mxu0 %v1959
      %1977 = vmatpush.bf16.msra.mxu0 %v1958
      %1978 = vmatpush.bf16.msra.mxu0 %v1957
      %1979 = vmatpush.bf16.msra.mxu0 %v1956
      %1980 = vmatmul.bf16.gmra.mxu0 %v1871
      %v1981 = vpop.f32.mrf.mxu0
      %v1982 = vadd.f32 0.0, %v1981
      %v1983 = vpop.f32.mrf.mxu0
      %v1984 = vadd.f32 0.0, %v1983
      %1985 = vmatmul.bf16.gmra.mxu0 %v1873
      %v1986 = vpop.f32.mrf.mxu0
      %v1987 = vadd.f32 0.0, %v1986
      %v1988 = vpop.f32.mrf.mxu0
      %v1989 = vadd.f32 0.0, %v1988
      %1990 = vmatmul.bf16.gmra.mxu0 %v1875
      %v1991 = vpop.f32.mrf.mxu0
      %v1992 = vadd.f32 0.0, %v1991
      %v1993 = vpop.f32.mrf.mxu0
      %v1994 = vadd.f32 0.0, %v1993
      %1995 = vmatmul.bf16.gmra.mxu0 %v1877
      %v1996 = vpop.f32.mrf.mxu0
      %v1997 = vadd.f32 0.0, %v1996
      %v1998 = vpop.f32.mrf.mxu0
      %v1999 = vadd.f32 0.0, %v1998
      %2000 = vmatmul.bf16.gmra.mxu0 %v1879
      %v2001 = vpop.f32.mrf.mxu0
      %v2002 = vadd.f32 0.0, %v2001
      %v2003 = vpop.f32.mrf.mxu0
      %v2004 = vadd.f32 0.0, %v2003
      %2005 = vmatmul.bf16.gmra.mxu0 %v1881
      %v2006 = vpop.f32.mrf.mxu0
      %v2007 = vadd.f32 0.0, %v2006
      %v2008 = vpop.f32.mrf.mxu0
      %v2009 = vadd.f32 0.0, %v2008
      %2010 = vmatmul.bf16.gmra.mxu0 %v1883
      %v2011 = vpop.f32.mrf.mxu0
      %v2012 = vadd.f32 0.0, %v2011
      %v2013 = vpop.f32.mrf.mxu0
      %v2014 = vadd.f32 0.0, %v2013
      %2015 = vmatmul.bf16.gmra.mxu0 %v1885
      %v2016 = vpop.f32.mrf.mxu0
      %v2017 = vadd.f32 0.0, %v2016
      %v2018 = vpop.f32.mrf.mxu0
      %v2019 = vadd.f32 0.0, %v2018
      %2020 = vmatmul.bf16.gmra.mxu0 %v1887
      %v2021 = vpop.f32.mrf.mxu0
      %v2022 = vadd.f32 0.0, %v2021
      %v2023 = vpop.f32.mrf.mxu0
      %v2024 = vadd.f32 0.0, %v2023
      %2025 = vmatmul.bf16.gmra.mxu0 %v1889
      %v2026 = vpop.f32.mrf.mxu0
      %v2027 = vadd.f32 0.0, %v2026
      %v2028 = vpop.f32.mrf.mxu0
      %v2029 = vadd.f32 0.0, %v2028
      %2030 = vmatmul.bf16.gmra.mxu0 %v1891
      %v2031 = vpop.f32.mrf.mxu0
      %v2032 = vadd.f32 0.0, %v2031
      %v2033 = vpop.f32.mrf.mxu0
      %v2034 = vadd.f32 0.0, %v2033
      %2035 = vmatmul.bf16.gmra.mxu0 %v1893
      %v2036 = vpop.f32.mrf.mxu0
      %v2037 = vadd.f32 0.0, %v2036
      %v2038 = vpop.f32.mrf.mxu0
      %v2039 = vadd.f32 0.0, %v2038
      %2040 = vmatmul.bf16.gmra.mxu0 %v1895
      %v2041 = vpop.f32.mrf.mxu0
      %v2042 = vadd.f32 0.0, %v2041
      %v2043 = vpop.f32.mrf.mxu0
      %v2044 = vadd.f32 0.0, %v2043
      %2045 = vmatmul.bf16.gmra.mxu0 %v1897
      %v2046 = vpop.f32.mrf.mxu0
      %v2047 = vadd.f32 0.0, %v2046
      %v2048 = vpop.f32.mrf.mxu0
      %v2049 = vadd.f32 0.0, %v2048
      %2050 = vmatmul.bf16.gmra.mxu0 %v1899
      %v2051 = vpop.f32.mrf.mxu0
      %v2052 = vadd.f32 0.0, %v2051
      %v2053 = vpop.f32.mrf.mxu0
      %v2054 = vadd.f32 0.0, %v2053
      %2055 = vmatmul.bf16.gmra.mxu0 %v1901
      %v2056 = vpop.f32.mrf.mxu0
      %v2057 = vadd.f32 0.0, %v2056
      %v2058 = vpop.f32.mrf.mxu0
      %v2059 = vadd.f32 0.0, %v2058
      %2060 = vmatmul.bf16.gmra.mxu0 %v1903
      %v2061 = vpop.f32.mrf.mxu0
      %v2062 = vadd.f32 0.0, %v2061
      %v2063 = vpop.f32.mrf.mxu0
      %v2064 = vadd.f32 0.0, %v2063
      %2065 = vmatmul.bf16.gmra.mxu0 %v1905
      %v2066 = vpop.f32.mrf.mxu0
      %v2067 = vadd.f32 0.0, %v2066
      %v2068 = vpop.f32.mrf.mxu0
      %v2069 = vadd.f32 0.0, %v2068
      %2070 = vdwg.mxu0
      %v2071 = vadd.f32 %v1686, %v1982
      %v2072 = vadd.f32 %v1687, %v1984
      %v2073 = vadd.f32 %v1688, %v1987
      %v2074 = vadd.f32 %v1689, %v1989
      %v2075 = vadd.f32 %v1690, %v1992
      %v2076 = vadd.f32 %v1691, %v1994
      %v2077 = vadd.f32 %v1692, %v1997
      %v2078 = vadd.f32 %v1693, %v1999
      %v2079 = vadd.f32 %v1694, %v2002
      %v2080 = vadd.f32 %v1695, %v2004
      %v2081 = vadd.f32 %v1696, %v2007
      %v2082 = vadd.f32 %v1697, %v2009
      %v2083 = vadd.f32 %v1698, %v2012
      %v2084 = vadd.f32 %v1699, %v2014
      %v2085 = vadd.f32 %v1700, %v2017
      %v2086 = vadd.f32 %v1701, %v2019
      %v2087 = vadd.f32 %v1702, %v2022
      %v2088 = vadd.f32 %v1703, %v2024
      %v2089 = vadd.f32 %v1704, %v2027
      %v2090 = vadd.f32 %v1705, %v2029
      %v2091 = vadd.f32 %v1706, %v2032
      %v2092 = vadd.f32 %v1707, %v2034
      %v2093 = vadd.f32 %v1708, %v2037
      %v2094 = vadd.f32 %v1709, %v2039
      %v2095 = vadd.f32 %v1710, %v2042
      %v2096 = vadd.f32 %v1711, %v2044
      %v2097 = vadd.f32 %v1712, %v2047
      %v2098 = vadd.f32 %v1713, %v2049
      %v2099 = vadd.f32 %v1714, %v2052
      %v2100 = vadd.f32 %v1715, %v2054
      %v2101 = vadd.f32 %v1716, %v2057
      %v2102 = vadd.f32 %v1717, %v2059
      %v2103 = vadd.f32 %v1718, %v2062
      %v2104 = vadd.f32 %v1719, %v2064
      %v2105 = vadd.f32 %v1720, %v2067
      %v2106 = vadd.f32 %v1721, %v2069
      %2107 = vst [vmem:[#allocation4] sm:$0xff] %v2071
      %2108 = vst [vmem:[#allocation4 + $0x8] sm:$0xff] %v2072
      %2109 = vst [vmem:[#allocation4 + $0x10] sm:$0xff] %v2073
      %2110 = vst [vmem:[#allocation4 + $0x18] sm:$0xff] %v2074
      %2111 = vst [vmem:[#allocation4 + $0x20] sm:$0xff] %v2075
      %2112 = vst [vmem:[#allocation4 + $0x28] sm:$0xff] %v2076
      %2113 = vst [vmem:[#allocation4 + $0x30] sm:$0xff] %v2077
      %2114 = vst [vmem:[#allocation4 + $0x38] sm:$0xff] %v2078
      %2115 = vst [vmem:[#allocation4 + $0x40] sm:$0xff] %v2079
      %2116 = vst [vmem:[#allocation4 + $0x48] sm:$0xff] %v2080
      %2117 = vst [vmem:[#allocation4 + $0x50] sm:$0xff] %v2081
      %2118 = vst [vmem:[#allocation4 + $0x58] sm:$0xff] %v2082
      %2119 = vst [vmem:[#allocation4 + $0x60] sm:$0xff] %v2083
      %2120 = vst [vmem:[#allocation4 + $0x68] sm:$0xff] %v2084
      %2121 = vst [vmem:[#allocation4 + $0x70] sm:$0xff] %v2085
      %2122 = vst [vmem:[#allocation4 + $0x78] sm:$0xff] %v2086
      %2123 = vst [vmem:[#allocation4 + $0x80] sm:$0xff] %v2087
      %2124 = vst [vmem:[#allocation4 + $0x88] sm:$0xff] %v2088
      %2125 = vst [vmem:[#allocation4 + $0x90] sm:$0xff] %v2089
      %2126 = vst [vmem:[#allocation4 + $0x98] sm:$0xff] %v2090
      %2127 = vst [vmem:[#allocation4 + $0xa0] sm:$0xff] %v2091
      %2128 = vst [vmem:[#allocation4 + $0xa8] sm:$0xff] %v2092
      %2129 = vst [vmem:[#allocation4 + $0xb0] sm:$0xff] %v2093
      %2130 = vst [vmem:[#allocation4 + $0xb8] sm:$0xff] %v2094
      %2131 = vst [vmem:[#allocation4 + $0xc0] sm:$0xff] %v2095
      %2132 = vst [vmem:[#allocation4 + $0xc8] sm:$0xff] %v2096
      %2133 = vst [vmem:[#allocation4 + $0xd0] sm:$0xff] %v2097
      %2134 = vst [vmem:[#allocation4 + $0xd8] sm:$0xff] %v2098
      %2135 = vst [vmem:[#allocation4 + $0xe0] sm:$0xff] %v2099
      %2136 = vst [vmem:[#allocation4 + $0xe8] sm:$0xff] %v2100
      %2137 = vst [vmem:[#allocation4 + $0xf0] sm:$0xff] %v2101
      %2138 = vst [vmem:[#allocation4 + $0xf8] sm:$0xff] %v2102
      %2139 = vst [vmem:[#allocation4 + $0x100] sm:$0xff] %v2103
      %2140 = vst [vmem:[#allocation4 + $0x108] sm:$0xff] %v2104
      %2141 = vst [vmem:[#allocation4 + $0x110] sm:$0xff] %v2105
      %2142 = vst [vmem:[#allocation4 + $0x118] sm:$0xff] %v2106
      %v2143 = vld [vmem:[#allocation4] sm:$0xff]
      %v2144 = vld [vmem:[#allocation4 + $0x8] sm:$0xff]
      %v2145 = vld [vmem:[#allocation4 + $0x10] sm:$0xff]
      %v2146 = vld [vmem:[#allocation4 + $0x18] sm:$0xff]
      %v2147 = vld [vmem:[#allocation4 + $0x20] sm:$0xff]
      %v2148 = vld [vmem:[#allocation4 + $0x28] sm:$0xff]
      %v2149 = vld [vmem:[#allocation4 + $0x30] sm:$0xff]
      %v2150 = vld [vmem:[#allocation4 + $0x38] sm:$0xff]
      %v2151 = vld [vmem:[#allocation4 + $0x40] sm:$0xff]
      %v2152 = vld [vmem:[#allocation4 + $0x48] sm:$0xff]
      %v2153 = vld [vmem:[#allocation4 + $0x50] sm:$0xff]
      %v2154 = vld [vmem:[#allocation4 + $0x58] sm:$0xff]
      %v2155 = vld [vmem:[#allocation4 + $0x60] sm:$0xff]
      %v2156 = vld [vmem:[#allocation4 + $0x68] sm:$0xff]
      %v2157 = vld [vmem:[#allocation4 + $0x70] sm:$0xff]
      %v2158 = vld [vmem:[#allocation4 + $0x78] sm:$0xff]
      %v2159 = vld [vmem:[#allocation4 + $0x80] sm:$0xff]
      %v2160 = vld [vmem:[#allocation4 + $0x88] sm:$0xff]
      %v2161 = vld [vmem:[#allocation4 + $0x90] sm:$0xff]
      %v2162 = vld [vmem:[#allocation4 + $0x98] sm:$0xff]
      %v2163 = vld [vmem:[#allocation4 + $0xa0] sm:$0xff]
      %v2164 = vld [vmem:[#allocation4 + $0xa8] sm:$0xff]
      %v2165 = vld [vmem:[#allocation4 + $0xb0] sm:$0xff]
      %v2166 = vld [vmem:[#allocation4 + $0xb8] sm:$0xff]
      %v2167 = vld [vmem:[#allocation4 + $0xc0] sm:$0xff]
      %v2168 = vld [vmem:[#allocation4 + $0xc8] sm:$0xff]
      %v2169 = vld [vmem:[#allocation4 + $0xd0] sm:$0xff]
      %v2170 = vld [vmem:[#allocation4 + $0xd8] sm:$0xff]
      %v2171 = vld [vmem:[#allocation4 + $0xe0] sm:$0xff]
      %v2172 = vld [vmem:[#allocation4 + $0xe8] sm:$0xff]
      %v2173 = vld [vmem:[#allocation4 + $0xf0] sm:$0xff]
      %v2174 = vld [vmem:[#allocation4 + $0xf8] sm:$0xff]
      %v2175 = vld [vmem:[#allocation4 + $0x100] sm:$0xff]
      %v2176 = vld [vmem:[#allocation4 + $0x108] sm:$0xff]
      %v2177 = vld [vmem:[#allocation4 + $0x110] sm:$0xff]
      %v2178 = vld [vmem:[#allocation4 + $0x118] sm:$0xff]
      %v2179 = vld [vmem:[%s310 + $0x8] sm:$0xe]
      %v2180 = vld [vmem:[%s310 + $0xc] sm:$0xf]
      %v2181 = vld [vmem:[%s310 + $0x10] sm:$0xf]
      %v2182 = vld [vmem:[%s310 + $0x14] sm:$0xf]
      %v2183 = vld [vmem:[%s310 + $0x18] sm:$0xf]
      %v2184 = vld [vmem:[%s310 + $0x1c] sm:$0xf]
      %v2185 = vld [vmem:[%s310 + $0x20] sm:$0xf]
      %v2186 = vld [vmem:[%s310 + $0x24] sm:$0xf]
      %v2187 = vld [vmem:[%s310 + $0x28] sm:$0xf]
      %v2188 = vld [vmem:[%s310 + $0x2c] sm:$0xf]
      %v2189 = vld [vmem:[%s310 + $0x30] sm:$0xf]
      %v2190 = vld [vmem:[%s310 + $0x34] sm:$0xf]
      %v2191 = vld [vmem:[%s310 + $0x38] sm:$0xf]
      %v2192 = vld [vmem:[%s310 + $0x3c] sm:$0xf]
      %v2193 = vld [vmem:[%s310 + $0x40] sm:$0xf]
      %v2194 = vld [vmem:[%s310 + $0x44] sm:$0xf]
      %v2195 = vld [vmem:[%s310 + $0x48] sm:$0xf]
      %v2196 = vld [vmem:[%s310 + $0x4c] sm:$0xf]
      %v2197 = vld [vmem:[%s310 + $0x50] sm:$0xf]
      %v2198 = vld [vmem:[%s310 + $0x54] sm:$0xf]
      %v2199 = vld [vmem:[%s310 + $0x58] sm:$0xf]
      %v2200 = vld [vmem:[%s310 + $0x5c] sm:$0xf]
      %v2201 = vld [vmem:[%s310 + $0x60] sm:$0xf]
      %v2202 = vld [vmem:[%s310 + $0x64] sm:$0xf]
      %v2203 = vld [vmem:[%s310 + $0x68] sm:$0xf]
      %v2204 = vld [vmem:[%s310 + $0x6c] sm:$0xf]
      %v2205 = vld [vmem:[%s310 + $0x70] sm:$0xf]
      %v2206 = vld [vmem:[%s310 + $0x74] sm:$0xf]
      %v2207 = vld [vmem:[%s310 + $0x78] sm:$0xf]
      %v2208 = vld [vmem:[%s310 + $0x7c] sm:$0xf]
      %v2209 = vld [vmem:[%s310 + $0x80] sm:$0xf]
      %v2210 = vld [vmem:[%s310 + $0x84] sm:$0xf]
      %v2211 = vld [vmem:[%s310 + $0x88] sm:$0xf]
      %v2212 = vld [vmem:[%s310 + $0x8c] sm:$0xf]
      %v2213 = vld [vmem:[%s310 + $0x90] sm:$0xf]
      %v2214 = vld [vmem:[%s310 + $0x94] sm:$0xf]
      %v2215 = vld [vmem:[%s310 + $0x98] sm:$0x3]
      %s2216 = scalar_lea.vmem %s1, 256
      %v2217 = vld [vmem:[%s2216] sm:$0xf]
      %v2218 = vld [vmem:[%s2216 + $0x4] sm:$0xf]
      %v2219 = vld [vmem:[%s2216 + $0x8] sm:$0xf]
      %v2220 = vld [vmem:[%s2216 + $0xc] sm:$0xf]
      %v2221 = vld [vmem:[%s2216 + $0x10] sm:$0xf]
      %v2222 = vld [vmem:[%s2216 + $0x14] sm:$0xf]
      %v2223 = vld [vmem:[%s2216 + $0x18] sm:$0xf]
      %v2224 = vld [vmem:[%s2216 + $0x1c] sm:$0xf]
      %v2225 = vld [vmem:[%s2216 + $0x20] sm:$0xf]
      %v2226 = vld [vmem:[%s2216 + $0x24] sm:$0xf]
      %v2227 = vld [vmem:[%s2216 + $0x28] sm:$0xf]
      %v2228 = vld [vmem:[%s2216 + $0x2c] sm:$0xf]
      %v2229 = vld [vmem:[%s2216 + $0x30] sm:$0xf]
      %v2230 = vld [vmem:[%s2216 + $0x34] sm:$0xf]
      %v2231 = vld [vmem:[%s2216 + $0x38] sm:$0xf]
      %v2232 = vld [vmem:[%s2216 + $0x3c] sm:$0xf]
      %v2270 = vunpack.c.l.b16 %v2179
      %v2271 = vunpack.c.l.b16 %v2180
      %v2272 = vunpack.c.l.b16 %v2181
      %v2273 = vunpack.c.l.b16 %v2182
      %v2274 = vunpack.c.l.b16 %v2183
      %v2275 = vunpack.c.l.b16 %v2184
      %v2276 = vunpack.c.l.b16 %v2185
      %v2277 = vunpack.c.l.b16 %v2186
      %v2278 = vunpack.c.l.b16 %v2187
      %v2279 = vunpack.c.l.b16 %v2188
      %v2280 = vunpack.c.l.b16 %v2189
      %v2281 = vunpack.c.l.b16 %v2190
      %v2282 = vunpack.c.l.b16 %v2191
      %v2283 = vunpack.c.l.b16 %v2192
      %v2284 = vunpack.c.l.b16 %v2193
      %v2285 = vunpack.c.l.b16 %v2194
      %v2286 = vunpack.c.l.b16 %v2195
      %v2287 = vunpack.c.l.b16 %v2196
      %v2288 = vunpack.c.l.b16 %v2197
      %v2289 = vunpack.c.l.b16 %v2198
      %v2290 = vunpack.c.l.b16 %v2199
      %v2291 = vunpack.c.l.b16 %v2200
      %v2292 = vunpack.c.l.b16 %v2201
      %v2293 = vunpack.c.l.b16 %v2202
      %v2294 = vunpack.c.l.b16 %v2203
      %v2295 = vunpack.c.l.b16 %v2204
      %v2296 = vunpack.c.l.b16 %v2205
      %v2297 = vunpack.c.l.b16 %v2206
      %v2298 = vunpack.c.l.b16 %v2207
      %v2299 = vunpack.c.l.b16 %v2208
      %v2300 = vunpack.c.l.b16 %v2209
      %v2301 = vunpack.c.l.b16 %v2210
      %v2302 = vunpack.c.l.b16 %v2211
      %v2303 = vunpack.c.l.b16 %v2212
      %v2304 = vunpack.c.l.b16 %v2213
      %v2305 = vunpack.c.l.b16 %v2214
      %v2306 = vunpack.c.l.b16 %v2215
      %v2307 = vpack.c.b16 %v2271, %v2270
      %v2308 = vpack.c.b16 %v2273, %v2272
      %v2309 = vpack.c.b16 %v2275, %v2274
      %v2310 = vpack.c.b16 %v2277, %v2276
      %v2311 = vpack.c.b16 %v2279, %v2278
      %v2312 = vpack.c.b16 %v2281, %v2280
      %v2313 = vpack.c.b16 %v2283, %v2282
      %v2314 = vpack.c.b16 %v2285, %v2284
      %v2315 = vpack.c.b16 %v2287, %v2286
      %v2316 = vpack.c.b16 %v2289, %v2288
      %v2317 = vpack.c.b16 %v2291, %v2290
      %v2318 = vpack.c.b16 %v2293, %v2292
      %v2319 = vpack.c.b16 %v2295, %v2294
      %v2320 = vpack.c.b16 %v2297, %v2296
      %v2321 = vpack.c.b16 %v2299, %v2298
      %v2322 = vpack.c.b16 %v2301, %v2300
      %v2323 = vpack.c.b16 %v2303, %v2302
      %v2324 = vpack.c.b16 %v2305, %v2304
      %v2325 = vpack.c.b16 %v2306, %v2306
      %vm2326 = vsmask.f32 6400
      %v2328 = vshrl.u32 %v2307, 16
      %v2330 = vrot.slane %v2328, 1
      %v2331 = vshll.u32 %v2307, 16
      %v2333 = vrot.slane %v2331, 2
      %v2334 = vor.u32 %v2330, %v2333
      %v2336 = vshrl.u32 %v2308, 16
      %v2338 = vrot.slane %v2336, 1
      %v2339 = vshll.u32 %v2308, 16
      %v2341 = vrot.slane %v2339, 2
      %v2342 = vor.u32 %v2338, %v2341
      %v2343 = vsel %vm2326, %v2334, %v2342
      %v2345 = vshrl.u32 %v2309, 16
      %v2347 = vrot.slane %v2345, 1
      %v2348 = vshll.u32 %v2309, 16
      %v2350 = vrot.slane %v2348, 2
      %v2351 = vor.u32 %v2347, %v2350
      %v2352 = vsel %vm2326, %v2342, %v2351
      %v2354 = vshrl.u32 %v2310, 16
      %v2356 = vrot.slane %v2354, 1
      %v2357 = vshll.u32 %v2310, 16
      %v2359 = vrot.slane %v2357, 2
      %v2360 = vor.u32 %v2356, %v2359
      %v2361 = vsel %vm2326, %v2351, %v2360
      %v2363 = vshrl.u32 %v2311, 16
      %v2365 = vrot.slane %v2363, 1
      %v2366 = vshll.u32 %v2311, 16
      %v2368 = vrot.slane %v2366, 2
      %v2369 = vor.u32 %v2365, %v2368
      %v2370 = vsel %vm2326, %v2360, %v2369
      %v2372 = vshrl.u32 %v2312, 16
      %v2374 = vrot.slane %v2372, 1
      %v2375 = vshll.u32 %v2312, 16
      %v2377 = vrot.slane %v2375, 2
      %v2378 = vor.u32 %v2374, %v2377
      %v2379 = vsel %vm2326, %v2369, %v2378
      %v2381 = vshrl.u32 %v2313, 16
      %v2383 = vrot.slane %v2381, 1
      %v2384 = vshll.u32 %v2313, 16
      %v2386 = vrot.slane %v2384, 2
      %v2387 = vor.u32 %v2383, %v2386
      %v2388 = vsel %vm2326, %v2378, %v2387
      %v2390 = vshrl.u32 %v2314, 16
      %v2392 = vrot.slane %v2390, 1
      %v2393 = vshll.u32 %v2314, 16
      %v2395 = vrot.slane %v2393, 2
      %v2396 = vor.u32 %v2392, %v2395
      %v2397 = vsel %vm2326, %v2387, %v2396
      %v2399 = vshrl.u32 %v2315, 16
      %v2401 = vrot.slane %v2399, 1
      %v2402 = vshll.u32 %v2315, 16
      %v2404 = vrot.slane %v2402, 2
      %v2405 = vor.u32 %v2401, %v2404
      %v2406 = vsel %vm2326, %v2396, %v2405
      %v2408 = vshrl.u32 %v2316, 16
      %v2410 = vrot.slane %v2408, 1
      %v2411 = vshll.u32 %v2316, 16
      %v2413 = vrot.slane %v2411, 2
      %v2414 = vor.u32 %v2410, %v2413
      %v2415 = vsel %vm2326, %v2405, %v2414
      %v2417 = vshrl.u32 %v2317, 16
      %v2419 = vrot.slane %v2417, 1
      %v2420 = vshll.u32 %v2317, 16
      %v2422 = vrot.slane %v2420, 2
      %v2423 = vor.u32 %v2419, %v2422
      %v2424 = vsel %vm2326, %v2414, %v2423
      %v2426 = vshrl.u32 %v2318, 16
      %v2428 = vrot.slane %v2426, 1
      %v2429 = vshll.u32 %v2318, 16
      %v2431 = vrot.slane %v2429, 2
      %v2432 = vor.u32 %v2428, %v2431
      %v2433 = vsel %vm2326, %v2423, %v2432
      %v2435 = vshrl.u32 %v2319, 16
      %v2437 = vrot.slane %v2435, 1
      %v2438 = vshll.u32 %v2319, 16
      %v2440 = vrot.slane %v2438, 2
      %v2441 = vor.u32 %v2437, %v2440
      %v2442 = vsel %vm2326, %v2432, %v2441
      %v2444 = vshrl.u32 %v2320, 16
      %v2446 = vrot.slane %v2444, 1
      %v2447 = vshll.u32 %v2320, 16
      %v2449 = vrot.slane %v2447, 2
      %v2450 = vor.u32 %v2446, %v2449
      %v2451 = vsel %vm2326, %v2441, %v2450
      %v2453 = vshrl.u32 %v2321, 16
      %v2455 = vrot.slane %v2453, 1
      %v2456 = vshll.u32 %v2321, 16
      %v2458 = vrot.slane %v2456, 2
      %v2459 = vor.u32 %v2455, %v2458
      %v2460 = vsel %vm2326, %v2450, %v2459
      %v2462 = vshrl.u32 %v2322, 16
      %v2464 = vrot.slane %v2462, 1
      %v2465 = vshll.u32 %v2322, 16
      %v2467 = vrot.slane %v2465, 2
      %v2468 = vor.u32 %v2464, %v2467
      %v2469 = vsel %vm2326, %v2459, %v2468
      %v2471 = vshrl.u32 %v2323, 16
      %v2473 = vrot.slane %v2471, 1
      %v2474 = vshll.u32 %v2323, 16
      %v2476 = vrot.slane %v2474, 2
      %v2477 = vor.u32 %v2473, %v2476
      %v2478 = vsel %vm2326, %v2468, %v2477
      %v2480 = vshrl.u32 %v2324, 16
      %v2482 = vrot.slane %v2480, 1
      %v2483 = vshll.u32 %v2324, 16
      %v2485 = vrot.slane %v2483, 2
      %v2486 = vor.u32 %v2482, %v2485
      %v2487 = vsel %vm2326, %v2477, %v2486
      %v2489 = vshrl.u32 %v2325, 16
      %v2491 = vrot.slane %v2489, 1
      %v2492 = vshll.u32 %v2325, 16
      %v2494 = vrot.slane %v2492, 2
      %v2495 = vor.u32 %v2491, %v2494
      %v2496 = vsel %vm2326, %v2486, %v2495
      %v2531 = vunpack.c.l.b16 %v2217
      %v2532 = vunpack.c.l.b16 %v2218
      %v2533 = vunpack.c.l.b16 %v2219
      %v2534 = vunpack.c.l.b16 %v2220
      %v2535 = vunpack.c.l.b16 %v2221
      %v2536 = vunpack.c.l.b16 %v2222
      %v2537 = vunpack.c.l.b16 %v2223
      %v2538 = vunpack.c.l.b16 %v2224
      %v2539 = vunpack.c.l.b16 %v2225
      %v2540 = vunpack.c.l.b16 %v2226
      %v2541 = vunpack.c.l.b16 %v2227
      %v2542 = vunpack.c.l.b16 %v2228
      %v2543 = vunpack.c.l.b16 %v2229
      %v2544 = vunpack.c.l.b16 %v2230
      %v2545 = vunpack.c.l.b16 %v2231
      %v2546 = vunpack.c.l.b16 %v2232
      %v2547 = vpack.c.b16 %v2532, %v2531
      %v2548 = vpack.c.b16 %v2534, %v2533
      %v2549 = vpack.c.b16 %v2536, %v2535
      %v2550 = vpack.c.b16 %v2538, %v2537
      %v2551 = vpack.c.b16 %v2540, %v2539
      %v2552 = vpack.c.b16 %v2542, %v2541
      %v2553 = vpack.c.b16 %v2544, %v2543
      %v2554 = vpack.c.b16 %v2546, %v2545
      %2563 = vmatpush.bf16.msra.mxu0 %v2554
      %2564 = vmatpush.bf16.msra.mxu0 %v2553
      %2565 = vmatpush.bf16.msra.mxu0 %v2552
      %2566 = vmatpush.bf16.msra.mxu0 %v2551
      %2567 = vmatpush.bf16.msra.mxu0 %v2550
      %2568 = vmatpush.bf16.msra.mxu0 %v2549
      %2569 = vmatpush.bf16.msra.mxu0 %v2548
      %2570 = vmatpush.bf16.msra.mxu0 %v2547
      %2571 = vmatmul.bf16.gmra.mxu0 %v2343
      %v2572 = vpop.f32.mrf.mxu0
      %v2573 = vadd.f32 0.0, %v2572
      %v2574 = vpop.f32.mrf.mxu0
      %v2575 = vadd.f32 0.0, %v2574
      %2576 = vmatmul.bf16.gmra.mxu0 %v2352
      %v2577 = vpop.f32.mrf.mxu0
      %v2578 = vadd.f32 0.0, %v2577
      %v2579 = vpop.f32.mrf.mxu0
      %v2580 = vadd.f32 0.0, %v2579
      %2581 = vmatmul.bf16.gmra.mxu0 %v2361
      %v2582 = vpop.f32.mrf.mxu0
      %v2583 = vadd.f32 0.0, %v2582
      %v2584 = vpop.f32.mrf.mxu0
      %v2585 = vadd.f32 0.0, %v2584
      %2586 = vmatmul.bf16.gmra.mxu0 %v2370
      %v2587 = vpop.f32.mrf.mxu0
      %v2588 = vadd.f32 0.0, %v2587
      %v2589 = vpop.f32.mrf.mxu0
      %v2590 = vadd.f32 0.0, %v2589
      %2591 = vmatmul.bf16.gmra.mxu0 %v2379
      %v2592 = vpop.f32.mrf.mxu0
      %v2593 = vadd.f32 0.0, %v2592
      %v2594 = vpop.f32.mrf.mxu0
      %v2595 = vadd.f32 0.0, %v2594
      %2596 = vmatmul.bf16.gmra.mxu0 %v2388
      %v2597 = vpop.f32.mrf.mxu0
      %v2598 = vadd.f32 0.0, %v2597
      %v2599 = vpop.f32.mrf.mxu0
      %v2600 = vadd.f32 0.0, %v2599
      %2601 = vmatmul.bf16.gmra.mxu0 %v2397
      %v2602 = vpop.f32.mrf.mxu0
      %v2603 = vadd.f32 0.0, %v2602
      %v2604 = vpop.f32.mrf.mxu0
      %v2605 = vadd.f32 0.0, %v2604
      %2606 = vmatmul.bf16.gmra.mxu0 %v2406
      %v2607 = vpop.f32.mrf.mxu0
      %v2608 = vadd.f32 0.0, %v2607
      %v2609 = vpop.f32.mrf.mxu0
      %v2610 = vadd.f32 0.0, %v2609
      %2611 = vmatmul.bf16.gmra.mxu0 %v2415
      %v2612 = vpop.f32.mrf.mxu0
      %v2613 = vadd.f32 0.0, %v2612
      %v2614 = vpop.f32.mrf.mxu0
      %v2615 = vadd.f32 0.0, %v2614
      %2616 = vmatmul.bf16.gmra.mxu0 %v2424
      %v2617 = vpop.f32.mrf.mxu0
      %v2618 = vadd.f32 0.0, %v2617
      %v2619 = vpop.f32.mrf.mxu0
      %v2620 = vadd.f32 0.0, %v2619
      %2621 = vmatmul.bf16.gmra.mxu0 %v2433
      %v2622 = vpop.f32.mrf.mxu0
      %v2623 = vadd.f32 0.0, %v2622
      %v2624 = vpop.f32.mrf.mxu0
      %v2625 = vadd.f32 0.0, %v2624
      %2626 = vmatmul.bf16.gmra.mxu0 %v2442
      %v2627 = vpop.f32.mrf.mxu0
      %v2628 = vadd.f32 0.0, %v2627
      %v2629 = vpop.f32.mrf.mxu0
      %v2630 = vadd.f32 0.0, %v2629
      %2631 = vmatmul.bf16.gmra.mxu0 %v2451
      %v2632 = vpop.f32.mrf.mxu0
      %v2633 = vadd.f32 0.0, %v2632
      %v2634 = vpop.f32.mrf.mxu0
      %v2635 = vadd.f32 0.0, %v2634
      %2636 = vmatmul.bf16.gmra.mxu0 %v2460
      %v2637 = vpop.f32.mrf.mxu0
      %v2638 = vadd.f32 0.0, %v2637
      %v2639 = vpop.f32.mrf.mxu0
      %v2640 = vadd.f32 0.0, %v2639
      %2641 = vmatmul.bf16.gmra.mxu0 %v2469
      %v2642 = vpop.f32.mrf.mxu0
      %v2643 = vadd.f32 0.0, %v2642
      %v2644 = vpop.f32.mrf.mxu0
      %v2645 = vadd.f32 0.0, %v2644
      %2646 = vmatmul.bf16.gmra.mxu0 %v2478
      %v2647 = vpop.f32.mrf.mxu0
      %v2648 = vadd.f32 0.0, %v2647
      %v2649 = vpop.f32.mrf.mxu0
      %v2650 = vadd.f32 0.0, %v2649
      %2651 = vmatmul.bf16.gmra.mxu0 %v2487
      %v2652 = vpop.f32.mrf.mxu0
      %v2653 = vadd.f32 0.0, %v2652
      %v2654 = vpop.f32.mrf.mxu0
      %v2655 = vadd.f32 0.0, %v2654
      %2656 = vmatmul.bf16.gmra.mxu0 %v2496
      %v2657 = vpop.f32.mrf.mxu0
      %v2658 = vadd.f32 0.0, %v2657
      %v2659 = vpop.f32.mrf.mxu0
      %v2660 = vadd.f32 0.0, %v2659
      %2661 = vdwg.mxu0
      %v2662 = vadd.f32 %v2143, %v2573
      %v2663 = vadd.f32 %v2144, %v2575
      %v2664 = vadd.f32 %v2145, %v2578
      %v2665 = vadd.f32 %v2146, %v2580
      %v2666 = vadd.f32 %v2147, %v2583
      %v2667 = vadd.f32 %v2148, %v2585
      %v2668 = vadd.f32 %v2149, %v2588
      %v2669 = vadd.f32 %v2150, %v2590
      %v2670 = vadd.f32 %v2151, %v2593
      %v2671 = vadd.f32 %v2152, %v2595
      %v2672 = vadd.f32 %v2153, %v2598
      %v2673 = vadd.f32 %v2154, %v2600
      %v2674 = vadd.f32 %v2155, %v2603
      %v2675 = vadd.f32 %v2156, %v2605
      %v2676 = vadd.f32 %v2157, %v2608
      %v2677 = vadd.f32 %v2158, %v2610
      %v2678 = vadd.f32 %v2159, %v2613
      %v2679 = vadd.f32 %v2160, %v2615
      %v2680 = vadd.f32 %v2161, %v2618
      %v2681 = vadd.f32 %v2162, %v2620
      %v2682 = vadd.f32 %v2163, %v2623
      %v2683 = vadd.f32 %v2164, %v2625
      %v2684 = vadd.f32 %v2165, %v2628
      %v2685 = vadd.f32 %v2166, %v2630
      %v2686 = vadd.f32 %v2167, %v2633
      %v2687 = vadd.f32 %v2168, %v2635
      %v2688 = vadd.f32 %v2169, %v2638
      %v2689 = vadd.f32 %v2170, %v2640
      %v2690 = vadd.f32 %v2171, %v2643
      %v2691 = vadd.f32 %v2172, %v2645
      %v2692 = vadd.f32 %v2173, %v2648
      %v2693 = vadd.f32 %v2174, %v2650
      %v2694 = vadd.f32 %v2175, %v2653
      %v2695 = vadd.f32 %v2176, %v2655
      %v2696 = vadd.f32 %v2177, %v2658
      %v2697 = vadd.f32 %v2178, %v2660
      %2698 = vst [vmem:[#allocation4] sm:$0xff] %v2662
      %2699 = vst [vmem:[#allocation4 + $0x8] sm:$0xff] %v2663
      %2700 = vst [vmem:[#allocation4 + $0x10] sm:$0xff] %v2664
      %2701 = vst [vmem:[#allocation4 + $0x18] sm:$0xff] %v2665
      %2702 = vst [vmem:[#allocation4 + $0x20] sm:$0xff] %v2666
      %2703 = vst [vmem:[#allocation4 + $0x28] sm:$0xff] %v2667
      %2704 = vst [vmem:[#allocation4 + $0x30] sm:$0xff] %v2668
      %2705 = vst [vmem:[#allocation4 + $0x38] sm:$0xff] %v2669
      %2706 = vst [vmem:[#allocation4 + $0x40] sm:$0xff] %v2670
      %2707 = vst [vmem:[#allocation4 + $0x48] sm:$0xff] %v2671
      %2708 = vst [vmem:[#allocation4 + $0x50] sm:$0xff] %v2672
      %2709 = vst [vmem:[#allocation4 + $0x58] sm:$0xff] %v2673
      %2710 = vst [vmem:[#allocation4 + $0x60] sm:$0xff] %v2674
      %2711 = vst [vmem:[#allocation4 + $0x68] sm:$0xff] %v2675
      %2712 = vst [vmem:[#allocation4 + $0x70] sm:$0xff] %v2676
      %2713 = vst [vmem:[#allocation4 + $0x78] sm:$0xff] %v2677
      %2714 = vst [vmem:[#allocation4 + $0x80] sm:$0xff] %v2678
      %2715 = vst [vmem:[#allocation4 + $0x88] sm:$0xff] %v2679
      %2716 = vst [vmem:[#allocation4 + $0x90] sm:$0xff] %v2680
      %2717 = vst [vmem:[#allocation4 + $0x98] sm:$0xff] %v2681
      %2718 = vst [vmem:[#allocation4 + $0xa0] sm:$0xff] %v2682
      %2719 = vst [vmem:[#allocation4 + $0xa8] sm:$0xff] %v2683
      %2720 = vst [vmem:[#allocation4 + $0xb0] sm:$0xff] %v2684
      %2721 = vst [vmem:[#allocation4 + $0xb8] sm:$0xff] %v2685
      %2722 = vst [vmem:[#allocation4 + $0xc0] sm:$0xff] %v2686
      %2723 = vst [vmem:[#allocation4 + $0xc8] sm:$0xff] %v2687
      %2724 = vst [vmem:[#allocation4 + $0xd0] sm:$0xff] %v2688
      %2725 = vst [vmem:[#allocation4 + $0xd8] sm:$0xff] %v2689
      %2726 = vst [vmem:[#allocation4 + $0xe0] sm:$0xff] %v2690
      %2727 = vst [vmem:[#allocation4 + $0xe8] sm:$0xff] %v2691
      %2728 = vst [vmem:[#allocation4 + $0xf0] sm:$0xff] %v2692
      %2729 = vst [vmem:[#allocation4 + $0xf8] sm:$0xff] %v2693
      %2730 = vst [vmem:[#allocation4 + $0x100] sm:$0xff] %v2694
      %2731 = vst [vmem:[#allocation4 + $0x108] sm:$0xff] %v2695
      %2732 = vst [vmem:[#allocation4 + $0x110] sm:$0xff] %v2696
      %2733 = vst [vmem:[#allocation4 + $0x118] sm:$0xff] %v2697
      %v2734 = vld [vmem:[#allocation4] sm:$0xff]
      %v2735 = vld [vmem:[#allocation4 + $0x8] sm:$0xff]
      %v2736 = vld [vmem:[#allocation4 + $0x10] sm:$0xff]
      %v2737 = vld [vmem:[#allocation4 + $0x18] sm:$0xff]
      %v2738 = vld [vmem:[#allocation4 + $0x20] sm:$0xff]
      %v2739 = vld [vmem:[#allocation4 + $0x28] sm:$0xff]
      %v2740 = vld [vmem:[#allocation4 + $0x30] sm:$0xff]
      %v2741 = vld [vmem:[#allocation4 + $0x38] sm:$0xff]
      %v2742 = vld [vmem:[#allocation4 + $0x40] sm:$0xff]
      %v2743 = vld [vmem:[#allocation4 + $0x48] sm:$0xff]
      %v2744 = vld [vmem:[#allocation4 + $0x50] sm:$0xff]
      %v2745 = vld [vmem:[#allocation4 + $0x58] sm:$0xff]
      %v2746 = vld [vmem:[#allocation4 + $0x60] sm:$0xff]
      %v2747 = vld [vmem:[#allocation4 + $0x68] sm:$0xff]
      %v2748 = vld [vmem:[#allocation4 + $0x70] sm:$0xff]
      %v2749 = vld [vmem:[#allocation4 + $0x78] sm:$0xff]
      %v2750 = vld [vmem:[#allocation4 + $0x80] sm:$0xff]
      %v2751 = vld [vmem:[#allocation4 + $0x88] sm:$0xff]
      %v2752 = vld [vmem:[#allocation4 + $0x90] sm:$0xff]
      %v2753 = vld [vmem:[#allocation4 + $0x98] sm:$0xff]
      %v2754 = vld [vmem:[#allocation4 + $0xa0] sm:$0xff]
      %v2755 = vld [vmem:[#allocation4 + $0xa8] sm:$0xff]
      %v2756 = vld [vmem:[#allocation4 + $0xb0] sm:$0xff]
      %v2757 = vld [vmem:[#allocation4 + $0xb8] sm:$0xff]
      %v2758 = vld [vmem:[#allocation4 + $0xc0] sm:$0xff]
      %v2759 = vld [vmem:[#allocation4 + $0xc8] sm:$0xff]
      %v2760 = vld [vmem:[#allocation4 + $0xd0] sm:$0xff]
      %v2761 = vld [vmem:[#allocation4 + $0xd8] sm:$0xff]
      %v2762 = vld [vmem:[#allocation4 + $0xe0] sm:$0xff]
      %v2763 = vld [vmem:[#allocation4 + $0xe8] sm:$0xff]
      %v2764 = vld [vmem:[#allocation4 + $0xf0] sm:$0xff]
      %v2765 = vld [vmem:[#allocation4 + $0xf8] sm:$0xff]
      %v2766 = vld [vmem:[#allocation4 + $0x100] sm:$0xff]
      %v2767 = vld [vmem:[#allocation4 + $0x108] sm:$0xff]
      %v2768 = vld [vmem:[#allocation4 + $0x110] sm:$0xff]
      %v2769 = vld [vmem:[#allocation4 + $0x118] sm:$0xff]
      %v2770 = vld [vmem:[%s310 + $0x8] sm:$0xc]
      %v2771 = vld [vmem:[%s310 + $0xc] sm:$0xf]
      %v2772 = vld [vmem:[%s310 + $0x10] sm:$0xf]
      %v2773 = vld [vmem:[%s310 + $0x14] sm:$0xf]
      %v2774 = vld [vmem:[%s310 + $0x18] sm:$0xf]
      %v2775 = vld [vmem:[%s310 + $0x1c] sm:$0xf]
      %v2776 = vld [vmem:[%s310 + $0x20] sm:$0xf]
      %v2777 = vld [vmem:[%s310 + $0x24] sm:$0xf]
      %v2778 = vld [vmem:[%s310 + $0x28] sm:$0xf]
      %v2779 = vld [vmem:[%s310 + $0x2c] sm:$0xf]
      %v2780 = vld [vmem:[%s310 + $0x30] sm:$0xf]
      %v2781 = vld [vmem:[%s310 + $0x34] sm:$0xf]
      %v2782 = vld [vmem:[%s310 + $0x38] sm:$0xf]
      %v2783 = vld [vmem:[%s310 + $0x3c] sm:$0xf]
      %v2784 = vld [vmem:[%s310 + $0x40] sm:$0xf]
      %v2785 = vld [vmem:[%s310 + $0x44] sm:$0xf]
      %v2786 = vld [vmem:[%s310 + $0x48] sm:$0xf]
      %v2787 = vld [vmem:[%s310 + $0x4c] sm:$0xf]
      %v2788 = vld [vmem:[%s310 + $0x50] sm:$0xf]
      %v2789 = vld [vmem:[%s310 + $0x54] sm:$0xf]
      %v2790 = vld [vmem:[%s310 + $0x58] sm:$0xf]
      %v2791 = vld [vmem:[%s310 + $0x5c] sm:$0xf]
      %v2792 = vld [vmem:[%s310 + $0x60] sm:$0xf]
      %v2793 = vld [vmem:[%s310 + $0x64] sm:$0xf]
      %v2794 = vld [vmem:[%s310 + $0x68] sm:$0xf]
      %v2795 = vld [vmem:[%s310 + $0x6c] sm:$0xf]
      %v2796 = vld [vmem:[%s310 + $0x70] sm:$0xf]
      %v2797 = vld [vmem:[%s310 + $0x74] sm:$0xf]
      %v2798 = vld [vmem:[%s310 + $0x78] sm:$0xf]
      %v2799 = vld [vmem:[%s310 + $0x7c] sm:$0xf]
      %v2800 = vld [vmem:[%s310 + $0x80] sm:$0xf]
      %v2801 = vld [vmem:[%s310 + $0x84] sm:$0xf]
      %v2802 = vld [vmem:[%s310 + $0x88] sm:$0xf]
      %v2803 = vld [vmem:[%s310 + $0x8c] sm:$0xf]
      %v2804 = vld [vmem:[%s310 + $0x90] sm:$0xf]
      %v2805 = vld [vmem:[%s310 + $0x94] sm:$0xf]
      %v2806 = vld [vmem:[%s310 + $0x98] sm:$0x3]
      %s2807 = scalar_lea.vmem %s1, 320
      %v2808 = vld [vmem:[%s2807] sm:$0xf]
      %v2809 = vld [vmem:[%s2807 + $0x4] sm:$0xf]
      %v2810 = vld [vmem:[%s2807 + $0x8] sm:$0xf]
      %v2811 = vld [vmem:[%s2807 + $0xc] sm:$0xf]
      %v2812 = vld [vmem:[%s2807 + $0x10] sm:$0xf]
      %v2813 = vld [vmem:[%s2807 + $0x14] sm:$0xf]
      %v2814 = vld [vmem:[%s2807 + $0x18] sm:$0xf]
      %v2815 = vld [vmem:[%s2807 + $0x1c] sm:$0xf]
      %v2816 = vld [vmem:[%s2807 + $0x20] sm:$0xf]
      %v2817 = vld [vmem:[%s2807 + $0x24] sm:$0xf]
      %v2818 = vld [vmem:[%s2807 + $0x28] sm:$0xf]
      %v2819 = vld [vmem:[%s2807 + $0x2c] sm:$0xf]
      %v2820 = vld [vmem:[%s2807 + $0x30] sm:$0xf]
      %v2821 = vld [vmem:[%s2807 + $0x34] sm:$0xf]
      %v2822 = vld [vmem:[%s2807 + $0x38] sm:$0xf]
      %v2823 = vld [vmem:[%s2807 + $0x3c] sm:$0xf]
      %v2861 = vunpack.c.l.b16 %v2770
      %v2862 = vunpack.c.l.b16 %v2771
      %v2863 = vunpack.c.l.b16 %v2772
      %v2864 = vunpack.c.l.b16 %v2773
      %v2865 = vunpack.c.l.b16 %v2774
      %v2866 = vunpack.c.l.b16 %v2775
      %v2867 = vunpack.c.l.b16 %v2776
      %v2868 = vunpack.c.l.b16 %v2777
      %v2869 = vunpack.c.l.b16 %v2778
      %v2870 = vunpack.c.l.b16 %v2779
      %v2871 = vunpack.c.l.b16 %v2780
      %v2872 = vunpack.c.l.b16 %v2781
      %v2873 = vunpack.c.l.b16 %v2782
      %v2874 = vunpack.c.l.b16 %v2783
      %v2875 = vunpack.c.l.b16 %v2784
      %v2876 = vunpack.c.l.b16 %v2785
      %v2877 = vunpack.c.l.b16 %v2786
      %v2878 = vunpack.c.l.b16 %v2787
      %v2879 = vunpack.c.l.b16 %v2788
      %v2880 = vunpack.c.l.b16 %v2789
      %v2881 = vunpack.c.l.b16 %v2790
      %v2882 = vunpack.c.l.b16 %v2791
      %v2883 = vunpack.c.l.b16 %v2792
      %v2884 = vunpack.c.l.b16 %v2793
      %v2885 = vunpack.c.l.b16 %v2794
      %v2886 = vunpack.c.l.b16 %v2795
      %v2887 = vunpack.c.l.b16 %v2796
      %v2888 = vunpack.c.l.b16 %v2797
      %v2889 = vunpack.c.l.b16 %v2798
      %v2890 = vunpack.c.l.b16 %v2799
      %v2891 = vunpack.c.l.b16 %v2800
      %v2892 = vunpack.c.l.b16 %v2801
      %v2893 = vunpack.c.l.b16 %v2802
      %v2894 = vunpack.c.l.b16 %v2803
      %v2895 = vunpack.c.l.b16 %v2804
      %v2896 = vunpack.c.l.b16 %v2805
      %v2897 = vunpack.c.l.b16 %v2806
      %v2898 = vpack.c.b16 %v2862, %v2861
      %v2899 = vpack.c.b16 %v2864, %v2863
      %v2900 = vpack.c.b16 %v2866, %v2865
      %v2901 = vpack.c.b16 %v2868, %v2867
      %v2902 = vpack.c.b16 %v2870, %v2869
      %v2903 = vpack.c.b16 %v2872, %v2871
      %v2904 = vpack.c.b16 %v2874, %v2873
      %v2905 = vpack.c.b16 %v2876, %v2875
      %v2906 = vpack.c.b16 %v2878, %v2877
      %v2907 = vpack.c.b16 %v2880, %v2879
      %v2908 = vpack.c.b16 %v2882, %v2881
      %v2909 = vpack.c.b16 %v2884, %v2883
      %v2910 = vpack.c.b16 %v2886, %v2885
      %v2911 = vpack.c.b16 %v2888, %v2887
      %v2912 = vpack.c.b16 %v2890, %v2889
      %v2913 = vpack.c.b16 %v2892, %v2891
      %v2914 = vpack.c.b16 %v2894, %v2893
      %v2915 = vpack.c.b16 %v2896, %v2895
      %v2916 = vpack.c.b16 %v2897, %v2897
      %vm2917 = vcmask 1045504
      %v2918 = vrot.slane %v2898, 2
      %v2919 = vrot.slane %v2899, 2
      %v2920 = vsel %vm2917, %v2918, %v2919
      %v2921 = vrot.slane %v2900, 2
      %v2922 = vsel %vm2917, %v2919, %v2921
      %v2923 = vrot.slane %v2901, 2
      %v2924 = vsel %vm2917, %v2921, %v2923
      %v2925 = vrot.slane %v2902, 2
      %v2926 = vsel %vm2917, %v2923, %v2925
      %v2927 = vrot.slane %v2903, 2
      %v2928 = vsel %vm2917, %v2925, %v2927
      %v2929 = vrot.slane %v2904, 2
      %v2930 = vsel %vm2917, %v2927, %v2929
      %v2931 = vrot.slane %v2905, 2
      %v2932 = vsel %vm2917, %v2929, %v2931
      %v2933 = vrot.slane %v2906, 2
      %v2934 = vsel %vm2917, %v2931, %v2933
      %v2935 = vrot.slane %v2907, 2
      %v2936 = vsel %vm2917, %v2933, %v2935
      %v2937 = vrot.slane %v2908, 2
      %v2938 = vsel %vm2917, %v2935, %v2937
      %v2939 = vrot.slane %v2909, 2
      %v2940 = vsel %vm2917, %v2937, %v2939
      %v2941 = vrot.slane %v2910, 2
      %v2942 = vsel %vm2917, %v2939, %v2941
      %v2943 = vrot.slane %v2911, 2
      %v2944 = vsel %vm2917, %v2941, %v2943
      %v2945 = vrot.slane %v2912, 2
      %v2946 = vsel %vm2917, %v2943, %v2945
      %v2947 = vrot.slane %v2913, 2
      %v2948 = vsel %vm2917, %v2945, %v2947
      %v2949 = vrot.slane %v2914, 2
      %v2950 = vsel %vm2917, %v2947, %v2949
      %v2951 = vrot.slane %v2915, 2
      %v2952 = vsel %vm2917, %v2949, %v2951
      %v2953 = vrot.slane %v2916, 2
      %v2954 = vsel %vm2917, %v2951, %v2953
      %v2989 = vunpack.c.l.b16 %v2808
      %v2990 = vunpack.c.l.b16 %v2809
      %v2991 = vunpack.c.l.b16 %v2810
      %v2992 = vunpack.c.l.b16 %v2811
      %v2993 = vunpack.c.l.b16 %v2812
      %v2994 = vunpack.c.l.b16 %v2813
      %v2995 = vunpack.c.l.b16 %v2814
      %v2996 = vunpack.c.l.b16 %v2815
      %v2997 = vunpack.c.l.b16 %v2816
      %v2998 = vunpack.c.l.b16 %v2817
      %v2999 = vunpack.c.l.b16 %v2818
      %v3000 = vunpack.c.l.b16 %v2819
      %v3001 = vunpack.c.l.b16 %v2820
      %v3002 = vunpack.c.l.b16 %v2821
      %v3003 = vunpack.c.l.b16 %v2822
      %v3004 = vunpack.c.l.b16 %v2823
      %v3005 = vpack.c.b16 %v2990, %v2989
      %v3006 = vpack.c.b16 %v2992, %v2991
      %v3007 = vpack.c.b16 %v2994, %v2993
      %v3008 = vpack.c.b16 %v2996, %v2995
      %v3009 = vpack.c.b16 %v2998, %v2997
      %v3010 = vpack.c.b16 %v3000, %v2999
      %v3011 = vpack.c.b16 %v3002, %v3001
      %v3012 = vpack.c.b16 %v3004, %v3003
      %3021 = vmatpush.bf16.msra.mxu0 %v3012
      %3022 = vmatpush.bf16.msra.mxu0 %v3011
      %3023 = vmatpush.bf16.msra.mxu0 %v3010
      %3024 = vmatpush.bf16.msra.mxu0 %v3009
      %3025 = vmatpush.bf16.msra.mxu0 %v3008
      %3026 = vmatpush.bf16.msra.mxu0 %v3007
      %3027 = vmatpush.bf16.msra.mxu0 %v3006
      %3028 = vmatpush.bf16.msra.mxu0 %v3005
      %3029 = vmatmul.bf16.gmra.mxu0 %v2920
      %v3030 = vpop.f32.mrf.mxu0
      %v3031 = vadd.f32 0.0, %v3030
      %v3032 = vpop.f32.mrf.mxu0
      %v3033 = vadd.f32 0.0, %v3032
      %3034 = vmatmul.bf16.gmra.mxu0 %v2922
      %v3035 = vpop.f32.mrf.mxu0
      %v3036 = vadd.f32 0.0, %v3035
      %v3037 = vpop.f32.mrf.mxu0
      %v3038 = vadd.f32 0.0, %v3037
      %3039 = vmatmul.bf16.gmra.mxu0 %v2924
      %v3040 = vpop.f32.mrf.mxu0
      %v3041 = vadd.f32 0.0, %v3040
      %v3042 = vpop.f32.mrf.mxu0
      %v3043 = vadd.f32 0.0, %v3042
      %3044 = vmatmul.bf16.gmra.mxu0 %v2926
      %v3045 = vpop.f32.mrf.mxu0
      %v3046 = vadd.f32 0.0, %v3045
      %v3047 = vpop.f32.mrf.mxu0
      %v3048 = vadd.f32 0.0, %v3047
      %3049 = vmatmul.bf16.gmra.mxu0 %v2928
      %v3050 = vpop.f32.mrf.mxu0
      %v3051 = vadd.f32 0.0, %v3050
      %v3052 = vpop.f32.mrf.mxu0
      %v3053 = vadd.f32 0.0, %v3052
      %3054 = vmatmul.bf16.gmra.mxu0 %v2930
      %v3055 = vpop.f32.mrf.mxu0
      %v3056 = vadd.f32 0.0, %v3055
      %v3057 = vpop.f32.mrf.mxu0
      %v3058 = vadd.f32 0.0, %v3057
      %3059 = vmatmul.bf16.gmra.mxu0 %v2932
      %v3060 = vpop.f32.mrf.mxu0
      %v3061 = vadd.f32 0.0, %v3060
      %v3062 = vpop.f32.mrf.mxu0
      %v3063 = vadd.f32 0.0, %v3062
      %3064 = vmatmul.bf16.gmra.mxu0 %v2934
      %v3065 = vpop.f32.mrf.mxu0
      %v3066 = vadd.f32 0.0, %v3065
      %v3067 = vpop.f32.mrf.mxu0
      %v3068 = vadd.f32 0.0, %v3067
      %3069 = vmatmul.bf16.gmra.mxu0 %v2936
      %v3070 = vpop.f32.mrf.mxu0
      %v3071 = vadd.f32 0.0, %v3070
      %v3072 = vpop.f32.mrf.mxu0
      %v3073 = vadd.f32 0.0, %v3072
      %3074 = vmatmul.bf16.gmra.mxu0 %v2938
      %v3075 = vpop.f32.mrf.mxu0
      %v3076 = vadd.f32 0.0, %v3075
      %v3077 = vpop.f32.mrf.mxu0
      %v3078 = vadd.f32 0.0, %v3077
      %3079 = vmatmul.bf16.gmra.mxu0 %v2940
      %v3080 = vpop.f32.mrf.mxu0
      %v3081 = vadd.f32 0.0, %v3080
      %v3082 = vpop.f32.mrf.mxu0
      %v3083 = vadd.f32 0.0, %v3082
      %3084 = vmatmul.bf16.gmra.mxu0 %v2942
      %v3085 = vpop.f32.mrf.mxu0
      %v3086 = vadd.f32 0.0, %v3085
      %v3087 = vpop.f32.mrf.mxu0
      %v3088 = vadd.f32 0.0, %v3087
      %3089 = vmatmul.bf16.gmra.mxu0 %v2944
      %v3090 = vpop.f32.mrf.mxu0
      %v3091 = vadd.f32 0.0, %v3090
      %v3092 = vpop.f32.mrf.mxu0
      %v3093 = vadd.f32 0.0, %v3092
      %3094 = vmatmul.bf16.gmra.mxu0 %v2946
      %v3095 = vpop.f32.mrf.mxu0
      %v3096 = vadd.f32 0.0, %v3095
      %v3097 = vpop.f32.mrf.mxu0
      %v3098 = vadd.f32 0.0, %v3097
      %3099 = vmatmul.bf16.gmra.mxu0 %v2948
      %v3100 = vpop.f32.mrf.mxu0
      %v3101 = vadd.f32 0.0, %v3100
      %v3102 = vpop.f32.mrf.mxu0
      %v3103 = vadd.f32 0.0, %v3102
      %3104 = vmatmul.bf16.gmra.mxu0 %v2950
      %v3105 = vpop.f32.mrf.mxu0
      %v3106 = vadd.f32 0.0, %v3105
      %v3107 = vpop.f32.mrf.mxu0
      %v3108 = vadd.f32 0.0, %v3107
      %3109 = vmatmul.bf16.gmra.mxu0 %v2952
      %v3110 = vpop.f32.mrf.mxu0
      %v3111 = vadd.f32 0.0, %v3110
      %v3112 = vpop.f32.mrf.mxu0
      %v3113 = vadd.f32 0.0, %v3112
      %3114 = vmatmul.bf16.gmra.mxu0 %v2954
      %v3115 = vpop.f32.mrf.mxu0
      %v3116 = vadd.f32 0.0, %v3115
      %v3117 = vpop.f32.mrf.mxu0
      %v3118 = vadd.f32 0.0, %v3117
      %3119 = vdwg.mxu0
      %v3120 = vadd.f32 %v2734, %v3031
      %v3121 = vadd.f32 %v2735, %v3033
      %v3122 = vadd.f32 %v2736, %v3036
      %v3123 = vadd.f32 %v2737, %v3038
      %v3124 = vadd.f32 %v2738, %v3041
      %v3125 = vadd.f32 %v2739, %v3043
      %v3126 = vadd.f32 %v2740, %v3046
      %v3127 = vadd.f32 %v2741, %v3048
      %v3128 = vadd.f32 %v2742, %v3051
      %v3129 = vadd.f32 %v2743, %v3053
      %v3130 = vadd.f32 %v2744, %v3056
      %v3131 = vadd.f32 %v2745, %v3058
      %v3132 = vadd.f32 %v2746, %v3061
      %v3133 = vadd.f32 %v2747, %v3063
      %v3134 = vadd.f32 %v2748, %v3066
      %v3135 = vadd.f32 %v2749, %v3068
      %v3136 = vadd.f32 %v2750, %v3071
      %v3137 = vadd.f32 %v2751, %v3073
      %v3138 = vadd.f32 %v2752, %v3076
      %v3139 = vadd.f32 %v2753, %v3078
      %v3140 = vadd.f32 %v2754, %v3081
      %v3141 = vadd.f32 %v2755, %v3083
      %v3142 = vadd.f32 %v2756, %v3086
      %v3143 = vadd.f32 %v2757, %v3088
      %v3144 = vadd.f32 %v2758, %v3091
      %v3145 = vadd.f32 %v2759, %v3093
      %v3146 = vadd.f32 %v2760, %v3096
      %v3147 = vadd.f32 %v2761, %v3098
      %v3148 = vadd.f32 %v2762, %v3101
      %v3149 = vadd.f32 %v2763, %v3103
      %v3150 = vadd.f32 %v2764, %v3106
      %v3151 = vadd.f32 %v2765, %v3108
      %v3152 = vadd.f32 %v2766, %v3111
      %v3153 = vadd.f32 %v2767, %v3113
      %v3154 = vadd.f32 %v2768, %v3116
      %v3155 = vadd.f32 %v2769, %v3118
      %3156 = vst [vmem:[#allocation4] sm:$0xff] %v3120
      %3157 = vst [vmem:[#allocation4 + $0x8] sm:$0xff] %v3121
      %3158 = vst [vmem:[#allocation4 + $0x10] sm:$0xff] %v3122
      %3159 = vst [vmem:[#allocation4 + $0x18] sm:$0xff] %v3123
      %3160 = vst [vmem:[#allocation4 + $0x20] sm:$0xff] %v3124
      %3161 = vst [vmem:[#allocation4 + $0x28] sm:$0xff] %v3125
      %3162 = vst [vmem:[#allocation4 + $0x30] sm:$0xff] %v3126
      %3163 = vst [vmem:[#allocation4 + $0x38] sm:$0xff] %v3127
      %3164 = vst [vmem:[#allocation4 + $0x40] sm:$0xff] %v3128
      %3165 = vst [vmem:[#allocation4 + $0x48] sm:$0xff] %v3129
      %3166 = vst [vmem:[#allocation4 + $0x50] sm:$0xff] %v3130
      %3167 = vst [vmem:[#allocation4 + $0x58] sm:$0xff] %v3131
      %3168 = vst [vmem:[#allocation4 + $0x60] sm:$0xff] %v3132
      %3169 = vst [vmem:[#allocation4 + $0x68] sm:$0xff] %v3133
      %3170 = vst [vmem:[#allocation4 + $0x70] sm:$0xff] %v3134
      %3171 = vst [vmem:[#allocation4 + $0x78] sm:$0xff] %v3135
      %3172 = vst [vmem:[#allocation4 + $0x80] sm:$0xff] %v3136
      %3173 = vst [vmem:[#allocation4 + $0x88] sm:$0xff] %v3137
      %3174 = vst [vmem:[#allocation4 + $0x90] sm:$0xff] %v3138
      %3175 = vst [vmem:[#allocation4 + $0x98] sm:$0xff] %v3139
      %3176 = vst [vmem:[#allocation4 + $0xa0] sm:$0xff] %v3140
      %3177 = vst [vmem:[#allocation4 + $0xa8] sm:$0xff] %v3141
      %3178 = vst [vmem:[#allocation4 + $0xb0] sm:$0xff] %v3142
      %3179 = vst [vmem:[#allocation4 + $0xb8] sm:$0xff] %v3143
      %3180 = vst [vmem:[#allocation4 + $0xc0] sm:$0xff] %v3144
      %3181 = vst [vmem:[#allocation4 + $0xc8] sm:$0xff] %v3145
      %3182 = vst [vmem:[#allocation4 + $0xd0] sm:$0xff] %v3146
      %3183 = vst [vmem:[#allocation4 + $0xd8] sm:$0xff] %v3147
      %3184 = vst [vmem:[#allocation4 + $0xe0] sm:$0xff] %v3148
      %3185 = vst [vmem:[#allocation4 + $0xe8] sm:$0xff] %v3149
      %3186 = vst [vmem:[#allocation4 + $0xf0] sm:$0xff] %v3150
      %3187 = vst [vmem:[#allocation4 + $0xf8] sm:$0xff] %v3151
      %3188 = vst [vmem:[#allocation4 + $0x100] sm:$0xff] %v3152
      %3189 = vst [vmem:[#allocation4 + $0x108] sm:$0xff] %v3153
      %3190 = vst [vmem:[#allocation4 + $0x110] sm:$0xff] %v3154
      %3191 = vst [vmem:[#allocation4 + $0x118] sm:$0xff] %v3155
      %v3192 = vld [vmem:[#allocation4] sm:$0xff]
      %v3193 = vld [vmem:[#allocation4 + $0x8] sm:$0xff]
      %v3194 = vld [vmem:[#allocation4 + $0x10] sm:$0xff]
      %v3195 = vld [vmem:[#allocation4 + $0x18] sm:$0xff]
      %v3196 = vld [vmem:[#allocation4 + $0x20] sm:$0xff]
      %v3197 = vld [vmem:[#allocation4 + $0x28] sm:$0xff]
      %v3198 = vld [vmem:[#allocation4 + $0x30] sm:$0xff]
      %v3199 = vld [vmem:[#allocation4 + $0x38] sm:$0xff]
      %v3200 = vld [vmem:[#allocation4 + $0x40] sm:$0xff]
      %v3201 = vld [vmem:[#allocation4 + $0x48] sm:$0xff]
      %v3202 = vld [vmem:[#allocation4 + $0x50] sm:$0xff]
      %v3203 = vld [vmem:[#allocation4 + $0x58] sm:$0xff]
      %v3204 = vld [vmem:[#allocation4 + $0x60] sm:$0xff]
      %v3205 = vld [vmem:[#allocation4 + $0x68] sm:$0xff]
      %v3206 = vld [vmem:[#allocation4 + $0x70] sm:$0xff]
      %v3207 = vld [vmem:[#allocation4 + $0x78] sm:$0xff]
      %v3208 = vld [vmem:[#allocation4 + $0x80] sm:$0xff]
      %v3209 = vld [vmem:[#allocation4 + $0x88] sm:$0xff]
      %v3210 = vld [vmem:[#allocation4 + $0x90] sm:$0xff]
      %v3211 = vld [vmem:[#allocation4 + $0x98] sm:$0xff]
      %v3212 = vld [vmem:[#allocation4 + $0xa0] sm:$0xff]
      %v3213 = vld [vmem:[#allocation4 + $0xa8] sm:$0xff]
      %v3214 = vld [vmem:[#allocation4 + $0xb0] sm:$0xff]
      %v3215 = vld [vmem:[#allocation4 + $0xb8] sm:$0xff]
      %v3216 = vld [vmem:[#allocation4 + $0xc0] sm:$0xff]
      %v3217 = vld [vmem:[#allocation4 + $0xc8] sm:$0xff]
      %v3218 = vld [vmem:[#allocation4 + $0xd0] sm:$0xff]
      %v3219 = vld [vmem:[#allocation4 + $0xd8] sm:$0xff]
      %v3220 = vld [vmem:[#allocation4 + $0xe0] sm:$0xff]
      %v3221 = vld [vmem:[#allocation4 + $0xe8] sm:$0xff]
      %v3222 = vld [vmem:[#allocation4 + $0xf0] sm:$0xff]
      %v3223 = vld [vmem:[#allocation4 + $0xf8] sm:$0xff]
      %v3224 = vld [vmem:[#allocation4 + $0x100] sm:$0xff]
      %v3225 = vld [vmem:[#allocation4 + $0x108] sm:$0xff]
      %v3226 = vld [vmem:[#allocation4 + $0x110] sm:$0xff]
      %v3227 = vld [vmem:[#allocation4 + $0x118] sm:$0xff]
      %v3228 = vld [vmem:[%s310 + $0x10] sm:$0xc]
      %v3229 = vld [vmem:[%s310 + $0x14] sm:$0xf]
      %v3230 = vld [vmem:[%s310 + $0x18] sm:$0xf]
      %v3231 = vld [vmem:[%s310 + $0x1c] sm:$0xf]
      %v3232 = vld [vmem:[%s310 + $0x20] sm:$0xf]
      %v3233 = vld [vmem:[%s310 + $0x24] sm:$0xf]
      %v3234 = vld [vmem:[%s310 + $0x28] sm:$0xf]
      %v3235 = vld [vmem:[%s310 + $0x2c] sm:$0xf]
      %v3236 = vld [vmem:[%s310 + $0x30] sm:$0xf]
      %v3237 = vld [vmem:[%s310 + $0x34] sm:$0xf]
      %v3238 = vld [vmem:[%s310 + $0x38] sm:$0xf]
      %v3239 = vld [vmem:[%s310 + $0x3c] sm:$0xf]
      %v3240 = vld [vmem:[%s310 + $0x40] sm:$0xf]
      %v3241 = vld [vmem:[%s310 + $0x44] sm:$0xf]
      %v3242 = vld [vmem:[%s310 + $0x48] sm:$0xf]
      %v3243 = vld [vmem:[%s310 + $0x4c] sm:$0xf]
      %v3244 = vld [vmem:[%s310 + $0x50] sm:$0xf]
      %v3245 = vld [vmem:[%s310 + $0x54] sm:$0xf]
      %v3246 = vld [vmem:[%s310 + $0x58] sm:$0xf]
      %v3247 = vld [vmem:[%s310 + $0x5c] sm:$0xf]
      %v3248 = vld [vmem:[%s310 + $0x60] sm:$0xf]
      %v3249 = vld [vmem:[%s310 + $0x64] sm:$0xf]
      %v3250 = vld [vmem:[%s310 + $0x68] sm:$0xf]
      %v3251 = vld [vmem:[%s310 + $0x6c] sm:$0xf]
      %v3252 = vld [vmem:[%s310 + $0x70] sm:$0xf]
      %v3253 = vld [vmem:[%s310 + $0x74] sm:$0xf]
      %v3254 = vld [vmem:[%s310 + $0x78] sm:$0xf]
      %v3255 = vld [vmem:[%s310 + $0x7c] sm:$0xf]
      %v3256 = vld [vmem:[%s310 + $0x80] sm:$0xf]
      %v3257 = vld [vmem:[%s310 + $0x84] sm:$0xf]
      %v3258 = vld [vmem:[%s310 + $0x88] sm:$0xf]
      %v3259 = vld [vmem:[%s310 + $0x8c] sm:$0xf]
      %v3260 = vld [vmem:[%s310 + $0x90] sm:$0xf]
      %v3261 = vld [vmem:[%s310 + $0x94] sm:$0xf]
      %v3262 = vld [vmem:[%s310 + $0x98] sm:$0xf]
      %v3263 = vld [vmem:[%s310 + $0x9c] sm:$0xf]
      %v3264 = vld [vmem:[%s310 + $0xa0] sm:$0x3]
      %s3265 = scalar_lea.vmem %s1, 384
      %v3266 = vld [vmem:[%s3265] sm:$0xf]
      %v3267 = vld [vmem:[%s3265 + $0x4] sm:$0xf]
      %v3268 = vld [vmem:[%s3265 + $0x8] sm:$0xf]
      %v3269 = vld [vmem:[%s3265 + $0xc] sm:$0xf]
      %v3270 = vld [vmem:[%s3265 + $0x10] sm:$0xf]
      %v3271 = vld [vmem:[%s3265 + $0x14] sm:$0xf]
      %v3272 = vld [vmem:[%s3265 + $0x18] sm:$0xf]
      %v3273 = vld [vmem:[%s3265 + $0x1c] sm:$0xf]
      %v3274 = vld [vmem:[%s3265 + $0x20] sm:$0xf]
      %v3275 = vld [vmem:[%s3265 + $0x24] sm:$0xf]
      %v3276 = vld [vmem:[%s3265 + $0x28] sm:$0xf]
      %v3277 = vld [vmem:[%s3265 + $0x2c] sm:$0xf]
      %v3278 = vld [vmem:[%s3265 + $0x30] sm:$0xf]
      %v3279 = vld [vmem:[%s3265 + $0x34] sm:$0xf]
      %v3280 = vld [vmem:[%s3265 + $0x38] sm:$0xf]
      %v3281 = vld [vmem:[%s3265 + $0x3c] sm:$0xf]
      %v3319 = vunpack.c.l.b16 %v3228
      %v3320 = vunpack.c.l.b16 %v3229
      %v3321 = vunpack.c.l.b16 %v3230
      %v3322 = vunpack.c.l.b16 %v3231
      %v3323 = vunpack.c.l.b16 %v3232
      %v3324 = vunpack.c.l.b16 %v3233
      %v3325 = vunpack.c.l.b16 %v3234
      %v3326 = vunpack.c.l.b16 %v3235
      %v3327 = vunpack.c.l.b16 %v3236
      %v3328 = vunpack.c.l.b16 %v3237
      %v3329 = vunpack.c.l.b16 %v3238
      %v3330 = vunpack.c.l.b16 %v3239
      %v3331 = vunpack.c.l.b16 %v3240
      %v3332 = vunpack.c.l.b16 %v3241
      %v3333 = vunpack.c.l.b16 %v3242
      %v3334 = vunpack.c.l.b16 %v3243
      %v3335 = vunpack.c.l.b16 %v3244
      %v3336 = vunpack.c.l.b16 %v3245
      %v3337 = vunpack.c.l.b16 %v3246
      %v3338 = vunpack.c.l.b16 %v3247
      %v3339 = vunpack.c.l.b16 %v3248
      %v3340 = vunpack.c.l.b16 %v3249
      %v3341 = vunpack.c.l.b16 %v3250
      %v3342 = vunpack.c.l.b16 %v3251
      %v3343 = vunpack.c.l.b16 %v3252
      %v3344 = vunpack.c.l.b16 %v3253
      %v3345 = vunpack.c.l.b16 %v3254
      %v3346 = vunpack.c.l.b16 %v3255
      %v3347 = vunpack.c.l.b16 %v3256
      %v3348 = vunpack.c.l.b16 %v3257
      %v3349 = vunpack.c.l.b16 %v3258
      %v3350 = vunpack.c.l.b16 %v3259
      %v3351 = vunpack.c.l.b16 %v3260
      %v3352 = vunpack.c.l.b16 %v3261
      %v3353 = vunpack.c.l.b16 %v3262
      %v3354 = vunpack.c.l.b16 %v3263
      %v3355 = vunpack.c.l.b16 %v3264
      %v3356 = vpack.c.b16 %v3320, %v3319
      %v3357 = vpack.c.b16 %v3322, %v3321
      %v3358 = vpack.c.b16 %v3324, %v3323
      %v3359 = vpack.c.b16 %v3326, %v3325
      %v3360 = vpack.c.b16 %v3328, %v3327
      %v3361 = vpack.c.b16 %v3330, %v3329
      %v3362 = vpack.c.b16 %v3332, %v3331
      %v3363 = vpack.c.b16 %v3334, %v3333
      %v3364 = vpack.c.b16 %v3336, %v3335
      %v3365 = vpack.c.b16 %v3338, %v3337
      %v3366 = vpack.c.b16 %v3340, %v3339
      %v3367 = vpack.c.b16 %v3342, %v3341
      %v3368 = vpack.c.b16 %v3344, %v3343
      %v3369 = vpack.c.b16 %v3346, %v3345
      %v3370 = vpack.c.b16 %v3348, %v3347
      %v3371 = vpack.c.b16 %v3350, %v3349
      %v3372 = vpack.c.b16 %v3352, %v3351
      %v3373 = vpack.c.b16 %v3354, %v3353
      %v3374 = vpack.c.b16 %v3355, %v3355
      %v3375 = vrot.slane %v3356, 2
      %v3376 = vrot.slane %v3357, 2
      %v3377 = vsel %vm2917, %v3375, %v3376
      %v3378 = vrot.slane %v3358, 2
      %v3379 = vsel %vm2917, %v3376, %v3378
      %v3380 = vrot.slane %v3359, 2
      %v3381 = vsel %vm2917, %v3378, %v3380
      %v3382 = vrot.slane %v3360, 2
      %v3383 = vsel %vm2917, %v3380, %v3382
      %v3384 = vrot.slane %v3361, 2
      %v3385 = vsel %vm2917, %v3382, %v3384
      %v3386 = vrot.slane %v3362, 2
      %v3387 = vsel %vm2917, %v3384, %v3386
      %v3388 = vrot.slane %v3363, 2
      %v3389 = vsel %vm2917, %v3386, %v3388
      %v3390 = vrot.slane %v3364, 2
      %v3391 = vsel %vm2917, %v3388, %v3390
      %v3392 = vrot.slane %v3365, 2
      %v3393 = vsel %vm2917, %v3390, %v3392
      %v3394 = vrot.slane %v3366, 2
      %v3395 = vsel %vm2917, %v3392, %v3394
      %v3396 = vrot.slane %v3367, 2
      %v3397 = vsel %vm2917, %v3394, %v3396
      %v3398 = vrot.slane %v3368, 2
      %v3399 = vsel %vm2917, %v3396, %v3398
      %v3400 = vrot.slane %v3369, 2
      %v3401 = vsel %vm2917, %v3398, %v3400
      %v3402 = vrot.slane %v3370, 2
      %v3403 = vsel %vm2917, %v3400, %v3402
      %v3404 = vrot.slane %v3371, 2
      %v3405 = vsel %vm2917, %v3402, %v3404
      %v3406 = vrot.slane %v3372, 2
      %v3407 = vsel %vm2917, %v3404, %v3406
      %v3408 = vrot.slane %v3373, 2
      %v3409 = vsel %vm2917, %v3406, %v3408
      %v3410 = vrot.slane %v3374, 2
      %v3411 = vsel %vm2917, %v3408, %v3410
      %v3446 = vunpack.c.l.b16 %v3266
      %v3447 = vunpack.c.l.b16 %v3267
      %v3448 = vunpack.c.l.b16 %v3268
      %v3449 = vunpack.c.l.b16 %v3269
      %v3450 = vunpack.c.l.b16 %v3270
      %v3451 = vunpack.c.l.b16 %v3271
      %v3452 = vunpack.c.l.b16 %v3272
      %v3453 = vunpack.c.l.b16 %v3273
      %v3454 = vunpack.c.l.b16 %v3274
      %v3455 = vunpack.c.l.b16 %v3275
      %v3456 = vunpack.c.l.b16 %v3276
      %v3457 = vunpack.c.l.b16 %v3277
      %v3458 = vunpack.c.l.b16 %v3278
      %v3459 = vunpack.c.l.b16 %v3279
      %v3460 = vunpack.c.l.b16 %v3280
      %v3461 = vunpack.c.l.b16 %v3281
      %v3462 = vpack.c.b16 %v3447, %v3446
      %v3463 = vpack.c.b16 %v3449, %v3448
      %v3464 = vpack.c.b16 %v3451, %v3450
      %v3465 = vpack.c.b16 %v3453, %v3452
      %v3466 = vpack.c.b16 %v3455, %v3454
      %v3467 = vpack.c.b16 %v3457, %v3456
      %v3468 = vpack.c.b16 %v3459, %v3458
      %v3469 = vpack.c.b16 %v3461, %v3460
      %3478 = vmatpush.bf16.msra.mxu0 %v3469
      %3479 = vmatpush.bf16.msra.mxu0 %v3468
      %3480 = vmatpush.bf16.msra.mxu0 %v3467
      %3481 = vmatpush.bf16.msra.mxu0 %v3466
      %3482 = vmatpush.bf16.msra.mxu0 %v3465
      %3483 = vmatpush.bf16.msra.mxu0 %v3464
      %3484 = vmatpush.bf16.msra.mxu0 %v3463
      %3485 = vmatpush.bf16.msra.mxu0 %v3462
      %3486 = vmatmul.bf16.gmra.mxu0 %v3377
      %v3487 = vpop.f32.mrf.mxu0
      %v3488 = vadd.f32 0.0, %v3487
      %v3489 = vpop.f32.mrf.mxu0
      %v3490 = vadd.f32 0.0, %v3489
      %3491 = vmatmul.bf16.gmra.mxu0 %v3379
      %v3492 = vpop.f32.mrf.mxu0
      %v3493 = vadd.f32 0.0, %v3492
      %v3494 = vpop.f32.mrf.mxu0
      %v3495 = vadd.f32 0.0, %v3494
      %3496 = vmatmul.bf16.gmra.mxu0 %v3381
      %v3497 = vpop.f32.mrf.mxu0
      %v3498 = vadd.f32 0.0, %v3497
      %v3499 = vpop.f32.mrf.mxu0
      %v3500 = vadd.f32 0.0, %v3499
      %3501 = vmatmul.bf16.gmra.mxu0 %v3383
      %v3502 = vpop.f32.mrf.mxu0
      %v3503 = vadd.f32 0.0, %v3502
      %v3504 = vpop.f32.mrf.mxu0
      %v3505 = vadd.f32 0.0, %v3504
      %3506 = vmatmul.bf16.gmra.mxu0 %v3385
      %v3507 = vpop.f32.mrf.mxu0
      %v3508 = vadd.f32 0.0, %v3507
      %v3509 = vpop.f32.mrf.mxu0
      %v3510 = vadd.f32 0.0, %v3509
      %3511 = vmatmul.bf16.gmra.mxu0 %v3387
      %v3512 = vpop.f32.mrf.mxu0
      %v3513 = vadd.f32 0.0, %v3512
      %v3514 = vpop.f32.mrf.mxu0
      %v3515 = vadd.f32 0.0, %v3514
      %3516 = vmatmul.bf16.gmra.mxu0 %v3389
      %v3517 = vpop.f32.mrf.mxu0
      %v3518 = vadd.f32 0.0, %v3517
      %v3519 = vpop.f32.mrf.mxu0
      %v3520 = vadd.f32 0.0, %v3519
      %3521 = vmatmul.bf16.gmra.mxu0 %v3391
      %v3522 = vpop.f32.mrf.mxu0
      %v3523 = vadd.f32 0.0, %v3522
      %v3524 = vpop.f32.mrf.mxu0
      %v3525 = vadd.f32 0.0, %v3524
      %3526 = vmatmul.bf16.gmra.mxu0 %v3393
      %v3527 = vpop.f32.mrf.mxu0
      %v3528 = vadd.f32 0.0, %v3527
      %v3529 = vpop.f32.mrf.mxu0
      %v3530 = vadd.f32 0.0, %v3529
      %3531 = vmatmul.bf16.gmra.mxu0 %v3395
      %v3532 = vpop.f32.mrf.mxu0
      %v3533 = vadd.f32 0.0, %v3532
      %v3534 = vpop.f32.mrf.mxu0
      %v3535 = vadd.f32 0.0, %v3534
      %3536 = vmatmul.bf16.gmra.mxu0 %v3397
      %v3537 = vpop.f32.mrf.mxu0
      %v3538 = vadd.f32 0.0, %v3537
      %v3539 = vpop.f32.mrf.mxu0
      %v3540 = vadd.f32 0.0, %v3539
      %3541 = vmatmul.bf16.gmra.mxu0 %v3399
      %v3542 = vpop.f32.mrf.mxu0
      %v3543 = vadd.f32 0.0, %v3542
      %v3544 = vpop.f32.mrf.mxu0
      %v3545 = vadd.f32 0.0, %v3544
      %3546 = vmatmul.bf16.gmra.mxu0 %v3401
      %v3547 = vpop.f32.mrf.mxu0
      %v3548 = vadd.f32 0.0, %v3547
      %v3549 = vpop.f32.mrf.mxu0
      %v3550 = vadd.f32 0.0, %v3549
      %3551 = vmatmul.bf16.gmra.mxu0 %v3403
      %v3552 = vpop.f32.mrf.mxu0
      %v3553 = vadd.f32 0.0, %v3552
      %v3554 = vpop.f32.mrf.mxu0
      %v3555 = vadd.f32 0.0, %v3554
      %3556 = vmatmul.bf16.gmra.mxu0 %v3405
      %v3557 = vpop.f32.mrf.mxu0
      %v3558 = vadd.f32 0.0, %v3557
      %v3559 = vpop.f32.mrf.mxu0
      %v3560 = vadd.f32 0.0, %v3559
      %3561 = vmatmul.bf16.gmra.mxu0 %v3407
      %v3562 = vpop.f32.mrf.mxu0
      %v3563 = vadd.f32 0.0, %v3562
      %v3564 = vpop.f32.mrf.mxu0
      %v3565 = vadd.f32 0.0, %v3564
      %3566 = vmatmul.bf16.gmra.mxu0 %v3409
      %v3567 = vpop.f32.mrf.mxu0
      %v3568 = vadd.f32 0.0, %v3567
      %v3569 = vpop.f32.mrf.mxu0
      %v3570 = vadd.f32 0.0, %v3569
      %3571 = vmatmul.bf16.gmra.mxu0 %v3411
      %v3572 = vpop.f32.mrf.mxu0
      %v3573 = vadd.f32 0.0, %v3572
      %v3574 = vpop.f32.mrf.mxu0
      %v3575 = vadd.f32 0.0, %v3574
      %3576 = vdwg.mxu0
      %v3577 = vadd.f32 %v3192, %v3488
      %v3578 = vadd.f32 %v3193, %v3490
      %v3579 = vadd.f32 %v3194, %v3493
      %v3580 = vadd.f32 %v3195, %v3495
      %v3581 = vadd.f32 %v3196, %v3498
      %v3582 = vadd.f32 %v3197, %v3500
      %v3583 = vadd.f32 %v3198, %v3503
      %v3584 = vadd.f32 %v3199, %v3505
      %v3585 = vadd.f32 %v3200, %v3508
      %v3586 = vadd.f32 %v3201, %v3510
      %v3587 = vadd.f32 %v3202, %v3513
      %v3588 = vadd.f32 %v3203, %v3515
      %v3589 = vadd.f32 %v3204, %v3518
      %v3590 = vadd.f32 %v3205, %v3520
      %v3591 = vadd.f32 %v3206, %v3523
      %v3592 = vadd.f32 %v3207, %v3525
      %v3593 = vadd.f32 %v3208, %v3528
      %v3594 = vadd.f32 %v3209, %v3530
      %v3595 = vadd.f32 %v3210, %v3533
      %v3596 = vadd.f32 %v3211, %v3535
      %v3597 = vadd.f32 %v3212, %v3538
      %v3598 = vadd.f32 %v3213, %v3540
      %v3599 = vadd.f32 %v3214, %v3543
      %v3600 = vadd.f32 %v3215, %v3545
      %v3601 = vadd.f32 %v3216, %v3548
      %v3602 = vadd.f32 %v3217, %v3550
      %v3603 = vadd.f32 %v3218, %v3553
      %v3604 = vadd.f32 %v3219, %v3555
      %v3605 = vadd.f32 %v3220, %v3558
      %v3606 = vadd.f32 %v3221, %v3560
      %v3607 = vadd.f32 %v3222, %v3563
      %v3608 = vadd.f32 %v3223, %v3565
      %v3609 = vadd.f32 %v3224, %v3568
      %v3610 = vadd.f32 %v3225, %v3570
      %v3611 = vadd.f32 %v3226, %v3573
      %v3612 = vadd.f32 %v3227, %v3575
      %3613 = vst [vmem:[#allocation4] sm:$0xff] %v3577
      %3614 = vst [vmem:[#allocation4 + $0x8] sm:$0xff] %v3578
      %3615 = vst [vmem:[#allocation4 + $0x10] sm:$0xff] %v3579
      %3616 = vst [vmem:[#allocation4 + $0x18] sm:$0xff] %v3580
      %3617 = vst [vmem:[#allocation4 + $0x20] sm:$0xff] %v3581
      %3618 = vst [vmem:[#allocation4 + $0x28] sm:$0xff] %v3582
      %3619 = vst [vmem:[#allocation4 + $0x30] sm:$0xff] %v3583
      %3620 = vst [vmem:[#allocation4 + $0x38] sm:$0xff] %v3584
      %3621 = vst [vmem:[#allocation4 + $0x40] sm:$0xff] %v3585
      %3622 = vst [vmem:[#allocation4 + $0x48] sm:$0xff] %v3586
      %3623 = vst [vmem:[#allocation4 + $0x50] sm:$0xff] %v3587
      %3624 = vst [vmem:[#allocation4 + $0x58] sm:$0xff] %v3588
      %3625 = vst [vmem:[#allocation4 + $0x60] sm:$0xff] %v3589
      %3626 = vst [vmem:[#allocation4 + $0x68] sm:$0xff] %v3590
      %3627 = vst [vmem:[#allocation4 + $0x70] sm:$0xff] %v3591
      %3628 = vst [vmem:[#allocation4 + $0x78] sm:$0xff] %v3592
      %3629 = vst [vmem:[#allocation4 + $0x80] sm:$0xff] %v3593
      %3630 = vst [vmem:[#allocation4 + $0x88] sm:$0xff] %v3594
      %3631 = vst [vmem:[#allocation4 + $0x90] sm:$0xff] %v3595
      %3632 = vst [vmem:[#allocation4 + $0x98] sm:$0xff] %v3596
      %3633 = vst [vmem:[#allocation4 + $0xa0] sm:$0xff] %v3597
      %3634 = vst [vmem:[#allocation4 + $0xa8] sm:$0xff] %v3598
      %3635 = vst [vmem:[#allocation4 + $0xb0] sm:$0xff] %v3599
      %3636 = vst [vmem:[#allocation4 + $0xb8] sm:$0xff] %v3600
      %3637 = vst [vmem:[#allocation4 + $0xc0] sm:$0xff] %v3601
      %3638 = vst [vmem:[#allocation4 + $0xc8] sm:$0xff] %v3602
      %3639 = vst [vmem:[#allocation4 + $0xd0] sm:$0xff] %v3603
      %3640 = vst [vmem:[#allocation4 + $0xd8] sm:$0xff] %v3604
      %3641 = vst [vmem:[#allocation4 + $0xe0] sm:$0xff] %v3605
      %3642 = vst [vmem:[#allocation4 + $0xe8] sm:$0xff] %v3606
      %3643 = vst [vmem:[#allocation4 + $0xf0] sm:$0xff] %v3607
      %3644 = vst [vmem:[#allocation4 + $0xf8] sm:$0xff] %v3608
      %3645 = vst [vmem:[#allocation4 + $0x100] sm:$0xff] %v3609
      %3646 = vst [vmem:[#allocation4 + $0x108] sm:$0xff] %v3610
      %3647 = vst [vmem:[#allocation4 + $0x110] sm:$0xff] %v3611
      %3648 = vst [vmem:[#allocation4 + $0x118] sm:$0xff] %v3612
      %v3649 = vld [vmem:[#allocation4] sm:$0xff]
      %v3650 = vld [vmem:[#allocation4 + $0x8] sm:$0xff]
      %v3651 = vld [vmem:[#allocation4 + $0x10] sm:$0xff]
      %v3652 = vld [vmem:[#allocation4 + $0x18] sm:$0xff]
      %v3653 = vld [vmem:[#allocation4 + $0x20] sm:$0xff]
      %v3654 = vld [vmem:[#allocation4 + $0x28] sm:$0xff]
      %v3655 = vld [vmem:[#allocation4 + $0x30] sm:$0xff]
      %v3656 = vld [vmem:[#allocation4 + $0x38] sm:$0xff]
      %v3657 = vld [vmem:[#allocation4 + $0x40] sm:$0xff]
      %v3658 = vld [vmem:[#allocation4 + $0x48] sm:$0xff]
      %v3659 = vld [vmem:[#allocation4 + $0x50] sm:$0xff]
      %v3660 = vld [vmem:[#allocation4 + $0x58] sm:$0xff]
      %v3661 = vld [vmem:[#allocation4 + $0x60] sm:$0xff]
      %v3662 = vld [vmem:[#allocation4 + $0x68] sm:$0xff]
      %v3663 = vld [vmem:[#allocation4 + $0x70] sm:$0xff]
      %v3664 = vld [vmem:[#allocation4 + $0x78] sm:$0xff]
      %v3665 = vld [vmem:[#allocation4 + $0x80] sm:$0xff]
      %v3666 = vld [vmem:[#allocation4 + $0x88] sm:$0xff]
      %v3667 = vld [vmem:[#allocation4 + $0x90] sm:$0xff]
      %v3668 = vld [vmem:[#allocation4 + $0x98] sm:$0xff]
      %v3669 = vld [vmem:[#allocation4 + $0xa0] sm:$0xff]
      %v3670 = vld [vmem:[#allocation4 + $0xa8] sm:$0xff]
      %v3671 = vld [vmem:[#allocation4 + $0xb0] sm:$0xff]
      %v3672 = vld [vmem:[#allocation4 + $0xb8] sm:$0xff]
      %v3673 = vld [vmem:[#allocation4 + $0xc0] sm:$0xff]
      %v3674 = vld [vmem:[#allocation4 + $0xc8] sm:$0xff]
      %v3675 = vld [vmem:[#allocation4 + $0xd0] sm:$0xff]
      %v3676 = vld [vmem:[#allocation4 + $0xd8] sm:$0xff]
      %v3677 = vld [vmem:[#allocation4 + $0xe0] sm:$0xff]
      %v3678 = vld [vmem:[#allocation4 + $0xe8] sm:$0xff]
      %v3679 = vld [vmem:[#allocation4 + $0xf0] sm:$0xff]
      %v3680 = vld [vmem:[#allocation4 + $0xf8] sm:$0xff]
      %v3681 = vld [vmem:[#allocation4 + $0x100] sm:$0xff]
      %v3682 = vld [vmem:[#allocation4 + $0x108] sm:$0xff]
      %v3683 = vld [vmem:[#allocation4 + $0x110] sm:$0xff]
      %v3684 = vld [vmem:[#allocation4 + $0x118] sm:$0xff]
      %v3685 = vld [vmem:[%s310 + $0x10] sm:$0xc]
      %v3686 = vld [vmem:[%s310 + $0x14] sm:$0xf]
      %v3687 = vld [vmem:[%s310 + $0x18] sm:$0xf]
      %v3688 = vld [vmem:[%s310 + $0x1c] sm:$0xf]
      %v3689 = vld [vmem:[%s310 + $0x20] sm:$0xf]
      %v3690 = vld [vmem:[%s310 + $0x24] sm:$0xf]
      %v3691 = vld [vmem:[%s310 + $0x28] sm:$0xf]
      %v3692 = vld [vmem:[%s310 + $0x2c] sm:$0xf]
      %v3693 = vld [vmem:[%s310 + $0x30] sm:$0xf]
      %v3694 = vld [vmem:[%s310 + $0x34] sm:$0xf]
      %v3695 = vld [vmem:[%s310 + $0x38] sm:$0xf]
      %v3696 = vld [vmem:[%s310 + $0x3c] sm:$0xf]
      %v3697 = vld [vmem:[%s310 + $0x40] sm:$0xf]
      %v3698 = vld [vmem:[%s310 + $0x44] sm:$0xf]
      %v3699 = vld [vmem:[%s310 + $0x48] sm:$0xf]
      %v3700 = vld [vmem:[%s310 + $0x4c] sm:$0xf]
      %v3701 = vld [vmem:[%s310 + $0x50] sm:$0xf]
      %v3702 = vld [vmem:[%s310 + $0x54] sm:$0xf]
      %v3703 = vld [vmem:[%s310 + $0x58] sm:$0xf]
      %v3704 = vld [vmem:[%s310 + $0x5c] sm:$0xf]
      %v3705 = vld [vmem:[%s310 + $0x60] sm:$0xf]
      %v3706 = vld [vmem:[%s310 + $0x64] sm:$0xf]
      %v3707 = vld [vmem:[%s310 + $0x68] sm:$0xf]
      %v3708 = vld [vmem:[%s310 + $0x6c] sm:$0xf]
      %v3709 = vld [vmem:[%s310 + $0x70] sm:$0xf]
      %v3710 = vld [vmem:[%s310 + $0x74] sm:$0xf]
      %v3711 = vld [vmem:[%s310 + $0x78] sm:$0xf]
      %v3712 = vld [vmem:[%s310 + $0x7c] sm:$0xf]
      %v3713 = vld [vmem:[%s310 + $0x80] sm:$0xf]
      %v3714 = vld [vmem:[%s310 + $0x84] sm:$0xf]
      %v3715 = vld [vmem:[%s310 + $0x88] sm:$0xf]
      %v3716 = vld [vmem:[%s310 + $0x8c] sm:$0xf]
      %v3717 = vld [vmem:[%s310 + $0x90] sm:$0xf]
      %v3718 = vld [vmem:[%s310 + $0x94] sm:$0xf]
      %v3719 = vld [vmem:[%s310 + $0x98] sm:$0xf]
      %v3720 = vld [vmem:[%s310 + $0x9c] sm:$0xf]
      %v3721 = vld [vmem:[%s310 + $0xa0] sm:$0x7]
      %s3722 = scalar_lea.vmem %s1, 448
      %v3723 = vld [vmem:[%s3722] sm:$0xf]
      %v3724 = vld [vmem:[%s3722 + $0x4] sm:$0xf]
      %v3725 = vld [vmem:[%s3722 + $0x8] sm:$0xf]
      %v3726 = vld [vmem:[%s3722 + $0xc] sm:$0xf]
      %v3727 = vld [vmem:[%s3722 + $0x10] sm:$0xf]
      %v3728 = vld [vmem:[%s3722 + $0x14] sm:$0xf]
      %v3729 = vld [vmem:[%s3722 + $0x18] sm:$0xf]
      %v3730 = vld [vmem:[%s3722 + $0x1c] sm:$0xf]
      %v3731 = vld [vmem:[%s3722 + $0x20] sm:$0xf]
      %v3732 = vld [vmem:[%s3722 + $0x24] sm:$0xf]
      %v3733 = vld [vmem:[%s3722 + $0x28] sm:$0xf]
      %v3734 = vld [vmem:[%s3722 + $0x2c] sm:$0xf]
      %v3735 = vld [vmem:[%s3722 + $0x30] sm:$0xf]
      %v3736 = vld [vmem:[%s3722 + $0x34] sm:$0xf]
      %v3737 = vld [vmem:[%s3722 + $0x38] sm:$0xf]
      %v3738 = vld [vmem:[%s3722 + $0x3c] sm:$0xf]
      %v3776 = vunpack.c.l.b16 %v3685
      %v3777 = vunpack.c.l.b16 %v3686
      %v3778 = vunpack.c.l.b16 %v3687
      %v3779 = vunpack.c.l.b16 %v3688
      %v3780 = vunpack.c.l.b16 %v3689
      %v3781 = vunpack.c.l.b16 %v3690
      %v3782 = vunpack.c.l.b16 %v3691
      %v3783 = vunpack.c.l.b16 %v3692
      %v3784 = vunpack.c.l.b16 %v3693
      %v3785 = vunpack.c.l.b16 %v3694
      %v3786 = vunpack.c.l.b16 %v3695
      %v3787 = vunpack.c.l.b16 %v3696
      %v3788 = vunpack.c.l.b16 %v3697
      %v3789 = vunpack.c.l.b16 %v3698
      %v3790 = vunpack.c.l.b16 %v3699
      %v3791 = vunpack.c.l.b16 %v3700
      %v3792 = vunpack.c.l.b16 %v3701
      %v3793 = vunpack.c.l.b16 %v3702
      %v3794 = vunpack.c.l.b16 %v3703
      %v3795 = vunpack.c.l.b16 %v3704
      %v3796 = vunpack.c.l.b16 %v3705
      %v3797 = vunpack.c.l.b16 %v3706
      %v3798 = vunpack.c.l.b16 %v3707
      %v3799 = vunpack.c.l.b16 %v3708
      %v3800 = vunpack.c.l.b16 %v3709
      %v3801 = vunpack.c.l.b16 %v3710
      %v3802 = vunpack.c.l.b16 %v3711
      %v3803 = vunpack.c.l.b16 %v3712
      %v3804 = vunpack.c.l.b16 %v3713
      %v3805 = vunpack.c.l.b16 %v3714
      %v3806 = vunpack.c.l.b16 %v3715
      %v3807 = vunpack.c.l.b16 %v3716
      %v3808 = vunpack.c.l.b16 %v3717
      %v3809 = vunpack.c.l.b16 %v3718
      %v3810 = vunpack.c.l.b16 %v3719
      %v3811 = vunpack.c.l.b16 %v3720
      %v3812 = vunpack.c.l.b16 %v3721
      %v3813 = vpack.c.b16 %v3777, %v3776
      %v3814 = vpack.c.b16 %v3779, %v3778
      %v3815 = vpack.c.b16 %v3781, %v3780
      %v3816 = vpack.c.b16 %v3783, %v3782
      %v3817 = vpack.c.b16 %v3785, %v3784
      %v3818 = vpack.c.b16 %v3787, %v3786
      %v3819 = vpack.c.b16 %v3789, %v3788
      %v3820 = vpack.c.b16 %v3791, %v3790
      %v3821 = vpack.c.b16 %v3793, %v3792
      %v3822 = vpack.c.b16 %v3795, %v3794
      %v3823 = vpack.c.b16 %v3797, %v3796
      %v3824 = vpack.c.b16 %v3799, %v3798
      %v3825 = vpack.c.b16 %v3801, %v3800
      %v3826 = vpack.c.b16 %v3803, %v3802
      %v3827 = vpack.c.b16 %v3805, %v3804
      %v3828 = vpack.c.b16 %v3807, %v3806
      %v3829 = vpack.c.b16 %v3809, %v3808
      %v3830 = vpack.c.b16 %v3811, %v3810
      %v3831 = vpack.c.b16 %v3812, %v3812
      %vm3832 = vsmask.f32 5376
      %v3834 = vshrl.u32 %v3813, 16
      %v3836 = vrot.slane %v3834, 2
      %v3837 = vshll.u32 %v3813, 16
      %v3839 = vrot.slane %v3837, 3
      %v3840 = vor.u32 %v3836, %v3839
      %v3842 = vshrl.u32 %v3814, 16
      %v3844 = vrot.slane %v3842, 2
      %v3845 = vshll.u32 %v3814, 16
      %v3847 = vrot.slane %v3845, 3
      %v3848 = vor.u32 %v3844, %v3847
      %v3849 = vsel %vm3832, %v3840, %v3848
      %v3851 = vshrl.u32 %v3815, 16
      %v3853 = vrot.slane %v3851, 2
      %v3854 = vshll.u32 %v3815, 16
      %v3856 = vrot.slane %v3854, 3
      %v3857 = vor.u32 %v3853, %v3856
      %v3858 = vsel %vm3832, %v3848, %v3857
      %v3860 = vshrl.u32 %v3816, 16
      %v3862 = vrot.slane %v3860, 2
      %v3863 = vshll.u32 %v3816, 16
      %v3865 = vrot.slane %v3863, 3
      %v3866 = vor.u32 %v3862, %v3865
      %v3867 = vsel %vm3832, %v3857, %v3866
      %v3869 = vshrl.u32 %v3817, 16
      %v3871 = vrot.slane %v3869, 2
      %v3872 = vshll.u32 %v3817, 16
      %v3874 = vrot.slane %v3872, 3
      %v3875 = vor.u32 %v3871, %v3874
      %v3876 = vsel %vm3832, %v3866, %v3875
      %v3878 = vshrl.u32 %v3818, 16
      %v3880 = vrot.slane %v3878, 2
      %v3881 = vshll.u32 %v3818, 16
      %v3883 = vrot.slane %v3881, 3
      %v3884 = vor.u32 %v3880, %v3883
      %v3885 = vsel %vm3832, %v3875, %v3884
      %v3887 = vshrl.u32 %v3819, 16
      %v3889 = vrot.slane %v3887, 2
      %v3890 = vshll.u32 %v3819, 16
      %v3892 = vrot.slane %v3890, 3
      %v3893 = vor.u32 %v3889, %v3892
      %v3894 = vsel %vm3832, %v3884, %v3893
      %v3896 = vshrl.u32 %v3820, 16
      %v3898 = vrot.slane %v3896, 2
      %v3899 = vshll.u32 %v3820, 16
      %v3901 = vrot.slane %v3899, 3
      %v3902 = vor.u32 %v3898, %v3901
      %v3903 = vsel %vm3832, %v3893, %v3902
      %v3905 = vshrl.u32 %v3821, 16
      %v3907 = vrot.slane %v3905, 2
      %v3908 = vshll.u32 %v3821, 16
      %v3910 = vrot.slane %v3908, 3
      %v3911 = vor.u32 %v3907, %v3910
      %v3912 = vsel %vm3832, %v3902, %v3911
      %v3914 = vshrl.u32 %v3822, 16
      %v3916 = vrot.slane %v3914, 2
      %v3917 = vshll.u32 %v3822, 16
      %v3919 = vrot.slane %v3917, 3
      %v3920 = vor.u32 %v3916, %v3919
      %v3921 = vsel %vm3832, %v3911, %v3920
      %v3923 = vshrl.u32 %v3823, 16
      %v3925 = vrot.slane %v3923, 2
      %v3926 = vshll.u32 %v3823, 16
      %v3928 = vrot.slane %v3926, 3
      %v3929 = vor.u32 %v3925, %v3928
      %v3930 = vsel %vm3832, %v3920, %v3929
      %v3932 = vshrl.u32 %v3824, 16
      %v3934 = vrot.slane %v3932, 2
      %v3935 = vshll.u32 %v3824, 16
      %v3937 = vrot.slane %v3935, 3
      %v3938 = vor.u32 %v3934, %v3937
      %v3939 = vsel %vm3832, %v3929, %v3938
      %v3941 = vshrl.u32 %v3825, 16
      %v3943 = vrot.slane %v3941, 2
      %v3944 = vshll.u32 %v3825, 16
      %v3946 = vrot.slane %v3944, 3
      %v3947 = vor.u32 %v3943, %v3946
      %v3948 = vsel %vm3832, %v3938, %v3947
      %v3950 = vshrl.u32 %v3826, 16
      %v3952 = vrot.slane %v3950, 2
      %v3953 = vshll.u32 %v3826, 16
      %v3955 = vrot.slane %v3953, 3
      %v3956 = vor.u32 %v3952, %v3955
      %v3957 = vsel %vm3832, %v3947, %v3956
      %v3959 = vshrl.u32 %v3827, 16
      %v3961 = vrot.slane %v3959, 2
      %v3962 = vshll.u32 %v3827, 16
      %v3964 = vrot.slane %v3962, 3
      %v3965 = vor.u32 %v3961, %v3964
      %v3966 = vsel %vm3832, %v3956, %v3965
      %v3968 = vshrl.u32 %v3828, 16
      %v3970 = vrot.slane %v3968, 2
      %v3971 = vshll.u32 %v3828, 16
      %v3973 = vrot.slane %v3971, 3
      %v3974 = vor.u32 %v3970, %v3973
      %v3975 = vsel %vm3832, %v3965, %v3974
      %v3977 = vshrl.u32 %v3829, 16
      %v3979 = vrot.slane %v3977, 2
      %v3980 = vshll.u32 %v3829, 16
      %v3982 = vrot.slane %v3980, 3
      %v3983 = vor.u32 %v3979, %v3982
      %v3984 = vsel %vm3832, %v3974, %v3983
      %v3986 = vshrl.u32 %v3830, 16
      %v3988 = vrot.slane %v3986, 2
      %v3989 = vshll.u32 %v3830, 16
      %v3991 = vrot.slane %v3989, 3
      %v3992 = vor.u32 %v3988, %v3991
      %v3993 = vsel %vm3832, %v3983, %v3992
      %v3995 = vshrl.u32 %v3831, 16
      %v3997 = vrot.slane %v3995, 2
      %v3998 = vshll.u32 %v3831, 16
      %v4000 = vrot.slane %v3998, 3
      %v4001 = vor.u32 %v3997, %v4000
      %v4002 = vsel %vm3832, %v3992, %v4001
      %v4037 = vunpack.c.l.b16 %v3723
      %v4038 = vunpack.c.l.b16 %v3724
      %v4039 = vunpack.c.l.b16 %v3725
      %v4040 = vunpack.c.l.b16 %v3726
      %v4041 = vunpack.c.l.b16 %v3727
      %v4042 = vunpack.c.l.b16 %v3728
      %v4043 = vunpack.c.l.b16 %v3729
      %v4044 = vunpack.c.l.b16 %v3730
      %v4045 = vunpack.c.l.b16 %v3731
      %v4046 = vunpack.c.l.b16 %v3732
      %v4047 = vunpack.c.l.b16 %v3733
      %v4048 = vunpack.c.l.b16 %v3734
      %v4049 = vunpack.c.l.b16 %v3735
      %v4050 = vunpack.c.l.b16 %v3736
      %v4051 = vunpack.c.l.b16 %v3737
      %v4052 = vunpack.c.l.b16 %v3738
      %v4053 = vpack.c.b16 %v4038, %v4037
      %v4054 = vpack.c.b16 %v4040, %v4039
      %v4055 = vpack.c.b16 %v4042, %v4041
      %v4056 = vpack.c.b16 %v4044, %v4043
      %v4057 = vpack.c.b16 %v4046, %v4045
      %v4058 = vpack.c.b16 %v4048, %v4047
      %v4059 = vpack.c.b16 %v4050, %v4049
      %v4060 = vpack.c.b16 %v4052, %v4051
      %4069 = vmatpush.bf16.msra.mxu0 %v4060
      %4070 = vmatpush.bf16.msra.mxu0 %v4059
      %4071 = vmatpush.bf16.msra.mxu0 %v4058
      %4072 = vmatpush.bf16.msra.mxu0 %v4057
      %4073 = vmatpush.bf16.msra.mxu0 %v4056
      %4074 = vmatpush.bf16.msra.mxu0 %v4055
      %4075 = vmatpush.bf16.msra.mxu0 %v4054
      %4076 = vmatpush.bf16.msra.mxu0 %v4053
      %4077 = vmatmul.bf16.gmra.mxu0 %v3849
      %v4078 = vpop.f32.mrf.mxu0
      %v4079 = vadd.f32 0.0, %v4078
      %v4080 = vpop.f32.mrf.mxu0
      %v4081 = vadd.f32 0.0, %v4080
      %4082 = vmatmul.bf16.gmra.mxu0 %v3858
      %v4083 = vpop.f32.mrf.mxu0
      %v4084 = vadd.f32 0.0, %v4083
      %v4085 = vpop.f32.mrf.mxu0
      %v4086 = vadd.f32 0.0, %v4085
      %4087 = vmatmul.bf16.gmra.mxu0 %v3867
      %v4088 = vpop.f32.mrf.mxu0
      %v4089 = vadd.f32 0.0, %v4088
      %v4090 = vpop.f32.mrf.mxu0
      %v4091 = vadd.f32 0.0, %v4090
      %4092 = vmatmul.bf16.gmra.mxu0 %v3876
      %v4093 = vpop.f32.mrf.mxu0
      %v4094 = vadd.f32 0.0, %v4093
      %v4095 = vpop.f32.mrf.mxu0
      %v4096 = vadd.f32 0.0, %v4095
      %4097 = vmatmul.bf16.gmra.mxu0 %v3885
      %v4098 = vpop.f32.mrf.mxu0
      %v4099 = vadd.f32 0.0, %v4098
      %v4100 = vpop.f32.mrf.mxu0
      %v4101 = vadd.f32 0.0, %v4100
      %4102 = vmatmul.bf16.gmra.mxu0 %v3894
      %v4103 = vpop.f32.mrf.mxu0
      %v4104 = vadd.f32 0.0, %v4103
      %v4105 = vpop.f32.mrf.mxu0
      %v4106 = vadd.f32 0.0, %v4105
      %4107 = vmatmul.bf16.gmra.mxu0 %v3903
      %v4108 = vpop.f32.mrf.mxu0
      %v4109 = vadd.f32 0.0, %v4108
      %v4110 = vpop.f32.mrf.mxu0
      %v4111 = vadd.f32 0.0, %v4110
      %4112 = vmatmul.bf16.gmra.mxu0 %v3912
      %v4113 = vpop.f32.mrf.mxu0
      %v4114 = vadd.f32 0.0, %v4113
      %v4115 = vpop.f32.mrf.mxu0
      %v4116 = vadd.f32 0.0, %v4115
      %4117 = vmatmul.bf16.gmra.mxu0 %v3921
      %v4118 = vpop.f32.mrf.mxu0
      %v4119 = vadd.f32 0.0, %v4118
      %v4120 = vpop.f32.mrf.mxu0
      %v4121 = vadd.f32 0.0, %v4120
      %4122 = vmatmul.bf16.gmra.mxu0 %v3930
      %v4123 = vpop.f32.mrf.mxu0
      %v4124 = vadd.f32 0.0, %v4123
      %v4125 = vpop.f32.mrf.mxu0
      %v4126 = vadd.f32 0.0, %v4125
      %4127 = vmatmul.bf16.gmra.mxu0 %v3939
      %v4128 = vpop.f32.mrf.mxu0
      %v4129 = vadd.f32 0.0, %v4128
      %v4130 = vpop.f32.mrf.mxu0
      %v4131 = vadd.f32 0.0, %v4130
      %4132 = vmatmul.bf16.gmra.mxu0 %v3948
      %v4133 = vpop.f32.mrf.mxu0
      %v4134 = vadd.f32 0.0, %v4133
      %v4135 = vpop.f32.mrf.mxu0
      %v4136 = vadd.f32 0.0, %v4135
      %4137 = vmatmul.bf16.gmra.mxu0 %v3957
      %v4138 = vpop.f32.mrf.mxu0
      %v4139 = vadd.f32 0.0, %v4138
      %v4140 = vpop.f32.mrf.mxu0
      %v4141 = vadd.f32 0.0, %v4140
      %4142 = vmatmul.bf16.gmra.mxu0 %v3966
      %v4143 = vpop.f32.mrf.mxu0
      %v4144 = vadd.f32 0.0, %v4143
      %v4145 = vpop.f32.mrf.mxu0
      %v4146 = vadd.f32 0.0, %v4145
      %4147 = vmatmul.bf16.gmra.mxu0 %v3975
      %v4148 = vpop.f32.mrf.mxu0
      %v4149 = vadd.f32 0.0, %v4148
      %v4150 = vpop.f32.mrf.mxu0
      %v4151 = vadd.f32 0.0, %v4150
      %4152 = vmatmul.bf16.gmra.mxu0 %v3984
      %v4153 = vpop.f32.mrf.mxu0
      %v4154 = vadd.f32 0.0, %v4153
      %v4155 = vpop.f32.mrf.mxu0
      %v4156 = vadd.f32 0.0, %v4155
      %4157 = vmatmul.bf16.gmra.mxu0 %v3993
      %v4158 = vpop.f32.mrf.mxu0
      %v4159 = vadd.f32 0.0, %v4158
      %v4160 = vpop.f32.mrf.mxu0
      %v4161 = vadd.f32 0.0, %v4160
      %4162 = vmatmul.bf16.gmra.mxu0 %v4002
      %v4163 = vpop.f32.mrf.mxu0
      %v4164 = vadd.f32 0.0, %v4163
      %v4165 = vpop.f32.mrf.mxu0
      %v4166 = vadd.f32 0.0, %v4165
      %4167 = vdwg.mxu0
      %v4168 = vadd.f32 %v3649, %v4079
      %v4169 = vadd.f32 %v3650, %v4081
      %v4170 = vadd.f32 %v3651, %v4084
      %v4171 = vadd.f32 %v3652, %v4086
      %v4172 = vadd.f32 %v3653, %v4089
      %v4173 = vadd.f32 %v3654, %v4091
      %v4174 = vadd.f32 %v3655, %v4094
      %v4175 = vadd.f32 %v3656, %v4096
      %v4176 = vadd.f32 %v3657, %v4099
      %v4177 = vadd.f32 %v3658, %v4101
      %v4178 = vadd.f32 %v3659, %v4104
      %v4179 = vadd.f32 %v3660, %v4106
      %v4180 = vadd.f32 %v3661, %v4109
      %v4181 = vadd.f32 %v3662, %v4111
      %v4182 = vadd.f32 %v3663, %v4114
      %v4183 = vadd.f32 %v3664, %v4116
      %v4184 = vadd.f32 %v3665, %v4119
      %v4185 = vadd.f32 %v3666, %v4121
      %v4186 = vadd.f32 %v3667, %v4124
      %v4187 = vadd.f32 %v3668, %v4126
      %v4188 = vadd.f32 %v3669, %v4129
      %v4189 = vadd.f32 %v3670, %v4131
      %v4190 = vadd.f32 %v3671, %v4134
      %v4191 = vadd.f32 %v3672, %v4136
      %v4192 = vadd.f32 %v3673, %v4139
      %v4193 = vadd.f32 %v3674, %v4141
      %v4194 = vadd.f32 %v3675, %v4144
      %v4195 = vadd.f32 %v3676, %v4146
      %v4196 = vadd.f32 %v3677, %v4149
      %v4197 = vadd.f32 %v3678, %v4151
      %v4198 = vadd.f32 %v3679, %v4154
      %v4199 = vadd.f32 %v3680, %v4156
      %v4200 = vadd.f32 %v3681, %v4159
      %v4201 = vadd.f32 %v3682, %v4161
      %v4202 = vadd.f32 %v3683, %v4164
      %v4203 = vadd.f32 %v3684, %v4166
      %4204 = vst [vmem:[#allocation4] sm:$0xff] %v4168
      %4205 = vst [vmem:[#allocation4 + $0x8] sm:$0xff] %v4169
      %4206 = vst [vmem:[#allocation4 + $0x10] sm:$0xff] %v4170
      %4207 = vst [vmem:[#allocation4 + $0x18] sm:$0xff] %v4171
      %4208 = vst [vmem:[#allocation4 + $0x20] sm:$0xff] %v4172
      %4209 = vst [vmem:[#allocation4 + $0x28] sm:$0xff] %v4173
      %4210 = vst [vmem:[#allocation4 + $0x30] sm:$0xff] %v4174
      %4211 = vst [vmem:[#allocation4 + $0x38] sm:$0xff] %v4175
      %4212 = vst [vmem:[#allocation4 + $0x40] sm:$0xff] %v4176
      %4213 = vst [vmem:[#allocation4 + $0x48] sm:$0xff] %v4177
      %4214 = vst [vmem:[#allocation4 + $0x50] sm:$0xff] %v4178
      %4215 = vst [vmem:[#allocation4 + $0x58] sm:$0xff] %v4179
      %4216 = vst [vmem:[#allocation4 + $0x60] sm:$0xff] %v4180
      %4217 = vst [vmem:[#allocation4 + $0x68] sm:$0xff] %v4181
      %4218 = vst [vmem:[#allocation4 + $0x70] sm:$0xff] %v4182
      %4219 = vst [vmem:[#allocation4 + $0x78] sm:$0xff] %v4183
      %4220 = vst [vmem:[#allocation4 + $0x80] sm:$0xff] %v4184
      %4221 = vst [vmem:[#allocation4 + $0x88] sm:$0xff] %v4185
      %4222 = vst [vmem:[#allocation4 + $0x90] sm:$0xff] %v4186
      %4223 = vst [vmem:[#allocation4 + $0x98] sm:$0xff] %v4187
      %4224 = vst [vmem:[#allocation4 + $0xa0] sm:$0xff] %v4188
      %4225 = vst [vmem:[#allocation4 + $0xa8] sm:$0xff] %v4189
      %4226 = vst [vmem:[#allocation4 + $0xb0] sm:$0xff] %v4190
      %4227 = vst [vmem:[#allocation4 + $0xb8] sm:$0xff] %v4191
      %4228 = vst [vmem:[#allocation4 + $0xc0] sm:$0xff] %v4192
      %4229 = vst [vmem:[#allocation4 + $0xc8] sm:$0xff] %v4193
      %4230 = vst [vmem:[#allocation4 + $0xd0] sm:$0xff] %v4194
      %4231 = vst [vmem:[#allocation4 + $0xd8] sm:$0xff] %v4195
      %4232 = vst [vmem:[#allocation4 + $0xe0] sm:$0xff] %v4196
      %4233 = vst [vmem:[#allocation4 + $0xe8] sm:$0xff] %v4197
      %4234 = vst [vmem:[#allocation4 + $0xf0] sm:$0xff] %v4198
      %4235 = vst [vmem:[#allocation4 + $0xf8] sm:$0xff] %v4199
      %4236 = vst [vmem:[#allocation4 + $0x100] sm:$0xff] %v4200
      %4237 = vst [vmem:[#allocation4 + $0x108] sm:$0xff] %v4201
      %4238 = vst [vmem:[#allocation4 + $0x110] sm:$0xff] %v4202
      %4239 = vst [vmem:[#allocation4 + $0x118] sm:$0xff] %v4203
      %v4240 = vld [vmem:[#allocation4] sm:$0xff]
      %v4241 = vld [vmem:[#allocation4 + $0x8] sm:$0xff]
      %v4242 = vld [vmem:[#allocation4 + $0x10] sm:$0xff]
      %v4243 = vld [vmem:[#allocation4 + $0x18] sm:$0xff]
      %v4244 = vld [vmem:[#allocation4 + $0x20] sm:$0xff]
      %v4245 = vld [vmem:[#allocation4 + $0x28] sm:$0xff]
      %v4246 = vld [vmem:[#allocation4 + $0x30] sm:$0xff]
      %v4247 = vld [vmem:[#allocation4 + $0x38] sm:$0xff]
      %v4248 = vld [vmem:[#allocation4 + $0x40] sm:$0xff]
      %v4249 = vld [vmem:[#allocation4 + $0x48] sm:$0xff]
      %v4250 = vld [vmem:[#allocation4 + $0x50] sm:$0xff]
      %v4251 = vld [vmem:[#allocation4 + $0x58] sm:$0xff]
      %v4252 = vld [vmem:[#allocation4 + $0x60] sm:$0xff]
      %v4253 = vld [vmem:[#allocation4 + $0x68] sm:$0xff]
      %v4254 = vld [vmem:[#allocation4 + $0x70] sm:$0xff]
      %v4255 = vld [vmem:[#allocation4 + $0x78] sm:$0xff]
      %v4256 = vld [vmem:[#allocation4 + $0x80] sm:$0xff]
      %v4257 = vld [vmem:[#allocation4 + $0x88] sm:$0xff]
      %v4258 = vld [vmem:[#allocation4 + $0x90] sm:$0xff]
      %v4259 = vld [vmem:[#allocation4 + $0x98] sm:$0xff]
      %v4260 = vld [vmem:[#allocation4 + $0xa0] sm:$0xff]
      %v4261 = vld [vmem:[#allocation4 + $0xa8] sm:$0xff]
      %v4262 = vld [vmem:[#allocation4 + $0xb0] sm:$0xff]
      %v4263 = vld [vmem:[#allocation4 + $0xb8] sm:$0xff]
      %v4264 = vld [vmem:[#allocation4 + $0xc0] sm:$0xff]
      %v4265 = vld [vmem:[#allocation4 + $0xc8] sm:$0xff]
      %v4266 = vld [vmem:[#allocation4 + $0xd0] sm:$0xff]
      %v4267 = vld [vmem:[#allocation4 + $0xd8] sm:$0xff]
      %v4268 = vld [vmem:[#allocation4 + $0xe0] sm:$0xff]
      %v4269 = vld [vmem:[#allocation4 + $0xe8] sm:$0xff]
      %v4270 = vld [vmem:[#allocation4 + $0xf0] sm:$0xff]
      %v4271 = vld [vmem:[#allocation4 + $0xf8] sm:$0xff]
      %v4272 = vld [vmem:[#allocation4 + $0x100] sm:$0xff]
      %v4273 = vld [vmem:[#allocation4 + $0x108] sm:$0xff]
      %v4274 = vld [vmem:[#allocation4 + $0x110] sm:$0xff]
      %v4275 = vld [vmem:[#allocation4 + $0x118] sm:$0xff]
      %v4276 = vld [vmem:[%s310 + $0x10] sm:$0x8]
      %v4277 = vld [vmem:[%s310 + $0x14] sm:$0xf]
      %v4278 = vld [vmem:[%s310 + $0x18] sm:$0xf]
      %v4279 = vld [vmem:[%s310 + $0x1c] sm:$0xf]
      %v4280 = vld [vmem:[%s310 + $0x20] sm:$0xf]
      %v4281 = vld [vmem:[%s310 + $0x24] sm:$0xf]
      %v4282 = vld [vmem:[%s310 + $0x28] sm:$0xf]
      %v4283 = vld [vmem:[%s310 + $0x2c] sm:$0xf]
      %v4284 = vld [vmem:[%s310 + $0x30] sm:$0xf]
      %v4285 = vld [vmem:[%s310 + $0x34] sm:$0xf]
      %v4286 = vld [vmem:[%s310 + $0x38] sm:$0xf]
      %v4287 = vld [vmem:[%s310 + $0x3c] sm:$0xf]
      %v4288 = vld [vmem:[%s310 + $0x40] sm:$0xf]
      %v4289 = vld [vmem:[%s310 + $0x44] sm:$0xf]
      %v4290 = vld [vmem:[%s310 + $0x48] sm:$0xf]
      %v4291 = vld [vmem:[%s310 + $0x4c] sm:$0xf]
      %v4292 = vld [vmem:[%s310 + $0x50] sm:$0xf]
      %v4293 = vld [vmem:[%s310 + $0x54] sm:$0xf]
      %v4294 = vld [vmem:[%s310 + $0x58] sm:$0xf]
      %v4295 = vld [vmem:[%s310 + $0x5c] sm:$0xf]
      %v4296 = vld [vmem:[%s310 + $0x60] sm:$0xf]
      %v4297 = vld [vmem:[%s310 + $0x64] sm:$0xf]
      %v4298 = vld [vmem:[%s310 + $0x68] sm:$0xf]
      %v4299 = vld [vmem:[%s310 + $0x6c] sm:$0xf]
      %v4300 = vld [vmem:[%s310 + $0x70] sm:$0xf]
      %v4301 = vld [vmem:[%s310 + $0x74] sm:$0xf]
      %v4302 = vld [vmem:[%s310 + $0x78] sm:$0xf]
      %v4303 = vld [vmem:[%s310 + $0x7c] sm:$0xf]
      %v4304 = vld [vmem:[%s310 + $0x80] sm:$0xf]
      %v4305 = vld [vmem:[%s310 + $0x84] sm:$0xf]
      %v4306 = vld [vmem:[%s310 + $0x88] sm:$0xf]
      %v4307 = vld [vmem:[%s310 + $0x8c] sm:$0xf]
      %v4308 = vld [vmem:[%s310 + $0x90] sm:$0xf]
      %v4309 = vld [vmem:[%s310 + $0x94] sm:$0xf]
      %v4310 = vld [vmem:[%s310 + $0x98] sm:$0xf]
      %v4311 = vld [vmem:[%s310 + $0x9c] sm:$0xf]
      %v4312 = vld [vmem:[%s310 + $0xa0] sm:$0x7]
      %s4313 = scalar_lea.vmem %s1, 512
      %v4314 = vld [vmem:[%s4313] sm:$0xf]
      %v4315 = vld [vmem:[%s4313 + $0x4] sm:$0xf]
      %v4316 = vld [vmem:[%s4313 + $0x8] sm:$0xf]
      %v4317 = vld [vmem:[%s4313 + $0xc] sm:$0xf]
      %v4318 = vld [vmem:[%s4313 + $0x10] sm:$0xf]
      %v4319 = vld [vmem:[%s4313 + $0x14] sm:$0xf]
      %v4320 = vld [vmem:[%s4313 + $0x18] sm:$0xf]
      %v4321 = vld [vmem:[%s4313 + $0x1c] sm:$0xf]
      %v4322 = vld [vmem:[%s4313 + $0x20] sm:$0xf]
      %v4323 = vld [vmem:[%s4313 + $0x24] sm:$0xf]
      %v4324 = vld [vmem:[%s4313 + $0x28] sm:$0xf]
      %v4325 = vld [vmem:[%s4313 + $0x2c] sm:$0xf]
      %v4326 = vld [vmem:[%s4313 + $0x30] sm:$0xf]
      %v4327 = vld [vmem:[%s4313 + $0x34] sm:$0xf]
      %v4328 = vld [vmem:[%s4313 + $0x38] sm:$0xf]
      %v4329 = vld [vmem:[%s4313 + $0x3c] sm:$0xf]
      %v4367 = vunpack.c.l.b16 %v4276
      %v4368 = vunpack.c.l.b16 %v4277
      %v4369 = vunpack.c.l.b16 %v4278
      %v4370 = vunpack.c.l.b16 %v4279
      %v4371 = vunpack.c.l.b16 %v4280
      %v4372 = vunpack.c.l.b16 %v4281
      %v4373 = vunpack.c.l.b16 %v4282
      %v4374 = vunpack.c.l.b16 %v4283
      %v4375 = vunpack.c.l.b16 %v4284
      %v4376 = vunpack.c.l.b16 %v4285
      %v4377 = vunpack.c.l.b16 %v4286
      %v4378 = vunpack.c.l.b16 %v4287
      %v4379 = vunpack.c.l.b16 %v4288
      %v4380 = vunpack.c.l.b16 %v4289
      %v4381 = vunpack.c.l.b16 %v4290
      %v4382 = vunpack.c.l.b16 %v4291
      %v4383 = vunpack.c.l.b16 %v4292
      %v4384 = vunpack.c.l.b16 %v4293
      %v4385 = vunpack.c.l.b16 %v4294
      %v4386 = vunpack.c.l.b16 %v4295
      %v4387 = vunpack.c.l.b16 %v4296
      %v4388 = vunpack.c.l.b16 %v4297
      %v4389 = vunpack.c.l.b16 %v4298
      %v4390 = vunpack.c.l.b16 %v4299
      %v4391 = vunpack.c.l.b16 %v4300
      %v4392 = vunpack.c.l.b16 %v4301
      %v4393 = vunpack.c.l.b16 %v4302
      %v4394 = vunpack.c.l.b16 %v4303
      %v4395 = vunpack.c.l.b16 %v4304
      %v4396 = vunpack.c.l.b16 %v4305
      %v4397 = vunpack.c.l.b16 %v4306
      %v4398 = vunpack.c.l.b16 %v4307
      %v4399 = vunpack.c.l.b16 %v4308
      %v4400 = vunpack.c.l.b16 %v4309
      %v4401 = vunpack.c.l.b16 %v4310
      %v4402 = vunpack.c.l.b16 %v4311
      %v4403 = vunpack.c.l.b16 %v4312
      %v4404 = vpack.c.b16 %v4368, %v4367
      %v4405 = vpack.c.b16 %v4370, %v4369
      %v4406 = vpack.c.b16 %v4372, %v4371
      %v4407 = vpack.c.b16 %v4374, %v4373
      %v4408 = vpack.c.b16 %v4376, %v4375
      %v4409 = vpack.c.b16 %v4378, %v4377
      %v4410 = vpack.c.b16 %v4380, %v4379
      %v4411 = vpack.c.b16 %v4382, %v4381
      %v4412 = vpack.c.b16 %v4384, %v4383
      %v4413 = vpack.c.b16 %v4386, %v4385
      %v4414 = vpack.c.b16 %v4388, %v4387
      %v4415 = vpack.c.b16 %v4390, %v4389
      %v4416 = vpack.c.b16 %v4392, %v4391
      %v4417 = vpack.c.b16 %v4394, %v4393
      %v4418 = vpack.c.b16 %v4396, %v4395
      %v4419 = vpack.c.b16 %v4398, %v4397
      %v4420 = vpack.c.b16 %v4400, %v4399
      %v4421 = vpack.c.b16 %v4402, %v4401
      %v4422 = vpack.c.b16 %v4403, %v4403
      %vm4423 = vcmask 1044480
      %v4424 = vrot.slane %v4404, 3
      %v4425 = vrot.slane %v4405, 3
      %v4426 = vsel %vm4423, %v4424, %v4425
      %v4427 = vrot.slane %v4406, 3
      %v4428 = vsel %vm4423, %v4425, %v4427
      %v4429 = vrot.slane %v4407, 3
      %v4430 = vsel %vm4423, %v4427, %v4429
      %v4431 = vrot.slane %v4408, 3
      %v4432 = vsel %vm4423, %v4429, %v4431
      %v4433 = vrot.slane %v4409, 3
      %v4434 = vsel %vm4423, %v4431, %v4433
      %v4435 = vrot.slane %v4410, 3
      %v4436 = vsel %vm4423, %v4433, %v4435
      %v4437 = vrot.slane %v4411, 3
      %v4438 = vsel %vm4423, %v4435, %v4437
      %v4439 = vrot.slane %v4412, 3
      %v4440 = vsel %vm4423, %v4437, %v4439
      %v4441 = vrot.slane %v4413, 3
      %v4442 = vsel %vm4423, %v4439, %v4441
      %v4443 = vrot.slane %v4414, 3
      %v4444 = vsel %vm4423, %v4441, %v4443
      %v4445 = vrot.slane %v4415, 3
      %v4446 = vsel %vm4423, %v4443, %v4445
      %v4447 = vrot.slane %v4416, 3
      %v4448 = vsel %vm4423, %v4445, %v4447
      %v4449 = vrot.slane %v4417, 3
      %v4450 = vsel %vm4423, %v4447, %v4449
      %v4451 = vrot.slane %v4418, 3
      %v4452 = vsel %vm4423, %v4449, %v4451
      %v4453 = vrot.slane %v4419, 3
      %v4454 = vsel %vm4423, %v4451, %v4453
      %v4455 = vrot.slane %v4420, 3
      %v4456 = vsel %vm4423, %v4453, %v4455
      %v4457 = vrot.slane %v4421, 3
      %v4458 = vsel %vm4423, %v4455, %v4457
      %v4459 = vrot.slane %v4422, 3
      %v4460 = vsel %vm4423, %v4457, %v4459
      %v4495 = vunpack.c.l.b16 %v4314
      %v4496 = vunpack.c.l.b16 %v4315
      %v4497 = vunpack.c.l.b16 %v4316
      %v4498 = vunpack.c.l.b16 %v4317
      %v4499 = vunpack.c.l.b16 %v4318
      %v4500 = vunpack.c.l.b16 %v4319
      %v4501 = vunpack.c.l.b16 %v4320
      %v4502 = vunpack.c.l.b16 %v4321
      %v4503 = vunpack.c.l.b16 %v4322
      %v4504 = vunpack.c.l.b16 %v4323
      %v4505 = vunpack.c.l.b16 %v4324
      %v4506 = vunpack.c.l.b16 %v4325
      %v4507 = vunpack.c.l.b16 %v4326
      %v4508 = vunpack.c.l.b16 %v4327
      %v4509 = vunpack.c.l.b16 %v4328
      %v4510 = vunpack.c.l.b16 %v4329
      %v4511 = vpack.c.b16 %v4496, %v4495
      %v4512 = vpack.c.b16 %v4498, %v4497
      %v4513 = vpack.c.b16 %v4500, %v4499
      %v4514 = vpack.c.b16 %v4502, %v4501
      %v4515 = vpack.c.b16 %v4504, %v4503
      %v4516 = vpack.c.b16 %v4506, %v4505
      %v4517 = vpack.c.b16 %v4508, %v4507
      %v4518 = vpack.c.b16 %v4510, %v4509
      %4527 = vmatpush.bf16.msra.mxu0 %v4518
      %4528 = vmatpush.bf16.msra.mxu0 %v4517
      %4529 = vmatpush.bf16.msra.mxu0 %v4516
      %4530 = vmatpush.bf16.msra.mxu0 %v4515
      %4531 = vmatpush.bf16.msra.mxu0 %v4514
      %4532 = vmatpush.bf16.msra.mxu0 %v4513
      %4533 = vmatpush.bf16.msra.mxu0 %v4512
      %4534 = vmatpush.bf16.msra.mxu0 %v4511
      %4535 = vmatmul.bf16.gmra.mxu0 %v4426
      %v4536 = vpop.f32.mrf.mxu0
      %v4537 = vadd.f32 0.0, %v4536
      %v4538 = vpop.f32.mrf.mxu0
      %v4539 = vadd.f32 0.0, %v4538
      %4540 = vmatmul.bf16.gmra.mxu0 %v4428
      %v4541 = vpop.f32.mrf.mxu0
      %v4542 = vadd.f32 0.0, %v4541
      %v4543 = vpop.f32.mrf.mxu0
      %v4544 = vadd.f32 0.0, %v4543
      %4545 = vmatmul.bf16.gmra.mxu0 %v4430
      %v4546 = vpop.f32.mrf.mxu0
      %v4547 = vadd.f32 0.0, %v4546
      %v4548 = vpop.f32.mrf.mxu0
      %v4549 = vadd.f32 0.0, %v4548
      %4550 = vmatmul.bf16.gmra.mxu0 %v4432
      %v4551 = vpop.f32.mrf.mxu0
      %v4552 = vadd.f32 0.0, %v4551
      %v4553 = vpop.f32.mrf.mxu0
      %v4554 = vadd.f32 0.0, %v4553
      %4555 = vmatmul.bf16.gmra.mxu0 %v4434
      %v4556 = vpop.f32.mrf.mxu0
      %v4557 = vadd.f32 0.0, %v4556
      %v4558 = vpop.f32.mrf.mxu0
      %v4559 = vadd.f32 0.0, %v4558
      %4560 = vmatmul.bf16.gmra.mxu0 %v4436
      %v4561 = vpop.f32.mrf.mxu0
      %v4562 = vadd.f32 0.0, %v4561
      %v4563 = vpop.f32.mrf.mxu0
      %v4564 = vadd.f32 0.0, %v4563
      %4565 = vmatmul.bf16.gmra.mxu0 %v4438
      %v4566 = vpop.f32.mrf.mxu0
      %v4567 = vadd.f32 0.0, %v4566
      %v4568 = vpop.f32.mrf.mxu0
      %v4569 = vadd.f32 0.0, %v4568
      %4570 = vmatmul.bf16.gmra.mxu0 %v4440
      %v4571 = vpop.f32.mrf.mxu0
      %v4572 = vadd.f32 0.0, %v4571
      %v4573 = vpop.f32.mrf.mxu0
      %v4574 = vadd.f32 0.0, %v4573
      %4575 = vmatmul.bf16.gmra.mxu0 %v4442
      %v4576 = vpop.f32.mrf.mxu0
      %v4577 = vadd.f32 0.0, %v4576
      %v4578 = vpop.f32.mrf.mxu0
      %v4579 = vadd.f32 0.0, %v4578
      %4580 = vmatmul.bf16.gmra.mxu0 %v4444
      %v4581 = vpop.f32.mrf.mxu0
      %v4582 = vadd.f32 0.0, %v4581
      %v4583 = vpop.f32.mrf.mxu0
      %v4584 = vadd.f32 0.0, %v4583
      %4585 = vmatmul.bf16.gmra.mxu0 %v4446
      %v4586 = vpop.f32.mrf.mxu0
      %v4587 = vadd.f32 0.0, %v4586
      %v4588 = vpop.f32.mrf.mxu0
      %v4589 = vadd.f32 0.0, %v4588
      %4590 = vmatmul.bf16.gmra.mxu0 %v4448
      %v4591 = vpop.f32.mrf.mxu0
      %v4592 = vadd.f32 0.0, %v4591
      %v4593 = vpop.f32.mrf.mxu0
      %v4594 = vadd.f32 0.0, %v4593
      %4595 = vmatmul.bf16.gmra.mxu0 %v4450
      %v4596 = vpop.f32.mrf.mxu0
      %v4597 = vadd.f32 0.0, %v4596
      %v4598 = vpop.f32.mrf.mxu0
      %v4599 = vadd.f32 0.0, %v4598
      %4600 = vmatmul.bf16.gmra.mxu0 %v4452
      %v4601 = vpop.f32.mrf.mxu0
      %v4602 = vadd.f32 0.0, %v4601
      %v4603 = vpop.f32.mrf.mxu0
      %v4604 = vadd.f32 0.0, %v4603
      %4605 = vmatmul.bf16.gmra.mxu0 %v4454
      %v4606 = vpop.f32.mrf.mxu0
      %v4607 = vadd.f32 0.0, %v4606
      %v4608 = vpop.f32.mrf.mxu0
      %v4609 = vadd.f32 0.0, %v4608
      %4610 = vmatmul.bf16.gmra.mxu0 %v4456
      %v4611 = vpop.f32.mrf.mxu0
      %v4612 = vadd.f32 0.0, %v4611
      %v4613 = vpop.f32.mrf.mxu0
      %v4614 = vadd.f32 0.0, %v4613
      %4615 = vmatmul.bf16.gmra.mxu0 %v4458
      %v4616 = vpop.f32.mrf.mxu0
      %v4617 = vadd.f32 0.0, %v4616
      %v4618 = vpop.f32.mrf.mxu0
      %v4619 = vadd.f32 0.0, %v4618
      %4620 = vmatmul.bf16.gmra.mxu0 %v4460
      %v4621 = vpop.f32.mrf.mxu0
      %v4622 = vadd.f32 0.0, %v4621
      %v4623 = vpop.f32.mrf.mxu0
      %v4624 = vadd.f32 0.0, %v4623
      %4625 = vdwg.mxu0
      %v4626 = vadd.f32 %v4240, %v4537
      %v4627 = vadd.f32 %v4241, %v4539
      %v4628 = vadd.f32 %v4242, %v4542
      %v4629 = vadd.f32 %v4243, %v4544
      %v4630 = vadd.f32 %v4244, %v4547
      %v4631 = vadd.f32 %v4245, %v4549
      %v4632 = vadd.f32 %v4246, %v4552
      %v4633 = vadd.f32 %v4247, %v4554
      %v4634 = vadd.f32 %v4248, %v4557
      %v4635 = vadd.f32 %v4249, %v4559
      %v4636 = vadd.f32 %v4250, %v4562
      %v4637 = vadd.f32 %v4251, %v4564
      %v4638 = vadd.f32 %v4252, %v4567
      %v4639 = vadd.f32 %v4253, %v4569
      %v4640 = vadd.f32 %v4254, %v4572
      %v4641 = vadd.f32 %v4255, %v4574
      %v4642 = vadd.f32 %v4256, %v4577
      %v4643 = vadd.f32 %v4257, %v4579
      %v4644 = vadd.f32 %v4258, %v4582
      %v4645 = vadd.f32 %v4259, %v4584
      %v4646 = vadd.f32 %v4260, %v4587
      %v4647 = vadd.f32 %v4261, %v4589
      %v4648 = vadd.f32 %v4262, %v4592
      %v4649 = vadd.f32 %v4263, %v4594
      %v4650 = vadd.f32 %v4264, %v4597
      %v4651 = vadd.f32 %v4265, %v4599
      %v4652 = vadd.f32 %v4266, %v4602
      %v4653 = vadd.f32 %v4267, %v4604
      %v4654 = vadd.f32 %v4268, %v4607
      %v4655 = vadd.f32 %v4269, %v4609
      %v4656 = vadd.f32 %v4270, %v4612
      %v4657 = vadd.f32 %v4271, %v4614
      %v4658 = vadd.f32 %v4272, %v4617
      %v4659 = vadd.f32 %v4273, %v4619
      %v4660 = vadd.f32 %v4274, %v4622
      %v4661 = vadd.f32 %v4275, %v4624
      %4662 = vst [vmem:[#allocation4] sm:$0xff] %v4626
      %4663 = vst [vmem:[#allocation4 + $0x8] sm:$0xff] %v4627
      %4664 = vst [vmem:[#allocation4 + $0x10] sm:$0xff] %v4628
      %4665 = vst [vmem:[#allocation4 + $0x18] sm:$0xff] %v4629
      %4666 = vst [vmem:[#allocation4 + $0x20] sm:$0xff] %v4630
      %4667 = vst [vmem:[#allocation4 + $0x28] sm:$0xff] %v4631
      %4668 = vst [vmem:[#allocation4 + $0x30] sm:$0xff] %v4632
      %4669 = vst [vmem:[#allocation4 + $0x38] sm:$0xff] %v4633
      %4670 = vst [vmem:[#allocation4 + $0x40] sm:$0xff] %v4634
      %4671 = vst [vmem:[#allocation4 + $0x48] sm:$0xff] %v4635
      %4672 = vst [vmem:[#allocation4 + $0x50] sm:$0xff] %v4636
      %4673 = vst [vmem:[#allocation4 + $0x58] sm:$0xff] %v4637
      %4674 = vst [vmem:[#allocation4 + $0x60] sm:$0xff] %v4638
      %4675 = vst [vmem:[#allocation4 + $0x68] sm:$0xff] %v4639
      %4676 = vst [vmem:[#allocation4 + $0x70] sm:$0xff] %v4640
      %4677 = vst [vmem:[#allocation4 + $0x78] sm:$0xff] %v4641
      %4678 = vst [vmem:[#allocation4 + $0x80] sm:$0xff] %v4642
      %4679 = vst [vmem:[#allocation4 + $0x88] sm:$0xff] %v4643
      %4680 = vst [vmem:[#allocation4 + $0x90] sm:$0xff] %v4644
      %4681 = vst [vmem:[#allocation4 + $0x98] sm:$0xff] %v4645
      %4682 = vst [vmem:[#allocation4 + $0xa0] sm:$0xff] %v4646
      %4683 = vst [vmem:[#allocation4 + $0xa8] sm:$0xff] %v4647
      %4684 = vst [vmem:[#allocation4 + $0xb0] sm:$0xff] %v4648
      %4685 = vst [vmem:[#allocation4 + $0xb8] sm:$0xff] %v4649
      %4686 = vst [vmem:[#allocation4 + $0xc0] sm:$0xff] %v4650
      %4687 = vst [vmem:[#allocation4 + $0xc8] sm:$0xff] %v4651
      %4688 = vst [vmem:[#allocation4 + $0xd0] sm:$0xff] %v4652
      %4689 = vst [vmem:[#allocation4 + $0xd8] sm:$0xff] %v4653
      %4690 = vst [vmem:[#allocation4 + $0xe0] sm:$0xff] %v4654
      %4691 = vst [vmem:[#allocation4 + $0xe8] sm:$0xff] %v4655
      %4692 = vst [vmem:[#allocation4 + $0xf0] sm:$0xff] %v4656
      %4693 = vst [vmem:[#allocation4 + $0xf8] sm:$0xff] %v4657
      %4694 = vst [vmem:[#allocation4 + $0x100] sm:$0xff] %v4658
      %4695 = vst [vmem:[#allocation4 + $0x108] sm:$0xff] %v4659
      %4696 = vst [vmem:[#allocation4 + $0x110] sm:$0xff] %v4660
      %4697 = vst [vmem:[#allocation4 + $0x118] sm:$0xff] %v4661
      %v4698 = vld [vmem:[#allocation4] sm:$0xff]
      %v4699 = vld [vmem:[#allocation4 + $0x8] sm:$0xff]
      %v4700 = vld [vmem:[#allocation4 + $0x10] sm:$0xff]
      %v4701 = vld [vmem:[#allocation4 + $0x18] sm:$0xff]
      %v4702 = vld [vmem:[#allocation4 + $0x20] sm:$0xff]
      %v4703 = vld [vmem:[#allocation4 + $0x28] sm:$0xff]
      %v4704 = vld [vmem:[#allocation4 + $0x30] sm:$0xff]
      %v4705 = vld [vmem:[#allocation4 + $0x38] sm:$0xff]
      %v4706 = vld [vmem:[#allocation4 + $0x40] sm:$0xff]
      %v4707 = vld [vmem:[#allocation4 + $0x48] sm:$0xff]
      %v4708 = vld [vmem:[#allocation4 + $0x50] sm:$0xff]
      %v4709 = vld [vmem:[#allocation4 + $0x58] sm:$0xff]
      %v4710 = vld [vmem:[#allocation4 + $0x60] sm:$0xff]
      %v4711 = vld [vmem:[#allocation4 + $0x68] sm:$0xff]
      %v4712 = vld [vmem:[#allocation4 + $0x70] sm:$0xff]
      %v4713 = vld [vmem:[#allocation4 + $0x78] sm:$0xff]
      %v4714 = vld [vmem:[#allocation4 + $0x80] sm:$0xff]
      %v4715 = vld [vmem:[#allocation4 + $0x88] sm:$0xff]
      %v4716 = vld [vmem:[#allocation4 + $0x90] sm:$0xff]
      %v4717 = vld [vmem:[#allocation4 + $0x98] sm:$0xff]
      %v4718 = vld [vmem:[#allocation4 + $0xa0] sm:$0xff]
      %v4719 = vld [vmem:[#allocation4 + $0xa8] sm:$0xff]
      %v4720 = vld [vmem:[#allocation4 + $0xb0] sm:$0xff]
      %v4721 = vld [vmem:[#allocation4 + $0xb8] sm:$0xff]
      %v4722 = vld [vmem:[#allocation4 + $0xc0] sm:$0xff]
      %v4723 = vld [vmem:[#allocation4 + $0xc8] sm:$0xff]
      %v4724 = vld [vmem:[#allocation4 + $0xd0] sm:$0xff]
      %v4725 = vld [vmem:[#allocation4 + $0xd8] sm:$0xff]
      %v4726 = vld [vmem:[#allocation4 + $0xe0] sm:$0xff]
      %v4727 = vld [vmem:[#allocation4 + $0xe8] sm:$0xff]
      %v4728 = vld [vmem:[#allocation4 + $0xf0] sm:$0xff]
      %v4729 = vld [vmem:[#allocation4 + $0xf8] sm:$0xff]
      %v4730 = vld [vmem:[#allocation4 + $0x100] sm:$0xff]
      %v4731 = vld [vmem:[#allocation4 + $0x108] sm:$0xff]
      %v4732 = vld [vmem:[#allocation4 + $0x110] sm:$0xff]
      %v4733 = vld [vmem:[#allocation4 + $0x118] sm:$0xff]
      %v4734 = vld [vmem:[%s2] sm:$0x1]
      %v4736 = vperm.slane %v4734, 0
      %v4738 = vadd.f32 %v4698, %v4736
      %v4739 = vadd.f32 %v4699, %v4736
      %v4740 = vadd.f32 %v4700, %v4736
      %v4741 = vadd.f32 %v4701, %v4736
      %v4742 = vadd.f32 %v4702, %v4736
      %v4743 = vadd.f32 %v4703, %v4736
      %v4744 = vadd.f32 %v4704, %v4736
      %v4745 = vadd.f32 %v4705, %v4736
      %v4746 = vadd.f32 %v4706, %v4736
      %v4747 = vadd.f32 %v4707, %v4736
      %v4748 = vadd.f32 %v4708, %v4736
      %v4749 = vadd.f32 %v4709, %v4736
      %v4750 = vadd.f32 %v4710, %v4736
      %v4751 = vadd.f32 %v4711, %v4736
      %v4752 = vadd.f32 %v4712, %v4736
      %v4753 = vadd.f32 %v4713, %v4736
      %v4754 = vadd.f32 %v4714, %v4736
      %v4755 = vadd.f32 %v4715, %v4736
      %v4756 = vadd.f32 %v4716, %v4736
      %v4757 = vadd.f32 %v4717, %v4736
      %v4758 = vadd.f32 %v4718, %v4736
      %v4759 = vadd.f32 %v4719, %v4736
      %v4760 = vadd.f32 %v4720, %v4736
      %v4761 = vadd.f32 %v4721, %v4736
      %v4762 = vadd.f32 %v4722, %v4736
      %v4763 = vadd.f32 %v4723, %v4736
      %v4764 = vadd.f32 %v4724, %v4736
      %v4765 = vadd.f32 %v4725, %v4736
      %v4766 = vadd.f32 %v4726, %v4736
      %v4767 = vadd.f32 %v4727, %v4736
      %v4768 = vadd.f32 %v4728, %v4736
      %v4769 = vadd.f32 %v4729, %v4736
      %v4770 = vadd.f32 %v4730, %v4736
      %v4771 = vadd.f32 %v4731, %v4736
      %v4772 = vadd.f32 %v4732, %v4736
      %v4773 = vadd.f32 %v4733, %v4736
      %v4774 = vmax.f32 %v4738, 0.0
      %v4775 = vmax.f32 %v4739, 0.0
      %v4776 = vmax.f32 %v4740, 0.0
      %v4777 = vmax.f32 %v4741, 0.0
      %v4778 = vmax.f32 %v4742, 0.0
      %v4779 = vmax.f32 %v4743, 0.0
      %v4780 = vmax.f32 %v4744, 0.0
      %v4781 = vmax.f32 %v4745, 0.0
      %v4782 = vmax.f32 %v4746, 0.0
      %v4783 = vmax.f32 %v4747, 0.0
      %v4784 = vmax.f32 %v4748, 0.0
      %v4785 = vmax.f32 %v4749, 0.0
      %v4786 = vmax.f32 %v4750, 0.0
      %v4787 = vmax.f32 %v4751, 0.0
      %v4788 = vmax.f32 %v4752, 0.0
      %v4789 = vmax.f32 %v4753, 0.0
      %v4790 = vmax.f32 %v4754, 0.0
      %v4791 = vmax.f32 %v4755, 0.0
      %v4792 = vmax.f32 %v4756, 0.0
      %v4793 = vmax.f32 %v4757, 0.0
      %v4794 = vmax.f32 %v4758, 0.0
      %v4795 = vmax.f32 %v4759, 0.0
      %v4796 = vmax.f32 %v4760, 0.0
      %v4797 = vmax.f32 %v4761, 0.0
      %v4798 = vmax.f32 %v4762, 0.0
      %v4799 = vmax.f32 %v4763, 0.0
      %v4800 = vmax.f32 %v4764, 0.0
      %v4801 = vmax.f32 %v4765, 0.0
      %v4802 = vmax.f32 %v4766, 0.0
      %v4803 = vmax.f32 %v4767, 0.0
      %v4804 = vmax.f32 %v4768, 0.0
      %v4805 = vmax.f32 %v4769, 0.0
      %v4806 = vmax.f32 %v4770, 0.0
      %v4807 = vmax.f32 %v4771, 0.0
      %v4808 = vmax.f32 %v4772, 0.0
      %v4809 = vmax.f32 %v4773, 0.0
      %v4810 = vpack.c.bf16 %v4774, %v4774
      %v4811 = vpack.c.bf16 %v4775, %v4775
      %v4812 = vpack.c.bf16 %v4776, %v4776
      %v4813 = vpack.c.bf16 %v4777, %v4777
      %v4814 = vpack.c.bf16 %v4778, %v4778
      %v4815 = vpack.c.bf16 %v4779, %v4779
      %v4816 = vpack.c.bf16 %v4780, %v4780
      %v4817 = vpack.c.bf16 %v4781, %v4781
      %v4818 = vpack.c.bf16 %v4782, %v4782
      %v4819 = vpack.c.bf16 %v4783, %v4783
      %v4820 = vpack.c.bf16 %v4784, %v4784
      %v4821 = vpack.c.bf16 %v4785, %v4785
      %v4822 = vpack.c.bf16 %v4786, %v4786
      %v4823 = vpack.c.bf16 %v4787, %v4787
      %v4824 = vpack.c.bf16 %v4788, %v4788
      %v4825 = vpack.c.bf16 %v4789, %v4789
      %v4826 = vpack.c.bf16 %v4790, %v4790
      %v4827 = vpack.c.bf16 %v4791, %v4791
      %v4828 = vpack.c.bf16 %v4792, %v4792
      %v4829 = vpack.c.bf16 %v4793, %v4793
      %v4830 = vpack.c.bf16 %v4794, %v4794
      %v4831 = vpack.c.bf16 %v4795, %v4795
      %v4832 = vpack.c.bf16 %v4796, %v4796
      %v4833 = vpack.c.bf16 %v4797, %v4797
      %v4834 = vpack.c.bf16 %v4798, %v4798
      %v4835 = vpack.c.bf16 %v4799, %v4799
      %v4836 = vpack.c.bf16 %v4800, %v4800
      %v4837 = vpack.c.bf16 %v4801, %v4801
      %v4838 = vpack.c.bf16 %v4802, %v4802
      %v4839 = vpack.c.bf16 %v4803, %v4803
      %v4840 = vpack.c.bf16 %v4804, %v4804
      %v4841 = vpack.c.bf16 %v4805, %v4805
      %v4842 = vpack.c.bf16 %v4806, %v4806
      %v4843 = vpack.c.bf16 %v4807, %v4807
      %v4844 = vpack.c.bf16 %v4808, %v4808
      %v4845 = vpack.c.bf16 %v4809, %v4809
      %4846 = vst [vmem:[%s146] sm:$0xf] %v4810
      %4847 = vst [vmem:[%s146 + $0x4] sm:$0xf] %v4811
      %4848 = vst [vmem:[%s146 + $0x8] sm:$0xf] %v4812
      %4849 = vst [vmem:[%s146 + $0xc] sm:$0xf] %v4813
      %4850 = vst [vmem:[%s146 + $0x10] sm:$0xf] %v4814
      %4851 = vst [vmem:[%s146 + $0x14] sm:$0xf] %v4815
      %4852 = vst [vmem:[%s146 + $0x18] sm:$0xf] %v4816
      %4853 = vst [vmem:[%s146 + $0x1c] sm:$0xf] %v4817
      %4854 = vst [vmem:[%s146 + $0x20] sm:$0xf] %v4818
      %4855 = vst [vmem:[%s146 + $0x24] sm:$0xf] %v4819
      %4856 = vst [vmem:[%s146 + $0x28] sm:$0xf] %v4820
      %4857 = vst [vmem:[%s146 + $0x2c] sm:$0xf] %v4821
      %4858 = vst [vmem:[%s146 + $0x30] sm:$0xf] %v4822
      %4859 = vst [vmem:[%s146 + $0x34] sm:$0xf] %v4823
      %4860 = vst [vmem:[%s146 + $0x38] sm:$0xf] %v4824
      %4861 = vst [vmem:[%s146 + $0x3c] sm:$0xf] %v4825
      %4862 = vst [vmem:[%s146 + $0x40] sm:$0xf] %v4826
      %4863 = vst [vmem:[%s146 + $0x44] sm:$0xf] %v4827
      %4864 = vst [vmem:[%s146 + $0x48] sm:$0xf] %v4828
      %4865 = vst [vmem:[%s146 + $0x4c] sm:$0xf] %v4829
      %4866 = vst [vmem:[%s146 + $0x50] sm:$0xf] %v4830
      %4867 = vst [vmem:[%s146 + $0x54] sm:$0xf] %v4831
      %4868 = vst [vmem:[%s146 + $0x58] sm:$0xf] %v4832
      %4869 = vst [vmem:[%s146 + $0x5c] sm:$0xf] %v4833
      %4870 = vst [vmem:[%s146 + $0x60] sm:$0xf] %v4834
      %4871 = vst [vmem:[%s146 + $0x64] sm:$0xf] %v4835
      %4872 = vst [vmem:[%s146 + $0x68] sm:$0xf] %v4836
      %4873 = vst [vmem:[%s146 + $0x6c] sm:$0xf] %v4837
      %4874 = vst [vmem:[%s146 + $0x70] sm:$0xf] %v4838
      %4875 = vst [vmem:[%s146 + $0x74] sm:$0xf] %v4839
      %4876 = vst [vmem:[%s146 + $0x78] sm:$0xf] %v4840
      %4877 = vst [vmem:[%s146 + $0x7c] sm:$0xf] %v4841
      %4878 = vst [vmem:[%s146 + $0x80] sm:$0xf] %v4842
      %4879 = vst [vmem:[%s146 + $0x84] sm:$0xf] %v4843
      %4880 = vst [vmem:[%s146 + $0x88] sm:$0xf] %v4844
      %4881 = vst [vmem:[%s146 + $0x8c] sm:$0xf] %v4845
      %s4882 = smul.u32 36, %s19
      %p4883 = scmp.lt.s32.totalorder %s18, 1
      %s4884 = scalar_select %p4883, %s18, 1
      %p4885 = scmp.lt.s32.totalorder %s4882, 35
      %s4886 = scalar_select %p4885, %s4882, 35
      %s4887 = smul.addr %s4884, 36
      %s4888 = sadd.s32 %s4886, %s4887
      %s4889 = smul.addr %s4888, 4
      %s4890 = scalar_lea.vmem %s3, %s4889
      // Predicated region
      $region75: #{bottleneck_forward.5} parent=27 // pred_check
        %p4891 = pneg %p88
      $region76: #{bottleneck_forward.5} parent=27 // pred_check_branch
        %4893 = sbr.rel (%p4891) target = $region78
      $region77: #{bottleneck_forward.5} parent=27 // pred_region
        %s4894 = smul.u32 36, %s19
      $region78: #{bottleneck_forward.5} parent=27 // pred_fallthru
        _
    $region28: #{bottleneck_forward.5} parent=5 // pred_fallthru
      _
    %p4895 = scmp.le.s32.totalorder 2, %s9
    // Predicated region
    $region79: #{bottleneck_forward.5} parent=5 // pred_check
      %p4896 = pneg %p4895
    $region80: #{bottleneck_forward.5} parent=5 // pred_check_branch
      %4898 = sbr.rel (%p4896) target = $region82
    $region81: #{bottleneck_forward.5} parent=5 // pred_region
      %s4899 = ssub.s32 %s9, 2
      // Predicated region
      $region83: #{bottleneck_forward.5} parent=81 // pred_check
        %p4900 = pneg %p94
      $region84: #{bottleneck_forward.5} parent=81 // pred_check_branch
        %4902 = sbr.rel (%p4900) target = $region86
      $region85: #{bottleneck_forward.5} parent=81 // pred_region
        %s4903 = smul.u32 36, %s21
        %p4904 = scmp.lt.s32.totalorder %s20, 1
        %s4905 = scalar_select %p4904, %s20, 1
        %p4906 = scmp.lt.s32.totalorder %s4903, 35
        %s4907 = scalar_select %p4906, %s4903, 35
        %s4908 = smul.addr %s4905, 36
        %s4909 = sadd.s32 %s4907, %s4908
        %s4910 = smul.addr %s4909, 4
        %s4911 = scalar_lea.vmem %s3, %s4910
      $region86: #{bottleneck_forward.5} parent=81 // pred_fallthru
        _
    $region82: #{bottleneck_forward.5} parent=5 // pred_fallthru
      _
  $region6: #{bottleneck_forward.5} parent=0 // loop_footer
    %s13 = sadd.s32 1, %s9
  $region7: #{bottleneck_forward.5} parent=0 // loop_footer_branch
    %8 = sbr.rel target = $region3
  $region8: #{bottleneck_forward.5} parent=0 // loop_exit
    _
  %4912 = vsyncmov [#allocation3]
  %s4913 = vpop.sfrf %4912
  %p4914 = scmp.eq.s32.totalorder %s4913, 0
  %p4915 = pneg %p4914
  %4917 = shalt.err (%p4915)
  %s4918 = scalar_lea.sflag [#allocation3], 1
  %4919 = vsyncmov %s4918
  %s4920 = vpop.sfrf %4919
  %p4921 = scmp.eq.s32.totalorder %s4920, 0
  %p4922 = pneg %p4921
  %4924 = shalt.err (%p4922)

</llo_original>
